<compile_context>
chip_gen: v6e
topology: v6e:2x2x1
jax: 0.10.0
libtpu: 0.0.40
codegen_flags: <defaults>
</compile_context>

<pallas_src>
import functools

import jax
import jax.numpy as jnp
from jax.experimental import pallas as pl
from jax.experimental.pallas import tpu as pltpu


def autopad(k, p=None):
    return p if p is not None else k // 2


def _round_up(x, m):
    return (x + m - 1) // m * m


def _vmem_cap_bytes():
    try:
        info = pltpu.get_tpu_info()
        cap = getattr(info, "vmem_capacity_bytes", None)
        if cap:
            return int(cap)
    except Exception:
        pass
    return 64 * 1024 * 1024  # conservative default (v7x per-TC VMEM)


# ----------------------------- Pallas kernel --------------------------------
def _make_kernel(k, s, tile_oh, ow_pad, c1, tile_c2, act):
    m = tile_oh * ow_pad
    kdim = k * k * c1

    def kernel(x_ref, w_ref, ss_ref, o_ref, slab_ref):
        # x_ref:    (band_rows, wq, s*c1) bf16  de-interleaved input row band
        # w_ref:    (kdim, tile_c2)       bf16  conv weights, (kh, kw, ci) major
        # ss_ref:   (2, tile_c2)          f32   row0 = BN scale, row1 = BN shift
        # o_ref:    (tile_oh, ow_pad, tile_c2)
        # slab_ref: (m, kdim)             bf16  im2col slab (VMEM scratch)
        if k == 1 and s == 1:
            lhs = x_ref[...].reshape(m, kdim)        # 1x1/s1 conv: no slab copy
        else:
            # Build the slab once per (batch, OH-tile); reuse for all C2 chunks
            # (innermost "arbitrary" grid axis, scratch persists across steps).
            @pl.when(pl.program_id(2) == 0)
            def _build_slab():
                for kh in range(k):
                    for kw in range(k):
                        if s == 1:
                            tap = x_ref[pl.ds(kh, tile_oh),
                                        pl.ds(kw, ow_pad), :]
                        else:
                            tap = x_ref[pl.ds(kh, tile_oh, stride=s),
                                        pl.ds(kw // s, ow_pad),
                                        pl.ds((kw % s) * c1, c1)]
                        t = kh * k + kw
                        slab_ref[:, t * c1:(t + 1) * c1] = tap.reshape(m, c1)

            lhs = slab_ref[...]

        # Single MXU GEMM with K = k*k*C1, f32 accumulation.
        acc = jnp.dot(lhs, w_ref[...], preferred_element_type=jnp.float32)
        y = acc * ss_ref[0:1, :] + ss_ref[1:2, :]          # BN affine in f32
        if act:
            # SiLU: y * sigmoid(y); sigmoid via one tanh EUP op.
            y = y * (0.5 * jnp.tanh(0.5 * y) + 0.5)
        o_ref[...] = y.reshape(tile_oh, ow_pad, tile_c2).astype(o_ref.dtype)

    return kernel


# -------------------------------- wrapper ------------------------------------
@functools.partial(jax.jit,
                   static_argnames=("k", "s", "p", "act", "single_buffer"))
def _conv_impl(x, weight, gamma, beta, run_mean, run_var, *, k, s, p, act,
               eps, single_buffer):
    n, c1, h, w = x.shape
    c2 = weight.shape[0]
    oh = (h + 2 * p - k) // s + 1
    ow = (w + 2 * p - k) // s + 1
    out_dtype = x.dtype

    # Per-channel BN affine (kept in f32, applied in the kernel epilogue).
    scale = gamma / jnp.sqrt(run_var + eps)                         # [C2]
    shift = beta - run_mean * scale                                 # [C2]

    # Output-channel tiling (lane dense; 256-wide chunks when divisible).
    c2p = _round_up(c2, 128)
    tile_c2 = min(c2p, 256) if c2p % 256 == 0 else 128
    n_c2 = c2p // tile_c2

    # Spatial tiling: m = tile_oh * ow_pad GEMM rows, sublane aligned.
    ow_pad = _round_up(ow, 8)
    tile_oh = max(1, min(oh, 256 // ow_pad))
    oh_pad = _round_up(oh, tile_oh)
    n_oh = oh_pad // tile_oh
    band_rows = (tile_oh - 1) * s + k
    m = tile_oh * ow_pad
    kdim = k * k * c1

    # Input prep: NCHW -> NHWC bf16, pad, de-interleave W columns by stride
    # residue into the lane dim, then gather one row band per OH tile
    # (duplicates only the k-s overlap rows in HBM).
    wq = ow_pad + (k - 1) // s
    w_total = s * wq
    h_need = (oh_pad - 1) * s + k

    xb = jnp.transpose(x.astype(jnp.bfloat16), (0, 2, 3, 1))        # NHWC
    xb = jnp.pad(xb, ((0, 0),
                      (p, max(0, h_need - h - p)),
                      (p, max(0, w_total - w - p)),
                      (0, 0)))
    xb = xb[:, :h_need, :w_total, :]
    # column q*s + r, channel c  ->  (..., q, r*c1 + c)
    xb = xb.reshape(n, h_need, wq, s * c1)
    band_idx = (jnp.arange(n_oh)[:, None] * (tile_oh * s)
                + jnp.arange(band_rows)[None, :])
    xb = xb[:, band_idx]                      # [N, n_oh, band_rows, wq, s*c1]

    # Weights: OIHW -> (kh, kw, c1, c2) -> (k*k*c1, c2p), bf16 for the MXU.
    wm = jnp.transpose(weight, (2, 3, 1, 0)).reshape(kdim, c2)
    wm = jnp.pad(wm, ((0, 0), (0, c2p - c2))).astype(jnp.bfloat16)
    ss = jnp.stack([scale, shift]).astype(jnp.float32)              # (2, C2)
    ss = jnp.pad(ss, ((0, 0), (0, c2p - c2)))

    kernel = _make_kernel(k, s, tile_oh, ow_pad, c1, tile_c2, act)

    # VMEM budget & per-generation limit (~cap - 16 MiB headroom).
    lane = 128
    x_blk = band_rows * _round_up(wq, 8) * _round_up(s * c1, lane) * 2
    w_blk = _round_up(kdim, 8) * tile_c2 * 2
    o_blk = tile_oh * ow_pad * tile_c2 * jnp.dtype(out_dtype).itemsize
    slab_b = m * _round_up(kdim, lane) * 2
    acc_b = m * tile_c2 * 4
    est = 2 * x_blk + 2 * w_blk + 2 * o_blk + slab_b + acc_b + 2 * 8 * tile_c2 * 4
    cap = _vmem_cap_bytes()
    vmem_limit = int(min(max(2 * est, 32 * 1024 * 1024),
                         cap - 16 * 1024 * 1024))

    invariant_mode = {}
    if single_buffer and n_c2 == 1:
        # Weight / scale-shift blocks are identical for every grid step:
        # a single VMEM buffer suffices (halves their footprint).
        invariant_mode = dict(pipeline_mode=pl.Buffered(1))

    out = pl.pallas_call(
        kernel,
        out_shape=jax.ShapeDtypeStruct((n, oh_pad, ow_pad, c2p), out_dtype),
        grid_spec=pltpu.PrefetchScalarGridSpec(
            num_scalar_prefetch=0,
            grid=(n, n_oh, n_c2),
            in_specs=[
                # One de-interleaved input row band per (batch, OH-tile),
                # streamed (double-buffered) -- never the whole image.
                pl.BlockSpec((None, None, band_rows, wq, s * c1),
                             lambda b, i, j: (b, i, 0, 0, 0)),
                pl.BlockSpec((kdim, tile_c2), lambda b, i, j: (0, j),
                             **invariant_mode),
                pl.BlockSpec((2, tile_c2), lambda b, i, j: (0, j),
                             **invariant_mode),
            ],
            out_specs=pl.BlockSpec((None, tile_oh, ow_pad, tile_c2),
                                   lambda b, i, j: (b, i, 0, j)),
            scratch_shapes=[pltpu.VMEM((m, kdim), jnp.bfloat16)],
        ),
        compiler_params=pltpu.CompilerParams(
            dimension_semantics=("parallel", "parallel", "arbitrary"),
            vmem_limit_bytes=vmem_limit),
        cost_estimate=pl.CostEstimate(
            flops=2 * n * oh * ow * c2 * kdim,
            transcendentals=(n * oh * ow * c2) if act else 0,
            bytes_accessed=(xb.size * 2 + wm.size * 2
                            + n * oh_pad * ow_pad * c2p
                            * jnp.dtype(out_dtype).itemsize)),
    )(xb, wm, ss)

    out = out[:, :oh, :ow, :c2]                          # drop padding
    return jnp.transpose(out, (0, 3, 1, 2))              # back to NCHW


def conv_bn_silu(x, weight, gamma, beta, run_mean, run_var, *, k, s, p,
                 act=True, eps=1e-5):
    """YOLOv5 Conv forward (inference): SiLU(BN(Conv2d(x))), NCHW in/out."""
    # TODO(synk): grouped conv (g > 1) not implemented; module default g=1 only.
    # TODO(synk): for the C1=3 stem, fold a 2x2 space-to-depth into the lane
    #             dim for better DMA/lane utilization (review item 11).
    try:
        out = _conv_impl(x, weight, gamma, beta, run_mean, run_var,
                         k=k, s=s, p=p, act=act, eps=eps, single_buffer=True)
        return jax.block_until_ready(out)
    except Exception:
        # pl.Buffered(1) single-buffering is a pure VMEM-footprint
        # optimization; fall back to default double-buffering if unsupported.
        return _conv_impl(x, weight, gamma, beta, run_mean, run_var,
                          k=k, s=s, p=p, act=act, eps=eps, single_buffer=False)


# ------------------------------ reference ------------------------------------
def _reference(x, weight, gamma, beta, run_mean, run_var, k, s, p, eps=1e-5):
    y = jax.lax.conv_general_dilated(
        x, weight, window_strides=(s, s), padding=[(p, p), (p, p)],
        dimension_numbers=("NCHW", "OIHW", "NCHW"))
    scale = (gamma / jnp.sqrt(run_var + eps)).reshape(1, -1, 1, 1)
    shift = (beta - run_mean * gamma / jnp.sqrt(run_var + eps)).reshape(1, -1, 1, 1)
    y = y * scale + shift
    return y * jax.nn.sigmoid(y)


# -------------------------------- main ---------------------------------------
if __name__ == "__main__":
    key = jax.random.PRNGKey(0)
    k_x, k_w, k_g, k_b, k_m, k_v = jax.random.split(key, 6)

    N, C1, H, W = 2, 4, 16, 16
    C2, K, S = 8, 3, 1
    P = autopad(K)

    x = jax.random.normal(k_x, (N, C1, H, W), dtype=jnp.float32)
    weight = jax.random.normal(k_w, (C2, C1, K, K), dtype=jnp.float32) * 0.1
    gamma = jax.random.normal(k_g, (C2,), dtype=jnp.float32) * 0.1 + 1.0
    beta = jax.random.normal(k_b, (C2,), dtype=jnp.float32) * 0.1
    run_mean = jax.random.normal(k_m, (C2,), dtype=jnp.float32) * 0.1
    run_var = jax.random.uniform(k_v, (C2,), dtype=jnp.float32,
                                 minval=0.5, maxval=1.5)

    out = conv_bn_silu(x, weight, gamma, beta, run_mean, run_var,
                       k=K, s=S, p=P)
    out = jax.block_until_ready(out)

    ref = _reference(x, weight, gamma, beta, run_mean, run_var, K, S, P)
    assert out.shape == (N, C2, H, W), out.shape
    # bf16 MXU operands dominate the error budget (sigmoid is exact via tanh).
    err = float(jnp.max(jnp.abs(out - ref)))
    assert err < 3e-2, err

    print("KERNEL_OK")
</pallas_src>

<mosaic_0001>
module attributes {stable_mosaic.version = 11 : i64} {
  func.func @kernel(%arg0: i32, %arg1: i32, %arg2: i32, %arg3: memref<1x1x18x18x4xbf16, #tpu.memory_space<vmem>>, %arg4: memref<36x128xbf16, #tpu.memory_space<vmem>>, %arg5: memref<2x128xf32, #tpu.memory_space<vmem>>, %arg6: memref<1x16x16x128xf32, #tpu.memory_space<vmem>>, %arg7: memref<256x36xbf16, #tpu.memory_space<vmem>>) attributes {dimension_semantics = [#tpu.dimension_semantics<parallel>, #tpu.dimension_semantics<parallel>, #tpu.dimension_semantics<arbitrary>], iteration_bounds = array<i64: 2, 1, 1>, scalar_prefetch = 0 : i64, scratch_operands = 1 : i64, tpu.core_type = #tpu.core_type<tc>, window_params = [{transform_indices = @transform_0, window_bounds = array<i64: 1, 1, 18, 18, 4>}, {pipeline_mode = #tpu.pipeline_mode<synchronous>, transform_indices = @transform_1, window_bounds = array<i64: 36, 128>}, {pipeline_mode = #tpu.pipeline_mode<synchronous>, transform_indices = @transform_2, window_bounds = array<i64: 2, 128>}, {transform_indices = @transform_3, window_bounds = array<i64: 1, 16, 16, 128>}]} {
    %c0_i32 = arith.constant 0 : i32
    %0 = arith.cmpi eq, %arg2, %c0_i32 : i32
    %1 = arith.extui %0 : i1 to i32
    %c0_i32_0 = arith.constant 0 : i32
    %2 = arith.cmpi ne, %1, %c0_i32_0 : i32
    scf.if %2 {
      %c0_14 = arith.constant 0 : index
      %c0_15 = arith.constant 0 : index
      %c0_16 = arith.constant 0 : index
      %c0_17 = arith.constant 0 : index
      %c0_18 = arith.constant 0 : index
      %24 = vector.load %arg3[%c0_14, %c0_15, %c0_16, %c0_17, %c0_18] : memref<1x1x18x18x4xbf16, #tpu.memory_space<vmem>>, vector<1x1x16x16x4xbf16>
      %25 = vector.shape_cast %24 : vector<1x1x16x16x4xbf16> to vector<16x16x4xbf16>
      %26 = vector.shape_cast %25 : vector<16x16x4xbf16> to vector<256x4xbf16>
      %c0_19 = arith.constant 0 : index
      %c0_20 = arith.constant 0 : index
      %27 = vector.load %arg7[%c0_19, %c0_20] : memref<256x36xbf16, #tpu.memory_space<vmem>>, vector<256x4xbf16>
      tpu.vector_store %arg7[%c0_19, %c0_20], %26 {strides = array<i32>} : memref<256x36xbf16, #tpu.memory_space<vmem>>, vector<256x4xbf16>,
      %c0_21 = arith.constant 0 : index
      %c0_22 = arith.constant 0 : index
      %c0_23 = arith.constant 0 : index
      %c1_24 = arith.constant 1 : index
      %c0_25 = arith.constant 0 : index
      %28 = vector.load %arg3[%c0_21, %c0_22, %c0_23, %c1_24, %c0_25] : memref<1x1x18x18x4xbf16, #tpu.memory_space<vmem>>, vector<1x1x16x16x4xbf16>
      %29 = vector.shape_cast %28 : vector<1x1x16x16x4xbf16> to vector<16x16x4xbf16>
      %30 = vector.shape_cast %29 : vector<16x16x4xbf16> to vector<256x4xbf16>
      %c0_26 = arith.constant 0 : index
      %c4 = arith.constant 4 : index
      %31 = vector.load %arg7[%c0_26, %c4] : memref<256x36xbf16, #tpu.memory_space<vmem>>, vector<256x4xbf16>
      tpu.vector_store %arg7[%c0_26, %c4], %30 {strides = array<i32>} : memref<256x36xbf16, #tpu.memory_space<vmem>>, vector<256x4xbf16>,
      %c0_27 = arith.constant 0 : index
      %c0_28 = arith.constant 0 : index
      %c0_29 = arith.constant 0 : index
      %c2 = arith.constant 2 : index
      %c0_30 = arith.constant 0 : index
      %32 = vector.load %arg3[%c0_27, %c0_28, %c0_29, %c2, %c0_30] : memref<1x1x18x18x4xbf16, #tpu.memory_space<vmem>>, vector<1x1x16x16x4xbf16>
      %33 = vector.shape_cast %32 : vector<1x1x16x16x4xbf16> to vector<16x16x4xbf16>
      %34 = vector.shape_cast %33 : vector<16x16x4xbf16> to vector<256x4xbf16>
      %c0_31 = arith.constant 0 : index
      %c8 = arith.constant 8 : index
      %35 = vector.load %arg7[%c0_31, %c8] : memref<256x36xbf16, #tpu.memory_space<vmem>>, vector<256x4xbf16>
      tpu.vector_store %arg7[%c0_31, %c8], %34 {strides = array<i32>} : memref<256x36xbf16, #tpu.memory_space<vmem>>, vector<256x4xbf16>,
      %c0_32 = arith.constant 0 : index
      %c0_33 = arith.constant 0 : index
      %c1_34 = arith.constant 1 : index
      %c0_35 = arith.constant 0 : index
      %c0_36 = arith.constant 0 : index
      %36 = vector.load %arg3[%c0_32, %c0_33, %c1_34, %c0_35, %c0_36] : memref<1x1x18x18x4xbf16, #tpu.memory_space<vmem>>, vector<1x1x16x16x4xbf16>
      %37 = vector.shape_cast %36 : vector<1x1x16x16x4xbf16> to vector<16x16x4xbf16>
      %38 = vector.shape_cast %37 : vector<16x16x4xbf16> to vector<256x4xbf16>
      %c0_37 = arith.constant 0 : index
      %c12 = arith.constant 12 : index
      %39 = vector.load %arg7[%c0_37, %c12] : memref<256x36xbf16, #tpu.memory_space<vmem>>, vector<256x4xbf16>
      tpu.vector_store %arg7[%c0_37, %c12], %38 {strides = array<i32>} : memref<256x36xbf16, #tpu.memory_space<vmem>>, vector<256x4xbf16>,
      %c0_38 = arith.constant 0 : index
      %c0_39 = arith.constant 0 : index
      %c1_40 = arith.constant 1 : index
      %c1_41 = arith.constant 1 : index
      %c0_42 = arith.constant 0 : index
      %40 = vector.load %arg3[%c0_38, %c0_39, %c1_40, %c1_41, %c0_42] : memref<1x1x18x18x4xbf16, #tpu.memory_space<vmem>>, vector<1x1x16x16x4xbf16>
      %41 = vector.shape_cast %40 : vector<1x1x16x16x4xbf16> to vector<16x16x4xbf16>
      %42 = vector.shape_cast %41 : vector<16x16x4xbf16> to vector<256x4xbf16>
      %c0_43 = arith.constant 0 : index
      %c16 = arith.constant 16 : index
      %43 = vector.load %arg7[%c0_43, %c16] : memref<256x36xbf16, #tpu.memory_space<vmem>>, vector<256x4xbf16>
      tpu.vector_store %arg7[%c0_43, %c16], %42 {strides = array<i32>} : memref<256x36xbf16, #tpu.memory_space<vmem>>, vector<256x4xbf16>,
      %c0_44 = arith.constant 0 : index
      %c0_45 = arith.constant 0 : index
      %c1_46 = arith.constant 1 : index
      %c2_47 = arith.constant 2 : index
      %c0_48 = arith.constant 0 : index
      %44 = vector.load %arg3[%c0_44, %c0_45, %c1_46, %c2_47, %c0_48] : memref<1x1x18x18x4xbf16, #tpu.memory_space<vmem>>, vector<1x1x16x16x4xbf16>
      %45 = vector.shape_cast %44 : vector<1x1x16x16x4xbf16> to vector<16x16x4xbf16>
      %46 = vector.shape_cast %45 : vector<16x16x4xbf16> to vector<256x4xbf16>
      %c0_49 = arith.constant 0 : index
      %c20 = arith.constant 20 : index
      %47 = vector.load %arg7[%c0_49, %c20] : memref<256x36xbf16, #tpu.memory_space<vmem>>, vector<256x4xbf16>
      tpu.vector_store %arg7[%c0_49, %c20], %46 {strides = array<i32>} : memref<256x36xbf16, #tpu.memory_space<vmem>>, vector<256x4xbf16>,
      %c0_50 = arith.constant 0 : index
      %c0_51 = arith.constant 0 : index
      %c2_52 = arith.constant 2 : index
      %c0_53 = arith.constant 0 : index
      %c0_54 = arith.constant 0 : index
      %48 = vector.load %arg3[%c0_50, %c0_51, %c2_52, %c0_53, %c0_54] : memref<1x1x18x18x4xbf16, #tpu.memory_space<vmem>>, vector<1x1x16x16x4xbf16>
      %49 = vector.shape_cast %48 : vector<1x1x16x16x4xbf16> to vector<16x16x4xbf16>
      %50 = vector.shape_cast %49 : vector<16x16x4xbf16> to vector<256x4xbf16>
      %c0_55 = arith.constant 0 : index
      %c24 = arith.constant 24 : index
      %51 = vector.load %arg7[%c0_55, %c24] : memref<256x36xbf16, #tpu.memory_space<vmem>>, vector<256x4xbf16>
      tpu.vector_store %arg7[%c0_55, %c24], %50 {strides = array<i32>} : memref<256x36xbf16, #tpu.memory_space<vmem>>, vector<256x4xbf16>,
      %c0_56 = arith.constant 0 : index
      %c0_57 = arith.constant 0 : index
      %c2_58 = arith.constant 2 : index
      %c1_59 = arith.constant 1 : index
      %c0_60 = arith.constant 0 : index
      %52 = vector.load %arg3[%c0_56, %c0_57, %c2_58, %c1_59, %c0_60] : memref<1x1x18x18x4xbf16, #tpu.memory_space<vmem>>, vector<1x1x16x16x4xbf16>
      %53 = vector.shape_cast %52 : vector<1x1x16x16x4xbf16> to vector<16x16x4xbf16>
      %54 = vector.shape_cast %53 : vector<16x16x4xbf16> to vector<256x4xbf16>
      %c0_61 = arith.constant 0 : index
      %c28 = arith.constant 28 : index
      %55 = vector.load %arg7[%c0_61, %c28] : memref<256x36xbf16, #tpu.memory_space<vmem>>, vector<256x4xbf16>
      tpu.vector_store %arg7[%c0_61, %c28], %54 {strides = array<i32>} : memref<256x36xbf16, #tpu.memory_space<vmem>>, vector<256x4xbf16>,
      %c0_62 = arith.constant 0 : index
      %c0_63 = arith.constant 0 : index
      %c2_64 = arith.constant 2 : index
      %c2_65 = arith.constant 2 : index
      %c0_66 = arith.constant 0 : index
      %56 = vector.load %arg3[%c0_62, %c0_63, %c2_64, %c2_65, %c0_66] : memref<1x1x18x18x4xbf16, #tpu.memory_space<vmem>>, vector<1x1x16x16x4xbf16>
      %57 = vector.shape_cast %56 : vector<1x1x16x16x4xbf16> to vector<16x16x4xbf16>
      %58 = vector.shape_cast %57 : vector<16x16x4xbf16> to vector<256x4xbf16>
      %c0_67 = arith.constant 0 : index
      %c32 = arith.constant 32 : index
      %59 = vector.load %arg7[%c0_67, %c32] : memref<256x36xbf16, #tpu.memory_space<vmem>>, vector<256x4xbf16>
      tpu.vector_store %arg7[%c0_67, %c32], %58 {strides = array<i32>} : memref<256x36xbf16, #tpu.memory_space<vmem>>, vector<256x4xbf16>,
    } else {
    }
    %c0 = arith.constant 0 : index
    %c0_1 = arith.constant 0 : index
    %3 = vector.load %arg7[%c0, %c0_1] : memref<256x36xbf16, #tpu.memory_space<vmem>>, vector<256x36xbf16>
    %c0_2 = arith.constant 0 : index
    %c0_3 = arith.constant 0 : index
    %4 = vector.load %arg4[%c0_2, %c0_3] : memref<36x128xbf16, #tpu.memory_space<vmem>>, vector<36x128xbf16>
    %cst = arith.constant dense<0.000000e+00> : vector<256x128xf32>
    %5 = tpu.matmul %3, %4, %cst {dimension_numbers = #tpu.dot_dimension_numbers<[1], [0], [0], [1], [0, 0, 1, 1], [], []>} : vector<256x36xbf16>, vector<36x128xbf16>, vector<256x128xf32> -> vector<256x128xf32>
    %c0_4 = arith.constant 0 : index
    %c0_5 = arith.constant 0 : index
    %6 = vector.load %arg5[%c0_4, %c0_5] : memref<2x128xf32, #tpu.memory_space<vmem>>, vector<1x128xf32>
    %7 = vector.broadcast %6 : vector<1x128xf32> to vector<256x128xf32>
    %8 = arith.mulf %5, %7 : vector<256x128xf32>
    %c1 = arith.constant 1 : index
    %c0_6 = arith.constant 0 : index
    %9 = vector.load %arg5[%c1, %c0_6] : memref<2x128xf32, #tpu.memory_space<vmem>>, vector<1x128xf32>
    %10 = vector.broadcast %9 : vector<1x128xf32> to vector<256x128xf32>
    %11 = arith.addf %8, %10 : vector<256x128xf32>
    %cst_7 = arith.constant 5.000000e-01 : f32
    %12 = vector.broadcast %cst_7 : f32 to vector<256x128xf32>
    %13 = arith.mulf %12, %11 : vector<256x128xf32>
    %14 = math.tanh %13 : vector<256x128xf32>
    %cst_8 = arith.constant 5.000000e-01 : f32
    %15 = vector.broadcast %cst_8 : f32 to vector<256x128xf32>
    %16 = arith.mulf %15, %14 : vector<256x128xf32>
    %cst_9 = arith.constant 5.000000e-01 : f32
    %17 = vector.broadcast %cst_9 : f32 to vector<256x128xf32>
    %18 = arith.addf %16, %17 : vector<256x128xf32>
    %19 = arith.mulf %11, %18 : vector<256x128xf32>
    %20 = vector.shape_cast %19 : vector<256x128xf32> to vector<16x16x128xf32>
    %c0_10 = arith.constant 0 : index
    %c0_11 = arith.constant 0 : index
    %c0_12 = arith.constant 0 : index
    %c0_13 = arith.constant 0 : index
    %21 = vector.load %arg6[%c0_10, %c0_11, %c0_12, %c0_13] : memref<1x16x16x128xf32, #tpu.memory_space<vmem>>, vector<1x16x16x128xf32>
    %22 = vector.shape_cast %21 : vector<1x16x16x128xf32> to vector<16x16x128xf32>
    %23 = vector.shape_cast %20 : vector<16x16x128xf32> to vector<1x16x16x128xf32>
    tpu.vector_store %arg6[%c0_10, %c0_11, %c0_12, %c0_13], %23 {strides = array<i32>} : memref<1x16x16x128xf32, #tpu.memory_space<vmem>>, vector<1x16x16x128xf32>,
    return
  }
  func.func @transform_0(%arg0: i32, %arg1: i32, %arg2: i32) -> (i32, i32, i32, i32, i32) {
    %c0_i32 = arith.constant 0 : i32
    %c0_i32_0 = arith.constant 0 : i32
    %c0_i32_1 = arith.constant 0 : i32
    %c0_i32_2 = arith.constant 0 : i32
    return %arg0, %arg1, %c0_i32, %c0_i32_0, %c0_i32_1 : i32, i32, i32, i32, i32
  }
  func.func @transform_1(%arg0: i32, %arg1: i32, %arg2: i32) -> (i32, i32) {
    %c0_i32 = arith.constant 0 : i32
    %c0_i32_0 = arith.constant 0 : i32
    return %c0_i32, %arg2 : i32, i32
  }
  func.func @transform_2(%arg0: i32, %arg1: i32, %arg2: i32) -> (i32, i32) {
    %c0_i32 = arith.constant 0 : i32
    %c0_i32_0 = arith.constant 0 : i32
    return %c0_i32, %arg2 : i32, i32
  }
  func.func @transform_3(%arg0: i32, %arg1: i32, %arg2: i32) -> (i32, i32, i32, i32) {
    %c0_i32 = arith.constant 0 : i32
    %c0_i32_0 = arith.constant 0 : i32
    return %arg0, %arg1, %c0_i32, %arg2 : i32, i32, i32, i32
  }
}

module attributes {stable_mosaic.version = 11 : i64} {
  func.func @kernel(%arg0: i32, %arg1: i32, %arg2: i32, %arg3: memref<1x1x18x18x4xbf16, #tpu.memory_space<vmem>>, %arg4: memref<36x128xbf16, #tpu.memory_space<vmem>>, %arg5: memref<2x128xf32, #tpu.memory_space<vmem>>, %arg6: memref<1x16x16x128xf32, #tpu.memory_space<vmem>>, %arg7: memref<256x36xbf16, #tpu.memory_space<vmem>>) attributes {dimension_semantics = [#tpu.dimension_semantics<parallel>, #tpu.dimension_semantics<parallel>, #tpu.dimension_semantics<arbitrary>], iteration_bounds = array<i64: 2, 1, 1>, scalar_prefetch = 0 : i64, scratch_operands = 1 : i64, tpu.core_type = #tpu.core_type<tc>, window_params = [{transform_indices = @transform_0, window_bounds = array<i64: 1, 1, 18, 18, 4>}, {transform_indices = @transform_1, window_bounds = array<i64: 36, 128>}, {transform_indices = @transform_2, window_bounds = array<i64: 2, 128>}, {transform_indices = @transform_3, window_bounds = array<i64: 1, 16, 16, 128>}]} {
    %c0_i32 = arith.constant 0 : i32
    %0 = arith.cmpi eq, %arg2, %c0_i32 : i32
    %1 = arith.extui %0 : i1 to i32
    %c0_i32_0 = arith.constant 0 : i32
    %2 = arith.cmpi ne, %1, %c0_i32_0 : i32
    scf.if %2 {
      %c0_14 = arith.constant 0 : index
      %c0_15 = arith.constant 0 : index
      %c0_16 = arith.constant 0 : index
      %c0_17 = arith.constant 0 : index
      %c0_18 = arith.constant 0 : index
      %24 = vector.load %arg3[%c0_14, %c0_15, %c0_16, %c0_17, %c0_18] : memref<1x1x18x18x4xbf16, #tpu.memory_space<vmem>>, vector<1x1x16x16x4xbf16>
      %25 = vector.shape_cast %24 : vector<1x1x16x16x4xbf16> to vector<16x16x4xbf16>
      %26 = vector.shape_cast %25 : vector<16x16x4xbf16> to vector<256x4xbf16>
      %c0_19 = arith.constant 0 : index
      %c0_20 = arith.constant 0 : index
      %27 = vector.load %arg7[%c0_19, %c0_20] : memref<256x36xbf16, #tpu.memory_space<vmem>>, vector<256x4xbf16>
      tpu.vector_store %arg7[%c0_19, %c0_20], %26 {strides = array<i32>} : memref<256x36xbf16, #tpu.memory_space<vmem>>, vector<256x4xbf16>,
      %c0_21 = arith.constant 0 : index
      %c0_22 = arith.constant 0 : index
      %c0_23 = arith.constant 0 : index
      %c1_24 = arith.constant 1 : index
      %c0_25 = arith.constant 0 : index
      %28 = vector.load %arg3[%c0_21, %c0_22, %c0_23, %c1_24, %c0_25] : memref<1x1x18x18x4xbf16, #tpu.memory_space<vmem>>, vector<1x1x16x16x4xbf16>
      %29 = vector.shape_cast %28 : vector<1x1x16x16x4xbf16> to vector<16x16x4xbf16>
      %30 = vector.shape_cast %29 : vector<16x16x4xbf16> to vector<256x4xbf16>
      %c0_26 = arith.constant 0 : index
      %c4 = arith.constant 4 : index
      %31 = vector.load %arg7[%c0_26, %c4] : memref<256x36xbf16, #tpu.memory_space<vmem>>, vector<256x4xbf16>
      tpu.vector_store %arg7[%c0_26, %c4], %30 {strides = array<i32>} : memref<256x36xbf16, #tpu.memory_space<vmem>>, vector<256x4xbf16>,
      %c0_27 = arith.constant 0 : index
      %c0_28 = arith.constant 0 : index
      %c0_29 = arith.constant 0 : index
      %c2 = arith.constant 2 : index
      %c0_30 = arith.constant 0 : index
      %32 = vector.load %arg3[%c0_27, %c0_28, %c0_29, %c2, %c0_30] : memref<1x1x18x18x4xbf16, #tpu.memory_space<vmem>>, vector<1x1x16x16x4xbf16>
      %33 = vector.shape_cast %32 : vector<1x1x16x16x4xbf16> to vector<16x16x4xbf16>
      %34 = vector.shape_cast %33 : vector<16x16x4xbf16> to vector<256x4xbf16>
      %c0_31 = arith.constant 0 : index
      %c8 = arith.constant 8 : index
      %35 = vector.load %arg7[%c0_31, %c8] : memref<256x36xbf16, #tpu.memory_space<vmem>>, vector<256x4xbf16>
      tpu.vector_store %arg7[%c0_31, %c8], %34 {strides = array<i32>} : memref<256x36xbf16, #tpu.memory_space<vmem>>, vector<256x4xbf16>,
      %c0_32 = arith.constant 0 : index
      %c0_33 = arith.constant 0 : index
      %c1_34 = arith.constant 1 : index
      %c0_35 = arith.constant 0 : index
      %c0_36 = arith.constant 0 : index
      %36 = vector.load %arg3[%c0_32, %c0_33, %c1_34, %c0_35, %c0_36] : memref<1x1x18x18x4xbf16, #tpu.memory_space<vmem>>, vector<1x1x16x16x4xbf16>
      %37 = vector.shape_cast %36 : vector<1x1x16x16x4xbf16> to vector<16x16x4xbf16>
      %38 = vector.shape_cast %37 : vector<16x16x4xbf16> to vector<256x4xbf16>
      %c0_37 = arith.constant 0 : index
      %c12 = arith.constant 12 : index
      %39 = vector.load %arg7[%c0_37, %c12] : memref<256x36xbf16, #tpu.memory_space<vmem>>, vector<256x4xbf16>
      tpu.vector_store %arg7[%c0_37, %c12], %38 {strides = array<i32>} : memref<256x36xbf16, #tpu.memory_space<vmem>>, vector<256x4xbf16>,
      %c0_38 = arith.constant 0 : index
      %c0_39 = arith.constant 0 : index
      %c1_40 = arith.constant 1 : index
      %c1_41 = arith.constant 1 : index
      %c0_42 = arith.constant 0 : index
      %40 = vector.load %arg3[%c0_38, %c0_39, %c1_40, %c1_41, %c0_42] : memref<1x1x18x18x4xbf16, #tpu.memory_space<vmem>>, vector<1x1x16x16x4xbf16>
      %41 = vector.shape_cast %40 : vector<1x1x16x16x4xbf16> to vector<16x16x4xbf16>
      %42 = vector.shape_cast %41 : vector<16x16x4xbf16> to vector<256x4xbf16>
      %c0_43 = arith.constant 0 : index
      %c16 = arith.constant 16 : index
      %43 = vector.load %arg7[%c0_43, %c16] : memref<256x36xbf16, #tpu.memory_space<vmem>>, vector<256x4xbf16>
      tpu.vector_store %arg7[%c0_43, %c16], %42 {strides = array<i32>} : memref<256x36xbf16, #tpu.memory_space<vmem>>, vector<256x4xbf16>,
      %c0_44 = arith.constant 0 : index
      %c0_45 = arith.constant 0 : index
      %c1_46 = arith.constant 1 : index
      %c2_47 = arith.constant 2 : index
      %c0_48 = arith.constant 0 : index
      %44 = vector.load %arg3[%c0_44, %c0_45, %c1_46, %c2_47, %c0_48] : memref<1x1x18x18x4xbf16, #tpu.memory_space<vmem>>, vector<1x1x16x16x4xbf16>
      %45 = vector.shape_cast %44 : vector<1x1x16x16x4xbf16> to vector<16x16x4xbf16>
      %46 = vector.shape_cast %45 : vector<16x16x4xbf16> to vector<256x4xbf16>
      %c0_49 = arith.constant 0 : index
      %c20 = arith.constant 20 : index
      %47 = vector.load %arg7[%c0_49, %c20] : memref<256x36xbf16, #tpu.memory_space<vmem>>, vector<256x4xbf16>
      tpu.vector_store %arg7[%c0_49, %c20], %46 {strides = array<i32>} : memref<256x36xbf16, #tpu.memory_space<vmem>>, vector<256x4xbf16>,
      %c0_50 = arith.constant 0 : index
      %c0_51 = arith.constant 0 : index
      %c2_52 = arith.constant 2 : index
      %c0_53 = arith.constant 0 : index
      %c0_54 = arith.constant 0 : index
      %48 = vector.load %arg3[%c0_50, %c0_51, %c2_52, %c0_53, %c0_54] : memref<1x1x18x18x4xbf16, #tpu.memory_space<vmem>>, vector<1x1x16x16x4xbf16>
      %49 = vector.shape_cast %48 : vector<1x1x16x16x4xbf16> to vector<16x16x4xbf16>
      %50 = vector.shape_cast %49 : vector<16x16x4xbf16> to vector<256x4xbf16>
      %c0_55 = arith.constant 0 : index
      %c24 = arith.constant 24 : index
      %51 = vector.load %arg7[%c0_55, %c24] : memref<256x36xbf16, #tpu.memory_space<vmem>>, vector<256x4xbf16>
      tpu.vector_store %arg7[%c0_55, %c24], %50 {strides = array<i32>} : memref<256x36xbf16, #tpu.memory_space<vmem>>, vector<256x4xbf16>,
      %c0_56 = arith.constant 0 : index
      %c0_57 = arith.constant 0 : index
      %c2_58 = arith.constant 2 : index
      %c1_59 = arith.constant 1 : index
      %c0_60 = arith.constant 0 : index
      %52 = vector.load %arg3[%c0_56, %c0_57, %c2_58, %c1_59, %c0_60] : memref<1x1x18x18x4xbf16, #tpu.memory_space<vmem>>, vector<1x1x16x16x4xbf16>
      %53 = vector.shape_cast %52 : vector<1x1x16x16x4xbf16> to vector<16x16x4xbf16>
      %54 = vector.shape_cast %53 : vector<16x16x4xbf16> to vector<256x4xbf16>
      %c0_61 = arith.constant 0 : index
      %c28 = arith.constant 28 : index
      %55 = vector.load %arg7[%c0_61, %c28] : memref<256x36xbf16, #tpu.memory_space<vmem>>, vector<256x4xbf16>
      tpu.vector_store %arg7[%c0_61, %c28], %54 {strides = array<i32>} : memref<256x36xbf16, #tpu.memory_space<vmem>>, vector<256x4xbf16>,
      %c0_62 = arith.constant 0 : index
      %c0_63 = arith.constant 0 : index
      %c2_64 = arith.constant 2 : index
      %c2_65 = arith.constant 2 : index
      %c0_66 = arith.constant 0 : index
      %56 = vector.load %arg3[%c0_62, %c0_63, %c2_64, %c2_65, %c0_66] : memref<1x1x18x18x4xbf16, #tpu.memory_space<vmem>>, vector<1x1x16x16x4xbf16>
      %57 = vector.shape_cast %56 : vector<1x1x16x16x4xbf16> to vector<16x16x4xbf16>
      %58 = vector.shape_cast %57 : vector<16x16x4xbf16> to vector<256x4xbf16>
      %c0_67 = arith.constant 0 : index
      %c32 = arith.constant 32 : index
      %59 = vector.load %arg7[%c0_67, %c32] : memref<256x36xbf16, #tpu.memory_space<vmem>>, vector<256x4xbf16>
      tpu.vector_store %arg7[%c0_67, %c32], %58 {strides = array<i32>} : memref<256x36xbf16, #tpu.memory_space<vmem>>, vector<256x4xbf16>,
    } else {
    }
    %c0 = arith.constant 0 : index
    %c0_1 = arith.constant 0 : index
    %3 = vector.load %arg7[%c0, %c0_1] : memref<256x36xbf16, #tpu.memory_space<vmem>>, vector<256x36xbf16>
    %c0_2 = arith.constant 0 : index
    %c0_3 = arith.constant 0 : index
    %4 = vector.load %arg4[%c0_2, %c0_3] : memref<36x128xbf16, #tpu.memory_space<vmem>>, vector<36x128xbf16>
    %cst = arith.constant dense<0.000000e+00> : vector<256x128xf32>
    %5 = tpu.matmul %3, %4, %cst {dimension_numbers = #tpu.dot_dimension_numbers<[1], [0], [0], [1], [0, 0, 1, 1], [], []>} : vector<256x36xbf16>, vector<36x128xbf16>, vector<256x128xf32> -> vector<256x128xf32>
    %c0_4 = arith.constant 0 : index
    %c0_5 = arith.constant 0 : index
    %6 = vector.load %arg5[%c0_4, %c0_5] : memref<2x128xf32, #tpu.memory_space<vmem>>, vector<1x128xf32>
    %7 = vector.broadcast %6 : vector<1x128xf32> to vector<256x128xf32>
    %8 = arith.mulf %5, %7 : vector<256x128xf32>
    %c1 = arith.constant 1 : index
    %c0_6 = arith.constant 0 : index
    %9 = vector.load %arg5[%c1, %c0_6] : memref<2x128xf32, #tpu.memory_space<vmem>>, vector<1x128xf32>
    %10 = vector.broadcast %9 : vector<1x128xf32> to vector<256x128xf32>
    %11 = arith.addf %8, %10 : vector<256x128xf32>
    %cst_7 = arith.constant 5.000000e-01 : f32
    %12 = vector.broadcast %cst_7 : f32 to vector<256x128xf32>
    %13 = arith.mulf %12, %11 : vector<256x128xf32>
    %14 = math.tanh %13 : vector<256x128xf32>
    %cst_8 = arith.constant 5.000000e-01 : f32
    %15 = vector.broadcast %cst_8 : f32 to vector<256x128xf32>
    %16 = arith.mulf %15, %14 : vector<256x128xf32>
    %cst_9 = arith.constant 5.000000e-01 : f32
    %17 = vector.broadcast %cst_9 : f32 to vector<256x128xf32>
    %18 = arith.addf %16, %17 : vector<256x128xf32>
    %19 = arith.mulf %11, %18 : vector<256x128xf32>
    %20 = vector.shape_cast %19 : vector<256x128xf32> to vector<16x16x128xf32>
    %c0_10 = arith.constant 0 : index
    %c0_11 = arith.constant 0 : index
    %c0_12 = arith.constant 0 : index
    %c0_13 = arith.constant 0 : index
    %21 = vector.load %arg6[%c0_10, %c0_11, %c0_12, %c0_13] : memref<1x16x16x128xf32, #tpu.memory_space<vmem>>, vector<1x16x16x128xf32>
    %22 = vector.shape_cast %21 : vector<1x16x16x128xf32> to vector<16x16x128xf32>
    %23 = vector.shape_cast %20 : vector<16x16x128xf32> to vector<1x16x16x128xf32>
    tpu.vector_store %arg6[%c0_10, %c0_11, %c0_12, %c0_13], %23 {strides = array<i32>} : memref<1x16x16x128xf32, #tpu.memory_space<vmem>>, vector<1x16x16x128xf32>,
    return
  }
  func.func @transform_0(%arg0: i32, %arg1: i32, %arg2: i32) -> (i32, i32, i32, i32, i32) {
    %c0_i32 = arith.constant 0 : i32
    %c0_i32_0 = arith.constant 0 : i32
    %c0_i32_1 = arith.constant 0 : i32
    %c0_i32_2 = arith.constant 0 : i32
    return %arg0, %arg1, %c0_i32, %c0_i32_0, %c0_i32_1 : i32, i32, i32, i32, i32
  }
  func.func @transform_1(%arg0: i32, %arg1: i32, %arg2: i32) -> (i32, i32) {
    %c0_i32 = arith.constant 0 : i32
    %c0_i32_0 = arith.constant 0 : i32
    return %c0_i32, %arg2 : i32, i32
  }
  func.func @transform_2(%arg0: i32, %arg1: i32, %arg2: i32) -> (i32, i32) {
    %c0_i32 = arith.constant 0 : i32
    %c0_i32_0 = arith.constant 0 : i32
    return %c0_i32, %arg2 : i32, i32
  }
  func.func @transform_3(%arg0: i32, %arg1: i32, %arg2: i32) -> (i32, i32, i32, i32) {
    %c0_i32 = arith.constant 0 : i32
    %c0_i32_0 = arith.constant 0 : i32
    return %arg0, %arg1, %c0_i32, %arg2 : i32, i32, i32, i32
  }
}

</mosaic_0001>

<llo_original>
// kernel: _conv_impl.1
$region0: #{_conv_impl.1}
  #allocation0 [shape = 'u32[]', space=smem, size = 0x4, offset = 0x4, fixed_abs, tag = 'smem constant byte address 0x4 - core index']
  #allocation1 [shape = 'u32[144,128]{1,0:T(1,128)}', space=vmem, size = 0x12000, scoped, tag = 'internal scratch']
  #allocation2 [shape = 'bf16[256,36]{1,0:T(8,128)(2,1)}', space=vmem, size = 0x10000, scoped, tag = 'scratch operand']
  %s0 = inlined_call_operand.vmem [shape: bf16[2,1,18,18,4], index: 0, kind: input, shape index: {}]
  %s1 = inlined_call_operand.vmem [shape: bf16[36,128], index: 1, kind: input, shape index: {}]
  %s2 = inlined_call_operand.vmem [shape: f32[2,128], index: 2, kind: input, shape index: {}]
  %s3 = inlined_call_operand.vmem [shape: f32[2,16,16,128], index: 3, kind: output, shape index: {}]
  %s4 = sld [smem:[#allocation0]]
  $region49: #{_conv_impl.1} parent=0
    _
  %s6 = ssub.s32 1, %s4
  %s7 = scalar_select 0, %s6, %s4
  loop: start=0, step=1, limit=4
  $region2: #{_conv_impl.1} parent=0 // loop_pre_header
    _
  $region3: #{_conv_impl.1} parent=0 // loop_header
    %s9 = sphi 0, %s13
    %p10 = scmp.ge.s32.totalorder %s9, 4
    %s16 = sphi 0, %s35
    %s17 = sphi 0, %s31
    %s18 = sphi 0, %s27
    %s19 = sphi 0, %s16
    %s20 = sphi 0, %s17
    %s21 = sphi 0, %s18
    %s22 = sphi 0, %s19
    %s23 = sphi 0, %s20
    %s24 = sphi 0, %s21
    %s40 = sphi 0, %s42
    %s43 = sphi 0, %s40
    %s44 = sphi 0, %s43
    %s60 = sphi 0, %s44
    %s66 = sphi 0, %s68
    %s69 = sphi 0, %s66
    %s70 = sphi 0, %s69
    %s86 = sphi 0, %s70
    %s92 = sphi 0, %s94
    %s95 = sphi 0, %s92
    %s96 = sphi 0, %s95
    %s112 = sphi 0, %s96
    %s122 = sphi 0, %s124
    %s125 = sphi 0, %s122
    %s126 = sphi 0, %s125
    %s142 = sphi 0, %s126
  $region4: #{_conv_impl.1} parent=0 // loop_header_branch
    %12 = sbr.rel (%p10) target = $region8
  $region5: #{_conv_impl.1} parent=0 // loop_body
    %s14 = ssub.s32 %s9, 1
    %s15 = ssub.s32 %s9, 2
    %s25 = sadd.s32 1, %s18
    %p26 = scmp.ge.s32.totalorder %s25, 1
    %s27 = scalar_select %p26, 0, %s25
    %s28 = sadd.s32 1, %s17
    %s29 = scalar_select %p26, %s28, %s17
    %p30 = scmp.ge.s32.totalorder %s29, 1
    %s31 = scalar_select %p30, 0, %s29
    %s32 = sadd.s32 1, %s16
    %s33 = scalar_select %p30, %s32, %s16
    %p34 = scmp.ge.s32.totalorder %s33, 2
    %s35 = scalar_select %p34, 0, %s33
    %s36 = ssub.s32 %s16, %s35
    %s37 = ssub.s32 %s17, %s31
    %s38 = sor.u32 %s36, %s37
    %p39 = scmp.eq.s32.totalorder %s38, 0
    %s41 = sadd.s32 %s40, 1
    %s42 = scalar_select %p39, %s40, %s41
    %p45 = pneg %p39
    %p46 = scmp.eq.s32.totalorder %s9, 1
    %p47 = por %p45, %p46
    %p48 = scmp.ne.s32.totalorder %s40, %s43
    %p49 = scmp.eq.s32.totalorder %s9, 0
    %p50 = por %p48, %p49
    %p51 = scmp.ne.s32.totalorder %s40, %s43
    %p52 = scmp.eq.s32.totalorder %s14, 1
    %p53 = por %p51, %p52
    %p54 = scmp.ne.s32.totalorder %s43, %s44
    %p55 = scmp.eq.s32.totalorder %s14, 0
    %p56 = por %p54, %p55
    %p57 = scmp.ne.s32.totalorder %s43, %s44
    %p58 = scmp.eq.s32.totalorder %s15, 1
    %p59 = por %p57, %p58
    %p61 = scmp.ne.s32.totalorder %s44, %s60
    %p62 = scmp.eq.s32.totalorder %s15, 0
    %p63 = por %p61, %p62
    %s64 = ssub.s32 %s18, %s27
    %p65 = scmp.eq.s32.totalorder %s64, 0
    %s67 = sadd.s32 %s66, 1
    %s68 = scalar_select %p65, %s66, %s67
    %p71 = pneg %p65
    %p72 = scmp.eq.s32.totalorder %s9, 1
    %p73 = por %p71, %p72
    %p74 = scmp.ne.s32.totalorder %s66, %s69
    %p75 = scmp.eq.s32.totalorder %s9, 0
    %p76 = por %p74, %p75
    %p77 = scmp.ne.s32.totalorder %s66, %s69
    %p78 = scmp.eq.s32.totalorder %s14, 1
    %p79 = por %p77, %p78
    %p80 = scmp.ne.s32.totalorder %s69, %s70
    %p81 = scmp.eq.s32.totalorder %s14, 0
    %p82 = por %p80, %p81
    %p83 = scmp.ne.s32.totalorder %s69, %s70
    %p84 = scmp.eq.s32.totalorder %s15, 1
    %p85 = por %p83, %p84
    %p87 = scmp.ne.s32.totalorder %s70, %s86
    %p88 = scmp.eq.s32.totalorder %s15, 0
    %p89 = por %p87, %p88
    %s90 = ssub.s32 %s18, %s27
    %p91 = scmp.eq.s32.totalorder %s90, 0
    %s93 = sadd.s32 %s92, 1
    %s94 = scalar_select %p91, %s92, %s93
    %p97 = pneg %p91
    %p98 = scmp.eq.s32.totalorder %s9, 1
    %p99 = por %p97, %p98
    %p100 = scmp.ne.s32.totalorder %s92, %s95
    %p101 = scmp.eq.s32.totalorder %s9, 0
    %p102 = por %p100, %p101
    %p103 = scmp.ne.s32.totalorder %s92, %s95
    %p104 = scmp.eq.s32.totalorder %s14, 1
    %p105 = por %p103, %p104
    %p106 = scmp.ne.s32.totalorder %s95, %s96
    %p107 = scmp.eq.s32.totalorder %s14, 0
    %p108 = por %p106, %p107
    %p109 = scmp.ne.s32.totalorder %s95, %s96
    %p110 = scmp.eq.s32.totalorder %s15, 1
    %p111 = por %p109, %p110
    %p113 = scmp.ne.s32.totalorder %s96, %s112
    %p114 = scmp.eq.s32.totalorder %s15, 0
    %p115 = por %p113, %p114
    %s116 = ssub.s32 %s16, %s35
    %s117 = ssub.s32 %s17, %s31
    %s118 = sor.u32 %s116, %s117
    %s119 = ssub.s32 %s18, %s27
    %s120 = sor.u32 %s118, %s119
    %p121 = scmp.eq.s32.totalorder %s120, 0
    %s123 = sadd.s32 %s122, 1
    %s124 = scalar_select %p121, %s122, %s123
    %p127 = pneg %p121
    %p128 = scmp.eq.s32.totalorder %s9, 1
    %p129 = por %p127, %p128
    %p130 = scmp.ne.s32.totalorder %s122, %s125
    %p131 = scmp.eq.s32.totalorder %s9, 0
    %p132 = por %p130, %p131
    %p133 = scmp.ne.s32.totalorder %s122, %s125
    %p134 = scmp.eq.s32.totalorder %s14, 1
    %p135 = por %p133, %p134
    %p136 = scmp.ne.s32.totalorder %s125, %s126
    %p137 = scmp.eq.s32.totalorder %s14, 0
    %p138 = por %p136, %p137
    %p139 = scmp.ne.s32.totalorder %s125, %s126
    %p140 = scmp.eq.s32.totalorder %s15, 1
    %p141 = por %p139, %p140
    %p143 = scmp.ne.s32.totalorder %s126, %s142
    %p144 = scmp.eq.s32.totalorder %s15, 0
    %p145 = por %p143, %p144
    %p146 = scmp.le.s32.totalorder 1, %s9
    %p147 = scmp.lt.s32.totalorder %s9, 3
    %p148 = pnand %p146, %p147
    %p149 = pneg %p148
    // Predicated region
    $region9: #{_conv_impl.1} parent=5 // pred_check
      _
    $region10: #{_conv_impl.1} parent=5 // pred_check_branch
      %151 = sbr.rel (%p148) target = $region12
    $region11: #{_conv_impl.1} parent=5 // pred_region
      %s152 = ssub.s32 %s9, 1
      // Predicated region
      $region13: #{_conv_impl.1} parent=11 // pred_check
        %p153 = pneg %p82
      $region14: #{_conv_impl.1} parent=11 // pred_check_branch
        %155 = sbr.rel (%p153) target = $region16
      $region15: #{_conv_impl.1} parent=11 // pred_region
        %p156 = scmp.lt.s32.totalorder %s21, 0
        %s157 = scalar_select %p156, %s21, 0
        %s158 = smul.addr %s157, 4
        %s159 = scalar_lea.vmem %s1, %s158
      $region16: #{_conv_impl.1} parent=11 // pred_fallthru
        _
      // Predicated region
      $region17: #{_conv_impl.1} parent=11 // pred_check
        %p160 = pneg %p108
      $region18: #{_conv_impl.1} parent=11 // pred_check_branch
        %162 = sbr.rel (%p160) target = $region20
      $region19: #{_conv_impl.1} parent=11 // pred_region
        %p163 = scmp.lt.s32.totalorder %s21, 0
        %s164 = scalar_select %p163, %s21, 0
        %s165 = smul.addr %s164, 2
        %s166 = scalar_lea.vmem %s2, %s165
      $region20: #{_conv_impl.1} parent=11 // pred_fallthru
        _
    $region12: #{_conv_impl.1} parent=5 // pred_fallthru
      _
    %p167 = scmp.lt.s32.totalorder %s9, 2
    // Predicated region
    $region21: #{_conv_impl.1} parent=5 // pred_check
      %p168 = pneg %p167
    $region22: #{_conv_impl.1} parent=5 // pred_check_branch
      %170 = sbr.rel (%p168) target = $region24
    $region23: #{_conv_impl.1} parent=5 // pred_region
      // Predicated region
      $region25: #{_conv_impl.1} parent=23 // pred_check
        %p171 = pneg %p50
      $region26: #{_conv_impl.1} parent=23 // pred_check_branch
        %173 = sbr.rel (%p171) target = $region28
      $region27: #{_conv_impl.1} parent=23 // pred_region
        %p174 = scmp.lt.s32.totalorder %s16, 1
        %s175 = scalar_select %p174, %s16, 1
        %p176 = scmp.lt.s32.totalorder %s17, 0
        %s177 = scalar_select %p176, %s17, 0
        %s178 = smul.addr %s177, 54
        %s179 = smul.addr %s175, 54
        %s180 = sadd.s32 %s178, %s179
        %s181 = smul.addr %s180, 4
        %s182 = scalar_lea.vmem %s0, %s181
      $region28: #{_conv_impl.1} parent=23 // pred_fallthru
        _
    $region24: #{_conv_impl.1} parent=5 // pred_fallthru
      _
    %p183 = scmp.le.s32.totalorder 1, %s9
    %p184 = scmp.lt.s32.totalorder %s9, 3
    %p185 = pnand %p183, %p184
    %p186 = pneg %p185
    // Predicated region
    $region29: #{_conv_impl.1} parent=5 // pred_check
      _
    $region30: #{_conv_impl.1} parent=5 // pred_check_branch
      %188 = sbr.rel (%p185) target = $region32
    $region31: #{_conv_impl.1} parent=5 // pred_region
      %s189 = ssub.s32 %s9, 1
      %p190 = scmp.lt.s32.totalorder %s19, 1
      %s191 = scalar_select %p190, %s19, 1
      %p192 = scmp.lt.s32.totalorder %s20, 0
      %s193 = scalar_select %p192, %s20, 0
      %s194 = smul.addr %s193, 54
      %s195 = smul.addr %s191, 54
      %s196 = sadd.s32 %s194, %s195
      %s197 = smul.addr %s196, 4
      %s198 = scalar_lea.vmem %s0, %s197
      %p199 = pneg %p56
      %p200 = pneg %p53
      %p201 = scmp.lt.s32.totalorder %s21, 0
      %s202 = scalar_select %p201, %s21, 0
      %s203 = smul.addr %s202, 4
      %s204 = scalar_lea.vmem %s1, %s203
      %p205 = pneg %p82
      %p206 = pneg %p79
      %p207 = scmp.lt.s32.totalorder %s21, 0
      %s208 = scalar_select %p207, %s21, 0
      %s209 = smul.addr %s208, 2
      %s210 = scalar_lea.vmem %s2, %s209
      %p211 = pneg %p108
      %p212 = pneg %p105
      %p213 = pneg %p138
      %p214 = pneg %p135
      %s215 = smul.u32 16, %s20
      %p216 = scmp.lt.s32.totalorder %s19, 1
      %s217 = scalar_select %p216, %s19, 1
      %p218 = scmp.lt.s32.totalorder %s215, 15
      %s219 = scalar_select %p218, %s215, 15
      %p220 = scmp.lt.s32.totalorder %s21, 0
      %s221 = scalar_select %p220, %s21, 0
      %s222 = smul.addr %s219, 2
      %s223 = sadd.s32 %s221, %s222
      %s224 = smul.addr %s217, 32
      %s225 = sadd.s32 %s223, %s224
      %s226 = smul.addr %s225, 8
      %s227 = scalar_lea.vmem %s3, %s226
      %p228 = scmp.lt.s32.totalorder %s19, 1
      %s229 = scalar_select %p228, %s19, 1
      %p230 = scmp.lt.s32.totalorder %s20, 0
      %s231 = scalar_select %p230, %s20, 0
      %s232 = smul.addr %s231, 54
      %s233 = smul.addr %s229, 54
      %s234 = sadd.s32 %s232, %s233
      %s235 = smul.addr %s234, 4
      %s236 = scalar_lea.vmem %s0, %s235
      %p237 = scmp.lt.s32.totalorder %s21, 0
      %s238 = scalar_select %p237, %s21, 0
      %s239 = smul.addr %s238, 4
      %s240 = scalar_lea.vmem %s1, %s239
      %p241 = scmp.lt.s32.totalorder %s21, 0
      %s242 = scalar_select %p241, %s21, 0
      %s243 = smul.addr %s242, 2
      %s244 = scalar_lea.vmem %s2, %s243
      %s245 = smul.u32 16, %s20
      %p246 = scmp.lt.s32.totalorder %s19, 1
      %s247 = scalar_select %p246, %s19, 1
      %p248 = scmp.lt.s32.totalorder %s245, 15
      %s249 = scalar_select %p248, %s245, 15
      %p250 = scmp.lt.s32.totalorder %s21, 0
      %s251 = scalar_select %p250, %s21, 0
      %s252 = smul.addr %s249, 2
      %s253 = sadd.s32 %s251, %s252
      %s254 = smul.addr %s247, 32
      %s255 = sadd.s32 %s253, %s254
      %s256 = smul.addr %s255, 8
      %s257 = scalar_lea.vmem %s3, %s256
      %s258 = smul.u32 16, %s20
      %p260 = scmp.eq.s32.totalorder %s21, 0
      // Predicated region
      $region33: #{_conv_impl.1} parent=31 // pred_check
        %p261 = pneg %p260
      $region34: #{_conv_impl.1} parent=31 // pred_check_branch
        %263 = sbr.rel (%p261) target = $region36
      $region35: #{_conv_impl.1} parent=31 // pred_region
        %v264 = vld [vmem:[%s236] sm:$0xf]
        %v265 = vld [vmem:[%s236 + $0x4] sm:$0xf]
        %v266 = vld [vmem:[%s236 + $0xc] sm:$0xf]
        %v267 = vld [vmem:[%s236 + $0x10] sm:$0xf]
        %v268 = vld [vmem:[%s236 + $0x18] sm:$0xf]
        %v269 = vld [vmem:[%s236 + $0x1c] sm:$0xf]
        %v270 = vld [vmem:[%s236 + $0x24] sm:$0xf]
        %v271 = vld [vmem:[%s236 + $0x28] sm:$0xf]
        %v272 = vld [vmem:[%s236 + $0x30] sm:$0xf]
        %v273 = vld [vmem:[%s236 + $0x34] sm:$0xf]
        %v274 = vld [vmem:[%s236 + $0x3c] sm:$0xf]
        %v275 = vld [vmem:[%s236 + $0x40] sm:$0xf]
        %v276 = vld [vmem:[%s236 + $0x48] sm:$0xf]
        %v277 = vld [vmem:[%s236 + $0x4c] sm:$0xf]
        %v278 = vld [vmem:[%s236 + $0x54] sm:$0xf]
        %v279 = vld [vmem:[%s236 + $0x58] sm:$0xf]
        %v280 = vld [vmem:[%s236 + $0x60] sm:$0xf]
        %v281 = vld [vmem:[%s236 + $0x64] sm:$0xf]
        %v282 = vld [vmem:[%s236 + $0x6c] sm:$0xf]
        %v283 = vld [vmem:[%s236 + $0x70] sm:$0xf]
        %v284 = vld [vmem:[%s236 + $0x78] sm:$0xf]
        %v285 = vld [vmem:[%s236 + $0x7c] sm:$0xf]
        %v286 = vld [vmem:[%s236 + $0x84] sm:$0xf]
        %v287 = vld [vmem:[%s236 + $0x88] sm:$0xf]
        %v288 = vld [vmem:[%s236 + $0x90] sm:$0xf]
        %v289 = vld [vmem:[%s236 + $0x94] sm:$0xf]
        %v290 = vld [vmem:[%s236 + $0x9c] sm:$0xf]
        %v291 = vld [vmem:[%s236 + $0xa0] sm:$0xf]
        %v292 = vld [vmem:[%s236 + $0xa8] sm:$0xf]
        %v293 = vld [vmem:[%s236 + $0xac] sm:$0xf]
        %v294 = vld [vmem:[%s236 + $0xb4] sm:$0xf]
        %v295 = vld [vmem:[%s236 + $0xb8] sm:$0xf]
        %vm296 = vcmask 27648
        %297 = vst.msk [vmem:[#allocation2] sm:$0xf] %vm296, %v264
        %298 = vst.msk [vmem:[#allocation2 + $0x4] sm:$0xf] %vm296, %v265
        %299 = vst.msk [vmem:[#allocation2 + $0x8] sm:$0xf] %vm296, %v266
        %300 = vst.msk [vmem:[#allocation2 + $0xc] sm:$0xf] %vm296, %v267
        %301 = vst.msk [vmem:[#allocation2 + $0x10] sm:$0xf] %vm296, %v268
        %302 = vst.msk [vmem:[#allocation2 + $0x14] sm:$0xf] %vm296, %v269
        %303 = vst.msk [vmem:[#allocation2 + $0x18] sm:$0xf] %vm296, %v270
        %304 = vst.msk [vmem:[#allocation2 + $0x1c] sm:$0xf] %vm296, %v271
        %305 = vst.msk [vmem:[#allocation2 + $0x20] sm:$0xf] %vm296, %v272
        %306 = vst.msk [vmem:[#allocation2 + $0x24] sm:$0xf] %vm296, %v273
        %307 = vst.msk [vmem:[#allocation2 + $0x28] sm:$0xf] %vm296, %v274
        %308 = vst.msk [vmem:[#allocation2 + $0x2c] sm:$0xf] %vm296, %v275
        %309 = vst.msk [vmem:[#allocation2 + $0x30] sm:$0xf] %vm296, %v276
        %310 = vst.msk [vmem:[#allocation2 + $0x34] sm:$0xf] %vm296, %v277
        %311 = vst.msk [vmem:[#allocation2 + $0x38] sm:$0xf] %vm296, %v278
        %312 = vst.msk [vmem:[#allocation2 + $0x3c] sm:$0xf] %vm296, %v279
        %313 = vst.msk [vmem:[#allocation2 + $0x40] sm:$0xf] %vm296, %v280
        %314 = vst.msk [vmem:[#allocation2 + $0x44] sm:$0xf] %vm296, %v281
        %315 = vst.msk [vmem:[#allocation2 + $0x48] sm:$0xf] %vm296, %v282
        %316 = vst.msk [vmem:[#allocation2 + $0x4c] sm:$0xf] %vm296, %v283
        %317 = vst.msk [vmem:[#allocation2 + $0x50] sm:$0xf] %vm296, %v284
        %318 = vst.msk [vmem:[#allocation2 + $0x54] sm:$0xf] %vm296, %v285
        %319 = vst.msk [vmem:[#allocation2 + $0x58] sm:$0xf] %vm296, %v286
        %320 = vst.msk [vmem:[#allocation2 + $0x5c] sm:$0xf] %vm296, %v287
        %321 = vst.msk [vmem:[#allocation2 + $0x60] sm:$0xf] %vm296, %v288
        %322 = vst.msk [vmem:[#allocation2 + $0x64] sm:$0xf] %vm296, %v289
        %323 = vst.msk [vmem:[#allocation2 + $0x68] sm:$0xf] %vm296, %v290
        %324 = vst.msk [vmem:[#allocation2 + $0x6c] sm:$0xf] %vm296, %v291
        %325 = vst.msk [vmem:[#allocation2 + $0x70] sm:$0xf] %vm296, %v292
        %326 = vst.msk [vmem:[#allocation2 + $0x74] sm:$0xf] %vm296, %v293
        %327 = vst.msk [vmem:[#allocation2 + $0x78] sm:$0xf] %vm296, %v294
        %328 = vst.msk [vmem:[#allocation2 + $0x7c] sm:$0xf] %vm296, %v295
        %v329 = vld [vmem:[%s236] sm:$0xf]
        %v330 = vld [vmem:[%s236 + $0x4] sm:$0xf]
        %v331 = vld [vmem:[%s236 + $0x8] sm:$0x1]
        %v332 = vld [vmem:[%s236 + $0xc] sm:$0xf]
        %v333 = vld [vmem:[%s236 + $0x10] sm:$0xf]
        %v334 = vld [vmem:[%s236 + $0x14] sm:$0x1]
        %v335 = vld [vmem:[%s236 + $0x18] sm:$0xf]
        %v336 = vld [vmem:[%s236 + $0x1c] sm:$0xf]
        %v337 = vld [vmem:[%s236 + $0x20] sm:$0x1]
        %v338 = vld [vmem:[%s236 + $0x24] sm:$0xf]
        %v339 = vld [vmem:[%s236 + $0x28] sm:$0xf]
        %v340 = vld [vmem:[%s236 + $0x2c] sm:$0x1]
        %v341 = vld [vmem:[%s236 + $0x30] sm:$0xf]
        %v342 = vld [vmem:[%s236 + $0x34] sm:$0xf]
        %v343 = vld [vmem:[%s236 + $0x38] sm:$0x1]
        %v344 = vld [vmem:[%s236 + $0x3c] sm:$0xf]
        %v345 = vld [vmem:[%s236 + $0x40] sm:$0xf]
        %v346 = vld [vmem:[%s236 + $0x44] sm:$0x1]
        %v347 = vld [vmem:[%s236 + $0x48] sm:$0xf]
        %v348 = vld [vmem:[%s236 + $0x4c] sm:$0xf]
        %v349 = vld [vmem:[%s236 + $0x50] sm:$0x1]
        %v350 = vld [vmem:[%s236 + $0x54] sm:$0xf]
        %v351 = vld [vmem:[%s236 + $0x58] sm:$0xf]
        %v352 = vld [vmem:[%s236 + $0x5c] sm:$0x1]
        %v353 = vld [vmem:[%s236 + $0x60] sm:$0xf]
        %v354 = vld [vmem:[%s236 + $0x64] sm:$0xf]
        %v355 = vld [vmem:[%s236 + $0x68] sm:$0x1]
        %v356 = vld [vmem:[%s236 + $0x6c] sm:$0xf]
        %v357 = vld [vmem:[%s236 + $0x70] sm:$0xf]
        %v358 = vld [vmem:[%s236 + $0x74] sm:$0x1]
        %v359 = vld [vmem:[%s236 + $0x78] sm:$0xf]
        %v360 = vld [vmem:[%s236 + $0x7c] sm:$0xf]
        %v361 = vld [vmem:[%s236 + $0x80] sm:$0x1]
        %v362 = vld [vmem:[%s236 + $0x84] sm:$0xf]
        %v363 = vld [vmem:[%s236 + $0x88] sm:$0xf]
        %v364 = vld [vmem:[%s236 + $0x8c] sm:$0x1]
        %v365 = vld [vmem:[%s236 + $0x90] sm:$0xf]
        %v366 = vld [vmem:[%s236 + $0x94] sm:$0xf]
        %v367 = vld [vmem:[%s236 + $0x98] sm:$0x1]
        %v368 = vld [vmem:[%s236 + $0x9c] sm:$0xf]
        %v369 = vld [vmem:[%s236 + $0xa0] sm:$0xf]
        %v370 = vld [vmem:[%s236 + $0xa4] sm:$0x1]
        %v371 = vld [vmem:[%s236 + $0xa8] sm:$0xf]
        %v372 = vld [vmem:[%s236 + $0xac] sm:$0xf]
        %v373 = vld [vmem:[%s236 + $0xb0] sm:$0x1]
        %v374 = vld [vmem:[%s236 + $0xb4] sm:$0xf]
        %v375 = vld [vmem:[%s236 + $0xb8] sm:$0xf]
        %v376 = vld [vmem:[%s236 + $0xbc] sm:$0x1]
        %vm377 = vsmask.f32 3328
        %vm378 = vsmask.f32 7440
        %vm379 = vmor %vm377, %vm378
        %v381 = vshrl.u32 %v329, 16
        %v383 = vrot.slane %v381, 4
        %v384 = vshll.u32 %v329, 16
        %v386 = vrot.slane %v384, 5
        %v387 = vor.u32 %v383, %v386
        %v388 = vrot.slane %v387, 4
        %v390 = vshll.u32 %v330, 16
        %v392 = vrot.slane %v390, 5
        %v393 = vsel %vm379, %v388, %v392
        %v394 = vshrl.u32 %v330, 16
        %v396 = vrot.slane %v394, 4
        %v397 = vor.u32 %v396, %v392
        %v398 = vrot.slane %v397, 4
        %v400 = vshll.u32 %v331, 16
        %v402 = vrot.slane %v400, 5
        %v403 = vsel %vm379, %v398, %v402
        %v405 = vshrl.u32 %v332, 16
        %v407 = vrot.slane %v405, 4
        %v408 = vshll.u32 %v332, 16
        %v410 = vrot.slane %v408, 5
        %v411 = vor.u32 %v407, %v410
        %v412 = vrot.slane %v411, 4
        %v414 = vshll.u32 %v333, 16
        %v416 = vrot.slane %v414, 5
        %v417 = vsel %vm379, %v412, %v416
        %v418 = vshrl.u32 %v333, 16
        %v420 = vrot.slane %v418, 4
        %v421 = vor.u32 %v420, %v416
        %v422 = vrot.slane %v421, 4
        %v424 = vshll.u32 %v334, 16
        %v426 = vrot.slane %v424, 5
        %v427 = vsel %vm379, %v422, %v426
        %v429 = vshrl.u32 %v335, 16
        %v431 = vrot.slane %v429, 4
        %v432 = vshll.u32 %v335, 16
        %v434 = vrot.slane %v432, 5
        %v435 = vor.u32 %v431, %v434
        %v436 = vrot.slane %v435, 4
        %v438 = vshll.u32 %v336, 16
        %v440 = vrot.slane %v438, 5
        %v441 = vsel %vm379, %v436, %v440
        %v442 = vshrl.u32 %v336, 16
        %v444 = vrot.slane %v442, 4
        %v445 = vor.u32 %v444, %v440
        %v446 = vrot.slane %v445, 4
        %v448 = vshll.u32 %v337, 16
        %v450 = vrot.slane %v448, 5
        %v451 = vsel %vm379, %v446, %v450
        %v453 = vshrl.u32 %v338, 16
        %v455 = vrot.slane %v453, 4
        %v456 = vshll.u32 %v338, 16
        %v458 = vrot.slane %v456, 5
        %v459 = vor.u32 %v455, %v458
        %v460 = vrot.slane %v459, 4
        %v462 = vshll.u32 %v339, 16
        %v464 = vrot.slane %v462, 5
        %v465 = vsel %vm379, %v460, %v464
        %v466 = vshrl.u32 %v339, 16
        %v468 = vrot.slane %v466, 4
        %v469 = vor.u32 %v468, %v464
        %v470 = vrot.slane %v469, 4
        %v472 = vshll.u32 %v340, 16
        %v474 = vrot.slane %v472, 5
        %v475 = vsel %vm379, %v470, %v474
        %v477 = vshrl.u32 %v341, 16
        %v479 = vrot.slane %v477, 4
        %v480 = vshll.u32 %v341, 16
        %v482 = vrot.slane %v480, 5
        %v483 = vor.u32 %v479, %v482
        %v484 = vrot.slane %v483, 4
        %v486 = vshll.u32 %v342, 16
        %v488 = vrot.slane %v486, 5
        %v489 = vsel %vm379, %v484, %v488
        %v490 = vshrl.u32 %v342, 16
        %v492 = vrot.slane %v490, 4
        %v493 = vor.u32 %v492, %v488
        %v494 = vrot.slane %v493, 4
        %v496 = vshll.u32 %v343, 16
        %v498 = vrot.slane %v496, 5
        %v499 = vsel %vm379, %v494, %v498
        %v501 = vshrl.u32 %v344, 16
        %v503 = vrot.slane %v501, 4
        %v504 = vshll.u32 %v344, 16
        %v506 = vrot.slane %v504, 5
        %v507 = vor.u32 %v503, %v506
        %v508 = vrot.slane %v507, 4
        %v510 = vshll.u32 %v345, 16
        %v512 = vrot.slane %v510, 5
        %v513 = vsel %vm379, %v508, %v512
        %v514 = vshrl.u32 %v345, 16
        %v516 = vrot.slane %v514, 4
        %v517 = vor.u32 %v516, %v512
        %v518 = vrot.slane %v517, 4
        %v520 = vshll.u32 %v346, 16
        %v522 = vrot.slane %v520, 5
        %v523 = vsel %vm379, %v518, %v522
        %v525 = vshrl.u32 %v347, 16
        %v527 = vrot.slane %v525, 4
        %v528 = vshll.u32 %v347, 16
        %v530 = vrot.slane %v528, 5
        %v531 = vor.u32 %v527, %v530
        %v532 = vrot.slane %v531, 4
        %v534 = vshll.u32 %v348, 16
        %v536 = vrot.slane %v534, 5
        %v537 = vsel %vm379, %v532, %v536
        %v538 = vshrl.u32 %v348, 16
        %v540 = vrot.slane %v538, 4
        %v541 = vor.u32 %v540, %v536
        %v542 = vrot.slane %v541, 4
        %v544 = vshll.u32 %v349, 16
        %v546 = vrot.slane %v544, 5
        %v547 = vsel %vm379, %v542, %v546
        %v549 = vshrl.u32 %v350, 16
        %v551 = vrot.slane %v549, 4
        %v552 = vshll.u32 %v350, 16
        %v554 = vrot.slane %v552, 5
        %v555 = vor.u32 %v551, %v554
        %v556 = vrot.slane %v555, 4
        %v558 = vshll.u32 %v351, 16
        %v560 = vrot.slane %v558, 5
        %v561 = vsel %vm379, %v556, %v560
        %v562 = vshrl.u32 %v351, 16
        %v564 = vrot.slane %v562, 4
        %v565 = vor.u32 %v564, %v560
        %v566 = vrot.slane %v565, 4
        %v568 = vshll.u32 %v352, 16
        %v570 = vrot.slane %v568, 5
        %v571 = vsel %vm379, %v566, %v570
        %v573 = vshrl.u32 %v353, 16
        %v575 = vrot.slane %v573, 4
        %v576 = vshll.u32 %v353, 16
        %v578 = vrot.slane %v576, 5
        %v579 = vor.u32 %v575, %v578
        %v580 = vrot.slane %v579, 4
        %v582 = vshll.u32 %v354, 16
        %v584 = vrot.slane %v582, 5
        %v585 = vsel %vm379, %v580, %v584
        %v586 = vshrl.u32 %v354, 16
        %v588 = vrot.slane %v586, 4
        %v589 = vor.u32 %v588, %v584
        %v590 = vrot.slane %v589, 4
        %v592 = vshll.u32 %v355, 16
        %v594 = vrot.slane %v592, 5
        %v595 = vsel %vm379, %v590, %v594
        %v597 = vshrl.u32 %v356, 16
        %v599 = vrot.slane %v597, 4
        %v600 = vshll.u32 %v356, 16
        %v602 = vrot.slane %v600, 5
        %v603 = vor.u32 %v599, %v602
        %v604 = vrot.slane %v603, 4
        %v606 = vshll.u32 %v357, 16
        %v608 = vrot.slane %v606, 5
        %v609 = vsel %vm379, %v604, %v608
        %v610 = vshrl.u32 %v357, 16
        %v612 = vrot.slane %v610, 4
        %v613 = vor.u32 %v612, %v608
        %v614 = vrot.slane %v613, 4
        %v616 = vshll.u32 %v358, 16
        %v618 = vrot.slane %v616, 5
        %v619 = vsel %vm379, %v614, %v618
        %v621 = vshrl.u32 %v359, 16
        %v623 = vrot.slane %v621, 4
        %v624 = vshll.u32 %v359, 16
        %v626 = vrot.slane %v624, 5
        %v627 = vor.u32 %v623, %v626
        %v628 = vrot.slane %v627, 4
        %v630 = vshll.u32 %v360, 16
        %v632 = vrot.slane %v630, 5
        %v633 = vsel %vm379, %v628, %v632
        %v634 = vshrl.u32 %v360, 16
        %v636 = vrot.slane %v634, 4
        %v637 = vor.u32 %v636, %v632
        %v638 = vrot.slane %v637, 4
        %v640 = vshll.u32 %v361, 16
        %v642 = vrot.slane %v640, 5
        %v643 = vsel %vm379, %v638, %v642
        %v645 = vshrl.u32 %v362, 16
        %v647 = vrot.slane %v645, 4
        %v648 = vshll.u32 %v362, 16
        %v650 = vrot.slane %v648, 5
        %v651 = vor.u32 %v647, %v650
        %v652 = vrot.slane %v651, 4
        %v654 = vshll.u32 %v363, 16
        %v656 = vrot.slane %v654, 5
        %v657 = vsel %vm379, %v652, %v656
        %v658 = vshrl.u32 %v363, 16
        %v660 = vrot.slane %v658, 4
        %v661 = vor.u32 %v660, %v656
        %v662 = vrot.slane %v661, 4
        %v664 = vshll.u32 %v364, 16
        %v666 = vrot.slane %v664, 5
        %v667 = vsel %vm379, %v662, %v666
        %v669 = vshrl.u32 %v365, 16
        %v671 = vrot.slane %v669, 4
        %v672 = vshll.u32 %v365, 16
        %v674 = vrot.slane %v672, 5
        %v675 = vor.u32 %v671, %v674
        %v676 = vrot.slane %v675, 4
        %v678 = vshll.u32 %v366, 16
        %v680 = vrot.slane %v678, 5
        %v681 = vsel %vm379, %v676, %v680
        %v682 = vshrl.u32 %v366, 16
        %v684 = vrot.slane %v682, 4
        %v685 = vor.u32 %v684, %v680
        %v686 = vrot.slane %v685, 4
        %v688 = vshll.u32 %v367, 16
        %v690 = vrot.slane %v688, 5
        %v691 = vsel %vm379, %v686, %v690
        %v693 = vshrl.u32 %v368, 16
        %v695 = vrot.slane %v693, 4
        %v696 = vshll.u32 %v368, 16
        %v698 = vrot.slane %v696, 5
        %v699 = vor.u32 %v695, %v698
        %v700 = vrot.slane %v699, 4
        %v702 = vshll.u32 %v369, 16
        %v704 = vrot.slane %v702, 5
        %v705 = vsel %vm379, %v700, %v704
        %v706 = vshrl.u32 %v369, 16
        %v708 = vrot.slane %v706, 4
        %v709 = vor.u32 %v708, %v704
        %v710 = vrot.slane %v709, 4
        %v712 = vshll.u32 %v370, 16
        %v714 = vrot.slane %v712, 5
        %v715 = vsel %vm379, %v710, %v714
        %v717 = vshrl.u32 %v371, 16
        %v719 = vrot.slane %v717, 4
        %v720 = vshll.u32 %v371, 16
        %v722 = vrot.slane %v720, 5
        %v723 = vor.u32 %v719, %v722
        %v724 = vrot.slane %v723, 4
        %v726 = vshll.u32 %v372, 16
        %v728 = vrot.slane %v726, 5
        %v729 = vsel %vm379, %v724, %v728
        %v730 = vshrl.u32 %v372, 16
        %v732 = vrot.slane %v730, 4
        %v733 = vor.u32 %v732, %v728
        %v734 = vrot.slane %v733, 4
        %v736 = vshll.u32 %v373, 16
        %v738 = vrot.slane %v736, 5
        %v739 = vsel %vm379, %v734, %v738
        %v741 = vshrl.u32 %v374, 16
        %v743 = vrot.slane %v741, 4
        %v744 = vshll.u32 %v374, 16
        %v746 = vrot.slane %v744, 5
        %v747 = vor.u32 %v743, %v746
        %v748 = vrot.slane %v747, 4
        %v750 = vshll.u32 %v375, 16
        %v752 = vrot.slane %v750, 5
        %v753 = vsel %vm379, %v748, %v752
        %v754 = vshrl.u32 %v375, 16
        %v756 = vrot.slane %v754, 4
        %v757 = vor.u32 %v756, %v752
        %v758 = vrot.slane %v757, 4
        %v760 = vshll.u32 %v376, 16
        %v762 = vrot.slane %v760, 5
        %v763 = vsel %vm379, %v758, %v762
        %764 = vrot.lane.b32.xlu0 %v393, 4
        %v765 = vpop.permute.xlu0 %764
        %766 = vrot.lane.b32.xlu0 %v403, 4
        %v767 = vpop.permute.xlu0 %766
        %768 = vrot.lane.b32.xlu0 %v417, 4
        %v769 = vpop.permute.xlu0 %768
        %770 = vrot.lane.b32.xlu0 %v427, 4
        %v771 = vpop.permute.xlu0 %770
        %772 = vrot.lane.b32.xlu0 %v441, 4
        %v773 = vpop.permute.xlu0 %772
        %774 = vrot.lane.b32.xlu0 %v451, 4
        %v775 = vpop.permute.xlu0 %774
        %776 = vrot.lane.b32.xlu0 %v465, 4
        %v777 = vpop.permute.xlu0 %776
        %778 = vrot.lane.b32.xlu0 %v475, 4
        %v779 = vpop.permute.xlu0 %778
        %780 = vrot.lane.b32.xlu0 %v489, 4
        %v781 = vpop.permute.xlu0 %780
        %782 = vrot.lane.b32.xlu0 %v499, 4
        %v783 = vpop.permute.xlu0 %782
        %784 = vrot.lane.b32.xlu0 %v513, 4
        %v785 = vpop.permute.xlu0 %784
        %786 = vrot.lane.b32.xlu0 %v523, 4
        %v787 = vpop.permute.xlu0 %786
        %788 = vrot.lane.b32.xlu0 %v537, 4
        %v789 = vpop.permute.xlu0 %788
        %790 = vrot.lane.b32.xlu0 %v547, 4
        %v791 = vpop.permute.xlu0 %790
        %792 = vrot.lane.b32.xlu0 %v561, 4
        %v793 = vpop.permute.xlu0 %792
        %794 = vrot.lane.b32.xlu0 %v571, 4
        %v795 = vpop.permute.xlu0 %794
        %796 = vrot.lane.b32.xlu0 %v585, 4
        %v797 = vpop.permute.xlu0 %796
        %798 = vrot.lane.b32.xlu0 %v595, 4
        %v799 = vpop.permute.xlu0 %798
        %800 = vrot.lane.b32.xlu0 %v609, 4
        %v801 = vpop.permute.xlu0 %800
        %802 = vrot.lane.b32.xlu0 %v619, 4
        %v803 = vpop.permute.xlu0 %802
        %804 = vrot.lane.b32.xlu0 %v633, 4
        %v805 = vpop.permute.xlu0 %804
        %806 = vrot.lane.b32.xlu0 %v643, 4
        %v807 = vpop.permute.xlu0 %806
        %808 = vrot.lane.b32.xlu0 %v657, 4
        %v809 = vpop.permute.xlu0 %808
        %810 = vrot.lane.b32.xlu0 %v667, 4
        %v811 = vpop.permute.xlu0 %810
        %812 = vrot.lane.b32.xlu0 %v681, 4
        %v813 = vpop.permute.xlu0 %812
        %814 = vrot.lane.b32.xlu0 %v691, 4
        %v815 = vpop.permute.xlu0 %814
        %816 = vrot.lane.b32.xlu0 %v705, 4
        %v817 = vpop.permute.xlu0 %816
        %818 = vrot.lane.b32.xlu0 %v715, 4
        %v819 = vpop.permute.xlu0 %818
        %820 = vrot.lane.b32.xlu0 %v729, 4
        %v821 = vpop.permute.xlu0 %820
        %822 = vrot.lane.b32.xlu0 %v739, 4
        %v823 = vpop.permute.xlu0 %822
        %824 = vrot.lane.b32.xlu0 %v753, 4
        %v825 = vpop.permute.xlu0 %824
        %826 = vrot.lane.b32.xlu0 %v763, 4
        %v827 = vpop.permute.xlu0 %826
        %vm860 = vcmask 60448
        %861 = vst.msk [vmem:[#allocation2] sm:$0xf] %vm860, %v765
        %862 = vst.msk [vmem:[#allocation2 + $0x4] sm:$0xf] %vm860, %v767
        %863 = vst.msk [vmem:[#allocation2 + $0x8] sm:$0xf] %vm860, %v769
        %864 = vst.msk [vmem:[#allocation2 + $0xc] sm:$0xf] %vm860, %v771
        %865 = vst.msk [vmem:[#allocation2 + $0x10] sm:$0xf] %vm860, %v773
        %866 = vst.msk [vmem:[#allocation2 + $0x14] sm:$0xf] %vm860, %v775
        %867 = vst.msk [vmem:[#allocation2 + $0x18] sm:$0xf] %vm860, %v777
        %868 = vst.msk [vmem:[#allocation2 + $0x1c] sm:$0xf] %vm860, %v779
        %869 = vst.msk [vmem:[#allocation2 + $0x20] sm:$0xf] %vm860, %v781
        %870 = vst.msk [vmem:[#allocation2 + $0x24] sm:$0xf] %vm860, %v783
        %871 = vst.msk [vmem:[#allocation2 + $0x28] sm:$0xf] %vm860, %v785
        %872 = vst.msk [vmem:[#allocation2 + $0x2c] sm:$0xf] %vm860, %v787
        %873 = vst.msk [vmem:[#allocation2 + $0x30] sm:$0xf] %vm860, %v789
        %874 = vst.msk [vmem:[#allocation2 + $0x34] sm:$0xf] %vm860, %v791
        %875 = vst.msk [vmem:[#allocation2 + $0x38] sm:$0xf] %vm860, %v793
        %876 = vst.msk [vmem:[#allocation2 + $0x3c] sm:$0xf] %vm860, %v795
        %877 = vst.msk [vmem:[#allocation2 + $0x40] sm:$0xf] %vm860, %v797
        %878 = vst.msk [vmem:[#allocation2 + $0x44] sm:$0xf] %vm860, %v799
        %879 = vst.msk [vmem:[#allocation2 + $0x48] sm:$0xf] %vm860, %v801
        %880 = vst.msk [vmem:[#allocation2 + $0x4c] sm:$0xf] %vm860, %v803
        %881 = vst.msk [vmem:[#allocation2 + $0x50] sm:$0xf] %vm860, %v805
        %882 = vst.msk [vmem:[#allocation2 + $0x54] sm:$0xf] %vm860, %v807
        %883 = vst.msk [vmem:[#allocation2 + $0x58] sm:$0xf] %vm860, %v809
        %884 = vst.msk [vmem:[#allocation2 + $0x5c] sm:$0xf] %vm860, %v811
        %885 = vst.msk [vmem:[#allocation2 + $0x60] sm:$0xf] %vm860, %v813
        %886 = vst.msk [vmem:[#allocation2 + $0x64] sm:$0xf] %vm860, %v815
        %887 = vst.msk [vmem:[#allocation2 + $0x68] sm:$0xf] %vm860, %v817
        %888 = vst.msk [vmem:[#allocation2 + $0x6c] sm:$0xf] %vm860, %v819
        %889 = vst.msk [vmem:[#allocation2 + $0x70] sm:$0xf] %vm860, %v821
        %890 = vst.msk [vmem:[#allocation2 + $0x74] sm:$0xf] %vm860, %v823
        %891 = vst.msk [vmem:[#allocation2 + $0x78] sm:$0xf] %vm860, %v825
        %892 = vst.msk [vmem:[#allocation2 + $0x7c] sm:$0xf] %vm860, %v827
        %v893 = vld [vmem:[%s236] sm:$0xe]
        %v894 = vld [vmem:[%s236 + $0x4] sm:$0xf]
        %v895 = vld [vmem:[%s236 + $0x8] sm:$0x1]
        %v896 = vld [vmem:[%s236 + $0xc] sm:$0xe]
        %v897 = vld [vmem:[%s236 + $0x10] sm:$0xf]
        %v898 = vld [vmem:[%s236 + $0x14] sm:$0x1]
        %v899 = vld [vmem:[%s236 + $0x18] sm:$0xe]
        %v900 = vld [vmem:[%s236 + $0x1c] sm:$0xf]
        %v901 = vld [vmem:[%s236 + $0x20] sm:$0x1]
        %v902 = vld [vmem:[%s236 + $0x24] sm:$0xe]
        %v903 = vld [vmem:[%s236 + $0x28] sm:$0xf]
        %v904 = vld [vmem:[%s236 + $0x2c] sm:$0x1]
        %v905 = vld [vmem:[%s236 + $0x30] sm:$0xe]
        %v906 = vld [vmem:[%s236 + $0x34] sm:$0xf]
        %v907 = vld [vmem:[%s236 + $0x38] sm:$0x1]
        %v908 = vld [vmem:[%s236 + $0x3c] sm:$0xe]
        %v909 = vld [vmem:[%s236 + $0x40] sm:$0xf]
        %v910 = vld [vmem:[%s236 + $0x44] sm:$0x1]
        %v911 = vld [vmem:[%s236 + $0x48] sm:$0xe]
        %v912 = vld [vmem:[%s236 + $0x4c] sm:$0xf]
        %v913 = vld [vmem:[%s236 + $0x50] sm:$0x1]
        %v914 = vld [vmem:[%s236 + $0x54] sm:$0xe]
        %v915 = vld [vmem:[%s236 + $0x58] sm:$0xf]
        %v916 = vld [vmem:[%s236 + $0x5c] sm:$0x1]
        %v917 = vld [vmem:[%s236 + $0x60] sm:$0xe]
        %v918 = vld [vmem:[%s236 + $0x64] sm:$0xf]
        %v919 = vld [vmem:[%s236 + $0x68] sm:$0x1]
        %v920 = vld [vmem:[%s236 + $0x6c] sm:$0xe]
        %v921 = vld [vmem:[%s236 + $0x70] sm:$0xf]
        %v922 = vld [vmem:[%s236 + $0x74] sm:$0x1]
        %v923 = vld [vmem:[%s236 + $0x78] sm:$0xe]
        %v924 = vld [vmem:[%s236 + $0x7c] sm:$0xf]
        %v925 = vld [vmem:[%s236 + $0x80] sm:$0x1]
        %v926 = vld [vmem:[%s236 + $0x84] sm:$0xe]
        %v927 = vld [vmem:[%s236 + $0x88] sm:$0xf]
        %v928 = vld [vmem:[%s236 + $0x8c] sm:$0x1]
        %v929 = vld [vmem:[%s236 + $0x90] sm:$0xe]
        %v930 = vld [vmem:[%s236 + $0x94] sm:$0xf]
        %v931 = vld [vmem:[%s236 + $0x98] sm:$0x1]
        %v932 = vld [vmem:[%s236 + $0x9c] sm:$0xe]
        %v933 = vld [vmem:[%s236 + $0xa0] sm:$0xf]
        %v934 = vld [vmem:[%s236 + $0xa4] sm:$0x1]
        %v935 = vld [vmem:[%s236 + $0xa8] sm:$0xe]
        %v936 = vld [vmem:[%s236 + $0xac] sm:$0xf]
        %v937 = vld [vmem:[%s236 + $0xb0] sm:$0x1]
        %v938 = vld [vmem:[%s236 + $0xb4] sm:$0xe]
        %v939 = vld [vmem:[%s236 + $0xb8] sm:$0xf]
        %v940 = vld [vmem:[%s236 + $0xbc] sm:$0x1]
        %vm989 = vcmask 1042432
        %vm990 = vcmask 1046532
        %vm991 = vmor %vm989, %vm990
        %v992 = vrot.slane %v893, 5
        %v993 = vrot.slane %v992, 4
        %v994 = vrot.slane %v894, 5
        %v995 = vsel %vm991, %v993, %v994
        %v996 = vrot.slane %v994, 4
        %v997 = vrot.slane %v895, 5
        %v998 = vsel %vm991, %v996, %v997
        %v999 = vrot.slane %v896, 5
        %v1000 = vrot.slane %v999, 4
        %v1001 = vrot.slane %v897, 5
        %v1002 = vsel %vm991, %v1000, %v1001
        %v1003 = vrot.slane %v1001, 4
        %v1004 = vrot.slane %v898, 5
        %v1005 = vsel %vm991, %v1003, %v1004
        %v1006 = vrot.slane %v899, 5
        %v1007 = vrot.slane %v1006, 4
        %v1008 = vrot.slane %v900, 5
        %v1009 = vsel %vm991, %v1007, %v1008
        %v1010 = vrot.slane %v1008, 4
        %v1011 = vrot.slane %v901, 5
        %v1012 = vsel %vm991, %v1010, %v1011
        %v1013 = vrot.slane %v902, 5
        %v1014 = vrot.slane %v1013, 4
        %v1015 = vrot.slane %v903, 5
        %v1016 = vsel %vm991, %v1014, %v1015
        %v1017 = vrot.slane %v1015, 4
        %v1018 = vrot.slane %v904, 5
        %v1019 = vsel %vm991, %v1017, %v1018
        %v1020 = vrot.slane %v905, 5
        %v1021 = vrot.slane %v1020, 4
        %v1022 = vrot.slane %v906, 5
        %v1023 = vsel %vm991, %v1021, %v1022
        %v1024 = vrot.slane %v1022, 4
        %v1025 = vrot.slane %v907, 5
        %v1026 = vsel %vm991, %v1024, %v1025
        %v1027 = vrot.slane %v908, 5
        %v1028 = vrot.slane %v1027, 4
        %v1029 = vrot.slane %v909, 5
        %v1030 = vsel %vm991, %v1028, %v1029
        %v1031 = vrot.slane %v1029, 4
        %v1032 = vrot.slane %v910, 5
        %v1033 = vsel %vm991, %v1031, %v1032
        %v1034 = vrot.slane %v911, 5
        %v1035 = vrot.slane %v1034, 4
        %v1036 = vrot.slane %v912, 5
        %v1037 = vsel %vm991, %v1035, %v1036
        %v1038 = vrot.slane %v1036, 4
        %v1039 = vrot.slane %v913, 5
        %v1040 = vsel %vm991, %v1038, %v1039
        %v1041 = vrot.slane %v914, 5
        %v1042 = vrot.slane %v1041, 4
        %v1043 = vrot.slane %v915, 5
        %v1044 = vsel %vm991, %v1042, %v1043
        %v1045 = vrot.slane %v1043, 4
        %v1046 = vrot.slane %v916, 5
        %v1047 = vsel %vm991, %v1045, %v1046
        %v1048 = vrot.slane %v917, 5
        %v1049 = vrot.slane %v1048, 4
        %v1050 = vrot.slane %v918, 5
        %v1051 = vsel %vm991, %v1049, %v1050
        %v1052 = vrot.slane %v1050, 4
        %v1053 = vrot.slane %v919, 5
        %v1054 = vsel %vm991, %v1052, %v1053
        %v1055 = vrot.slane %v920, 5
        %v1056 = vrot.slane %v1055, 4
        %v1057 = vrot.slane %v921, 5
        %v1058 = vsel %vm991, %v1056, %v1057
        %v1059 = vrot.slane %v1057, 4
        %v1060 = vrot.slane %v922, 5
        %v1061 = vsel %vm991, %v1059, %v1060
        %v1062 = vrot.slane %v923, 5
        %v1063 = vrot.slane %v1062, 4
        %v1064 = vrot.slane %v924, 5
        %v1065 = vsel %vm991, %v1063, %v1064
        %v1066 = vrot.slane %v1064, 4
        %v1067 = vrot.slane %v925, 5
        %v1068 = vsel %vm991, %v1066, %v1067
        %v1069 = vrot.slane %v926, 5
        %v1070 = vrot.slane %v1069, 4
        %v1071 = vrot.slane %v927, 5
        %v1072 = vsel %vm991, %v1070, %v1071
        %v1073 = vrot.slane %v1071, 4
        %v1074 = vrot.slane %v928, 5
        %v1075 = vsel %vm991, %v1073, %v1074
        %v1076 = vrot.slane %v929, 5
        %v1077 = vrot.slane %v1076, 4
        %v1078 = vrot.slane %v930, 5
        %v1079 = vsel %vm991, %v1077, %v1078
        %v1080 = vrot.slane %v1078, 4
        %v1081 = vrot.slane %v931, 5
        %v1082 = vsel %vm991, %v1080, %v1081
        %v1083 = vrot.slane %v932, 5
        %v1084 = vrot.slane %v1083, 4
        %v1085 = vrot.slane %v933, 5
        %v1086 = vsel %vm991, %v1084, %v1085
        %v1087 = vrot.slane %v1085, 4
        %v1088 = vrot.slane %v934, 5
        %v1089 = vsel %vm991, %v1087, %v1088
        %v1090 = vrot.slane %v935, 5
        %v1091 = vrot.slane %v1090, 4
        %v1092 = vrot.slane %v936, 5
        %v1093 = vsel %vm991, %v1091, %v1092
        %v1094 = vrot.slane %v1092, 4
        %v1095 = vrot.slane %v937, 5
        %v1096 = vsel %vm991, %v1094, %v1095
        %v1097 = vrot.slane %v938, 5
        %v1098 = vrot.slane %v1097, 4
        %v1099 = vrot.slane %v939, 5
        %v1100 = vsel %vm991, %v1098, %v1099
        %v1101 = vrot.slane %v1099, 4
        %v1102 = vrot.slane %v940, 5
        %v1103 = vsel %vm991, %v1101, %v1102
        %1104 = vrot.lane.b32.xlu0 %v995, 8
        %v1105 = vpop.permute.xlu0 %1104
        %1106 = vrot.lane.b32.xlu0 %v998, 8
        %v1107 = vpop.permute.xlu0 %1106
        %1108 = vrot.lane.b32.xlu0 %v1002, 8
        %v1109 = vpop.permute.xlu0 %1108
        %1110 = vrot.lane.b32.xlu0 %v1005, 8
        %v1111 = vpop.permute.xlu0 %1110
        %1112 = vrot.lane.b32.xlu0 %v1009, 8
        %v1113 = vpop.permute.xlu0 %1112
        %1114 = vrot.lane.b32.xlu0 %v1012, 8
        %v1115 = vpop.permute.xlu0 %1114
        %1116 = vrot.lane.b32.xlu0 %v1016, 8
        %v1117 = vpop.permute.xlu0 %1116
        %1118 = vrot.lane.b32.xlu0 %v1019, 8
        %v1119 = vpop.permute.xlu0 %1118
        %1120 = vrot.lane.b32.xlu0 %v1023, 8
        %v1121 = vpop.permute.xlu0 %1120
        %1122 = vrot.lane.b32.xlu0 %v1026, 8
        %v1123 = vpop.permute.xlu0 %1122
        %1124 = vrot.lane.b32.xlu0 %v1030, 8
        %v1125 = vpop.permute.xlu0 %1124
        %1126 = vrot.lane.b32.xlu0 %v1033, 8
        %v1127 = vpop.permute.xlu0 %1126
        %1128 = vrot.lane.b32.xlu0 %v1037, 8
        %v1129 = vpop.permute.xlu0 %1128
        %1130 = vrot.lane.b32.xlu0 %v1040, 8
        %v1131 = vpop.permute.xlu0 %1130
        %1132 = vrot.lane.b32.xlu0 %v1044, 8
        %v1133 = vpop.permute.xlu0 %1132
        %1134 = vrot.lane.b32.xlu0 %v1047, 8
        %v1135 = vpop.permute.xlu0 %1134
        %1136 = vrot.lane.b32.xlu0 %v1051, 8
        %v1137 = vpop.permute.xlu0 %1136
        %1138 = vrot.lane.b32.xlu0 %v1054, 8
        %v1139 = vpop.permute.xlu0 %1138
        %1140 = vrot.lane.b32.xlu0 %v1058, 8
        %v1141 = vpop.permute.xlu0 %1140
        %1142 = vrot.lane.b32.xlu0 %v1061, 8
        %v1143 = vpop.permute.xlu0 %1142
        %1144 = vrot.lane.b32.xlu0 %v1065, 8
        %v1145 = vpop.permute.xlu0 %1144
        %1146 = vrot.lane.b32.xlu0 %v1068, 8
        %v1147 = vpop.permute.xlu0 %1146
        %1148 = vrot.lane.b32.xlu0 %v1072, 8
        %v1149 = vpop.permute.xlu0 %1148
        %1150 = vrot.lane.b32.xlu0 %v1075, 8
        %v1151 = vpop.permute.xlu0 %1150
        %1152 = vrot.lane.b32.xlu0 %v1079, 8
        %v1153 = vpop.permute.xlu0 %1152
        %1154 = vrot.lane.b32.xlu0 %v1082, 8
        %v1155 = vpop.permute.xlu0 %1154
        %1156 = vrot.lane.b32.xlu0 %v1086, 8
        %v1157 = vpop.permute.xlu0 %1156
        %1158 = vrot.lane.b32.xlu0 %v1089, 8
        %v1159 = vpop.permute.xlu0 %1158
        %1160 = vrot.lane.b32.xlu0 %v1093, 8
        %v1161 = vpop.permute.xlu0 %1160
        %1162 = vrot.lane.b32.xlu0 %v1096, 8
        %v1163 = vpop.permute.xlu0 %1162
        %1164 = vrot.lane.b32.xlu0 %v1100, 8
        %v1165 = vpop.permute.xlu0 %1164
        %1166 = vrot.lane.b32.xlu0 %v1103, 8
        %v1167 = vpop.permute.xlu0 %1166
        %vm1200 = vcmask 93248
        %1201 = vst.msk [vmem:[#allocation2] sm:$0xf] %vm1200, %v1105
        %1202 = vst.msk [vmem:[#allocation2 + $0x4] sm:$0xf] %vm1200, %v1107
        %1203 = vst.msk [vmem:[#allocation2 + $0x8] sm:$0xf] %vm1200, %v1109
        %1204 = vst.msk [vmem:[#allocation2 + $0xc] sm:$0xf] %vm1200, %v1111
        %1205 = vst.msk [vmem:[#allocation2 + $0x10] sm:$0xf] %vm1200, %v1113
        %1206 = vst.msk [vmem:[#allocation2 + $0x14] sm:$0xf] %vm1200, %v1115
        %1207 = vst.msk [vmem:[#allocation2 + $0x18] sm:$0xf] %vm1200, %v1117
        %1208 = vst.msk [vmem:[#allocation2 + $0x1c] sm:$0xf] %vm1200, %v1119
        %1209 = vst.msk [vmem:[#allocation2 + $0x20] sm:$0xf] %vm1200, %v1121
        %1210 = vst.msk [vmem:[#allocation2 + $0x24] sm:$0xf] %vm1200, %v1123
        %1211 = vst.msk [vmem:[#allocation2 + $0x28] sm:$0xf] %vm1200, %v1125
        %1212 = vst.msk [vmem:[#allocation2 + $0x2c] sm:$0xf] %vm1200, %v1127
        %1213 = vst.msk [vmem:[#allocation2 + $0x30] sm:$0xf] %vm1200, %v1129
        %1214 = vst.msk [vmem:[#allocation2 + $0x34] sm:$0xf] %vm1200, %v1131
        %1215 = vst.msk [vmem:[#allocation2 + $0x38] sm:$0xf] %vm1200, %v1133
        %1216 = vst.msk [vmem:[#allocation2 + $0x3c] sm:$0xf] %vm1200, %v1135
        %1217 = vst.msk [vmem:[#allocation2 + $0x40] sm:$0xf] %vm1200, %v1137
        %1218 = vst.msk [vmem:[#allocation2 + $0x44] sm:$0xf] %vm1200, %v1139
        %1219 = vst.msk [vmem:[#allocation2 + $0x48] sm:$0xf] %vm1200, %v1141
        %1220 = vst.msk [vmem:[#allocation2 + $0x4c] sm:$0xf] %vm1200, %v1143
        %1221 = vst.msk [vmem:[#allocation2 + $0x50] sm:$0xf] %vm1200, %v1145
        %1222 = vst.msk [vmem:[#allocation2 + $0x54] sm:$0xf] %vm1200, %v1147
        %1223 = vst.msk [vmem:[#allocation2 + $0x58] sm:$0xf] %vm1200, %v1149
        %1224 = vst.msk [vmem:[#allocation2 + $0x5c] sm:$0xf] %vm1200, %v1151
        %1225 = vst.msk [vmem:[#allocation2 + $0x60] sm:$0xf] %vm1200, %v1153
        %1226 = vst.msk [vmem:[#allocation2 + $0x64] sm:$0xf] %vm1200, %v1155
        %1227 = vst.msk [vmem:[#allocation2 + $0x68] sm:$0xf] %vm1200, %v1157
        %1228 = vst.msk [vmem:[#allocation2 + $0x6c] sm:$0xf] %vm1200, %v1159
        %1229 = vst.msk [vmem:[#allocation2 + $0x70] sm:$0xf] %vm1200, %v1161
        %1230 = vst.msk [vmem:[#allocation2 + $0x74] sm:$0xf] %vm1200, %v1163
        %1231 = vst.msk [vmem:[#allocation2 + $0x78] sm:$0xf] %vm1200, %v1165
        %1232 = vst.msk [vmem:[#allocation2 + $0x7c] sm:$0xf] %vm1200, %v1167
        %s1233 = scalar_lea.vmem %s236, 12
        %v1234 = vld [vmem:[%s1233] sm:$0xf]
        %v1235 = vld [vmem:[%s1233 + $0x4] sm:$0xf]
        %v1236 = vld [vmem:[%s1233 + $0xc] sm:$0xf]
        %v1237 = vld [vmem:[%s1233 + $0x10] sm:$0xf]
        %v1238 = vld [vmem:[%s1233 + $0x18] sm:$0xf]
        %v1239 = vld [vmem:[%s1233 + $0x1c] sm:$0xf]
        %v1240 = vld [vmem:[%s1233 + $0x24] sm:$0xf]
        %v1241 = vld [vmem:[%s1233 + $0x28] sm:$0xf]
        %v1242 = vld [vmem:[%s1233 + $0x30] sm:$0xf]
        %v1243 = vld [vmem:[%s1233 + $0x34] sm:$0xf]
        %v1244 = vld [vmem:[%s1233 + $0x3c] sm:$0xf]
        %v1245 = vld [vmem:[%s1233 + $0x40] sm:$0xf]
        %v1246 = vld [vmem:[%s1233 + $0x48] sm:$0xf]
        %v1247 = vld [vmem:[%s1233 + $0x4c] sm:$0xf]
        %v1248 = vld [vmem:[%s1233 + $0x54] sm:$0xf]
        %v1249 = vld [vmem:[%s1233 + $0x58] sm:$0xf]
        %v1250 = vld [vmem:[%s1233 + $0x60] sm:$0xf]
        %v1251 = vld [vmem:[%s1233 + $0x64] sm:$0xf]
        %v1252 = vld [vmem:[%s1233 + $0x6c] sm:$0xf]
        %v1253 = vld [vmem:[%s1233 + $0x70] sm:$0xf]
        %v1254 = vld [vmem:[%s1233 + $0x78] sm:$0xf]
        %v1255 = vld [vmem:[%s1233 + $0x7c] sm:$0xf]
        %v1256 = vld [vmem:[%s1233 + $0x84] sm:$0xf]
        %v1257 = vld [vmem:[%s1233 + $0x88] sm:$0xf]
        %v1258 = vld [vmem:[%s1233 + $0x90] sm:$0xf]
        %v1259 = vld [vmem:[%s1233 + $0x94] sm:$0xf]
        %v1260 = vld [vmem:[%s1233 + $0x9c] sm:$0xf]
        %v1261 = vld [vmem:[%s1233 + $0xa0] sm:$0xf]
        %v1262 = vld [vmem:[%s1233 + $0xa8] sm:$0xf]
        %v1263 = vld [vmem:[%s1233 + $0xac] sm:$0xf]
        %v1264 = vld [vmem:[%s1233 + $0xb4] sm:$0xf]
        %v1265 = vld [vmem:[%s1233 + $0xb8] sm:$0xf]
        %1298 = vrot.lane.b32.xlu0 %v1234, 12
        %v1299 = vpop.permute.xlu0 %1298
        %1300 = vrot.lane.b32.xlu0 %v1235, 12
        %v1301 = vpop.permute.xlu0 %1300
        %1302 = vrot.lane.b32.xlu0 %v1236, 12
        %v1303 = vpop.permute.xlu0 %1302
        %1304 = vrot.lane.b32.xlu0 %v1237, 12
        %v1305 = vpop.permute.xlu0 %1304
        %1306 = vrot.lane.b32.xlu0 %v1238, 12
        %v1307 = vpop.permute.xlu0 %1306
        %1308 = vrot.lane.b32.xlu0 %v1239, 12
        %v1309 = vpop.permute.xlu0 %1308
        %1310 = vrot.lane.b32.xlu0 %v1240, 12
        %v1311 = vpop.permute.xlu0 %1310
        %1312 = vrot.lane.b32.xlu0 %v1241, 12
        %v1313 = vpop.permute.xlu0 %1312
        %1314 = vrot.lane.b32.xlu0 %v1242, 12
        %v1315 = vpop.permute.xlu0 %1314
        %1316 = vrot.lane.b32.xlu0 %v1243, 12
        %v1317 = vpop.permute.xlu0 %1316
        %1318 = vrot.lane.b32.xlu0 %v1244, 12
        %v1319 = vpop.permute.xlu0 %1318
        %1320 = vrot.lane.b32.xlu0 %v1245, 12
        %v1321 = vpop.permute.xlu0 %1320
        %1322 = vrot.lane.b32.xlu0 %v1246, 12
        %v1323 = vpop.permute.xlu0 %1322
        %1324 = vrot.lane.b32.xlu0 %v1247, 12
        %v1325 = vpop.permute.xlu0 %1324
        %1326 = vrot.lane.b32.xlu0 %v1248, 12
        %v1327 = vpop.permute.xlu0 %1326
        %1328 = vrot.lane.b32.xlu0 %v1249, 12
        %v1329 = vpop.permute.xlu0 %1328
        %1330 = vrot.lane.b32.xlu0 %v1250, 12
        %v1331 = vpop.permute.xlu0 %1330
        %1332 = vrot.lane.b32.xlu0 %v1251, 12
        %v1333 = vpop.permute.xlu0 %1332
        %1334 = vrot.lane.b32.xlu0 %v1252, 12
        %v1335 = vpop.permute.xlu0 %1334
        %1336 = vrot.lane.b32.xlu0 %v1253, 12
        %v1337 = vpop.permute.xlu0 %1336
        %1338 = vrot.lane.b32.xlu0 %v1254, 12
        %v1339 = vpop.permute.xlu0 %1338
        %1340 = vrot.lane.b32.xlu0 %v1255, 12
        %v1341 = vpop.permute.xlu0 %1340
        %1342 = vrot.lane.b32.xlu0 %v1256, 12
        %v1343 = vpop.permute.xlu0 %1342
        %1344 = vrot.lane.b32.xlu0 %v1257, 12
        %v1345 = vpop.permute.xlu0 %1344
        %1346 = vrot.lane.b32.xlu0 %v1258, 12
        %v1347 = vpop.permute.xlu0 %1346
        %1348 = vrot.lane.b32.xlu0 %v1259, 12
        %v1349 = vpop.permute.xlu0 %1348
        %1350 = vrot.lane.b32.xlu0 %v1260, 12
        %v1351 = vpop.permute.xlu0 %1350
        %1352 = vrot.lane.b32.xlu0 %v1261, 12
        %v1353 = vpop.permute.xlu0 %1352
        %1354 = vrot.lane.b32.xlu0 %v1262, 12
        %v1355 = vpop.permute.xlu0 %1354
        %1356 = vrot.lane.b32.xlu0 %v1263, 12
        %v1357 = vpop.permute.xlu0 %1356
        %1358 = vrot.lane.b32.xlu0 %v1264, 12
        %v1359 = vpop.permute.xlu0 %1358
        %1360 = vrot.lane.b32.xlu0 %v1265, 12
        %v1361 = vpop.permute.xlu0 %1360
        %vm1394 = vcmask 126048
        %1395 = vst.msk [vmem:[#allocation2] sm:$0xf] %vm1394, %v1299
        %1396 = vst.msk [vmem:[#allocation2 + $0x4] sm:$0xf] %vm1394, %v1301
        %1397 = vst.msk [vmem:[#allocation2 + $0x8] sm:$0xf] %vm1394, %v1303
        %1398 = vst.msk [vmem:[#allocation2 + $0xc] sm:$0xf] %vm1394, %v1305
        %1399 = vst.msk [vmem:[#allocation2 + $0x10] sm:$0xf] %vm1394, %v1307
        %1400 = vst.msk [vmem:[#allocation2 + $0x14] sm:$0xf] %vm1394, %v1309
        %1401 = vst.msk [vmem:[#allocation2 + $0x18] sm:$0xf] %vm1394, %v1311
        %1402 = vst.msk [vmem:[#allocation2 + $0x1c] sm:$0xf] %vm1394, %v1313
        %1403 = vst.msk [vmem:[#allocation2 + $0x20] sm:$0xf] %vm1394, %v1315
        %1404 = vst.msk [vmem:[#allocation2 + $0x24] sm:$0xf] %vm1394, %v1317
        %1405 = vst.msk [vmem:[#allocation2 + $0x28] sm:$0xf] %vm1394, %v1319
        %1406 = vst.msk [vmem:[#allocation2 + $0x2c] sm:$0xf] %vm1394, %v1321
        %1407 = vst.msk [vmem:[#allocation2 + $0x30] sm:$0xf] %vm1394, %v1323
        %1408 = vst.msk [vmem:[#allocation2 + $0x34] sm:$0xf] %vm1394, %v1325
        %1409 = vst.msk [vmem:[#allocation2 + $0x38] sm:$0xf] %vm1394, %v1327
        %1410 = vst.msk [vmem:[#allocation2 + $0x3c] sm:$0xf] %vm1394, %v1329
        %1411 = vst.msk [vmem:[#allocation2 + $0x40] sm:$0xf] %vm1394, %v1331
        %1412 = vst.msk [vmem:[#allocation2 + $0x44] sm:$0xf] %vm1394, %v1333
        %1413 = vst.msk [vmem:[#allocation2 + $0x48] sm:$0xf] %vm1394, %v1335
        %1414 = vst.msk [vmem:[#allocation2 + $0x4c] sm:$0xf] %vm1394, %v1337
        %1415 = vst.msk [vmem:[#allocation2 + $0x50] sm:$0xf] %vm1394, %v1339
        %1416 = vst.msk [vmem:[#allocation2 + $0x54] sm:$0xf] %vm1394, %v1341
        %1417 = vst.msk [vmem:[#allocation2 + $0x58] sm:$0xf] %vm1394, %v1343
        %1418 = vst.msk [vmem:[#allocation2 + $0x5c] sm:$0xf] %vm1394, %v1345
        %1419 = vst.msk [vmem:[#allocation2 + $0x60] sm:$0xf] %vm1394, %v1347
        %1420 = vst.msk [vmem:[#allocation2 + $0x64] sm:$0xf] %vm1394, %v1349
        %1421 = vst.msk [vmem:[#allocation2 + $0x68] sm:$0xf] %vm1394, %v1351
        %1422 = vst.msk [vmem:[#allocation2 + $0x6c] sm:$0xf] %vm1394, %v1353
        %1423 = vst.msk [vmem:[#allocation2 + $0x70] sm:$0xf] %vm1394, %v1355
        %1424 = vst.msk [vmem:[#allocation2 + $0x74] sm:$0xf] %vm1394, %v1357
        %1425 = vst.msk [vmem:[#allocation2 + $0x78] sm:$0xf] %vm1394, %v1359
        %1426 = vst.msk [vmem:[#allocation2 + $0x7c] sm:$0xf] %vm1394, %v1361
        %v1427 = vld [vmem:[%s1233] sm:$0xf]
        %v1428 = vld [vmem:[%s1233 + $0x4] sm:$0xf]
        %v1429 = vld [vmem:[%s1233 + $0x8] sm:$0x1]
        %v1430 = vld [vmem:[%s1233 + $0xc] sm:$0xf]
        %v1431 = vld [vmem:[%s1233 + $0x10] sm:$0xf]
        %v1432 = vld [vmem:[%s1233 + $0x14] sm:$0x1]
        %v1433 = vld [vmem:[%s1233 + $0x18] sm:$0xf]
        %v1434 = vld [vmem:[%s1233 + $0x1c] sm:$0xf]
        %v1435 = vld [vmem:[%s1233 + $0x20] sm:$0x1]
        %v1436 = vld [vmem:[%s1233 + $0x24] sm:$0xf]
        %v1437 = vld [vmem:[%s1233 + $0x28] sm:$0xf]
        %v1438 = vld [vmem:[%s1233 + $0x2c] sm:$0x1]
        %v1439 = vld [vmem:[%s1233 + $0x30] sm:$0xf]
        %v1440 = vld [vmem:[%s1233 + $0x34] sm:$0xf]
        %v1441 = vld [vmem:[%s1233 + $0x38] sm:$0x1]
        %v1442 = vld [vmem:[%s1233 + $0x3c] sm:$0xf]
        %v1443 = vld [vmem:[%s1233 + $0x40] sm:$0xf]
        %v1444 = vld [vmem:[%s1233 + $0x44] sm:$0x1]
        %v1445 = vld [vmem:[%s1233 + $0x48] sm:$0xf]
        %v1446 = vld [vmem:[%s1233 + $0x4c] sm:$0xf]
        %v1447 = vld [vmem:[%s1233 + $0x50] sm:$0x1]
        %v1448 = vld [vmem:[%s1233 + $0x54] sm:$0xf]
        %v1449 = vld [vmem:[%s1233 + $0x58] sm:$0xf]
        %v1450 = vld [vmem:[%s1233 + $0x5c] sm:$0x1]
        %v1451 = vld [vmem:[%s1233 + $0x60] sm:$0xf]
        %v1452 = vld [vmem:[%s1233 + $0x64] sm:$0xf]
        %v1453 = vld [vmem:[%s1233 + $0x68] sm:$0x1]
        %v1454 = vld [vmem:[%s1233 + $0x6c] sm:$0xf]
        %v1455 = vld [vmem:[%s1233 + $0x70] sm:$0xf]
        %v1456 = vld [vmem:[%s1233 + $0x74] sm:$0x1]
        %v1457 = vld [vmem:[%s1233 + $0x78] sm:$0xf]
        %v1458 = vld [vmem:[%s1233 + $0x7c] sm:$0xf]
        %v1459 = vld [vmem:[%s1233 + $0x80] sm:$0x1]
        %v1460 = vld [vmem:[%s1233 + $0x84] sm:$0xf]
        %v1461 = vld [vmem:[%s1233 + $0x88] sm:$0xf]
        %v1462 = vld [vmem:[%s1233 + $0x8c] sm:$0x1]
        %v1463 = vld [vmem:[%s1233 + $0x90] sm:$0xf]
        %v1464 = vld [vmem:[%s1233 + $0x94] sm:$0xf]
        %v1465 = vld [vmem:[%s1233 + $0x98] sm:$0x1]
        %v1466 = vld [vmem:[%s1233 + $0x9c] sm:$0xf]
        %v1467 = vld [vmem:[%s1233 + $0xa0] sm:$0xf]
        %v1468 = vld [vmem:[%s1233 + $0xa4] sm:$0x1]
        %v1469 = vld [vmem:[%s1233 + $0xa8] sm:$0xf]
        %v1470 = vld [vmem:[%s1233 + $0xac] sm:$0xf]
        %v1471 = vld [vmem:[%s1233 + $0xb0] sm:$0x1]
        %v1472 = vld [vmem:[%s1233 + $0xb4] sm:$0xf]
        %v1473 = vld [vmem:[%s1233 + $0xb8] sm:$0xf]
        %v1474 = vld [vmem:[%s1233 + $0xbc] sm:$0x1]
        %v1476 = vshrl.u32 %v1427, 16
        %v1478 = vrot.slane %v1476, 4
        %v1479 = vshll.u32 %v1427, 16
        %v1481 = vrot.slane %v1479, 5
        %v1482 = vor.u32 %v1478, %v1481
        %v1483 = vrot.slane %v1482, 4
        %v1485 = vshll.u32 %v1428, 16
        %v1487 = vrot.slane %v1485, 5
        %v1488 = vsel %vm379, %v1483, %v1487
        %v1489 = vshrl.u32 %v1428, 16
        %v1491 = vrot.slane %v1489, 4
        %v1492 = vor.u32 %v1491, %v1487
        %v1493 = vrot.slane %v1492, 4
        %v1495 = vshll.u32 %v1429, 16
        %v1497 = vrot.slane %v1495, 5
        %v1498 = vsel %vm379, %v1493, %v1497
        %v1500 = vshrl.u32 %v1430, 16
        %v1502 = vrot.slane %v1500, 4
        %v1503 = vshll.u32 %v1430, 16
        %v1505 = vrot.slane %v1503, 5
        %v1506 = vor.u32 %v1502, %v1505
        %v1507 = vrot.slane %v1506, 4
        %v1509 = vshll.u32 %v1431, 16
        %v1511 = vrot.slane %v1509, 5
        %v1512 = vsel %vm379, %v1507, %v1511
        %v1513 = vshrl.u32 %v1431, 16
        %v1515 = vrot.slane %v1513, 4
        %v1516 = vor.u32 %v1515, %v1511
        %v1517 = vrot.slane %v1516, 4
        %v1519 = vshll.u32 %v1432, 16
        %v1521 = vrot.slane %v1519, 5
        %v1522 = vsel %vm379, %v1517, %v1521
        %v1524 = vshrl.u32 %v1433, 16
        %v1526 = vrot.slane %v1524, 4
        %v1527 = vshll.u32 %v1433, 16
        %v1529 = vrot.slane %v1527, 5
        %v1530 = vor.u32 %v1526, %v1529
        %v1531 = vrot.slane %v1530, 4
        %v1533 = vshll.u32 %v1434, 16
        %v1535 = vrot.slane %v1533, 5
        %v1536 = vsel %vm379, %v1531, %v1535
        %v1537 = vshrl.u32 %v1434, 16
        %v1539 = vrot.slane %v1537, 4
        %v1540 = vor.u32 %v1539, %v1535
        %v1541 = vrot.slane %v1540, 4
        %v1543 = vshll.u32 %v1435, 16
        %v1545 = vrot.slane %v1543, 5
        %v1546 = vsel %vm379, %v1541, %v1545
        %v1548 = vshrl.u32 %v1436, 16
        %v1550 = vrot.slane %v1548, 4
        %v1551 = vshll.u32 %v1436, 16
        %v1553 = vrot.slane %v1551, 5
        %v1554 = vor.u32 %v1550, %v1553
        %v1555 = vrot.slane %v1554, 4
        %v1557 = vshll.u32 %v1437, 16
        %v1559 = vrot.slane %v1557, 5
        %v1560 = vsel %vm379, %v1555, %v1559
        %v1561 = vshrl.u32 %v1437, 16
        %v1563 = vrot.slane %v1561, 4
        %v1564 = vor.u32 %v1563, %v1559
        %v1565 = vrot.slane %v1564, 4
        %v1567 = vshll.u32 %v1438, 16
        %v1569 = vrot.slane %v1567, 5
        %v1570 = vsel %vm379, %v1565, %v1569
        %v1572 = vshrl.u32 %v1439, 16
        %v1574 = vrot.slane %v1572, 4
        %v1575 = vshll.u32 %v1439, 16
        %v1577 = vrot.slane %v1575, 5
        %v1578 = vor.u32 %v1574, %v1577
        %v1579 = vrot.slane %v1578, 4
        %v1581 = vshll.u32 %v1440, 16
        %v1583 = vrot.slane %v1581, 5
        %v1584 = vsel %vm379, %v1579, %v1583
        %v1585 = vshrl.u32 %v1440, 16
        %v1587 = vrot.slane %v1585, 4
        %v1588 = vor.u32 %v1587, %v1583
        %v1589 = vrot.slane %v1588, 4
        %v1591 = vshll.u32 %v1441, 16
        %v1593 = vrot.slane %v1591, 5
        %v1594 = vsel %vm379, %v1589, %v1593
        %v1596 = vshrl.u32 %v1442, 16
        %v1598 = vrot.slane %v1596, 4
        %v1599 = vshll.u32 %v1442, 16
        %v1601 = vrot.slane %v1599, 5
        %v1602 = vor.u32 %v1598, %v1601
        %v1603 = vrot.slane %v1602, 4
        %v1605 = vshll.u32 %v1443, 16
        %v1607 = vrot.slane %v1605, 5
        %v1608 = vsel %vm379, %v1603, %v1607
        %v1609 = vshrl.u32 %v1443, 16
        %v1611 = vrot.slane %v1609, 4
        %v1612 = vor.u32 %v1611, %v1607
        %v1613 = vrot.slane %v1612, 4
        %v1615 = vshll.u32 %v1444, 16
        %v1617 = vrot.slane %v1615, 5
        %v1618 = vsel %vm379, %v1613, %v1617
        %v1620 = vshrl.u32 %v1445, 16
        %v1622 = vrot.slane %v1620, 4
        %v1623 = vshll.u32 %v1445, 16
        %v1625 = vrot.slane %v1623, 5
        %v1626 = vor.u32 %v1622, %v1625
        %v1627 = vrot.slane %v1626, 4
        %v1629 = vshll.u32 %v1446, 16
        %v1631 = vrot.slane %v1629, 5
        %v1632 = vsel %vm379, %v1627, %v1631
        %v1633 = vshrl.u32 %v1446, 16
        %v1635 = vrot.slane %v1633, 4
        %v1636 = vor.u32 %v1635, %v1631
        %v1637 = vrot.slane %v1636, 4
        %v1639 = vshll.u32 %v1447, 16
        %v1641 = vrot.slane %v1639, 5
        %v1642 = vsel %vm379, %v1637, %v1641
        %v1644 = vshrl.u32 %v1448, 16
        %v1646 = vrot.slane %v1644, 4
        %v1647 = vshll.u32 %v1448, 16
        %v1649 = vrot.slane %v1647, 5
        %v1650 = vor.u32 %v1646, %v1649
        %v1651 = vrot.slane %v1650, 4
        %v1653 = vshll.u32 %v1449, 16
        %v1655 = vrot.slane %v1653, 5
        %v1656 = vsel %vm379, %v1651, %v1655
        %v1657 = vshrl.u32 %v1449, 16
        %v1659 = vrot.slane %v1657, 4
        %v1660 = vor.u32 %v1659, %v1655
        %v1661 = vrot.slane %v1660, 4
        %v1663 = vshll.u32 %v1450, 16
        %v1665 = vrot.slane %v1663, 5
        %v1666 = vsel %vm379, %v1661, %v1665
        %v1668 = vshrl.u32 %v1451, 16
        %v1670 = vrot.slane %v1668, 4
        %v1671 = vshll.u32 %v1451, 16
        %v1673 = vrot.slane %v1671, 5
        %v1674 = vor.u32 %v1670, %v1673
        %v1675 = vrot.slane %v1674, 4
        %v1677 = vshll.u32 %v1452, 16
        %v1679 = vrot.slane %v1677, 5
        %v1680 = vsel %vm379, %v1675, %v1679
        %v1681 = vshrl.u32 %v1452, 16
        %v1683 = vrot.slane %v1681, 4
        %v1684 = vor.u32 %v1683, %v1679
        %v1685 = vrot.slane %v1684, 4
        %v1687 = vshll.u32 %v1453, 16
        %v1689 = vrot.slane %v1687, 5
        %v1690 = vsel %vm379, %v1685, %v1689
        %v1692 = vshrl.u32 %v1454, 16
        %v1694 = vrot.slane %v1692, 4
        %v1695 = vshll.u32 %v1454, 16
        %v1697 = vrot.slane %v1695, 5
        %v1698 = vor.u32 %v1694, %v1697
        %v1699 = vrot.slane %v1698, 4
        %v1701 = vshll.u32 %v1455, 16
        %v1703 = vrot.slane %v1701, 5
        %v1704 = vsel %vm379, %v1699, %v1703
        %v1705 = vshrl.u32 %v1455, 16
        %v1707 = vrot.slane %v1705, 4
        %v1708 = vor.u32 %v1707, %v1703
        %v1709 = vrot.slane %v1708, 4
        %v1711 = vshll.u32 %v1456, 16
        %v1713 = vrot.slane %v1711, 5
        %v1714 = vsel %vm379, %v1709, %v1713
        %v1716 = vshrl.u32 %v1457, 16
        %v1718 = vrot.slane %v1716, 4
        %v1719 = vshll.u32 %v1457, 16
        %v1721 = vrot.slane %v1719, 5
        %v1722 = vor.u32 %v1718, %v1721
        %v1723 = vrot.slane %v1722, 4
        %v1725 = vshll.u32 %v1458, 16
        %v1727 = vrot.slane %v1725, 5
        %v1728 = vsel %vm379, %v1723, %v1727
        %v1729 = vshrl.u32 %v1458, 16
        %v1731 = vrot.slane %v1729, 4
        %v1732 = vor.u32 %v1731, %v1727
        %v1733 = vrot.slane %v1732, 4
        %v1735 = vshll.u32 %v1459, 16
        %v1737 = vrot.slane %v1735, 5
        %v1738 = vsel %vm379, %v1733, %v1737
        %v1740 = vshrl.u32 %v1460, 16
        %v1742 = vrot.slane %v1740, 4
        %v1743 = vshll.u32 %v1460, 16
        %v1745 = vrot.slane %v1743, 5
        %v1746 = vor.u32 %v1742, %v1745
        %v1747 = vrot.slane %v1746, 4
        %v1749 = vshll.u32 %v1461, 16
        %v1751 = vrot.slane %v1749, 5
        %v1752 = vsel %vm379, %v1747, %v1751
        %v1753 = vshrl.u32 %v1461, 16
        %v1755 = vrot.slane %v1753, 4
        %v1756 = vor.u32 %v1755, %v1751
        %v1757 = vrot.slane %v1756, 4
        %v1759 = vshll.u32 %v1462, 16
        %v1761 = vrot.slane %v1759, 5
        %v1762 = vsel %vm379, %v1757, %v1761
        %v1764 = vshrl.u32 %v1463, 16
        %v1766 = vrot.slane %v1764, 4
        %v1767 = vshll.u32 %v1463, 16
        %v1769 = vrot.slane %v1767, 5
        %v1770 = vor.u32 %v1766, %v1769
        %v1771 = vrot.slane %v1770, 4
        %v1773 = vshll.u32 %v1464, 16
        %v1775 = vrot.slane %v1773, 5
        %v1776 = vsel %vm379, %v1771, %v1775
        %v1777 = vshrl.u32 %v1464, 16
        %v1779 = vrot.slane %v1777, 4
        %v1780 = vor.u32 %v1779, %v1775
        %v1781 = vrot.slane %v1780, 4
        %v1783 = vshll.u32 %v1465, 16
        %v1785 = vrot.slane %v1783, 5
        %v1786 = vsel %vm379, %v1781, %v1785
        %v1788 = vshrl.u32 %v1466, 16
        %v1790 = vrot.slane %v1788, 4
        %v1791 = vshll.u32 %v1466, 16
        %v1793 = vrot.slane %v1791, 5
        %v1794 = vor.u32 %v1790, %v1793
        %v1795 = vrot.slane %v1794, 4
        %v1797 = vshll.u32 %v1467, 16
        %v1799 = vrot.slane %v1797, 5
        %v1800 = vsel %vm379, %v1795, %v1799
        %v1801 = vshrl.u32 %v1467, 16
        %v1803 = vrot.slane %v1801, 4
        %v1804 = vor.u32 %v1803, %v1799
        %v1805 = vrot.slane %v1804, 4
        %v1807 = vshll.u32 %v1468, 16
        %v1809 = vrot.slane %v1807, 5
        %v1810 = vsel %vm379, %v1805, %v1809
        %v1812 = vshrl.u32 %v1469, 16
        %v1814 = vrot.slane %v1812, 4
        %v1815 = vshll.u32 %v1469, 16
        %v1817 = vrot.slane %v1815, 5
        %v1818 = vor.u32 %v1814, %v1817
        %v1819 = vrot.slane %v1818, 4
        %v1821 = vshll.u32 %v1470, 16
        %v1823 = vrot.slane %v1821, 5
        %v1824 = vsel %vm379, %v1819, %v1823
        %v1825 = vshrl.u32 %v1470, 16
        %v1827 = vrot.slane %v1825, 4
        %v1828 = vor.u32 %v1827, %v1823
        %v1829 = vrot.slane %v1828, 4
        %v1831 = vshll.u32 %v1471, 16
        %v1833 = vrot.slane %v1831, 5
        %v1834 = vsel %vm379, %v1829, %v1833
        %v1836 = vshrl.u32 %v1472, 16
        %v1838 = vrot.slane %v1836, 4
        %v1839 = vshll.u32 %v1472, 16
        %v1841 = vrot.slane %v1839, 5
        %v1842 = vor.u32 %v1838, %v1841
        %v1843 = vrot.slane %v1842, 4
        %v1845 = vshll.u32 %v1473, 16
        %v1847 = vrot.slane %v1845, 5
        %v1848 = vsel %vm379, %v1843, %v1847
        %v1849 = vshrl.u32 %v1473, 16
        %v1851 = vrot.slane %v1849, 4
        %v1852 = vor.u32 %v1851, %v1847
        %v1853 = vrot.slane %v1852, 4
        %v1855 = vshll.u32 %v1474, 16
        %v1857 = vrot.slane %v1855, 5
        %v1858 = vsel %vm379, %v1853, %v1857
        %1859 = vrot.lane.b32.xlu0 %v1488, 16
        %v1860 = vpop.permute.xlu0 %1859
        %1861 = vrot.lane.b32.xlu0 %v1498, 16
        %v1862 = vpop.permute.xlu0 %1861
        %1863 = vrot.lane.b32.xlu0 %v1512, 16
        %v1864 = vpop.permute.xlu0 %1863
        %1865 = vrot.lane.b32.xlu0 %v1522, 16
        %v1866 = vpop.permute.xlu0 %1865
        %1867 = vrot.lane.b32.xlu0 %v1536, 16
        %v1868 = vpop.permute.xlu0 %1867
        %1869 = vrot.lane.b32.xlu0 %v1546, 16
        %v1870 = vpop.permute.xlu0 %1869
        %1871 = vrot.lane.b32.xlu0 %v1560, 16
        %v1872 = vpop.permute.xlu0 %1871
        %1873 = vrot.lane.b32.xlu0 %v1570, 16
        %v1874 = vpop.permute.xlu0 %1873
        %1875 = vrot.lane.b32.xlu0 %v1584, 16
        %v1876 = vpop.permute.xlu0 %1875
        %1877 = vrot.lane.b32.xlu0 %v1594, 16
        %v1878 = vpop.permute.xlu0 %1877
        %1879 = vrot.lane.b32.xlu0 %v1608, 16
        %v1880 = vpop.permute.xlu0 %1879
        %1881 = vrot.lane.b32.xlu0 %v1618, 16
        %v1882 = vpop.permute.xlu0 %1881
        %1883 = vrot.lane.b32.xlu0 %v1632, 16
        %v1884 = vpop.permute.xlu0 %1883
        %1885 = vrot.lane.b32.xlu0 %v1642, 16
        %v1886 = vpop.permute.xlu0 %1885
        %1887 = vrot.lane.b32.xlu0 %v1656, 16
        %v1888 = vpop.permute.xlu0 %1887
        %1889 = vrot.lane.b32.xlu0 %v1666, 16
        %v1890 = vpop.permute.xlu0 %1889
        %1891 = vrot.lane.b32.xlu0 %v1680, 16
        %v1892 = vpop.permute.xlu0 %1891
        %1893 = vrot.lane.b32.xlu0 %v1690, 16
        %v1894 = vpop.permute.xlu0 %1893
        %1895 = vrot.lane.b32.xlu0 %v1704, 16
        %v1896 = vpop.permute.xlu0 %1895
        %1897 = vrot.lane.b32.xlu0 %v1714, 16
        %v1898 = vpop.permute.xlu0 %1897
        %1899 = vrot.lane.b32.xlu0 %v1728, 16
        %v1900 = vpop.permute.xlu0 %1899
        %1901 = vrot.lane.b32.xlu0 %v1738, 16
        %v1902 = vpop.permute.xlu0 %1901
        %1903 = vrot.lane.b32.xlu0 %v1752, 16
        %v1904 = vpop.permute.xlu0 %1903
        %1905 = vrot.lane.b32.xlu0 %v1762, 16
        %v1906 = vpop.permute.xlu0 %1905
        %1907 = vrot.lane.b32.xlu0 %v1776, 16
        %v1908 = vpop.permute.xlu0 %1907
        %1909 = vrot.lane.b32.xlu0 %v1786, 16
        %v1910 = vpop.permute.xlu0 %1909
        %1911 = vrot.lane.b32.xlu0 %v1800, 16
        %v1912 = vpop.permute.xlu0 %1911
        %1913 = vrot.lane.b32.xlu0 %v1810, 16
        %v1914 = vpop.permute.xlu0 %1913
        %1915 = vrot.lane.b32.xlu0 %v1824, 16
        %v1916 = vpop.permute.xlu0 %1915
        %1917 = vrot.lane.b32.xlu0 %v1834, 16
        %v1918 = vpop.permute.xlu0 %1917
        %1919 = vrot.lane.b32.xlu0 %v1848, 16
        %v1920 = vpop.permute.xlu0 %1919
        %1921 = vrot.lane.b32.xlu0 %v1858, 16
        %v1922 = vpop.permute.xlu0 %1921
        %vm1955 = vcmask 158848
        %1956 = vst.msk [vmem:[#allocation2] sm:$0xf] %vm1955, %v1860
        %1957 = vst.msk [vmem:[#allocation2 + $0x4] sm:$0xf] %vm1955, %v1862
        %1958 = vst.msk [vmem:[#allocation2 + $0x8] sm:$0xf] %vm1955, %v1864
        %1959 = vst.msk [vmem:[#allocation2 + $0xc] sm:$0xf] %vm1955, %v1866
        %1960 = vst.msk [vmem:[#allocation2 + $0x10] sm:$0xf] %vm1955, %v1868
        %1961 = vst.msk [vmem:[#allocation2 + $0x14] sm:$0xf] %vm1955, %v1870
        %1962 = vst.msk [vmem:[#allocation2 + $0x18] sm:$0xf] %vm1955, %v1872
        %1963 = vst.msk [vmem:[#allocation2 + $0x1c] sm:$0xf] %vm1955, %v1874
        %1964 = vst.msk [vmem:[#allocation2 + $0x20] sm:$0xf] %vm1955, %v1876
        %1965 = vst.msk [vmem:[#allocation2 + $0x24] sm:$0xf] %vm1955, %v1878
        %1966 = vst.msk [vmem:[#allocation2 + $0x28] sm:$0xf] %vm1955, %v1880
        %1967 = vst.msk [vmem:[#allocation2 + $0x2c] sm:$0xf] %vm1955, %v1882
        %1968 = vst.msk [vmem:[#allocation2 + $0x30] sm:$0xf] %vm1955, %v1884
        %1969 = vst.msk [vmem:[#allocation2 + $0x34] sm:$0xf] %vm1955, %v1886
        %1970 = vst.msk [vmem:[#allocation2 + $0x38] sm:$0xf] %vm1955, %v1888
        %1971 = vst.msk [vmem:[#allocation2 + $0x3c] sm:$0xf] %vm1955, %v1890
        %1972 = vst.msk [vmem:[#allocation2 + $0x40] sm:$0xf] %vm1955, %v1892
        %1973 = vst.msk [vmem:[#allocation2 + $0x44] sm:$0xf] %vm1955, %v1894
        %1974 = vst.msk [vmem:[#allocation2 + $0x48] sm:$0xf] %vm1955, %v1896
        %1975 = vst.msk [vmem:[#allocation2 + $0x4c] sm:$0xf] %vm1955, %v1898
        %1976 = vst.msk [vmem:[#allocation2 + $0x50] sm:$0xf] %vm1955, %v1900
        %1977 = vst.msk [vmem:[#allocation2 + $0x54] sm:$0xf] %vm1955, %v1902
        %1978 = vst.msk [vmem:[#allocation2 + $0x58] sm:$0xf] %vm1955, %v1904
        %1979 = vst.msk [vmem:[#allocation2 + $0x5c] sm:$0xf] %vm1955, %v1906
        %1980 = vst.msk [vmem:[#allocation2 + $0x60] sm:$0xf] %vm1955, %v1908
        %1981 = vst.msk [vmem:[#allocation2 + $0x64] sm:$0xf] %vm1955, %v1910
        %1982 = vst.msk [vmem:[#allocation2 + $0x68] sm:$0xf] %vm1955, %v1912
        %1983 = vst.msk [vmem:[#allocation2 + $0x6c] sm:$0xf] %vm1955, %v1914
        %1984 = vst.msk [vmem:[#allocation2 + $0x70] sm:$0xf] %vm1955, %v1916
        %1985 = vst.msk [vmem:[#allocation2 + $0x74] sm:$0xf] %vm1955, %v1918
        %1986 = vst.msk [vmem:[#allocation2 + $0x78] sm:$0xf] %vm1955, %v1920
        %1987 = vst.msk [vmem:[#allocation2 + $0x7c] sm:$0xf] %vm1955, %v1922
        %v1988 = vld [vmem:[%s1233] sm:$0xe]
        %v1989 = vld [vmem:[%s1233 + $0x4] sm:$0xf]
        %v1990 = vld [vmem:[%s1233 + $0x8] sm:$0x1]
        %v1991 = vld [vmem:[%s1233 + $0xc] sm:$0xe]
        %v1992 = vld [vmem:[%s1233 + $0x10] sm:$0xf]
        %v1993 = vld [vmem:[%s1233 + $0x14] sm:$0x1]
        %v1994 = vld [vmem:[%s1233 + $0x18] sm:$0xe]
        %v1995 = vld [vmem:[%s1233 + $0x1c] sm:$0xf]
        %v1996 = vld [vmem:[%s1233 + $0x20] sm:$0x1]
        %v1997 = vld [vmem:[%s1233 + $0x24] sm:$0xe]
        %v1998 = vld [vmem:[%s1233 + $0x28] sm:$0xf]
        %v1999 = vld [vmem:[%s1233 + $0x2c] sm:$0x1]
        %v2000 = vld [vmem:[%s1233 + $0x30] sm:$0xe]
        %v2001 = vld [vmem:[%s1233 + $0x34] sm:$0xf]
        %v2002 = vld [vmem:[%s1233 + $0x38] sm:$0x1]
        %v2003 = vld [vmem:[%s1233 + $0x3c] sm:$0xe]
        %v2004 = vld [vmem:[%s1233 + $0x40] sm:$0xf]
        %v2005 = vld [vmem:[%s1233 + $0x44] sm:$0x1]
        %v2006 = vld [vmem:[%s1233 + $0x48] sm:$0xe]
        %v2007 = vld [vmem:[%s1233 + $0x4c] sm:$0xf]
        %v2008 = vld [vmem:[%s1233 + $0x50] sm:$0x1]
        %v2009 = vld [vmem:[%s1233 + $0x54] sm:$0xe]
        %v2010 = vld [vmem:[%s1233 + $0x58] sm:$0xf]
        %v2011 = vld [vmem:[%s1233 + $0x5c] sm:$0x1]
        %v2012 = vld [vmem:[%s1233 + $0x60] sm:$0xe]
        %v2013 = vld [vmem:[%s1233 + $0x64] sm:$0xf]
        %v2014 = vld [vmem:[%s1233 + $0x68] sm:$0x1]
        %v2015 = vld [vmem:[%s1233 + $0x6c] sm:$0xe]
        %v2016 = vld [vmem:[%s1233 + $0x70] sm:$0xf]
        %v2017 = vld [vmem:[%s1233 + $0x74] sm:$0x1]
        %v2018 = vld [vmem:[%s1233 + $0x78] sm:$0xe]
        %v2019 = vld [vmem:[%s1233 + $0x7c] sm:$0xf]
        %v2020 = vld [vmem:[%s1233 + $0x80] sm:$0x1]
        %v2021 = vld [vmem:[%s1233 + $0x84] sm:$0xe]
        %v2022 = vld [vmem:[%s1233 + $0x88] sm:$0xf]
        %v2023 = vld [vmem:[%s1233 + $0x8c] sm:$0x1]
        %v2024 = vld [vmem:[%s1233 + $0x90] sm:$0xe]
        %v2025 = vld [vmem:[%s1233 + $0x94] sm:$0xf]
        %v2026 = vld [vmem:[%s1233 + $0x98] sm:$0x1]
        %v2027 = vld [vmem:[%s1233 + $0x9c] sm:$0xe]
        %v2028 = vld [vmem:[%s1233 + $0xa0] sm:$0xf]
        %v2029 = vld [vmem:[%s1233 + $0xa4] sm:$0x1]
        %v2030 = vld [vmem:[%s1233 + $0xa8] sm:$0xe]
        %v2031 = vld [vmem:[%s1233 + $0xac] sm:$0xf]
        %v2032 = vld [vmem:[%s1233 + $0xb0] sm:$0x1]
        %v2033 = vld [vmem:[%s1233 + $0xb4] sm:$0xe]
        %v2034 = vld [vmem:[%s1233 + $0xb8] sm:$0xf]
        %v2035 = vld [vmem:[%s1233 + $0xbc] sm:$0x1]
        %v2084 = vrot.slane %v1988, 5
        %v2085 = vrot.slane %v2084, 4
        %v2086 = vrot.slane %v1989, 5
        %v2087 = vsel %vm991, %v2085, %v2086
        %v2088 = vrot.slane %v2086, 4
        %v2089 = vrot.slane %v1990, 5
        %v2090 = vsel %vm991, %v2088, %v2089
        %v2091 = vrot.slane %v1991, 5
        %v2092 = vrot.slane %v2091, 4
        %v2093 = vrot.slane %v1992, 5
        %v2094 = vsel %vm991, %v2092, %v2093
        %v2095 = vrot.slane %v2093, 4
        %v2096 = vrot.slane %v1993, 5
        %v2097 = vsel %vm991, %v2095, %v2096
        %v2098 = vrot.slane %v1994, 5
        %v2099 = vrot.slane %v2098, 4
        %v2100 = vrot.slane %v1995, 5
        %v2101 = vsel %vm991, %v2099, %v2100
        %v2102 = vrot.slane %v2100, 4
        %v2103 = vrot.slane %v1996, 5
        %v2104 = vsel %vm991, %v2102, %v2103
        %v2105 = vrot.slane %v1997, 5
        %v2106 = vrot.slane %v2105, 4
        %v2107 = vrot.slane %v1998, 5
        %v2108 = vsel %vm991, %v2106, %v2107
        %v2109 = vrot.slane %v2107, 4
        %v2110 = vrot.slane %v1999, 5
        %v2111 = vsel %vm991, %v2109, %v2110
        %v2112 = vrot.slane %v2000, 5
        %v2113 = vrot.slane %v2112, 4
        %v2114 = vrot.slane %v2001, 5
        %v2115 = vsel %vm991, %v2113, %v2114
        %v2116 = vrot.slane %v2114, 4
        %v2117 = vrot.slane %v2002, 5
        %v2118 = vsel %vm991, %v2116, %v2117
        %v2119 = vrot.slane %v2003, 5
        %v2120 = vrot.slane %v2119, 4
        %v2121 = vrot.slane %v2004, 5
        %v2122 = vsel %vm991, %v2120, %v2121
        %v2123 = vrot.slane %v2121, 4
        %v2124 = vrot.slane %v2005, 5
        %v2125 = vsel %vm991, %v2123, %v2124
        %v2126 = vrot.slane %v2006, 5
        %v2127 = vrot.slane %v2126, 4
        %v2128 = vrot.slane %v2007, 5
        %v2129 = vsel %vm991, %v2127, %v2128
        %v2130 = vrot.slane %v2128, 4
        %v2131 = vrot.slane %v2008, 5
        %v2132 = vsel %vm991, %v2130, %v2131
        %v2133 = vrot.slane %v2009, 5
        %v2134 = vrot.slane %v2133, 4
        %v2135 = vrot.slane %v2010, 5
        %v2136 = vsel %vm991, %v2134, %v2135
        %v2137 = vrot.slane %v2135, 4
        %v2138 = vrot.slane %v2011, 5
        %v2139 = vsel %vm991, %v2137, %v2138
        %v2140 = vrot.slane %v2012, 5
        %v2141 = vrot.slane %v2140, 4
        %v2142 = vrot.slane %v2013, 5
        %v2143 = vsel %vm991, %v2141, %v2142
        %v2144 = vrot.slane %v2142, 4
        %v2145 = vrot.slane %v2014, 5
        %v2146 = vsel %vm991, %v2144, %v2145
        %v2147 = vrot.slane %v2015, 5
        %v2148 = vrot.slane %v2147, 4
        %v2149 = vrot.slane %v2016, 5
        %v2150 = vsel %vm991, %v2148, %v2149
        %v2151 = vrot.slane %v2149, 4
        %v2152 = vrot.slane %v2017, 5
        %v2153 = vsel %vm991, %v2151, %v2152
        %v2154 = vrot.slane %v2018, 5
        %v2155 = vrot.slane %v2154, 4
        %v2156 = vrot.slane %v2019, 5
        %v2157 = vsel %vm991, %v2155, %v2156
        %v2158 = vrot.slane %v2156, 4
        %v2159 = vrot.slane %v2020, 5
        %v2160 = vsel %vm991, %v2158, %v2159
        %v2161 = vrot.slane %v2021, 5
        %v2162 = vrot.slane %v2161, 4
        %v2163 = vrot.slane %v2022, 5
        %v2164 = vsel %vm991, %v2162, %v2163
        %v2165 = vrot.slane %v2163, 4
        %v2166 = vrot.slane %v2023, 5
        %v2167 = vsel %vm991, %v2165, %v2166
        %v2168 = vrot.slane %v2024, 5
        %v2169 = vrot.slane %v2168, 4
        %v2170 = vrot.slane %v2025, 5
        %v2171 = vsel %vm991, %v2169, %v2170
        %v2172 = vrot.slane %v2170, 4
        %v2173 = vrot.slane %v2026, 5
        %v2174 = vsel %vm991, %v2172, %v2173
        %v2175 = vrot.slane %v2027, 5
        %v2176 = vrot.slane %v2175, 4
        %v2177 = vrot.slane %v2028, 5
        %v2178 = vsel %vm991, %v2176, %v2177
        %v2179 = vrot.slane %v2177, 4
        %v2180 = vrot.slane %v2029, 5
        %v2181 = vsel %vm991, %v2179, %v2180
        %v2182 = vrot.slane %v2030, 5
        %v2183 = vrot.slane %v2182, 4
        %v2184 = vrot.slane %v2031, 5
        %v2185 = vsel %vm991, %v2183, %v2184
        %v2186 = vrot.slane %v2184, 4
        %v2187 = vrot.slane %v2032, 5
        %v2188 = vsel %vm991, %v2186, %v2187
        %v2189 = vrot.slane %v2033, 5
        %v2190 = vrot.slane %v2189, 4
        %v2191 = vrot.slane %v2034, 5
        %v2192 = vsel %vm991, %v2190, %v2191
        %v2193 = vrot.slane %v2191, 4
        %v2194 = vrot.slane %v2035, 5
        %v2195 = vsel %vm991, %v2193, %v2194
        %2196 = vrot.lane.b32.xlu0 %v2087, 20
        %v2197 = vpop.permute.xlu0 %2196
        %2198 = vrot.lane.b32.xlu0 %v2090, 20
        %v2199 = vpop.permute.xlu0 %2198
        %2200 = vrot.lane.b32.xlu0 %v2094, 20
        %v2201 = vpop.permute.xlu0 %2200
        %2202 = vrot.lane.b32.xlu0 %v2097, 20
        %v2203 = vpop.permute.xlu0 %2202
        %2204 = vrot.lane.b32.xlu0 %v2101, 20
        %v2205 = vpop.permute.xlu0 %2204
        %2206 = vrot.lane.b32.xlu0 %v2104, 20
        %v2207 = vpop.permute.xlu0 %2206
        %2208 = vrot.lane.b32.xlu0 %v2108, 20
        %v2209 = vpop.permute.xlu0 %2208
        %2210 = vrot.lane.b32.xlu0 %v2111, 20
        %v2211 = vpop.permute.xlu0 %2210
        %2212 = vrot.lane.b32.xlu0 %v2115, 20
        %v2213 = vpop.permute.xlu0 %2212
        %2214 = vrot.lane.b32.xlu0 %v2118, 20
        %v2215 = vpop.permute.xlu0 %2214
        %2216 = vrot.lane.b32.xlu0 %v2122, 20
        %v2217 = vpop.permute.xlu0 %2216
        %2218 = vrot.lane.b32.xlu0 %v2125, 20
        %v2219 = vpop.permute.xlu0 %2218
        %2220 = vrot.lane.b32.xlu0 %v2129, 20
        %v2221 = vpop.permute.xlu0 %2220
        %2222 = vrot.lane.b32.xlu0 %v2132, 20
        %v2223 = vpop.permute.xlu0 %2222
        %2224 = vrot.lane.b32.xlu0 %v2136, 20
        %v2225 = vpop.permute.xlu0 %2224
        %2226 = vrot.lane.b32.xlu0 %v2139, 20
        %v2227 = vpop.permute.xlu0 %2226
        %2228 = vrot.lane.b32.xlu0 %v2143, 20
        %v2229 = vpop.permute.xlu0 %2228
        %2230 = vrot.lane.b32.xlu0 %v2146, 20
        %v2231 = vpop.permute.xlu0 %2230
        %2232 = vrot.lane.b32.xlu0 %v2150, 20
        %v2233 = vpop.permute.xlu0 %2232
        %2234 = vrot.lane.b32.xlu0 %v2153, 20
        %v2235 = vpop.permute.xlu0 %2234
        %2236 = vrot.lane.b32.xlu0 %v2157, 20
        %v2237 = vpop.permute.xlu0 %2236
        %2238 = vrot.lane.b32.xlu0 %v2160, 20
        %v2239 = vpop.permute.xlu0 %2238
        %2240 = vrot.lane.b32.xlu0 %v2164, 20
        %v2241 = vpop.permute.xlu0 %2240
        %2242 = vrot.lane.b32.xlu0 %v2167, 20
        %v2243 = vpop.permute.xlu0 %2242
        %2244 = vrot.lane.b32.xlu0 %v2171, 20
        %v2245 = vpop.permute.xlu0 %2244
        %2246 = vrot.lane.b32.xlu0 %v2174, 20
        %v2247 = vpop.permute.xlu0 %2246
        %2248 = vrot.lane.b32.xlu0 %v2178, 20
        %v2249 = vpop.permute.xlu0 %2248
        %2250 = vrot.lane.b32.xlu0 %v2181, 20
        %v2251 = vpop.permute.xlu0 %2250
        %2252 = vrot.lane.b32.xlu0 %v2185, 20
        %v2253 = vpop.permute.xlu0 %2252
        %2254 = vrot.lane.b32.xlu0 %v2188, 20
        %v2255 = vpop.permute.xlu0 %2254
        %2256 = vrot.lane.b32.xlu0 %v2192, 20
        %v2257 = vpop.permute.xlu0 %2256
        %2258 = vrot.lane.b32.xlu0 %v2195, 20
        %v2259 = vpop.permute.xlu0 %2258
        %vm2292 = vcmask 191648
        %2293 = vst.msk [vmem:[#allocation2] sm:$0xf] %vm2292, %v2197
        %2294 = vst.msk [vmem:[#allocation2 + $0x4] sm:$0xf] %vm2292, %v2199
        %2295 = vst.msk [vmem:[#allocation2 + $0x8] sm:$0xf] %vm2292, %v2201
        %2296 = vst.msk [vmem:[#allocation2 + $0xc] sm:$0xf] %vm2292, %v2203
        %2297 = vst.msk [vmem:[#allocation2 + $0x10] sm:$0xf] %vm2292, %v2205
        %2298 = vst.msk [vmem:[#allocation2 + $0x14] sm:$0xf] %vm2292, %v2207
        %2299 = vst.msk [vmem:[#allocation2 + $0x18] sm:$0xf] %vm2292, %v2209
        %2300 = vst.msk [vmem:[#allocation2 + $0x1c] sm:$0xf] %vm2292, %v2211
        %2301 = vst.msk [vmem:[#allocation2 + $0x20] sm:$0xf] %vm2292, %v2213
        %2302 = vst.msk [vmem:[#allocation2 + $0x24] sm:$0xf] %vm2292, %v2215
        %2303 = vst.msk [vmem:[#allocation2 + $0x28] sm:$0xf] %vm2292, %v2217
        %2304 = vst.msk [vmem:[#allocation2 + $0x2c] sm:$0xf] %vm2292, %v2219
        %2305 = vst.msk [vmem:[#allocation2 + $0x30] sm:$0xf] %vm2292, %v2221
        %2306 = vst.msk [vmem:[#allocation2 + $0x34] sm:$0xf] %vm2292, %v2223
        %2307 = vst.msk [vmem:[#allocation2 + $0x38] sm:$0xf] %vm2292, %v2225
        %2308 = vst.msk [vmem:[#allocation2 + $0x3c] sm:$0xf] %vm2292, %v2227
        %2309 = vst.msk [vmem:[#allocation2 + $0x40] sm:$0xf] %vm2292, %v2229
        %2310 = vst.msk [vmem:[#allocation2 + $0x44] sm:$0xf] %vm2292, %v2231
        %2311 = vst.msk [vmem:[#allocation2 + $0x48] sm:$0xf] %vm2292, %v2233
        %2312 = vst.msk [vmem:[#allocation2 + $0x4c] sm:$0xf] %vm2292, %v2235
        %2313 = vst.msk [vmem:[#allocation2 + $0x50] sm:$0xf] %vm2292, %v2237
        %2314 = vst.msk [vmem:[#allocation2 + $0x54] sm:$0xf] %vm2292, %v2239
        %2315 = vst.msk [vmem:[#allocation2 + $0x58] sm:$0xf] %vm2292, %v2241
        %2316 = vst.msk [vmem:[#allocation2 + $0x5c] sm:$0xf] %vm2292, %v2243
        %2317 = vst.msk [vmem:[#allocation2 + $0x60] sm:$0xf] %vm2292, %v2245
        %2318 = vst.msk [vmem:[#allocation2 + $0x64] sm:$0xf] %vm2292, %v2247
        %2319 = vst.msk [vmem:[#allocation2 + $0x68] sm:$0xf] %vm2292, %v2249
        %2320 = vst.msk [vmem:[#allocation2 + $0x6c] sm:$0xf] %vm2292, %v2251
        %2321 = vst.msk [vmem:[#allocation2 + $0x70] sm:$0xf] %vm2292, %v2253
        %2322 = vst.msk [vmem:[#allocation2 + $0x74] sm:$0xf] %vm2292, %v2255
        %2323 = vst.msk [vmem:[#allocation2 + $0x78] sm:$0xf] %vm2292, %v2257
        %2324 = vst.msk [vmem:[#allocation2 + $0x7c] sm:$0xf] %vm2292, %v2259
        %s2325 = scalar_lea.vmem %s236, 24
        %v2326 = vld [vmem:[%s2325] sm:$0xf]
        %v2327 = vld [vmem:[%s2325 + $0x4] sm:$0xf]
        %v2328 = vld [vmem:[%s2325 + $0xc] sm:$0xf]
        %v2329 = vld [vmem:[%s2325 + $0x10] sm:$0xf]
        %v2330 = vld [vmem:[%s2325 + $0x18] sm:$0xf]
        %v2331 = vld [vmem:[%s2325 + $0x1c] sm:$0xf]
        %v2332 = vld [vmem:[%s2325 + $0x24] sm:$0xf]
        %v2333 = vld [vmem:[%s2325 + $0x28] sm:$0xf]
        %v2334 = vld [vmem:[%s2325 + $0x30] sm:$0xf]
        %v2335 = vld [vmem:[%s2325 + $0x34] sm:$0xf]
        %v2336 = vld [vmem:[%s2325 + $0x3c] sm:$0xf]
        %v2337 = vld [vmem:[%s2325 + $0x40] sm:$0xf]
        %v2338 = vld [vmem:[%s2325 + $0x48] sm:$0xf]
        %v2339 = vld [vmem:[%s2325 + $0x4c] sm:$0xf]
        %v2340 = vld [vmem:[%s2325 + $0x54] sm:$0xf]
        %v2341 = vld [vmem:[%s2325 + $0x58] sm:$0xf]
        %v2342 = vld [vmem:[%s2325 + $0x60] sm:$0xf]
        %v2343 = vld [vmem:[%s2325 + $0x64] sm:$0xf]
        %v2344 = vld [vmem:[%s2325 + $0x6c] sm:$0xf]
        %v2345 = vld [vmem:[%s2325 + $0x70] sm:$0xf]
        %v2346 = vld [vmem:[%s2325 + $0x78] sm:$0xf]
        %v2347 = vld [vmem:[%s2325 + $0x7c] sm:$0xf]
        %v2348 = vld [vmem:[%s2325 + $0x84] sm:$0xf]
        %v2349 = vld [vmem:[%s2325 + $0x88] sm:$0xf]
        %v2350 = vld [vmem:[%s2325 + $0x90] sm:$0xf]
        %v2351 = vld [vmem:[%s2325 + $0x94] sm:$0xf]
        %v2352 = vld [vmem:[%s2325 + $0x9c] sm:$0xf]
        %v2353 = vld [vmem:[%s2325 + $0xa0] sm:$0xf]
        %v2354 = vld [vmem:[%s2325 + $0xa8] sm:$0xf]
        %v2355 = vld [vmem:[%s2325 + $0xac] sm:$0xf]
        %v2356 = vld [vmem:[%s2325 + $0xb4] sm:$0xf]
        %v2357 = vld [vmem:[%s2325 + $0xb8] sm:$0xf]
        %2390 = vrot.lane.b32.xlu0 %v2326, 24
        %v2391 = vpop.permute.xlu0 %2390
        %2392 = vrot.lane.b32.xlu0 %v2327, 24
        %v2393 = vpop.permute.xlu0 %2392
        %2394 = vrot.lane.b32.xlu0 %v2328, 24
        %v2395 = vpop.permute.xlu0 %2394
        %2396 = vrot.lane.b32.xlu0 %v2329, 24
        %v2397 = vpop.permute.xlu0 %2396
        %2398 = vrot.lane.b32.xlu0 %v2330, 24
        %v2399 = vpop.permute.xlu0 %2398
        %2400 = vrot.lane.b32.xlu0 %v2331, 24
        %v2401 = vpop.permute.xlu0 %2400
        %2402 = vrot.lane.b32.xlu0 %v2332, 24
        %v2403 = vpop.permute.xlu0 %2402
        %2404 = vrot.lane.b32.xlu0 %v2333, 24
        %v2405 = vpop.permute.xlu0 %2404
        %2406 = vrot.lane.b32.xlu0 %v2334, 24
        %v2407 = vpop.permute.xlu0 %2406
        %2408 = vrot.lane.b32.xlu0 %v2335, 24
        %v2409 = vpop.permute.xlu0 %2408
        %2410 = vrot.lane.b32.xlu0 %v2336, 24
        %v2411 = vpop.permute.xlu0 %2410
        %2412 = vrot.lane.b32.xlu0 %v2337, 24
        %v2413 = vpop.permute.xlu0 %2412
        %2414 = vrot.lane.b32.xlu0 %v2338, 24
        %v2415 = vpop.permute.xlu0 %2414
        %2416 = vrot.lane.b32.xlu0 %v2339, 24
        %v2417 = vpop.permute.xlu0 %2416
        %2418 = vrot.lane.b32.xlu0 %v2340, 24
        %v2419 = vpop.permute.xlu0 %2418
        %2420 = vrot.lane.b32.xlu0 %v2341, 24
        %v2421 = vpop.permute.xlu0 %2420
        %2422 = vrot.lane.b32.xlu0 %v2342, 24
        %v2423 = vpop.permute.xlu0 %2422
        %2424 = vrot.lane.b32.xlu0 %v2343, 24
        %v2425 = vpop.permute.xlu0 %2424
        %2426 = vrot.lane.b32.xlu0 %v2344, 24
        %v2427 = vpop.permute.xlu0 %2426
        %2428 = vrot.lane.b32.xlu0 %v2345, 24
        %v2429 = vpop.permute.xlu0 %2428
        %2430 = vrot.lane.b32.xlu0 %v2346, 24
        %v2431 = vpop.permute.xlu0 %2430
        %2432 = vrot.lane.b32.xlu0 %v2347, 24
        %v2433 = vpop.permute.xlu0 %2432
        %2434 = vrot.lane.b32.xlu0 %v2348, 24
        %v2435 = vpop.permute.xlu0 %2434
        %2436 = vrot.lane.b32.xlu0 %v2349, 24
        %v2437 = vpop.permute.xlu0 %2436
        %2438 = vrot.lane.b32.xlu0 %v2350, 24
        %v2439 = vpop.permute.xlu0 %2438
        %2440 = vrot.lane.b32.xlu0 %v2351, 24
        %v2441 = vpop.permute.xlu0 %2440
        %2442 = vrot.lane.b32.xlu0 %v2352, 24
        %v2443 = vpop.permute.xlu0 %2442
        %2444 = vrot.lane.b32.xlu0 %v2353, 24
        %v2445 = vpop.permute.xlu0 %2444
        %2446 = vrot.lane.b32.xlu0 %v2354, 24
        %v2447 = vpop.permute.xlu0 %2446
        %2448 = vrot.lane.b32.xlu0 %v2355, 24
        %v2449 = vpop.permute.xlu0 %2448
        %2450 = vrot.lane.b32.xlu0 %v2356, 24
        %v2451 = vpop.permute.xlu0 %2450
        %2452 = vrot.lane.b32.xlu0 %v2357, 24
        %v2453 = vpop.permute.xlu0 %2452
        %vm2486 = vcmask 224448
        %2487 = vst.msk [vmem:[#allocation2] sm:$0xf] %vm2486, %v2391
        %2488 = vst.msk [vmem:[#allocation2 + $0x4] sm:$0xf] %vm2486, %v2393
        %2489 = vst.msk [vmem:[#allocation2 + $0x8] sm:$0xf] %vm2486, %v2395
        %2490 = vst.msk [vmem:[#allocation2 + $0xc] sm:$0xf] %vm2486, %v2397
        %2491 = vst.msk [vmem:[#allocation2 + $0x10] sm:$0xf] %vm2486, %v2399
        %2492 = vst.msk [vmem:[#allocation2 + $0x14] sm:$0xf] %vm2486, %v2401
        %2493 = vst.msk [vmem:[#allocation2 + $0x18] sm:$0xf] %vm2486, %v2403
        %2494 = vst.msk [vmem:[#allocation2 + $0x1c] sm:$0xf] %vm2486, %v2405
        %2495 = vst.msk [vmem:[#allocation2 + $0x20] sm:$0xf] %vm2486, %v2407
        %2496 = vst.msk [vmem:[#allocation2 + $0x24] sm:$0xf] %vm2486, %v2409
        %2497 = vst.msk [vmem:[#allocation2 + $0x28] sm:$0xf] %vm2486, %v2411
        %2498 = vst.msk [vmem:[#allocation2 + $0x2c] sm:$0xf] %vm2486, %v2413
        %2499 = vst.msk [vmem:[#allocation2 + $0x30] sm:$0xf] %vm2486, %v2415
        %2500 = vst.msk [vmem:[#allocation2 + $0x34] sm:$0xf] %vm2486, %v2417
        %2501 = vst.msk [vmem:[#allocation2 + $0x38] sm:$0xf] %vm2486, %v2419
        %2502 = vst.msk [vmem:[#allocation2 + $0x3c] sm:$0xf] %vm2486, %v2421
        %2503 = vst.msk [vmem:[#allocation2 + $0x40] sm:$0xf] %vm2486, %v2423
        %2504 = vst.msk [vmem:[#allocation2 + $0x44] sm:$0xf] %vm2486, %v2425
        %2505 = vst.msk [vmem:[#allocation2 + $0x48] sm:$0xf] %vm2486, %v2427
        %2506 = vst.msk [vmem:[#allocation2 + $0x4c] sm:$0xf] %vm2486, %v2429
        %2507 = vst.msk [vmem:[#allocation2 + $0x50] sm:$0xf] %vm2486, %v2431
        %2508 = vst.msk [vmem:[#allocation2 + $0x54] sm:$0xf] %vm2486, %v2433
        %2509 = vst.msk [vmem:[#allocation2 + $0x58] sm:$0xf] %vm2486, %v2435
        %2510 = vst.msk [vmem:[#allocation2 + $0x5c] sm:$0xf] %vm2486, %v2437
        %2511 = vst.msk [vmem:[#allocation2 + $0x60] sm:$0xf] %vm2486, %v2439
        %2512 = vst.msk [vmem:[#allocation2 + $0x64] sm:$0xf] %vm2486, %v2441
        %2513 = vst.msk [vmem:[#allocation2 + $0x68] sm:$0xf] %vm2486, %v2443
        %2514 = vst.msk [vmem:[#allocation2 + $0x6c] sm:$0xf] %vm2486, %v2445
        %2515 = vst.msk [vmem:[#allocation2 + $0x70] sm:$0xf] %vm2486, %v2447
        %2516 = vst.msk [vmem:[#allocation2 + $0x74] sm:$0xf] %vm2486, %v2449
        %2517 = vst.msk [vmem:[#allocation2 + $0x78] sm:$0xf] %vm2486, %v2451
        %2518 = vst.msk [vmem:[#allocation2 + $0x7c] sm:$0xf] %vm2486, %v2453
        %v2519 = vld [vmem:[%s2325] sm:$0xf]
        %v2520 = vld [vmem:[%s2325 + $0x4] sm:$0xf]
        %v2521 = vld [vmem:[%s2325 + $0x8] sm:$0x1]
        %v2522 = vld [vmem:[%s2325 + $0xc] sm:$0xf]
        %v2523 = vld [vmem:[%s2325 + $0x10] sm:$0xf]
        %v2524 = vld [vmem:[%s2325 + $0x14] sm:$0x1]
        %v2525 = vld [vmem:[%s2325 + $0x18] sm:$0xf]
        %v2526 = vld [vmem:[%s2325 + $0x1c] sm:$0xf]
        %v2527 = vld [vmem:[%s2325 + $0x20] sm:$0x1]
        %v2528 = vld [vmem:[%s2325 + $0x24] sm:$0xf]
        %v2529 = vld [vmem:[%s2325 + $0x28] sm:$0xf]
        %v2530 = vld [vmem:[%s2325 + $0x2c] sm:$0x1]
        %v2531 = vld [vmem:[%s2325 + $0x30] sm:$0xf]
        %v2532 = vld [vmem:[%s2325 + $0x34] sm:$0xf]
        %v2533 = vld [vmem:[%s2325 + $0x38] sm:$0x1]
        %v2534 = vld [vmem:[%s2325 + $0x3c] sm:$0xf]
        %v2535 = vld [vmem:[%s2325 + $0x40] sm:$0xf]
        %v2536 = vld [vmem:[%s2325 + $0x44] sm:$0x1]
        %v2537 = vld [vmem:[%s2325 + $0x48] sm:$0xf]
        %v2538 = vld [vmem:[%s2325 + $0x4c] sm:$0xf]
        %v2539 = vld [vmem:[%s2325 + $0x50] sm:$0x1]
        %v2540 = vld [vmem:[%s2325 + $0x54] sm:$0xf]
        %v2541 = vld [vmem:[%s2325 + $0x58] sm:$0xf]
        %v2542 = vld [vmem:[%s2325 + $0x5c] sm:$0x1]
        %v2543 = vld [vmem:[%s2325 + $0x60] sm:$0xf]
        %v2544 = vld [vmem:[%s2325 + $0x64] sm:$0xf]
        %v2545 = vld [vmem:[%s2325 + $0x68] sm:$0x1]
        %v2546 = vld [vmem:[%s2325 + $0x6c] sm:$0xf]
        %v2547 = vld [vmem:[%s2325 + $0x70] sm:$0xf]
        %v2548 = vld [vmem:[%s2325 + $0x74] sm:$0x1]
        %v2549 = vld [vmem:[%s2325 + $0x78] sm:$0xf]
        %v2550 = vld [vmem:[%s2325 + $0x7c] sm:$0xf]
        %v2551 = vld [vmem:[%s2325 + $0x80] sm:$0x1]
        %v2552 = vld [vmem:[%s2325 + $0x84] sm:$0xf]
        %v2553 = vld [vmem:[%s2325 + $0x88] sm:$0xf]
        %v2554 = vld [vmem:[%s2325 + $0x8c] sm:$0x1]
        %v2555 = vld [vmem:[%s2325 + $0x90] sm:$0xf]
        %v2556 = vld [vmem:[%s2325 + $0x94] sm:$0xf]
        %v2557 = vld [vmem:[%s2325 + $0x98] sm:$0x1]
        %v2558 = vld [vmem:[%s2325 + $0x9c] sm:$0xf]
        %v2559 = vld [vmem:[%s2325 + $0xa0] sm:$0xf]
        %v2560 = vld [vmem:[%s2325 + $0xa4] sm:$0x1]
        %v2561 = vld [vmem:[%s2325 + $0xa8] sm:$0xf]
        %v2562 = vld [vmem:[%s2325 + $0xac] sm:$0xf]
        %v2563 = vld [vmem:[%s2325 + $0xb0] sm:$0x1]
        %v2564 = vld [vmem:[%s2325 + $0xb4] sm:$0xf]
        %v2565 = vld [vmem:[%s2325 + $0xb8] sm:$0xf]
        %v2566 = vld [vmem:[%s2325 + $0xbc] sm:$0x1]
        %v2568 = vshrl.u32 %v2519, 16
        %v2570 = vrot.slane %v2568, 4
        %v2571 = vshll.u32 %v2519, 16
        %v2573 = vrot.slane %v2571, 5
        %v2574 = vor.u32 %v2570, %v2573
        %v2575 = vrot.slane %v2574, 4
        %v2577 = vshll.u32 %v2520, 16
        %v2579 = vrot.slane %v2577, 5
        %v2580 = vsel %vm379, %v2575, %v2579
        %v2581 = vshrl.u32 %v2520, 16
        %v2583 = vrot.slane %v2581, 4
        %v2584 = vor.u32 %v2583, %v2579
        %v2585 = vrot.slane %v2584, 4
        %v2587 = vshll.u32 %v2521, 16
        %v2589 = vrot.slane %v2587, 5
        %v2590 = vsel %vm379, %v2585, %v2589
        %v2592 = vshrl.u32 %v2522, 16
        %v2594 = vrot.slane %v2592, 4
        %v2595 = vshll.u32 %v2522, 16
        %v2597 = vrot.slane %v2595, 5
        %v2598 = vor.u32 %v2594, %v2597
        %v2599 = vrot.slane %v2598, 4
        %v2601 = vshll.u32 %v2523, 16
        %v2603 = vrot.slane %v2601, 5
        %v2604 = vsel %vm379, %v2599, %v2603
        %v2605 = vshrl.u32 %v2523, 16
        %v2607 = vrot.slane %v2605, 4
        %v2608 = vor.u32 %v2607, %v2603
        %v2609 = vrot.slane %v2608, 4
        %v2611 = vshll.u32 %v2524, 16
        %v2613 = vrot.slane %v2611, 5
        %v2614 = vsel %vm379, %v2609, %v2613
        %v2616 = vshrl.u32 %v2525, 16
        %v2618 = vrot.slane %v2616, 4
        %v2619 = vshll.u32 %v2525, 16
        %v2621 = vrot.slane %v2619, 5
        %v2622 = vor.u32 %v2618, %v2621
        %v2623 = vrot.slane %v2622, 4
        %v2625 = vshll.u32 %v2526, 16
        %v2627 = vrot.slane %v2625, 5
        %v2628 = vsel %vm379, %v2623, %v2627
        %v2629 = vshrl.u32 %v2526, 16
        %v2631 = vrot.slane %v2629, 4
        %v2632 = vor.u32 %v2631, %v2627
        %v2633 = vrot.slane %v2632, 4
        %v2635 = vshll.u32 %v2527, 16
        %v2637 = vrot.slane %v2635, 5
        %v2638 = vsel %vm379, %v2633, %v2637
        %v2640 = vshrl.u32 %v2528, 16
        %v2642 = vrot.slane %v2640, 4
        %v2643 = vshll.u32 %v2528, 16
        %v2645 = vrot.slane %v2643, 5
        %v2646 = vor.u32 %v2642, %v2645
        %v2647 = vrot.slane %v2646, 4
        %v2649 = vshll.u32 %v2529, 16
        %v2651 = vrot.slane %v2649, 5
        %v2652 = vsel %vm379, %v2647, %v2651
        %v2653 = vshrl.u32 %v2529, 16
        %v2655 = vrot.slane %v2653, 4
        %v2656 = vor.u32 %v2655, %v2651
        %v2657 = vrot.slane %v2656, 4
        %v2659 = vshll.u32 %v2530, 16
        %v2661 = vrot.slane %v2659, 5
        %v2662 = vsel %vm379, %v2657, %v2661
        %v2664 = vshrl.u32 %v2531, 16
        %v2666 = vrot.slane %v2664, 4
        %v2667 = vshll.u32 %v2531, 16
        %v2669 = vrot.slane %v2667, 5
        %v2670 = vor.u32 %v2666, %v2669
        %v2671 = vrot.slane %v2670, 4
        %v2673 = vshll.u32 %v2532, 16
        %v2675 = vrot.slane %v2673, 5
        %v2676 = vsel %vm379, %v2671, %v2675
        %v2677 = vshrl.u32 %v2532, 16
        %v2679 = vrot.slane %v2677, 4
        %v2680 = vor.u32 %v2679, %v2675
        %v2681 = vrot.slane %v2680, 4
        %v2683 = vshll.u32 %v2533, 16
        %v2685 = vrot.slane %v2683, 5
        %v2686 = vsel %vm379, %v2681, %v2685
        %v2688 = vshrl.u32 %v2534, 16
        %v2690 = vrot.slane %v2688, 4
        %v2691 = vshll.u32 %v2534, 16
        %v2693 = vrot.slane %v2691, 5
        %v2694 = vor.u32 %v2690, %v2693
        %v2695 = vrot.slane %v2694, 4
        %v2697 = vshll.u32 %v2535, 16
        %v2699 = vrot.slane %v2697, 5
        %v2700 = vsel %vm379, %v2695, %v2699
        %v2701 = vshrl.u32 %v2535, 16
        %v2703 = vrot.slane %v2701, 4
        %v2704 = vor.u32 %v2703, %v2699
        %v2705 = vrot.slane %v2704, 4
        %v2707 = vshll.u32 %v2536, 16
        %v2709 = vrot.slane %v2707, 5
        %v2710 = vsel %vm379, %v2705, %v2709
        %v2712 = vshrl.u32 %v2537, 16
        %v2714 = vrot.slane %v2712, 4
        %v2715 = vshll.u32 %v2537, 16
        %v2717 = vrot.slane %v2715, 5
        %v2718 = vor.u32 %v2714, %v2717
        %v2719 = vrot.slane %v2718, 4
        %v2721 = vshll.u32 %v2538, 16
        %v2723 = vrot.slane %v2721, 5
        %v2724 = vsel %vm379, %v2719, %v2723
        %v2725 = vshrl.u32 %v2538, 16
        %v2727 = vrot.slane %v2725, 4
        %v2728 = vor.u32 %v2727, %v2723
        %v2729 = vrot.slane %v2728, 4
        %v2731 = vshll.u32 %v2539, 16
        %v2733 = vrot.slane %v2731, 5
        %v2734 = vsel %vm379, %v2729, %v2733
        %v2736 = vshrl.u32 %v2540, 16
        %v2738 = vrot.slane %v2736, 4
        %v2739 = vshll.u32 %v2540, 16
        %v2741 = vrot.slane %v2739, 5
        %v2742 = vor.u32 %v2738, %v2741
        %v2743 = vrot.slane %v2742, 4
        %v2745 = vshll.u32 %v2541, 16
        %v2747 = vrot.slane %v2745, 5
        %v2748 = vsel %vm379, %v2743, %v2747
        %v2749 = vshrl.u32 %v2541, 16
        %v2751 = vrot.slane %v2749, 4
        %v2752 = vor.u32 %v2751, %v2747
        %v2753 = vrot.slane %v2752, 4
        %v2755 = vshll.u32 %v2542, 16
        %v2757 = vrot.slane %v2755, 5
        %v2758 = vsel %vm379, %v2753, %v2757
        %v2760 = vshrl.u32 %v2543, 16
        %v2762 = vrot.slane %v2760, 4
        %v2763 = vshll.u32 %v2543, 16
        %v2765 = vrot.slane %v2763, 5
        %v2766 = vor.u32 %v2762, %v2765
        %v2767 = vrot.slane %v2766, 4
        %v2769 = vshll.u32 %v2544, 16
        %v2771 = vrot.slane %v2769, 5
        %v2772 = vsel %vm379, %v2767, %v2771
        %v2773 = vshrl.u32 %v2544, 16
        %v2775 = vrot.slane %v2773, 4
        %v2776 = vor.u32 %v2775, %v2771
        %v2777 = vrot.slane %v2776, 4
        %v2779 = vshll.u32 %v2545, 16
        %v2781 = vrot.slane %v2779, 5
        %v2782 = vsel %vm379, %v2777, %v2781
        %v2784 = vshrl.u32 %v2546, 16
        %v2786 = vrot.slane %v2784, 4
        %v2787 = vshll.u32 %v2546, 16
        %v2789 = vrot.slane %v2787, 5
        %v2790 = vor.u32 %v2786, %v2789
        %v2791 = vrot.slane %v2790, 4
        %v2793 = vshll.u32 %v2547, 16
        %v2795 = vrot.slane %v2793, 5
        %v2796 = vsel %vm379, %v2791, %v2795
        %v2797 = vshrl.u32 %v2547, 16
        %v2799 = vrot.slane %v2797, 4
        %v2800 = vor.u32 %v2799, %v2795
        %v2801 = vrot.slane %v2800, 4
        %v2803 = vshll.u32 %v2548, 16
        %v2805 = vrot.slane %v2803, 5
        %v2806 = vsel %vm379, %v2801, %v2805
        %v2808 = vshrl.u32 %v2549, 16
        %v2810 = vrot.slane %v2808, 4
        %v2811 = vshll.u32 %v2549, 16
        %v2813 = vrot.slane %v2811, 5
        %v2814 = vor.u32 %v2810, %v2813
        %v2815 = vrot.slane %v2814, 4
        %v2817 = vshll.u32 %v2550, 16
        %v2819 = vrot.slane %v2817, 5
        %v2820 = vsel %vm379, %v2815, %v2819
        %v2821 = vshrl.u32 %v2550, 16
        %v2823 = vrot.slane %v2821, 4
        %v2824 = vor.u32 %v2823, %v2819
        %v2825 = vrot.slane %v2824, 4
        %v2827 = vshll.u32 %v2551, 16
        %v2829 = vrot.slane %v2827, 5
        %v2830 = vsel %vm379, %v2825, %v2829
        %v2832 = vshrl.u32 %v2552, 16
        %v2834 = vrot.slane %v2832, 4
        %v2835 = vshll.u32 %v2552, 16
        %v2837 = vrot.slane %v2835, 5
        %v2838 = vor.u32 %v2834, %v2837
        %v2839 = vrot.slane %v2838, 4
        %v2841 = vshll.u32 %v2553, 16
        %v2843 = vrot.slane %v2841, 5
        %v2844 = vsel %vm379, %v2839, %v2843
        %v2845 = vshrl.u32 %v2553, 16
        %v2847 = vrot.slane %v2845, 4
        %v2848 = vor.u32 %v2847, %v2843
        %v2849 = vrot.slane %v2848, 4
        %v2851 = vshll.u32 %v2554, 16
        %v2853 = vrot.slane %v2851, 5
        %v2854 = vsel %vm379, %v2849, %v2853
        %v2856 = vshrl.u32 %v2555, 16
        %v2858 = vrot.slane %v2856, 4
        %v2859 = vshll.u32 %v2555, 16
        %v2861 = vrot.slane %v2859, 5
        %v2862 = vor.u32 %v2858, %v2861
        %v2863 = vrot.slane %v2862, 4
        %v2865 = vshll.u32 %v2556, 16
        %v2867 = vrot.slane %v2865, 5
        %v2868 = vsel %vm379, %v2863, %v2867
        %v2869 = vshrl.u32 %v2556, 16
        %v2871 = vrot.slane %v2869, 4
        %v2872 = vor.u32 %v2871, %v2867
        %v2873 = vrot.slane %v2872, 4
        %v2875 = vshll.u32 %v2557, 16
        %v2877 = vrot.slane %v2875, 5
        %v2878 = vsel %vm379, %v2873, %v2877
        %v2880 = vshrl.u32 %v2558, 16
        %v2882 = vrot.slane %v2880, 4
        %v2883 = vshll.u32 %v2558, 16
        %v2885 = vrot.slane %v2883, 5
        %v2886 = vor.u32 %v2882, %v2885
        %v2887 = vrot.slane %v2886, 4
        %v2889 = vshll.u32 %v2559, 16
        %v2891 = vrot.slane %v2889, 5
        %v2892 = vsel %vm379, %v2887, %v2891
        %v2893 = vshrl.u32 %v2559, 16
        %v2895 = vrot.slane %v2893, 4
        %v2896 = vor.u32 %v2895, %v2891
        %v2897 = vrot.slane %v2896, 4
        %v2899 = vshll.u32 %v2560, 16
        %v2901 = vrot.slane %v2899, 5
        %v2902 = vsel %vm379, %v2897, %v2901
        %v2904 = vshrl.u32 %v2561, 16
        %v2906 = vrot.slane %v2904, 4
        %v2907 = vshll.u32 %v2561, 16
        %v2909 = vrot.slane %v2907, 5
        %v2910 = vor.u32 %v2906, %v2909
        %v2911 = vrot.slane %v2910, 4
        %v2913 = vshll.u32 %v2562, 16
        %v2915 = vrot.slane %v2913, 5
        %v2916 = vsel %vm379, %v2911, %v2915
        %v2917 = vshrl.u32 %v2562, 16
        %v2919 = vrot.slane %v2917, 4
        %v2920 = vor.u32 %v2919, %v2915
        %v2921 = vrot.slane %v2920, 4
        %v2923 = vshll.u32 %v2563, 16
        %v2925 = vrot.slane %v2923, 5
        %v2926 = vsel %vm379, %v2921, %v2925
        %v2928 = vshrl.u32 %v2564, 16
        %v2930 = vrot.slane %v2928, 4
        %v2931 = vshll.u32 %v2564, 16
        %v2933 = vrot.slane %v2931, 5
        %v2934 = vor.u32 %v2930, %v2933
        %v2935 = vrot.slane %v2934, 4
        %v2937 = vshll.u32 %v2565, 16
        %v2939 = vrot.slane %v2937, 5
        %v2940 = vsel %vm379, %v2935, %v2939
        %v2941 = vshrl.u32 %v2565, 16
        %v2943 = vrot.slane %v2941, 4
        %v2944 = vor.u32 %v2943, %v2939
        %v2945 = vrot.slane %v2944, 4
        %v2947 = vshll.u32 %v2566, 16
        %v2949 = vrot.slane %v2947, 5
        %v2950 = vsel %vm379, %v2945, %v2949
        %2951 = vrot.lane.b32.xlu0 %v2580, 28
        %v2952 = vpop.permute.xlu0 %2951
        %2953 = vrot.lane.b32.xlu0 %v2590, 28
        %v2954 = vpop.permute.xlu0 %2953
        %2955 = vrot.lane.b32.xlu0 %v2604, 28
        %v2956 = vpop.permute.xlu0 %2955
        %2957 = vrot.lane.b32.xlu0 %v2614, 28
        %v2958 = vpop.permute.xlu0 %2957
        %2959 = vrot.lane.b32.xlu0 %v2628, 28
        %v2960 = vpop.permute.xlu0 %2959
        %2961 = vrot.lane.b32.xlu0 %v2638, 28
        %v2962 = vpop.permute.xlu0 %2961
        %2963 = vrot.lane.b32.xlu0 %v2652, 28
        %v2964 = vpop.permute.xlu0 %2963
        %2965 = vrot.lane.b32.xlu0 %v2662, 28
        %v2966 = vpop.permute.xlu0 %2965
        %2967 = vrot.lane.b32.xlu0 %v2676, 28
        %v2968 = vpop.permute.xlu0 %2967
        %2969 = vrot.lane.b32.xlu0 %v2686, 28
        %v2970 = vpop.permute.xlu0 %2969
        %2971 = vrot.lane.b32.xlu0 %v2700, 28
        %v2972 = vpop.permute.xlu0 %2971
        %2973 = vrot.lane.b32.xlu0 %v2710, 28
        %v2974 = vpop.permute.xlu0 %2973
        %2975 = vrot.lane.b32.xlu0 %v2724, 28
        %v2976 = vpop.permute.xlu0 %2975
        %2977 = vrot.lane.b32.xlu0 %v2734, 28
        %v2978 = vpop.permute.xlu0 %2977
        %2979 = vrot.lane.b32.xlu0 %v2748, 28
        %v2980 = vpop.permute.xlu0 %2979
        %2981 = vrot.lane.b32.xlu0 %v2758, 28
        %v2982 = vpop.permute.xlu0 %2981
        %2983 = vrot.lane.b32.xlu0 %v2772, 28
        %v2984 = vpop.permute.xlu0 %2983
        %2985 = vrot.lane.b32.xlu0 %v2782, 28
        %v2986 = vpop.permute.xlu0 %2985
        %2987 = vrot.lane.b32.xlu0 %v2796, 28
        %v2988 = vpop.permute.xlu0 %2987
        %2989 = vrot.lane.b32.xlu0 %v2806, 28
        %v2990 = vpop.permute.xlu0 %2989
        %2991 = vrot.lane.b32.xlu0 %v2820, 28
        %v2992 = vpop.permute.xlu0 %2991
        %2993 = vrot.lane.b32.xlu0 %v2830, 28
        %v2994 = vpop.permute.xlu0 %2993
        %2995 = vrot.lane.b32.xlu0 %v2844, 28
        %v2996 = vpop.permute.xlu0 %2995
        %2997 = vrot.lane.b32.xlu0 %v2854, 28
        %v2998 = vpop.permute.xlu0 %2997
        %2999 = vrot.lane.b32.xlu0 %v2868, 28
        %v3000 = vpop.permute.xlu0 %2999
        %3001 = vrot.lane.b32.xlu0 %v2878, 28
        %v3002 = vpop.permute.xlu0 %3001
        %3003 = vrot.lane.b32.xlu0 %v2892, 28
        %v3004 = vpop.permute.xlu0 %3003
        %3005 = vrot.lane.b32.xlu0 %v2902, 28
        %v3006 = vpop.permute.xlu0 %3005
        %3007 = vrot.lane.b32.xlu0 %v2916, 28
        %v3008 = vpop.permute.xlu0 %3007
        %3009 = vrot.lane.b32.xlu0 %v2926, 28
        %v3010 = vpop.permute.xlu0 %3009
        %3011 = vrot.lane.b32.xlu0 %v2940, 28
        %v3012 = vpop.permute.xlu0 %3011
        %3013 = vrot.lane.b32.xlu0 %v2950, 28
        %v3014 = vpop.permute.xlu0 %3013
        %vm3047 = vcmask 257248
        %3048 = vst.msk [vmem:[#allocation2] sm:$0xf] %vm3047, %v2952
        %3049 = vst.msk [vmem:[#allocation2 + $0x4] sm:$0xf] %vm3047, %v2954
        %3050 = vst.msk [vmem:[#allocation2 + $0x8] sm:$0xf] %vm3047, %v2956
        %3051 = vst.msk [vmem:[#allocation2 + $0xc] sm:$0xf] %vm3047, %v2958
        %3052 = vst.msk [vmem:[#allocation2 + $0x10] sm:$0xf] %vm3047, %v2960
        %3053 = vst.msk [vmem:[#allocation2 + $0x14] sm:$0xf] %vm3047, %v2962
        %3054 = vst.msk [vmem:[#allocation2 + $0x18] sm:$0xf] %vm3047, %v2964
        %3055 = vst.msk [vmem:[#allocation2 + $0x1c] sm:$0xf] %vm3047, %v2966
        %3056 = vst.msk [vmem:[#allocation2 + $0x20] sm:$0xf] %vm3047, %v2968
        %3057 = vst.msk [vmem:[#allocation2 + $0x24] sm:$0xf] %vm3047, %v2970
        %3058 = vst.msk [vmem:[#allocation2 + $0x28] sm:$0xf] %vm3047, %v2972
        %3059 = vst.msk [vmem:[#allocation2 + $0x2c] sm:$0xf] %vm3047, %v2974
        %3060 = vst.msk [vmem:[#allocation2 + $0x30] sm:$0xf] %vm3047, %v2976
        %3061 = vst.msk [vmem:[#allocation2 + $0x34] sm:$0xf] %vm3047, %v2978
        %3062 = vst.msk [vmem:[#allocation2 + $0x38] sm:$0xf] %vm3047, %v2980
        %3063 = vst.msk [vmem:[#allocation2 + $0x3c] sm:$0xf] %vm3047, %v2982
        %3064 = vst.msk [vmem:[#allocation2 + $0x40] sm:$0xf] %vm3047, %v2984
        %3065 = vst.msk [vmem:[#allocation2 + $0x44] sm:$0xf] %vm3047, %v2986
        %3066 = vst.msk [vmem:[#allocation2 + $0x48] sm:$0xf] %vm3047, %v2988
        %3067 = vst.msk [vmem:[#allocation2 + $0x4c] sm:$0xf] %vm3047, %v2990
        %3068 = vst.msk [vmem:[#allocation2 + $0x50] sm:$0xf] %vm3047, %v2992
        %3069 = vst.msk [vmem:[#allocation2 + $0x54] sm:$0xf] %vm3047, %v2994
        %3070 = vst.msk [vmem:[#allocation2 + $0x58] sm:$0xf] %vm3047, %v2996
        %3071 = vst.msk [vmem:[#allocation2 + $0x5c] sm:$0xf] %vm3047, %v2998
        %3072 = vst.msk [vmem:[#allocation2 + $0x60] sm:$0xf] %vm3047, %v3000
        %3073 = vst.msk [vmem:[#allocation2 + $0x64] sm:$0xf] %vm3047, %v3002
        %3074 = vst.msk [vmem:[#allocation2 + $0x68] sm:$0xf] %vm3047, %v3004
        %3075 = vst.msk [vmem:[#allocation2 + $0x6c] sm:$0xf] %vm3047, %v3006
        %3076 = vst.msk [vmem:[#allocation2 + $0x70] sm:$0xf] %vm3047, %v3008
        %3077 = vst.msk [vmem:[#allocation2 + $0x74] sm:$0xf] %vm3047, %v3010
        %3078 = vst.msk [vmem:[#allocation2 + $0x78] sm:$0xf] %vm3047, %v3012
        %3079 = vst.msk [vmem:[#allocation2 + $0x7c] sm:$0xf] %vm3047, %v3014
        %v3080 = vld [vmem:[%s2325] sm:$0xe]
        %v3081 = vld [vmem:[%s2325 + $0x4] sm:$0xf]
        %v3082 = vld [vmem:[%s2325 + $0x8] sm:$0x1]
        %v3083 = vld [vmem:[%s2325 + $0xc] sm:$0xe]
        %v3084 = vld [vmem:[%s2325 + $0x10] sm:$0xf]
        %v3085 = vld [vmem:[%s2325 + $0x14] sm:$0x1]
        %v3086 = vld [vmem:[%s2325 + $0x18] sm:$0xe]
        %v3087 = vld [vmem:[%s2325 + $0x1c] sm:$0xf]
        %v3088 = vld [vmem:[%s2325 + $0x20] sm:$0x1]
        %v3089 = vld [vmem:[%s2325 + $0x24] sm:$0xe]
        %v3090 = vld [vmem:[%s2325 + $0x28] sm:$0xf]
        %v3091 = vld [vmem:[%s2325 + $0x2c] sm:$0x1]
        %v3092 = vld [vmem:[%s2325 + $0x30] sm:$0xe]
        %v3093 = vld [vmem:[%s2325 + $0x34] sm:$0xf]
        %v3094 = vld [vmem:[%s2325 + $0x38] sm:$0x1]
        %v3095 = vld [vmem:[%s2325 + $0x3c] sm:$0xe]
        %v3096 = vld [vmem:[%s2325 + $0x40] sm:$0xf]
        %v3097 = vld [vmem:[%s2325 + $0x44] sm:$0x1]
        %v3098 = vld [vmem:[%s2325 + $0x48] sm:$0xe]
        %v3099 = vld [vmem:[%s2325 + $0x4c] sm:$0xf]
        %v3100 = vld [vmem:[%s2325 + $0x50] sm:$0x1]
        %v3101 = vld [vmem:[%s2325 + $0x54] sm:$0xe]
        %v3102 = vld [vmem:[%s2325 + $0x58] sm:$0xf]
        %v3103 = vld [vmem:[%s2325 + $0x5c] sm:$0x1]
        %v3104 = vld [vmem:[%s2325 + $0x60] sm:$0xe]
        %v3105 = vld [vmem:[%s2325 + $0x64] sm:$0xf]
        %v3106 = vld [vmem:[%s2325 + $0x68] sm:$0x1]
        %v3107 = vld [vmem:[%s2325 + $0x6c] sm:$0xe]
        %v3108 = vld [vmem:[%s2325 + $0x70] sm:$0xf]
        %v3109 = vld [vmem:[%s2325 + $0x74] sm:$0x1]
        %v3110 = vld [vmem:[%s2325 + $0x78] sm:$0xe]
        %v3111 = vld [vmem:[%s2325 + $0x7c] sm:$0xf]
        %v3112 = vld [vmem:[%s2325 + $0x80] sm:$0x1]
        %v3113 = vld [vmem:[%s2325 + $0x84] sm:$0xe]
        %v3114 = vld [vmem:[%s2325 + $0x88] sm:$0xf]
        %v3115 = vld [vmem:[%s2325 + $0x8c] sm:$0x1]
        %v3116 = vld [vmem:[%s2325 + $0x90] sm:$0xe]
        %v3117 = vld [vmem:[%s2325 + $0x94] sm:$0xf]
        %v3118 = vld [vmem:[%s2325 + $0x98] sm:$0x1]
        %v3119 = vld [vmem:[%s2325 + $0x9c] sm:$0xe]
        %v3120 = vld [vmem:[%s2325 + $0xa0] sm:$0xf]
        %v3121 = vld [vmem:[%s2325 + $0xa4] sm:$0x1]
        %v3122 = vld [vmem:[%s2325 + $0xa8] sm:$0xe]
        %v3123 = vld [vmem:[%s2325 + $0xac] sm:$0xf]
        %v3124 = vld [vmem:[%s2325 + $0xb0] sm:$0x1]
        %v3125 = vld [vmem:[%s2325 + $0xb4] sm:$0xe]
        %v3126 = vld [vmem:[%s2325 + $0xb8] sm:$0xf]
        %v3127 = vld [vmem:[%s2325 + $0xbc] sm:$0x1]
        %v3176 = vrot.slane %v3080, 5
        %v3177 = vrot.slane %v3176, 4
        %v3178 = vrot.slane %v3081, 5
        %v3179 = vsel %vm991, %v3177, %v3178
        %v3180 = vrot.slane %v3178, 4
        %v3181 = vrot.slane %v3082, 5
        %v3182 = vsel %vm991, %v3180, %v3181
        %v3183 = vrot.slane %v3083, 5
        %v3184 = vrot.slane %v3183, 4
        %v3185 = vrot.slane %v3084, 5
        %v3186 = vsel %vm991, %v3184, %v3185
        %v3187 = vrot.slane %v3185, 4
        %v3188 = vrot.slane %v3085, 5
        %v3189 = vsel %vm991, %v3187, %v3188
        %v3190 = vrot.slane %v3086, 5
        %v3191 = vrot.slane %v3190, 4
        %v3192 = vrot.slane %v3087, 5
        %v3193 = vsel %vm991, %v3191, %v3192
        %v3194 = vrot.slane %v3192, 4
        %v3195 = vrot.slane %v3088, 5
        %v3196 = vsel %vm991, %v3194, %v3195
        %v3197 = vrot.slane %v3089, 5
        %v3198 = vrot.slane %v3197, 4
        %v3199 = vrot.slane %v3090, 5
        %v3200 = vsel %vm991, %v3198, %v3199
        %v3201 = vrot.slane %v3199, 4
        %v3202 = vrot.slane %v3091, 5
        %v3203 = vsel %vm991, %v3201, %v3202
        %v3204 = vrot.slane %v3092, 5
        %v3205 = vrot.slane %v3204, 4
        %v3206 = vrot.slane %v3093, 5
        %v3207 = vsel %vm991, %v3205, %v3206
        %v3208 = vrot.slane %v3206, 4
        %v3209 = vrot.slane %v3094, 5
        %v3210 = vsel %vm991, %v3208, %v3209
        %v3211 = vrot.slane %v3095, 5
        %v3212 = vrot.slane %v3211, 4
        %v3213 = vrot.slane %v3096, 5
        %v3214 = vsel %vm991, %v3212, %v3213
        %v3215 = vrot.slane %v3213, 4
        %v3216 = vrot.slane %v3097, 5
        %v3217 = vsel %vm991, %v3215, %v3216
        %v3218 = vrot.slane %v3098, 5
        %v3219 = vrot.slane %v3218, 4
        %v3220 = vrot.slane %v3099, 5
        %v3221 = vsel %vm991, %v3219, %v3220
        %v3222 = vrot.slane %v3220, 4
        %v3223 = vrot.slane %v3100, 5
        %v3224 = vsel %vm991, %v3222, %v3223
        %v3225 = vrot.slane %v3101, 5
        %v3226 = vrot.slane %v3225, 4
        %v3227 = vrot.slane %v3102, 5
        %v3228 = vsel %vm991, %v3226, %v3227
        %v3229 = vrot.slane %v3227, 4
        %v3230 = vrot.slane %v3103, 5
        %v3231 = vsel %vm991, %v3229, %v3230
        %v3232 = vrot.slane %v3104, 5
        %v3233 = vrot.slane %v3232, 4
        %v3234 = vrot.slane %v3105, 5
        %v3235 = vsel %vm991, %v3233, %v3234
        %v3236 = vrot.slane %v3234, 4
        %v3237 = vrot.slane %v3106, 5
        %v3238 = vsel %vm991, %v3236, %v3237
        %v3239 = vrot.slane %v3107, 5
        %v3240 = vrot.slane %v3239, 4
        %v3241 = vrot.slane %v3108, 5
        %v3242 = vsel %vm991, %v3240, %v3241
        %v3243 = vrot.slane %v3241, 4
        %v3244 = vrot.slane %v3109, 5
        %v3245 = vsel %vm991, %v3243, %v3244
        %v3246 = vrot.slane %v3110, 5
        %v3247 = vrot.slane %v3246, 4
        %v3248 = vrot.slane %v3111, 5
        %v3249 = vsel %vm991, %v3247, %v3248
        %v3250 = vrot.slane %v3248, 4
        %v3251 = vrot.slane %v3112, 5
        %v3252 = vsel %vm991, %v3250, %v3251
        %v3253 = vrot.slane %v3113, 5
        %v3254 = vrot.slane %v3253, 4
        %v3255 = vrot.slane %v3114, 5
        %v3256 = vsel %vm991, %v3254, %v3255
        %v3257 = vrot.slane %v3255, 4
        %v3258 = vrot.slane %v3115, 5
        %v3259 = vsel %vm991, %v3257, %v3258
        %v3260 = vrot.slane %v3116, 5
        %v3261 = vrot.slane %v3260, 4
        %v3262 = vrot.slane %v3117, 5
        %v3263 = vsel %vm991, %v3261, %v3262
        %v3264 = vrot.slane %v3262, 4
        %v3265 = vrot.slane %v3118, 5
        %v3266 = vsel %vm991, %v3264, %v3265
        %v3267 = vrot.slane %v3119, 5
        %v3268 = vrot.slane %v3267, 4
        %v3269 = vrot.slane %v3120, 5
        %v3270 = vsel %vm991, %v3268, %v3269
        %v3271 = vrot.slane %v3269, 4
        %v3272 = vrot.slane %v3121, 5
        %v3273 = vsel %vm991, %v3271, %v3272
        %v3274 = vrot.slane %v3122, 5
        %v3275 = vrot.slane %v3274, 4
        %v3276 = vrot.slane %v3123, 5
        %v3277 = vsel %vm991, %v3275, %v3276
        %v3278 = vrot.slane %v3276, 4
        %v3279 = vrot.slane %v3124, 5
        %v3280 = vsel %vm991, %v3278, %v3279
        %v3281 = vrot.slane %v3125, 5
        %v3282 = vrot.slane %v3281, 4
        %v3283 = vrot.slane %v3126, 5
        %v3284 = vsel %vm991, %v3282, %v3283
        %v3285 = vrot.slane %v3283, 4
        %v3286 = vrot.slane %v3127, 5
        %v3287 = vsel %vm991, %v3285, %v3286
        %3288 = vrot.lane.b32.xlu0 %v3179, 32
        %v3289 = vpop.permute.xlu0 %3288
        %3290 = vrot.lane.b32.xlu0 %v3182, 32
        %v3291 = vpop.permute.xlu0 %3290
        %3292 = vrot.lane.b32.xlu0 %v3186, 32
        %v3293 = vpop.permute.xlu0 %3292
        %3294 = vrot.lane.b32.xlu0 %v3189, 32
        %v3295 = vpop.permute.xlu0 %3294
        %3296 = vrot.lane.b32.xlu0 %v3193, 32
        %v3297 = vpop.permute.xlu0 %3296
        %3298 = vrot.lane.b32.xlu0 %v3196, 32
        %v3299 = vpop.permute.xlu0 %3298
        %3300 = vrot.lane.b32.xlu0 %v3200, 32
        %v3301 = vpop.permute.xlu0 %3300
        %3302 = vrot.lane.b32.xlu0 %v3203, 32
        %v3303 = vpop.permute.xlu0 %3302
        %3304 = vrot.lane.b32.xlu0 %v3207, 32
        %v3305 = vpop.permute.xlu0 %3304
        %3306 = vrot.lane.b32.xlu0 %v3210, 32
        %v3307 = vpop.permute.xlu0 %3306
        %3308 = vrot.lane.b32.xlu0 %v3214, 32
        %v3309 = vpop.permute.xlu0 %3308
        %3310 = vrot.lane.b32.xlu0 %v3217, 32
        %v3311 = vpop.permute.xlu0 %3310
        %3312 = vrot.lane.b32.xlu0 %v3221, 32
        %v3313 = vpop.permute.xlu0 %3312
        %3314 = vrot.lane.b32.xlu0 %v3224, 32
        %v3315 = vpop.permute.xlu0 %3314
        %3316 = vrot.lane.b32.xlu0 %v3228, 32
        %v3317 = vpop.permute.xlu0 %3316
        %3318 = vrot.lane.b32.xlu0 %v3231, 32
        %v3319 = vpop.permute.xlu0 %3318
        %3320 = vrot.lane.b32.xlu0 %v3235, 32
        %v3321 = vpop.permute.xlu0 %3320
        %3322 = vrot.lane.b32.xlu0 %v3238, 32
        %v3323 = vpop.permute.xlu0 %3322
        %3324 = vrot.lane.b32.xlu0 %v3242, 32
        %v3325 = vpop.permute.xlu0 %3324
        %3326 = vrot.lane.b32.xlu0 %v3245, 32
        %v3327 = vpop.permute.xlu0 %3326
        %3328 = vrot.lane.b32.xlu0 %v3249, 32
        %v3329 = vpop.permute.xlu0 %3328
        %3330 = vrot.lane.b32.xlu0 %v3252, 32
        %v3331 = vpop.permute.xlu0 %3330
        %3332 = vrot.lane.b32.xlu0 %v3256, 32
        %v3333 = vpop.permute.xlu0 %3332
        %3334 = vrot.lane.b32.xlu0 %v3259, 32
        %v3335 = vpop.permute.xlu0 %3334
        %3336 = vrot.lane.b32.xlu0 %v3263, 32
        %v3337 = vpop.permute.xlu0 %3336
        %3338 = vrot.lane.b32.xlu0 %v3266, 32
        %v3339 = vpop.permute.xlu0 %3338
        %3340 = vrot.lane.b32.xlu0 %v3270, 32
        %v3341 = vpop.permute.xlu0 %3340
        %3342 = vrot.lane.b32.xlu0 %v3273, 32
        %v3343 = vpop.permute.xlu0 %3342
        %3344 = vrot.lane.b32.xlu0 %v3277, 32
        %v3345 = vpop.permute.xlu0 %3344
        %3346 = vrot.lane.b32.xlu0 %v3280, 32
        %v3347 = vpop.permute.xlu0 %3346
        %3348 = vrot.lane.b32.xlu0 %v3284, 32
        %v3349 = vpop.permute.xlu0 %3348
        %3350 = vrot.lane.b32.xlu0 %v3287, 32
        %v3351 = vpop.permute.xlu0 %3350
        %vm3384 = vcmask 290048
        %3385 = vst.msk [vmem:[#allocation2] sm:$0xf] %vm3384, %v3289
        %3386 = vst.msk [vmem:[#allocation2 + $0x4] sm:$0xf] %vm3384, %v3291
        %3387 = vst.msk [vmem:[#allocation2 + $0x8] sm:$0xf] %vm3384, %v3293
        %3388 = vst.msk [vmem:[#allocation2 + $0xc] sm:$0xf] %vm3384, %v3295
        %3389 = vst.msk [vmem:[#allocation2 + $0x10] sm:$0xf] %vm3384, %v3297
        %3390 = vst.msk [vmem:[#allocation2 + $0x14] sm:$0xf] %vm3384, %v3299
        %3391 = vst.msk [vmem:[#allocation2 + $0x18] sm:$0xf] %vm3384, %v3301
        %3392 = vst.msk [vmem:[#allocation2 + $0x1c] sm:$0xf] %vm3384, %v3303
        %3393 = vst.msk [vmem:[#allocation2 + $0x20] sm:$0xf] %vm3384, %v3305
        %3394 = vst.msk [vmem:[#allocation2 + $0x24] sm:$0xf] %vm3384, %v3307
        %3395 = vst.msk [vmem:[#allocation2 + $0x28] sm:$0xf] %vm3384, %v3309
        %3396 = vst.msk [vmem:[#allocation2 + $0x2c] sm:$0xf] %vm3384, %v3311
        %3397 = vst.msk [vmem:[#allocation2 + $0x30] sm:$0xf] %vm3384, %v3313
        %3398 = vst.msk [vmem:[#allocation2 + $0x34] sm:$0xf] %vm3384, %v3315
        %3399 = vst.msk [vmem:[#allocation2 + $0x38] sm:$0xf] %vm3384, %v3317
        %3400 = vst.msk [vmem:[#allocation2 + $0x3c] sm:$0xf] %vm3384, %v3319
        %3401 = vst.msk [vmem:[#allocation2 + $0x40] sm:$0xf] %vm3384, %v3321
        %3402 = vst.msk [vmem:[#allocation2 + $0x44] sm:$0xf] %vm3384, %v3323
        %3403 = vst.msk [vmem:[#allocation2 + $0x48] sm:$0xf] %vm3384, %v3325
        %3404 = vst.msk [vmem:[#allocation2 + $0x4c] sm:$0xf] %vm3384, %v3327
        %3405 = vst.msk [vmem:[#allocation2 + $0x50] sm:$0xf] %vm3384, %v3329
        %3406 = vst.msk [vmem:[#allocation2 + $0x54] sm:$0xf] %vm3384, %v3331
        %3407 = vst.msk [vmem:[#allocation2 + $0x58] sm:$0xf] %vm3384, %v3333
        %3408 = vst.msk [vmem:[#allocation2 + $0x5c] sm:$0xf] %vm3384, %v3335
        %3409 = vst.msk [vmem:[#allocation2 + $0x60] sm:$0xf] %vm3384, %v3337
        %3410 = vst.msk [vmem:[#allocation2 + $0x64] sm:$0xf] %vm3384, %v3339
        %3411 = vst.msk [vmem:[#allocation2 + $0x68] sm:$0xf] %vm3384, %v3341
        %3412 = vst.msk [vmem:[#allocation2 + $0x6c] sm:$0xf] %vm3384, %v3343
        %3413 = vst.msk [vmem:[#allocation2 + $0x70] sm:$0xf] %vm3384, %v3345
        %3414 = vst.msk [vmem:[#allocation2 + $0x74] sm:$0xf] %vm3384, %v3347
        %3415 = vst.msk [vmem:[#allocation2 + $0x78] sm:$0xf] %vm3384, %v3349
        %3416 = vst.msk [vmem:[#allocation2 + $0x7c] sm:$0xf] %vm3384, %v3351
      $region36: #{_conv_impl.1} parent=31 // pred_fallthru
        _
      %v3417 = vld [vmem:[#allocation2] sm:$0xf]
      %v3418 = vld [vmem:[#allocation2 + $0x4] sm:$0xf]
      %v3419 = vld [vmem:[#allocation2 + $0x8] sm:$0xf]
      %v3420 = vld [vmem:[#allocation2 + $0xc] sm:$0xf]
      %v3421 = vld [vmem:[#allocation2 + $0x10] sm:$0xf]
      %v3422 = vld [vmem:[#allocation2 + $0x14] sm:$0xf]
      %v3423 = vld [vmem:[#allocation2 + $0x18] sm:$0xf]
      %v3424 = vld [vmem:[#allocation2 + $0x1c] sm:$0xf]
      %v3425 = vld [vmem:[#allocation2 + $0x20] sm:$0xf]
      %v3426 = vld [vmem:[#allocation2 + $0x24] sm:$0xf]
      %v3427 = vld [vmem:[#allocation2 + $0x28] sm:$0xf]
      %v3428 = vld [vmem:[#allocation2 + $0x2c] sm:$0xf]
      %v3429 = vld [vmem:[#allocation2 + $0x30] sm:$0xf]
      %v3430 = vld [vmem:[#allocation2 + $0x34] sm:$0xf]
      %v3431 = vld [vmem:[#allocation2 + $0x38] sm:$0xf]
      %v3432 = vld [vmem:[#allocation2 + $0x3c] sm:$0xf]
      %v3433 = vld [vmem:[#allocation2 + $0x40] sm:$0xf]
      %v3434 = vld [vmem:[#allocation2 + $0x44] sm:$0xf]
      %v3435 = vld [vmem:[#allocation2 + $0x48] sm:$0xf]
      %v3436 = vld [vmem:[#allocation2 + $0x4c] sm:$0xf]
      %v3437 = vld [vmem:[#allocation2 + $0x50] sm:$0xf]
      %v3438 = vld [vmem:[#allocation2 + $0x54] sm:$0xf]
      %v3439 = vld [vmem:[#allocation2 + $0x58] sm:$0xf]
      %v3440 = vld [vmem:[#allocation2 + $0x5c] sm:$0xf]
      %v3441 = vld [vmem:[#allocation2 + $0x60] sm:$0xf]
      %v3442 = vld [vmem:[#allocation2 + $0x64] sm:$0xf]
      %v3443 = vld [vmem:[#allocation2 + $0x68] sm:$0xf]
      %v3444 = vld [vmem:[#allocation2 + $0x6c] sm:$0xf]
      %v3445 = vld [vmem:[#allocation2 + $0x70] sm:$0xf]
      %v3446 = vld [vmem:[#allocation2 + $0x74] sm:$0xf]
      %v3447 = vld [vmem:[#allocation2 + $0x78] sm:$0xf]
      %v3448 = vld [vmem:[#allocation2 + $0x7c] sm:$0xf]
      %v3449 = vld [vmem:[%s240] sm:$0xf]
      %v3450 = vld [vmem:[%s240 + $0x4] sm:$0xf]
      %v3451 = vld [vmem:[%s240 + $0x8] sm:$0xf]
      %v3452 = vld [vmem:[%s240 + $0xc] sm:$0xf]
      %v3453 = vld [vmem:[%s240 + $0x10] sm:$0x3]
      %v3486 = vunpack.c.l.b16 %v3417
      %v3487 = vunpack.c.l.b16 %v3418
      %v3488 = vunpack.c.l.b16 %v3419
      %v3489 = vunpack.c.l.b16 %v3420
      %v3490 = vunpack.c.l.b16 %v3421
      %v3491 = vunpack.c.l.b16 %v3422
      %v3492 = vunpack.c.l.b16 %v3423
      %v3493 = vunpack.c.l.b16 %v3424
      %v3494 = vunpack.c.l.b16 %v3425
      %v3495 = vunpack.c.l.b16 %v3426
      %v3496 = vunpack.c.l.b16 %v3427
      %v3497 = vunpack.c.l.b16 %v3428
      %v3498 = vunpack.c.l.b16 %v3429
      %v3499 = vunpack.c.l.b16 %v3430
      %v3500 = vunpack.c.l.b16 %v3431
      %v3501 = vunpack.c.l.b16 %v3432
      %v3502 = vunpack.c.l.b16 %v3433
      %v3503 = vunpack.c.l.b16 %v3434
      %v3504 = vunpack.c.l.b16 %v3435
      %v3505 = vunpack.c.l.b16 %v3436
      %v3506 = vunpack.c.l.b16 %v3437
      %v3507 = vunpack.c.l.b16 %v3438
      %v3508 = vunpack.c.l.b16 %v3439
      %v3509 = vunpack.c.l.b16 %v3440
      %v3510 = vunpack.c.l.b16 %v3441
      %v3511 = vunpack.c.l.b16 %v3442
      %v3512 = vunpack.c.l.b16 %v3443
      %v3513 = vunpack.c.l.b16 %v3444
      %v3514 = vunpack.c.l.b16 %v3445
      %v3515 = vunpack.c.l.b16 %v3446
      %v3516 = vunpack.c.l.b16 %v3447
      %v3517 = vunpack.c.l.b16 %v3448
      %v3518 = vpack.c.b16 %v3487, %v3486
      %v3519 = vpack.c.b16 %v3489, %v3488
      %v3520 = vpack.c.b16 %v3491, %v3490
      %v3521 = vpack.c.b16 %v3493, %v3492
      %v3522 = vpack.c.b16 %v3495, %v3494
      %v3523 = vpack.c.b16 %v3497, %v3496
      %v3524 = vpack.c.b16 %v3499, %v3498
      %v3525 = vpack.c.b16 %v3501, %v3500
      %v3526 = vpack.c.b16 %v3503, %v3502
      %v3527 = vpack.c.b16 %v3505, %v3504
      %v3528 = vpack.c.b16 %v3507, %v3506
      %v3529 = vpack.c.b16 %v3509, %v3508
      %v3530 = vpack.c.b16 %v3511, %v3510
      %v3531 = vpack.c.b16 %v3513, %v3512
      %v3532 = vpack.c.b16 %v3515, %v3514
      %v3533 = vpack.c.b16 %v3517, %v3516
      %v3539 = vunpack.c.l.b16 %v3449
      %v3540 = vunpack.c.l.b16 %v3450
      %v3541 = vunpack.c.l.b16 %v3451
      %v3542 = vunpack.c.l.b16 %v3452
      %v3543 = vunpack.c.l.b16 %v3453
      %v3544 = vpack.c.b16 %v3540, %v3539
      %v3545 = vpack.c.b16 %v3542, %v3541
      %v3546 = vpack.c.b16 %v3543, %v3543
      %vm3549 = vcmask 293888
      %v3551 = vsel %vm3549, %v3518, 0
      %v3554 = vsel %vm3549, %v3519, 0
      %v3557 = vsel %vm3549, %v3520, 0
      %v3560 = vsel %vm3549, %v3521, 0
      %v3563 = vsel %vm3549, %v3522, 0
      %v3566 = vsel %vm3549, %v3523, 0
      %v3569 = vsel %vm3549, %v3524, 0
      %v3572 = vsel %vm3549, %v3525, 0
      %v3575 = vsel %vm3549, %v3526, 0
      %v3578 = vsel %vm3549, %v3527, 0
      %v3581 = vsel %vm3549, %v3528, 0
      %v3584 = vsel %vm3549, %v3529, 0
      %v3587 = vsel %vm3549, %v3530, 0
      %v3590 = vsel %vm3549, %v3531, 0
      %v3593 = vsel %vm3549, %v3532, 0
      %v3596 = vsel %vm3549, %v3533, 0
      %vm3598 = vcmask 1041408
      %v3600 = vsel %vm3598, %v3546, 0
      %3602 = vmatprep.subr.bf16.mxu0 0
      %3603 = vmatpush1.bf16.msra.mxu0 0
      %3604 = vmatprep.subr.bf16.mxu0 0
      %3605 = vmatpush1.bf16.msra.mxu0 0
      %3606 = vmatprep.subr.bf16.mxu0 0
      %3607 = vmatpush1.bf16.msra.mxu0 0
      %3608 = vmatprep.subr.bf16.mxu0 0
      %3609 = vmatpush1.bf16.msra.mxu0 0
      %3610 = vmatprep.subr.bf16.mxu0 0
      %3611 = vmatpush1.bf16.msra.mxu0 0
      %3612 = vmatprep.subr.bf16.mxu0 0
      %3613 = vmatpush1.bf16.msra.mxu0 %v3600
      %3614 = vmatprep.subr.bf16.mxu0 0
      %3615 = vmatpush1.bf16.msra.mxu0 %v3545
      %3616 = vmatprep.subr.bf16.mxu0 0
      %3617 = vmatpush1.bf16.msra.mxu0 %v3544
      %3618 = vmatprep.subr.bf16.mxu0 0
      %3619 = vmatpush2.bf16.msra.mxu0 0
      %3620 = vmatprep.subr.bf16.mxu0 0
      %3621 = vmatpush2.bf16.msra.mxu0 0
      %3622 = vmatprep.subr.bf16.mxu0 0
      %3623 = vmatpush2.bf16.msra.mxu0 0
      %3624 = vmatprep.subr.bf16.mxu0 0
      %3625 = vmatpush2.bf16.msra.mxu0 0
      %3626 = vmatprep.subr.bf16.mxu0 0
      %3627 = vmatpush2.bf16.msra.mxu0 0
      %3628 = vmatprep.subr.bf16.mxu0 0
      %3629 = vmatpush2.bf16.msra.mxu0 0
      %3630 = vmatprep.subr.bf16.mxu0 0
      %3631 = vmatpush2.bf16.msra.mxu0 0
      %3632 = vmatprep.subr.bf16.mxu0 0
      %3633 = vmatpush2.bf16.msra.mxu0 0
      %3634 = vmatprep.mubr.bf16.mxu0 0
      %3635 = vmatmul.mubr.bf16.gmra.mxu0 %v3551
      %v3636 = vpop.f32.mrf.mxu0
      %v3637 = vadd.f32 0.0, %v3636
      %v3638 = vpop.f32.mrf.mxu0
      %v3639 = vpop.f32.mrf.mxu0
      %v3640 = vadd.f32 0.0, %v3639
      %v3641 = vpop.f32.mrf.mxu0
      %3642 = vmatprep.mubr.bf16.mxu0 0
      %3643 = vmatmul.mubr.bf16.gmra.mxu0 %v3554
      %v3644 = vpop.f32.mrf.mxu0
      %v3645 = vadd.f32 0.0, %v3644
      %v3646 = vpop.f32.mrf.mxu0
      %v3647 = vpop.f32.mrf.mxu0
      %v3648 = vadd.f32 0.0, %v3647
      %v3649 = vpop.f32.mrf.mxu0
      %3650 = vmatprep.mubr.bf16.mxu0 0
      %3651 = vmatmul.mubr.bf16.gmra.mxu0 %v3557
      %v3652 = vpop.f32.mrf.mxu0
      %v3653 = vadd.f32 0.0, %v3652
      %v3654 = vpop.f32.mrf.mxu0
      %v3655 = vpop.f32.mrf.mxu0
      %v3656 = vadd.f32 0.0, %v3655
      %v3657 = vpop.f32.mrf.mxu0
      %3658 = vmatprep.mubr.bf16.mxu0 0
      %3659 = vmatmul.mubr.bf16.gmra.mxu0 %v3560
      %v3660 = vpop.f32.mrf.mxu0
      %v3661 = vadd.f32 0.0, %v3660
      %v3662 = vpop.f32.mrf.mxu0
      %v3663 = vpop.f32.mrf.mxu0
      %v3664 = vadd.f32 0.0, %v3663
      %v3665 = vpop.f32.mrf.mxu0
      %3666 = vmatprep.mubr.bf16.mxu0 0
      %3667 = vmatmul.mubr.bf16.gmra.mxu0 %v3563
      %v3668 = vpop.f32.mrf.mxu0
      %v3669 = vadd.f32 0.0, %v3668
      %v3670 = vpop.f32.mrf.mxu0
      %v3671 = vpop.f32.mrf.mxu0
      %v3672 = vadd.f32 0.0, %v3671
      %v3673 = vpop.f32.mrf.mxu0
      %3674 = vmatprep.mubr.bf16.mxu0 0
      %3675 = vmatmul.mubr.bf16.gmra.mxu0 %v3566
      %v3676 = vpop.f32.mrf.mxu0
      %v3677 = vadd.f32 0.0, %v3676
      %v3678 = vpop.f32.mrf.mxu0
      %v3679 = vpop.f32.mrf.mxu0
      %v3680 = vadd.f32 0.0, %v3679
      %v3681 = vpop.f32.mrf.mxu0
      %3682 = vmatprep.mubr.bf16.mxu0 0
      %3683 = vmatmul.mubr.bf16.gmra.mxu0 %v3569
      %v3684 = vpop.f32.mrf.mxu0
      %v3685 = vadd.f32 0.0, %v3684
      %v3686 = vpop.f32.mrf.mxu0
      %v3687 = vpop.f32.mrf.mxu0
      %v3688 = vadd.f32 0.0, %v3687
      %v3689 = vpop.f32.mrf.mxu0
      %3690 = vmatprep.mubr.bf16.mxu0 0
      %3691 = vmatmul.mubr.bf16.gmra.mxu0 %v3572
      %v3692 = vpop.f32.mrf.mxu0
      %v3693 = vadd.f32 0.0, %v3692
      %v3694 = vpop.f32.mrf.mxu0
      %v3695 = vpop.f32.mrf.mxu0
      %v3696 = vadd.f32 0.0, %v3695
      %v3697 = vpop.f32.mrf.mxu0
      %3698 = vmatprep.mubr.bf16.mxu0 0
      %3699 = vmatmul.mubr.bf16.gmra.mxu0 %v3575
      %v3700 = vpop.f32.mrf.mxu0
      %v3701 = vadd.f32 0.0, %v3700
      %v3702 = vpop.f32.mrf.mxu0
      %v3703 = vpop.f32.mrf.mxu0
      %v3704 = vadd.f32 0.0, %v3703
      %v3705 = vpop.f32.mrf.mxu0
      %3706 = vmatprep.mubr.bf16.mxu0 0
      %3707 = vmatmul.mubr.bf16.gmra.mxu0 %v3578
      %v3708 = vpop.f32.mrf.mxu0
      %v3709 = vadd.f32 0.0, %v3708
      %v3710 = vpop.f32.mrf.mxu0
      %v3711 = vpop.f32.mrf.mxu0
      %v3712 = vadd.f32 0.0, %v3711
      %v3713 = vpop.f32.mrf.mxu0
      %3714 = vmatprep.mubr.bf16.mxu0 0
      %3715 = vmatmul.mubr.bf16.gmra.mxu0 %v3581
      %v3716 = vpop.f32.mrf.mxu0
      %v3717 = vadd.f32 0.0, %v3716
      %v3718 = vpop.f32.mrf.mxu0
      %v3719 = vpop.f32.mrf.mxu0
      %v3720 = vadd.f32 0.0, %v3719
      %v3721 = vpop.f32.mrf.mxu0
      %3722 = vmatprep.mubr.bf16.mxu0 0
      %3723 = vmatmul.mubr.bf16.gmra.mxu0 %v3584
      %v3724 = vpop.f32.mrf.mxu0
      %v3725 = vadd.f32 0.0, %v3724
      %v3726 = vpop.f32.mrf.mxu0
      %v3727 = vpop.f32.mrf.mxu0
      %v3728 = vadd.f32 0.0, %v3727
      %v3729 = vpop.f32.mrf.mxu0
      %3730 = vmatprep.mubr.bf16.mxu0 0
      %3731 = vmatmul.mubr.bf16.gmra.mxu0 %v3587
      %v3732 = vpop.f32.mrf.mxu0
      %v3733 = vadd.f32 0.0, %v3732
      %v3734 = vpop.f32.mrf.mxu0
      %v3735 = vpop.f32.mrf.mxu0
      %v3736 = vadd.f32 0.0, %v3735
      %v3737 = vpop.f32.mrf.mxu0
      %3738 = vmatprep.mubr.bf16.mxu0 0
      %3739 = vmatmul.mubr.bf16.gmra.mxu0 %v3590
      %v3740 = vpop.f32.mrf.mxu0
      %v3741 = vadd.f32 0.0, %v3740
      %v3742 = vpop.f32.mrf.mxu0
      %v3743 = vpop.f32.mrf.mxu0
      %v3744 = vadd.f32 0.0, %v3743
      %v3745 = vpop.f32.mrf.mxu0
      %3746 = vmatprep.mubr.bf16.mxu0 0
      %3747 = vmatmul.mubr.bf16.gmra.mxu0 %v3593
      %v3748 = vpop.f32.mrf.mxu0
      %v3749 = vadd.f32 0.0, %v3748
      %v3750 = vpop.f32.mrf.mxu0
      %v3751 = vpop.f32.mrf.mxu0
      %v3752 = vadd.f32 0.0, %v3751
      %v3753 = vpop.f32.mrf.mxu0
      %3754 = vmatprep.mubr.bf16.mxu0 0
      %3755 = vmatmul.mubr.bf16.gmra.mxu0 %v3596
      %v3756 = vpop.f32.mrf.mxu0
      %v3757 = vadd.f32 0.0, %v3756
      %v3758 = vpop.f32.mrf.mxu0
      %v3759 = vpop.f32.mrf.mxu0
      %v3760 = vadd.f32 0.0, %v3759
      %v3761 = vpop.f32.mrf.mxu0
      %3762 = vdwg.mxu0
      %v3763 = vld [vmem:[%s244] sm:$0x1]
      %v3764 = vlaneseq
      %v3765 = vshrl.u32 %v3764, 7
      %v3766 = vsub.s32 0, %v3765
      %v3767 = vrot.slane %v3763, %v3766
      %v3768 = vmul.f32 %v3637, %v3767
      %v3769 = vmul.f32 %v3640, %v3767
      %v3770 = vmul.f32 %v3645, %v3767
      %v3771 = vmul.f32 %v3648, %v3767
      %v3772 = vmul.f32 %v3653, %v3767
      %v3773 = vmul.f32 %v3656, %v3767
      %v3774 = vmul.f32 %v3661, %v3767
      %v3775 = vmul.f32 %v3664, %v3767
      %v3776 = vmul.f32 %v3669, %v3767
      %v3777 = vmul.f32 %v3672, %v3767
      %v3778 = vmul.f32 %v3677, %v3767
      %v3779 = vmul.f32 %v3680, %v3767
      %v3780 = vmul.f32 %v3685, %v3767
      %v3781 = vmul.f32 %v3688, %v3767
      %v3782 = vmul.f32 %v3693, %v3767
      %v3783 = vmul.f32 %v3696, %v3767
      %v3784 = vmul.f32 %v3701, %v3767
      %v3785 = vmul.f32 %v3704, %v3767
      %v3786 = vmul.f32 %v3709, %v3767
      %v3787 = vmul.f32 %v3712, %v3767
      %v3788 = vmul.f32 %v3717, %v3767
      %v3789 = vmul.f32 %v3720, %v3767
      %v3790 = vmul.f32 %v3725, %v3767
      %v3791 = vmul.f32 %v3728, %v3767
      %v3792 = vmul.f32 %v3733, %v3767
      %v3793 = vmul.f32 %v3736, %v3767
      %v3794 = vmul.f32 %v3741, %v3767
      %v3795 = vmul.f32 %v3744, %v3767
      %v3796 = vmul.f32 %v3749, %v3767
      %v3797 = vmul.f32 %v3752, %v3767
      %v3798 = vmul.f32 %v3757, %v3767
      %v3799 = vmul.f32 %v3760, %v3767
      %v3800 = vld [vmem:[%s244 + $0x1] sm:$0x1]
      %v3801 = vlaneseq
      %v3802 = vshrl.u32 %v3801, 7
      %v3803 = vsub.s32 0, %v3802
      %v3804 = vrot.slane %v3800, %v3803
      %v3805 = vadd.f32 %v3768, %v3804
      %v3806 = vadd.f32 %v3769, %v3804
      %v3807 = vadd.f32 %v3770, %v3804
      %v3808 = vadd.f32 %v3771, %v3804
      %v3809 = vadd.f32 %v3772, %v3804
      %v3810 = vadd.f32 %v3773, %v3804
      %v3811 = vadd.f32 %v3774, %v3804
      %v3812 = vadd.f32 %v3775, %v3804
      %v3813 = vadd.f32 %v3776, %v3804
      %v3814 = vadd.f32 %v3777, %v3804
      %v3815 = vadd.f32 %v3778, %v3804
      %v3816 = vadd.f32 %v3779, %v3804
      %v3817 = vadd.f32 %v3780, %v3804
      %v3818 = vadd.f32 %v3781, %v3804
      %v3819 = vadd.f32 %v3782, %v3804
      %v3820 = vadd.f32 %v3783, %v3804
      %v3821 = vadd.f32 %v3784, %v3804
      %v3822 = vadd.f32 %v3785, %v3804
      %v3823 = vadd.f32 %v3786, %v3804
      %v3824 = vadd.f32 %v3787, %v3804
      %v3825 = vadd.f32 %v3788, %v3804
      %v3826 = vadd.f32 %v3789, %v3804
      %v3827 = vadd.f32 %v3790, %v3804
      %v3828 = vadd.f32 %v3791, %v3804
      %v3829 = vadd.f32 %v3792, %v3804
      %v3830 = vadd.f32 %v3793, %v3804
      %v3831 = vadd.f32 %v3794, %v3804
      %v3832 = vadd.f32 %v3795, %v3804
      %v3833 = vadd.f32 %v3796, %v3804
      %v3834 = vadd.f32 %v3797, %v3804
      %v3835 = vadd.f32 %v3798, %v3804
      %v3836 = vadd.f32 %v3799, %v3804
      %v3837 = vmul.f32 %v3805, 0.5
      %v3838 = vmul.f32 %v3806, 0.5
      %v3839 = vmul.f32 %v3807, 0.5
      %v3840 = vmul.f32 %v3808, 0.5
      %v3841 = vmul.f32 %v3809, 0.5
      %v3842 = vmul.f32 %v3810, 0.5
      %v3843 = vmul.f32 %v3811, 0.5
      %v3844 = vmul.f32 %v3812, 0.5
      %v3845 = vmul.f32 %v3813, 0.5
      %v3846 = vmul.f32 %v3814, 0.5
      %v3847 = vmul.f32 %v3815, 0.5
      %v3848 = vmul.f32 %v3816, 0.5
      %v3849 = vmul.f32 %v3817, 0.5
      %v3850 = vmul.f32 %v3818, 0.5
      %v3851 = vmul.f32 %v3819, 0.5
      %v3852 = vmul.f32 %v3820, 0.5
      %v3853 = vmul.f32 %v3821, 0.5
      %v3854 = vmul.f32 %v3822, 0.5
      %v3855 = vmul.f32 %v3823, 0.5
      %v3856 = vmul.f32 %v3824, 0.5
      %v3857 = vmul.f32 %v3825, 0.5
      %v3858 = vmul.f32 %v3826, 0.5
      %v3859 = vmul.f32 %v3827, 0.5
      %v3860 = vmul.f32 %v3828, 0.5
      %v3861 = vmul.f32 %v3829, 0.5
      %v3862 = vmul.f32 %v3830, 0.5
      %v3863 = vmul.f32 %v3831, 0.5
      %v3864 = vmul.f32 %v3832, 0.5
      %v3865 = vmul.f32 %v3833, 0.5
      %v3866 = vmul.f32 %v3834, 0.5
      %v3867 = vmul.f32 %v3835, 0.5
      %v3868 = vmul.f32 %v3836, 0.5
      %v3869 = vtanh.pop %v3837
      %v3870 = vtanh.pop %v3838
      %v3871 = vtanh.pop %v3839
      %v3872 = vtanh.pop %v3840
      %v3873 = vtanh.pop %v3841
      %v3874 = vtanh.pop %v3842
      %v3875 = vtanh.pop %v3843
      %v3876 = vtanh.pop %v3844
      %v3877 = vtanh.pop %v3845
      %v3878 = vtanh.pop %v3846
      %v3879 = vtanh.pop %v3847
      %v3880 = vtanh.pop %v3848
      %v3881 = vtanh.pop %v3849
      %v3882 = vtanh.pop %v3850
      %v3883 = vtanh.pop %v3851
      %v3884 = vtanh.pop %v3852
      %v3885 = vtanh.pop %v3853
      %v3886 = vtanh.pop %v3854
      %v3887 = vtanh.pop %v3855
      %v3888 = vtanh.pop %v3856
      %v3889 = vtanh.pop %v3857
      %v3890 = vtanh.pop %v3858
      %v3891 = vtanh.pop %v3859
      %v3892 = vtanh.pop %v3860
      %v3893 = vtanh.pop %v3861
      %v3894 = vtanh.pop %v3862
      %v3895 = vtanh.pop %v3863
      %v3896 = vtanh.pop %v3864
      %v3897 = vtanh.pop %v3865
      %v3898 = vtanh.pop %v3866
      %v3899 = vtanh.pop %v3867
      %v3900 = vtanh.pop %v3868
      %v3901 = vmul.f32 %v3869, 0.5
      %v3902 = vmul.f32 %v3870, 0.5
      %v3903 = vmul.f32 %v3871, 0.5
      %v3904 = vmul.f32 %v3872, 0.5
      %v3905 = vmul.f32 %v3873, 0.5
      %v3906 = vmul.f32 %v3874, 0.5
      %v3907 = vmul.f32 %v3875, 0.5
      %v3908 = vmul.f32 %v3876, 0.5
      %v3909 = vmul.f32 %v3877, 0.5
      %v3910 = vmul.f32 %v3878, 0.5
      %v3911 = vmul.f32 %v3879, 0.5
      %v3912 = vmul.f32 %v3880, 0.5
      %v3913 = vmul.f32 %v3881, 0.5
      %v3914 = vmul.f32 %v3882, 0.5
      %v3915 = vmul.f32 %v3883, 0.5
      %v3916 = vmul.f32 %v3884, 0.5
      %v3917 = vmul.f32 %v3885, 0.5
      %v3918 = vmul.f32 %v3886, 0.5
      %v3919 = vmul.f32 %v3887, 0.5
      %v3920 = vmul.f32 %v3888, 0.5
      %v3921 = vmul.f32 %v3889, 0.5
      %v3922 = vmul.f32 %v3890, 0.5
      %v3923 = vmul.f32 %v3891, 0.5
      %v3924 = vmul.f32 %v3892, 0.5
      %v3925 = vmul.f32 %v3893, 0.5
      %v3926 = vmul.f32 %v3894, 0.5
      %v3927 = vmul.f32 %v3895, 0.5
      %v3928 = vmul.f32 %v3896, 0.5
      %v3929 = vmul.f32 %v3897, 0.5
      %v3930 = vmul.f32 %v3898, 0.5
      %v3931 = vmul.f32 %v3899, 0.5
      %v3932 = vmul.f32 %v3900, 0.5
      %v3933 = vadd.f32 %v3901, 0.5
      %v3934 = vadd.f32 %v3902, 0.5
      %v3935 = vadd.f32 %v3903, 0.5
      %v3936 = vadd.f32 %v3904, 0.5
      %v3937 = vadd.f32 %v3905, 0.5
      %v3938 = vadd.f32 %v3906, 0.5
      %v3939 = vadd.f32 %v3907, 0.5
      %v3940 = vadd.f32 %v3908, 0.5
      %v3941 = vadd.f32 %v3909, 0.5
      %v3942 = vadd.f32 %v3910, 0.5
      %v3943 = vadd.f32 %v3911, 0.5
      %v3944 = vadd.f32 %v3912, 0.5
      %v3945 = vadd.f32 %v3913, 0.5
      %v3946 = vadd.f32 %v3914, 0.5
      %v3947 = vadd.f32 %v3915, 0.5
      %v3948 = vadd.f32 %v3916, 0.5
      %v3949 = vadd.f32 %v3917, 0.5
      %v3950 = vadd.f32 %v3918, 0.5
      %v3951 = vadd.f32 %v3919, 0.5
      %v3952 = vadd.f32 %v3920, 0.5
      %v3953 = vadd.f32 %v3921, 0.5
      %v3954 = vadd.f32 %v3922, 0.5
      %v3955 = vadd.f32 %v3923, 0.5
      %v3956 = vadd.f32 %v3924, 0.5
      %v3957 = vadd.f32 %v3925, 0.5
      %v3958 = vadd.f32 %v3926, 0.5
      %v3959 = vadd.f32 %v3927, 0.5
      %v3960 = vadd.f32 %v3928, 0.5
      %v3961 = vadd.f32 %v3929, 0.5
      %v3962 = vadd.f32 %v3930, 0.5
      %v3963 = vadd.f32 %v3931, 0.5
      %v3964 = vadd.f32 %v3932, 0.5
      %v3965 = vmul.f32 %v3805, %v3933
      %v3966 = vmul.f32 %v3806, %v3934
      %v3967 = vmul.f32 %v3807, %v3935
      %v3968 = vmul.f32 %v3808, %v3936
      %v3969 = vmul.f32 %v3809, %v3937
      %v3970 = vmul.f32 %v3810, %v3938
      %v3971 = vmul.f32 %v3811, %v3939
      %v3972 = vmul.f32 %v3812, %v3940
      %v3973 = vmul.f32 %v3813, %v3941
      %v3974 = vmul.f32 %v3814, %v3942
      %v3975 = vmul.f32 %v3815, %v3943
      %v3976 = vmul.f32 %v3816, %v3944
      %v3977 = vmul.f32 %v3817, %v3945
      %v3978 = vmul.f32 %v3818, %v3946
      %v3979 = vmul.f32 %v3819, %v3947
      %v3980 = vmul.f32 %v3820, %v3948
      %v3981 = vmul.f32 %v3821, %v3949
      %v3982 = vmul.f32 %v3822, %v3950
      %v3983 = vmul.f32 %v3823, %v3951
      %v3984 = vmul.f32 %v3824, %v3952
      %v3985 = vmul.f32 %v3825, %v3953
      %v3986 = vmul.f32 %v3826, %v3954
      %v3987 = vmul.f32 %v3827, %v3955
      %v3988 = vmul.f32 %v3828, %v3956
      %v3989 = vmul.f32 %v3829, %v3957
      %v3990 = vmul.f32 %v3830, %v3958
      %v3991 = vmul.f32 %v3831, %v3959
      %v3992 = vmul.f32 %v3832, %v3960
      %v3993 = vmul.f32 %v3833, %v3961
      %v3994 = vmul.f32 %v3834, %v3962
      %v3995 = vmul.f32 %v3835, %v3963
      %v3996 = vmul.f32 %v3836, %v3964
      %3997 = vst [vmem:[%s257] sm:$0xff] %v3965
      %3998 = vst [vmem:[%s257 + $0x8] sm:$0xff] %v3966
      %3999 = vst [vmem:[%s257 + $0x10] sm:$0xff] %v3967
      %4000 = vst [vmem:[%s257 + $0x18] sm:$0xff] %v3968
      %4001 = vst [vmem:[%s257 + $0x20] sm:$0xff] %v3969
      %4002 = vst [vmem:[%s257 + $0x28] sm:$0xff] %v3970
      %4003 = vst [vmem:[%s257 + $0x30] sm:$0xff] %v3971
      %4004 = vst [vmem:[%s257 + $0x38] sm:$0xff] %v3972
      %4005 = vst [vmem:[%s257 + $0x40] sm:$0xff] %v3973
      %4006 = vst [vmem:[%s257 + $0x48] sm:$0xff] %v3974
      %4007 = vst [vmem:[%s257 + $0x50] sm:$0xff] %v3975
      %4008 = vst [vmem:[%s257 + $0x58] sm:$0xff] %v3976
      %4009 = vst [vmem:[%s257 + $0x60] sm:$0xff] %v3977
      %4010 = vst [vmem:[%s257 + $0x68] sm:$0xff] %v3978
      %4011 = vst [vmem:[%s257 + $0x70] sm:$0xff] %v3979
      %4012 = vst [vmem:[%s257 + $0x78] sm:$0xff] %v3980
      %4013 = vst [vmem:[%s257 + $0x80] sm:$0xff] %v3981
      %4014 = vst [vmem:[%s257 + $0x88] sm:$0xff] %v3982
      %4015 = vst [vmem:[%s257 + $0x90] sm:$0xff] %v3983
      %4016 = vst [vmem:[%s257 + $0x98] sm:$0xff] %v3984
      %4017 = vst [vmem:[%s257 + $0xa0] sm:$0xff] %v3985
      %4018 = vst [vmem:[%s257 + $0xa8] sm:$0xff] %v3986
      %4019 = vst [vmem:[%s257 + $0xb0] sm:$0xff] %v3987
      %4020 = vst [vmem:[%s257 + $0xb8] sm:$0xff] %v3988
      %4021 = vst [vmem:[%s257 + $0xc0] sm:$0xff] %v3989
      %4022 = vst [vmem:[%s257 + $0xc8] sm:$0xff] %v3990
      %4023 = vst [vmem:[%s257 + $0xd0] sm:$0xff] %v3991
      %4024 = vst [vmem:[%s257 + $0xd8] sm:$0xff] %v3992
      %4025 = vst [vmem:[%s257 + $0xe0] sm:$0xff] %v3993
      %4026 = vst [vmem:[%s257 + $0xe8] sm:$0xff] %v3994
      %4027 = vst [vmem:[%s257 + $0xf0] sm:$0xff] %v3995
      %4028 = vst [vmem:[%s257 + $0xf8] sm:$0xff] %v3996
      %s4029 = smul.u32 16, %s20
      %p4030 = scmp.lt.s32.totalorder %s19, 1
      %s4031 = scalar_select %p4030, %s19, 1
      %p4032 = scmp.lt.s32.totalorder %s4029, 15
      %s4033 = scalar_select %p4032, %s4029, 15
      %p4034 = scmp.lt.s32.totalorder %s21, 0
      %s4035 = scalar_select %p4034, %s21, 0
      %s4036 = smul.addr %s4033, 2
      %s4037 = sadd.s32 %s4035, %s4036
      %s4038 = smul.addr %s4031, 32
      %s4039 = sadd.s32 %s4037, %s4038
      %s4040 = smul.addr %s4039, 8
      %s4041 = scalar_lea.vmem %s3, %s4040
      // Predicated region
      $region37: #{_conv_impl.1} parent=31 // pred_check
        %p4042 = pneg %p135
      $region38: #{_conv_impl.1} parent=31 // pred_check_branch
        %4044 = sbr.rel (%p4042) target = $region40
      $region39: #{_conv_impl.1} parent=31 // pred_region
        %s4045 = smul.u32 16, %s20
      $region40: #{_conv_impl.1} parent=31 // pred_fallthru
        _
    $region32: #{_conv_impl.1} parent=5 // pred_fallthru
      _
    %p4046 = scmp.le.s32.totalorder 2, %s9
    // Predicated region
    $region41: #{_conv_impl.1} parent=5 // pred_check
      %p4047 = pneg %p4046
    $region42: #{_conv_impl.1} parent=5 // pred_check_branch
      %4049 = sbr.rel (%p4047) target = $region44
    $region43: #{_conv_impl.1} parent=5 // pred_region
      %s4050 = ssub.s32 %s9, 2
      // Predicated region
      $region45: #{_conv_impl.1} parent=43 // pred_check
        %p4051 = pneg %p141
      $region46: #{_conv_impl.1} parent=43 // pred_check_branch
        %4053 = sbr.rel (%p4051) target = $region48
      $region47: #{_conv_impl.1} parent=43 // pred_region
        %s4054 = smul.u32 16, %s23
        %p4055 = scmp.lt.s32.totalorder %s22, 1
        %s4056 = scalar_select %p4055, %s22, 1
        %p4057 = scmp.lt.s32.totalorder %s4054, 15
        %s4058 = scalar_select %p4057, %s4054, 15
        %p4059 = scmp.lt.s32.totalorder %s24, 0
        %s4060 = scalar_select %p4059, %s24, 0
        %s4061 = smul.addr %s4058, 2
        %s4062 = sadd.s32 %s4060, %s4061
        %s4063 = smul.addr %s4056, 32
        %s4064 = sadd.s32 %s4062, %s4063
        %s4065 = smul.addr %s4064, 8
        %s4066 = scalar_lea.vmem %s3, %s4065
      $region48: #{_conv_impl.1} parent=43 // pred_fallthru
        _
    $region44: #{_conv_impl.1} parent=5 // pred_fallthru
      _
  $region6: #{_conv_impl.1} parent=0 // loop_footer
    %s13 = sadd.s32 1, %s9
  $region7: #{_conv_impl.1} parent=0 // loop_footer_branch
    %8 = sbr.rel target = $region3
  $region8: #{_conv_impl.1} parent=0 // loop_exit
    _

// kernel: _conv_impl.1
$region0: #{_conv_impl.1}
  #allocation0 [shape = 'u32[]', space=smem, size = 0x4, offset = 0x4, fixed_abs, tag = 'smem constant byte address 0x4 - core index']
  #allocation1 [shape = 'u32[144,128]{1,0:T(1,128)}', space=vmem, size = 0x12000, scoped, tag = 'internal scratch']
  #allocation2 [shape = 'bf16[256,36]{1,0:T(8,128)(2,1)}', space=vmem, size = 0x10000, scoped, tag = 'scratch operand']
  %s0 = inlined_call_operand.vmem [shape: bf16[2,1,18,18,4], index: 0, kind: input, shape index: {}]
  %s1 = inlined_call_operand.vmem [shape: bf16[36,128], index: 1, kind: input, shape index: {}]
  %s2 = inlined_call_operand.vmem [shape: f32[2,128], index: 2, kind: input, shape index: {}]
  %s3 = inlined_call_operand.vmem [shape: f32[2,16,16,128], index: 3, kind: output, shape index: {}]
  %s4 = sld [smem:[#allocation0]]
  $region49: #{_conv_impl.1} parent=0
    _
  %s6 = ssub.s32 1, %s4
  %s7 = scalar_select 0, %s6, %s4
  loop: start=0, step=1, limit=4
  $region2: #{_conv_impl.1} parent=0 // loop_pre_header
    _
  $region3: #{_conv_impl.1} parent=0 // loop_header
    %s9 = sphi 0, %s13
    %p10 = scmp.ge.s32.totalorder %s9, 4
    %s16 = sphi 0, %s35
    %s17 = sphi 0, %s31
    %s18 = sphi 0, %s27
    %s19 = sphi 0, %s16
    %s20 = sphi 0, %s17
    %s21 = sphi 0, %s18
    %s22 = sphi 0, %s19
    %s23 = sphi 0, %s20
    %s24 = sphi 0, %s21
    %s40 = sphi 0, %s42
    %s43 = sphi 0, %s40
    %s44 = sphi 0, %s43
    %s60 = sphi 0, %s44
    %s66 = sphi 0, %s68
    %s69 = sphi 0, %s66
    %s70 = sphi 0, %s69
    %s86 = sphi 0, %s70
    %s92 = sphi 0, %s94
    %s95 = sphi 0, %s92
    %s96 = sphi 0, %s95
    %s112 = sphi 0, %s96
    %s122 = sphi 0, %s124
    %s125 = sphi 0, %s122
    %s126 = sphi 0, %s125
    %s142 = sphi 0, %s126
  $region4: #{_conv_impl.1} parent=0 // loop_header_branch
    %12 = sbr.rel (%p10) target = $region8
  $region5: #{_conv_impl.1} parent=0 // loop_body
    %s14 = ssub.s32 %s9, 1
    %s15 = ssub.s32 %s9, 2
    %s25 = sadd.s32 1, %s18
    %p26 = scmp.ge.s32.totalorder %s25, 1
    %s27 = scalar_select %p26, 0, %s25
    %s28 = sadd.s32 1, %s17
    %s29 = scalar_select %p26, %s28, %s17
    %p30 = scmp.ge.s32.totalorder %s29, 1
    %s31 = scalar_select %p30, 0, %s29
    %s32 = sadd.s32 1, %s16
    %s33 = scalar_select %p30, %s32, %s16
    %p34 = scmp.ge.s32.totalorder %s33, 2
    %s35 = scalar_select %p34, 0, %s33
    %s36 = ssub.s32 %s16, %s35
    %s37 = ssub.s32 %s17, %s31
    %s38 = sor.u32 %s36, %s37
    %p39 = scmp.eq.s32.totalorder %s38, 0
    %s41 = sadd.s32 %s40, 1
    %s42 = scalar_select %p39, %s40, %s41
    %p45 = pneg %p39
    %p46 = scmp.eq.s32.totalorder %s9, 1
    %p47 = por %p45, %p46
    %p48 = scmp.ne.s32.totalorder %s40, %s43
    %p49 = scmp.eq.s32.totalorder %s9, 0
    %p50 = por %p48, %p49
    %p51 = scmp.ne.s32.totalorder %s40, %s43
    %p52 = scmp.eq.s32.totalorder %s14, 1
    %p53 = por %p51, %p52
    %p54 = scmp.ne.s32.totalorder %s43, %s44
    %p55 = scmp.eq.s32.totalorder %s14, 0
    %p56 = por %p54, %p55
    %p57 = scmp.ne.s32.totalorder %s43, %s44
    %p58 = scmp.eq.s32.totalorder %s15, 1
    %p59 = por %p57, %p58
    %p61 = scmp.ne.s32.totalorder %s44, %s60
    %p62 = scmp.eq.s32.totalorder %s15, 0
    %p63 = por %p61, %p62
    %s64 = ssub.s32 %s18, %s27
    %p65 = scmp.eq.s32.totalorder %s64, 0
    %s67 = sadd.s32 %s66, 1
    %s68 = scalar_select %p65, %s66, %s67
    %p71 = pneg %p65
    %p72 = scmp.eq.s32.totalorder %s9, 1
    %p73 = por %p71, %p72
    %p74 = scmp.ne.s32.totalorder %s66, %s69
    %p75 = scmp.eq.s32.totalorder %s9, 0
    %p76 = por %p74, %p75
    %p77 = scmp.ne.s32.totalorder %s66, %s69
    %p78 = scmp.eq.s32.totalorder %s14, 1
    %p79 = por %p77, %p78
    %p80 = scmp.ne.s32.totalorder %s69, %s70
    %p81 = scmp.eq.s32.totalorder %s14, 0
    %p82 = por %p80, %p81
    %p83 = scmp.ne.s32.totalorder %s69, %s70
    %p84 = scmp.eq.s32.totalorder %s15, 1
    %p85 = por %p83, %p84
    %p87 = scmp.ne.s32.totalorder %s70, %s86
    %p88 = scmp.eq.s32.totalorder %s15, 0
    %p89 = por %p87, %p88
    %s90 = ssub.s32 %s18, %s27
    %p91 = scmp.eq.s32.totalorder %s90, 0
    %s93 = sadd.s32 %s92, 1
    %s94 = scalar_select %p91, %s92, %s93
    %p97 = pneg %p91
    %p98 = scmp.eq.s32.totalorder %s9, 1
    %p99 = por %p97, %p98
    %p100 = scmp.ne.s32.totalorder %s92, %s95
    %p101 = scmp.eq.s32.totalorder %s9, 0
    %p102 = por %p100, %p101
    %p103 = scmp.ne.s32.totalorder %s92, %s95
    %p104 = scmp.eq.s32.totalorder %s14, 1
    %p105 = por %p103, %p104
    %p106 = scmp.ne.s32.totalorder %s95, %s96
    %p107 = scmp.eq.s32.totalorder %s14, 0
    %p108 = por %p106, %p107
    %p109 = scmp.ne.s32.totalorder %s95, %s96
    %p110 = scmp.eq.s32.totalorder %s15, 1
    %p111 = por %p109, %p110
    %p113 = scmp.ne.s32.totalorder %s96, %s112
    %p114 = scmp.eq.s32.totalorder %s15, 0
    %p115 = por %p113, %p114
    %s116 = ssub.s32 %s16, %s35
    %s117 = ssub.s32 %s17, %s31
    %s118 = sor.u32 %s116, %s117
    %s119 = ssub.s32 %s18, %s27
    %s120 = sor.u32 %s118, %s119
    %p121 = scmp.eq.s32.totalorder %s120, 0
    %s123 = sadd.s32 %s122, 1
    %s124 = scalar_select %p121, %s122, %s123
    %p127 = pneg %p121
    %p128 = scmp.eq.s32.totalorder %s9, 1
    %p129 = por %p127, %p128
    %p130 = scmp.ne.s32.totalorder %s122, %s125
    %p131 = scmp.eq.s32.totalorder %s9, 0
    %p132 = por %p130, %p131
    %p133 = scmp.ne.s32.totalorder %s122, %s125
    %p134 = scmp.eq.s32.totalorder %s14, 1
    %p135 = por %p133, %p134
    %p136 = scmp.ne.s32.totalorder %s125, %s126
    %p137 = scmp.eq.s32.totalorder %s14, 0
    %p138 = por %p136, %p137
    %p139 = scmp.ne.s32.totalorder %s125, %s126
    %p140 = scmp.eq.s32.totalorder %s15, 1
    %p141 = por %p139, %p140
    %p143 = scmp.ne.s32.totalorder %s126, %s142
    %p144 = scmp.eq.s32.totalorder %s15, 0
    %p145 = por %p143, %p144
    %p146 = scmp.le.s32.totalorder 1, %s9
    %p147 = scmp.lt.s32.totalorder %s9, 3
    %p148 = pnand %p146, %p147
    %p149 = pneg %p148
    // Predicated region
    $region9: #{_conv_impl.1} parent=5 // pred_check
      _
    $region10: #{_conv_impl.1} parent=5 // pred_check_branch
      %151 = sbr.rel (%p148) target = $region12
    $region11: #{_conv_impl.1} parent=5 // pred_region
      %s152 = ssub.s32 %s9, 1
      // Predicated region
      $region13: #{_conv_impl.1} parent=11 // pred_check
        %p153 = pneg %p82
      $region14: #{_conv_impl.1} parent=11 // pred_check_branch
        %155 = sbr.rel (%p153) target = $region16
      $region15: #{_conv_impl.1} parent=11 // pred_region
        %p156 = scmp.lt.s32.totalorder %s21, 0
        %s157 = scalar_select %p156, %s21, 0
        %s158 = smul.addr %s157, 4
        %s159 = scalar_lea.vmem %s1, %s158
      $region16: #{_conv_impl.1} parent=11 // pred_fallthru
        _
      // Predicated region
      $region17: #{_conv_impl.1} parent=11 // pred_check
        %p160 = pneg %p108
      $region18: #{_conv_impl.1} parent=11 // pred_check_branch
        %162 = sbr.rel (%p160) target = $region20
      $region19: #{_conv_impl.1} parent=11 // pred_region
        %p163 = scmp.lt.s32.totalorder %s21, 0
        %s164 = scalar_select %p163, %s21, 0
        %s165 = smul.addr %s164, 2
        %s166 = scalar_lea.vmem %s2, %s165
      $region20: #{_conv_impl.1} parent=11 // pred_fallthru
        _
    $region12: #{_conv_impl.1} parent=5 // pred_fallthru
      _
    %p167 = scmp.lt.s32.totalorder %s9, 2
    // Predicated region
    $region21: #{_conv_impl.1} parent=5 // pred_check
      %p168 = pneg %p167
    $region22: #{_conv_impl.1} parent=5 // pred_check_branch
      %170 = sbr.rel (%p168) target = $region24
    $region23: #{_conv_impl.1} parent=5 // pred_region
      // Predicated region
      $region25: #{_conv_impl.1} parent=23 // pred_check
        %p171 = pneg %p50
      $region26: #{_conv_impl.1} parent=23 // pred_check_branch
        %173 = sbr.rel (%p171) target = $region28
      $region27: #{_conv_impl.1} parent=23 // pred_region
        %p174 = scmp.lt.s32.totalorder %s16, 1
        %s175 = scalar_select %p174, %s16, 1
        %p176 = scmp.lt.s32.totalorder %s17, 0
        %s177 = scalar_select %p176, %s17, 0
        %s178 = smul.addr %s177, 54
        %s179 = smul.addr %s175, 54
        %s180 = sadd.s32 %s178, %s179
        %s181 = smul.addr %s180, 4
        %s182 = scalar_lea.vmem %s0, %s181
      $region28: #{_conv_impl.1} parent=23 // pred_fallthru
        _
    $region24: #{_conv_impl.1} parent=5 // pred_fallthru
      _
    %p183 = scmp.le.s32.totalorder 1, %s9
    %p184 = scmp.lt.s32.totalorder %s9, 3
    %p185 = pnand %p183, %p184
    %p186 = pneg %p185
    // Predicated region
    $region29: #{_conv_impl.1} parent=5 // pred_check
      _
    $region30: #{_conv_impl.1} parent=5 // pred_check_branch
      %188 = sbr.rel (%p185) target = $region32
    $region31: #{_conv_impl.1} parent=5 // pred_region
      %s189 = ssub.s32 %s9, 1
      %p190 = scmp.lt.s32.totalorder %s19, 1
      %s191 = scalar_select %p190, %s19, 1
      %p192 = scmp.lt.s32.totalorder %s20, 0
      %s193 = scalar_select %p192, %s20, 0
      %s194 = smul.addr %s193, 54
      %s195 = smul.addr %s191, 54
      %s196 = sadd.s32 %s194, %s195
      %s197 = smul.addr %s196, 4
      %s198 = scalar_lea.vmem %s0, %s197
      %p199 = pneg %p56
      %p200 = pneg %p53
      %p201 = scmp.lt.s32.totalorder %s21, 0
      %s202 = scalar_select %p201, %s21, 0
      %s203 = smul.addr %s202, 4
      %s204 = scalar_lea.vmem %s1, %s203
      %p205 = pneg %p82
      %p206 = pneg %p79
      %p207 = scmp.lt.s32.totalorder %s21, 0
      %s208 = scalar_select %p207, %s21, 0
      %s209 = smul.addr %s208, 2
      %s210 = scalar_lea.vmem %s2, %s209
      %p211 = pneg %p108
      %p212 = pneg %p105
      %p213 = pneg %p138
      %p214 = pneg %p135
      %s215 = smul.u32 16, %s20
      %p216 = scmp.lt.s32.totalorder %s19, 1
      %s217 = scalar_select %p216, %s19, 1
      %p218 = scmp.lt.s32.totalorder %s215, 15
      %s219 = scalar_select %p218, %s215, 15
      %p220 = scmp.lt.s32.totalorder %s21, 0
      %s221 = scalar_select %p220, %s21, 0
      %s222 = smul.addr %s219, 2
      %s223 = sadd.s32 %s221, %s222
      %s224 = smul.addr %s217, 32
      %s225 = sadd.s32 %s223, %s224
      %s226 = smul.addr %s225, 8
      %s227 = scalar_lea.vmem %s3, %s226
      %p228 = scmp.lt.s32.totalorder %s19, 1
      %s229 = scalar_select %p228, %s19, 1
      %p230 = scmp.lt.s32.totalorder %s20, 0
      %s231 = scalar_select %p230, %s20, 0
      %s232 = smul.addr %s231, 54
      %s233 = smul.addr %s229, 54
      %s234 = sadd.s32 %s232, %s233
      %s235 = smul.addr %s234, 4
      %s236 = scalar_lea.vmem %s0, %s235
      %p237 = scmp.lt.s32.totalorder %s21, 0
      %s238 = scalar_select %p237, %s21, 0
      %s239 = smul.addr %s238, 4
      %s240 = scalar_lea.vmem %s1, %s239
      %p241 = scmp.lt.s32.totalorder %s21, 0
      %s242 = scalar_select %p241, %s21, 0
      %s243 = smul.addr %s242, 2
      %s244 = scalar_lea.vmem %s2, %s243
      %s245 = smul.u32 16, %s20
      %p246 = scmp.lt.s32.totalorder %s19, 1
      %s247 = scalar_select %p246, %s19, 1
      %p248 = scmp.lt.s32.totalorder %s245, 15
      %s249 = scalar_select %p248, %s245, 15
      %p250 = scmp.lt.s32.totalorder %s21, 0
      %s251 = scalar_select %p250, %s21, 0
      %s252 = smul.addr %s249, 2
      %s253 = sadd.s32 %s251, %s252
      %s254 = smul.addr %s247, 32
      %s255 = sadd.s32 %s253, %s254
      %s256 = smul.addr %s255, 8
      %s257 = scalar_lea.vmem %s3, %s256
      %s258 = smul.u32 16, %s20
      %p260 = scmp.eq.s32.totalorder %s21, 0
      // Predicated region
      $region33: #{_conv_impl.1} parent=31 // pred_check
        %p261 = pneg %p260
      $region34: #{_conv_impl.1} parent=31 // pred_check_branch
        %263 = sbr.rel (%p261) target = $region36
      $region35: #{_conv_impl.1} parent=31 // pred_region
        %v264 = vld [vmem:[%s236] sm:$0xf]
        %v265 = vld [vmem:[%s236 + $0x4] sm:$0xf]
        %v266 = vld [vmem:[%s236 + $0xc] sm:$0xf]
        %v267 = vld [vmem:[%s236 + $0x10] sm:$0xf]
        %v268 = vld [vmem:[%s236 + $0x18] sm:$0xf]
        %v269 = vld [vmem:[%s236 + $0x1c] sm:$0xf]
        %v270 = vld [vmem:[%s236 + $0x24] sm:$0xf]
        %v271 = vld [vmem:[%s236 + $0x28] sm:$0xf]
        %v272 = vld [vmem:[%s236 + $0x30] sm:$0xf]
        %v273 = vld [vmem:[%s236 + $0x34] sm:$0xf]
        %v274 = vld [vmem:[%s236 + $0x3c] sm:$0xf]
        %v275 = vld [vmem:[%s236 + $0x40] sm:$0xf]
        %v276 = vld [vmem:[%s236 + $0x48] sm:$0xf]
        %v277 = vld [vmem:[%s236 + $0x4c] sm:$0xf]
        %v278 = vld [vmem:[%s236 + $0x54] sm:$0xf]
        %v279 = vld [vmem:[%s236 + $0x58] sm:$0xf]
        %v280 = vld [vmem:[%s236 + $0x60] sm:$0xf]
        %v281 = vld [vmem:[%s236 + $0x64] sm:$0xf]
        %v282 = vld [vmem:[%s236 + $0x6c] sm:$0xf]
        %v283 = vld [vmem:[%s236 + $0x70] sm:$0xf]
        %v284 = vld [vmem:[%s236 + $0x78] sm:$0xf]
        %v285 = vld [vmem:[%s236 + $0x7c] sm:$0xf]
        %v286 = vld [vmem:[%s236 + $0x84] sm:$0xf]
        %v287 = vld [vmem:[%s236 + $0x88] sm:$0xf]
        %v288 = vld [vmem:[%s236 + $0x90] sm:$0xf]
        %v289 = vld [vmem:[%s236 + $0x94] sm:$0xf]
        %v290 = vld [vmem:[%s236 + $0x9c] sm:$0xf]
        %v291 = vld [vmem:[%s236 + $0xa0] sm:$0xf]
        %v292 = vld [vmem:[%s236 + $0xa8] sm:$0xf]
        %v293 = vld [vmem:[%s236 + $0xac] sm:$0xf]
        %v294 = vld [vmem:[%s236 + $0xb4] sm:$0xf]
        %v295 = vld [vmem:[%s236 + $0xb8] sm:$0xf]
        %vm296 = vcmask 27648
        %297 = vst.msk [vmem:[#allocation2] sm:$0xf] %vm296, %v264
        %298 = vst.msk [vmem:[#allocation2 + $0x4] sm:$0xf] %vm296, %v265
        %299 = vst.msk [vmem:[#allocation2 + $0x8] sm:$0xf] %vm296, %v266
        %300 = vst.msk [vmem:[#allocation2 + $0xc] sm:$0xf] %vm296, %v267
        %301 = vst.msk [vmem:[#allocation2 + $0x10] sm:$0xf] %vm296, %v268
        %302 = vst.msk [vmem:[#allocation2 + $0x14] sm:$0xf] %vm296, %v269
        %303 = vst.msk [vmem:[#allocation2 + $0x18] sm:$0xf] %vm296, %v270
        %304 = vst.msk [vmem:[#allocation2 + $0x1c] sm:$0xf] %vm296, %v271
        %305 = vst.msk [vmem:[#allocation2 + $0x20] sm:$0xf] %vm296, %v272
        %306 = vst.msk [vmem:[#allocation2 + $0x24] sm:$0xf] %vm296, %v273
        %307 = vst.msk [vmem:[#allocation2 + $0x28] sm:$0xf] %vm296, %v274
        %308 = vst.msk [vmem:[#allocation2 + $0x2c] sm:$0xf] %vm296, %v275
        %309 = vst.msk [vmem:[#allocation2 + $0x30] sm:$0xf] %vm296, %v276
        %310 = vst.msk [vmem:[#allocation2 + $0x34] sm:$0xf] %vm296, %v277
        %311 = vst.msk [vmem:[#allocation2 + $0x38] sm:$0xf] %vm296, %v278
        %312 = vst.msk [vmem:[#allocation2 + $0x3c] sm:$0xf] %vm296, %v279
        %313 = vst.msk [vmem:[#allocation2 + $0x40] sm:$0xf] %vm296, %v280
        %314 = vst.msk [vmem:[#allocation2 + $0x44] sm:$0xf] %vm296, %v281
        %315 = vst.msk [vmem:[#allocation2 + $0x48] sm:$0xf] %vm296, %v282
        %316 = vst.msk [vmem:[#allocation2 + $0x4c] sm:$0xf] %vm296, %v283
        %317 = vst.msk [vmem:[#allocation2 + $0x50] sm:$0xf] %vm296, %v284
        %318 = vst.msk [vmem:[#allocation2 + $0x54] sm:$0xf] %vm296, %v285
        %319 = vst.msk [vmem:[#allocation2 + $0x58] sm:$0xf] %vm296, %v286
        %320 = vst.msk [vmem:[#allocation2 + $0x5c] sm:$0xf] %vm296, %v287
        %321 = vst.msk [vmem:[#allocation2 + $0x60] sm:$0xf] %vm296, %v288
        %322 = vst.msk [vmem:[#allocation2 + $0x64] sm:$0xf] %vm296, %v289
        %323 = vst.msk [vmem:[#allocation2 + $0x68] sm:$0xf] %vm296, %v290
        %324 = vst.msk [vmem:[#allocation2 + $0x6c] sm:$0xf] %vm296, %v291
        %325 = vst.msk [vmem:[#allocation2 + $0x70] sm:$0xf] %vm296, %v292
        %326 = vst.msk [vmem:[#allocation2 + $0x74] sm:$0xf] %vm296, %v293
        %327 = vst.msk [vmem:[#allocation2 + $0x78] sm:$0xf] %vm296, %v294
        %328 = vst.msk [vmem:[#allocation2 + $0x7c] sm:$0xf] %vm296, %v295
        %v329 = vld [vmem:[%s236] sm:$0xf]
        %v330 = vld [vmem:[%s236 + $0x4] sm:$0xf]
        %v331 = vld [vmem:[%s236 + $0x8] sm:$0x1]
        %v332 = vld [vmem:[%s236 + $0xc] sm:$0xf]
        %v333 = vld [vmem:[%s236 + $0x10] sm:$0xf]
        %v334 = vld [vmem:[%s236 + $0x14] sm:$0x1]
        %v335 = vld [vmem:[%s236 + $0x18] sm:$0xf]
        %v336 = vld [vmem:[%s236 + $0x1c] sm:$0xf]
        %v337 = vld [vmem:[%s236 + $0x20] sm:$0x1]
        %v338 = vld [vmem:[%s236 + $0x24] sm:$0xf]
        %v339 = vld [vmem:[%s236 + $0x28] sm:$0xf]
        %v340 = vld [vmem:[%s236 + $0x2c] sm:$0x1]
        %v341 = vld [vmem:[%s236 + $0x30] sm:$0xf]
        %v342 = vld [vmem:[%s236 + $0x34] sm:$0xf]
        %v343 = vld [vmem:[%s236 + $0x38] sm:$0x1]
        %v344 = vld [vmem:[%s236 + $0x3c] sm:$0xf]
        %v345 = vld [vmem:[%s236 + $0x40] sm:$0xf]
        %v346 = vld [vmem:[%s236 + $0x44] sm:$0x1]
        %v347 = vld [vmem:[%s236 + $0x48] sm:$0xf]
        %v348 = vld [vmem:[%s236 + $0x4c] sm:$0xf]
        %v349 = vld [vmem:[%s236 + $0x50] sm:$0x1]
        %v350 = vld [vmem:[%s236 + $0x54] sm:$0xf]
        %v351 = vld [vmem:[%s236 + $0x58] sm:$0xf]
        %v352 = vld [vmem:[%s236 + $0x5c] sm:$0x1]
        %v353 = vld [vmem:[%s236 + $0x60] sm:$0xf]
        %v354 = vld [vmem:[%s236 + $0x64] sm:$0xf]
        %v355 = vld [vmem:[%s236 + $0x68] sm:$0x1]
        %v356 = vld [vmem:[%s236 + $0x6c] sm:$0xf]
        %v357 = vld [vmem:[%s236 + $0x70] sm:$0xf]
        %v358 = vld [vmem:[%s236 + $0x74] sm:$0x1]
        %v359 = vld [vmem:[%s236 + $0x78] sm:$0xf]
        %v360 = vld [vmem:[%s236 + $0x7c] sm:$0xf]
        %v361 = vld [vmem:[%s236 + $0x80] sm:$0x1]
        %v362 = vld [vmem:[%s236 + $0x84] sm:$0xf]
        %v363 = vld [vmem:[%s236 + $0x88] sm:$0xf]
        %v364 = vld [vmem:[%s236 + $0x8c] sm:$0x1]
        %v365 = vld [vmem:[%s236 + $0x90] sm:$0xf]
        %v366 = vld [vmem:[%s236 + $0x94] sm:$0xf]
        %v367 = vld [vmem:[%s236 + $0x98] sm:$0x1]
        %v368 = vld [vmem:[%s236 + $0x9c] sm:$0xf]
        %v369 = vld [vmem:[%s236 + $0xa0] sm:$0xf]
        %v370 = vld [vmem:[%s236 + $0xa4] sm:$0x1]
        %v371 = vld [vmem:[%s236 + $0xa8] sm:$0xf]
        %v372 = vld [vmem:[%s236 + $0xac] sm:$0xf]
        %v373 = vld [vmem:[%s236 + $0xb0] sm:$0x1]
        %v374 = vld [vmem:[%s236 + $0xb4] sm:$0xf]
        %v375 = vld [vmem:[%s236 + $0xb8] sm:$0xf]
        %v376 = vld [vmem:[%s236 + $0xbc] sm:$0x1]
        %vm377 = vsmask.f32 3328
        %vm378 = vsmask.f32 7440
        %vm379 = vmor %vm377, %vm378
        %v381 = vshrl.u32 %v329, 16
        %v383 = vrot.slane %v381, 4
        %v384 = vshll.u32 %v329, 16
        %v386 = vrot.slane %v384, 5
        %v387 = vor.u32 %v383, %v386
        %v388 = vrot.slane %v387, 4
        %v390 = vshll.u32 %v330, 16
        %v392 = vrot.slane %v390, 5
        %v393 = vsel %vm379, %v388, %v392
        %v394 = vshrl.u32 %v330, 16
        %v396 = vrot.slane %v394, 4
        %v397 = vor.u32 %v396, %v392
        %v398 = vrot.slane %v397, 4
        %v400 = vshll.u32 %v331, 16
        %v402 = vrot.slane %v400, 5
        %v403 = vsel %vm379, %v398, %v402
        %v405 = vshrl.u32 %v332, 16
        %v407 = vrot.slane %v405, 4
        %v408 = vshll.u32 %v332, 16
        %v410 = vrot.slane %v408, 5
        %v411 = vor.u32 %v407, %v410
        %v412 = vrot.slane %v411, 4
        %v414 = vshll.u32 %v333, 16
        %v416 = vrot.slane %v414, 5
        %v417 = vsel %vm379, %v412, %v416
        %v418 = vshrl.u32 %v333, 16
        %v420 = vrot.slane %v418, 4
        %v421 = vor.u32 %v420, %v416
        %v422 = vrot.slane %v421, 4
        %v424 = vshll.u32 %v334, 16
        %v426 = vrot.slane %v424, 5
        %v427 = vsel %vm379, %v422, %v426
        %v429 = vshrl.u32 %v335, 16
        %v431 = vrot.slane %v429, 4
        %v432 = vshll.u32 %v335, 16
        %v434 = vrot.slane %v432, 5
        %v435 = vor.u32 %v431, %v434
        %v436 = vrot.slane %v435, 4
        %v438 = vshll.u32 %v336, 16
        %v440 = vrot.slane %v438, 5
        %v441 = vsel %vm379, %v436, %v440
        %v442 = vshrl.u32 %v336, 16
        %v444 = vrot.slane %v442, 4
        %v445 = vor.u32 %v444, %v440
        %v446 = vrot.slane %v445, 4
        %v448 = vshll.u32 %v337, 16
        %v450 = vrot.slane %v448, 5
        %v451 = vsel %vm379, %v446, %v450
        %v453 = vshrl.u32 %v338, 16
        %v455 = vrot.slane %v453, 4
        %v456 = vshll.u32 %v338, 16
        %v458 = vrot.slane %v456, 5
        %v459 = vor.u32 %v455, %v458
        %v460 = vrot.slane %v459, 4
        %v462 = vshll.u32 %v339, 16
        %v464 = vrot.slane %v462, 5
        %v465 = vsel %vm379, %v460, %v464
        %v466 = vshrl.u32 %v339, 16
        %v468 = vrot.slane %v466, 4
        %v469 = vor.u32 %v468, %v464
        %v470 = vrot.slane %v469, 4
        %v472 = vshll.u32 %v340, 16
        %v474 = vrot.slane %v472, 5
        %v475 = vsel %vm379, %v470, %v474
        %v477 = vshrl.u32 %v341, 16
        %v479 = vrot.slane %v477, 4
        %v480 = vshll.u32 %v341, 16
        %v482 = vrot.slane %v480, 5
        %v483 = vor.u32 %v479, %v482
        %v484 = vrot.slane %v483, 4
        %v486 = vshll.u32 %v342, 16
        %v488 = vrot.slane %v486, 5
        %v489 = vsel %vm379, %v484, %v488
        %v490 = vshrl.u32 %v342, 16
        %v492 = vrot.slane %v490, 4
        %v493 = vor.u32 %v492, %v488
        %v494 = vrot.slane %v493, 4
        %v496 = vshll.u32 %v343, 16
        %v498 = vrot.slane %v496, 5
        %v499 = vsel %vm379, %v494, %v498
        %v501 = vshrl.u32 %v344, 16
        %v503 = vrot.slane %v501, 4
        %v504 = vshll.u32 %v344, 16
        %v506 = vrot.slane %v504, 5
        %v507 = vor.u32 %v503, %v506
        %v508 = vrot.slane %v507, 4
        %v510 = vshll.u32 %v345, 16
        %v512 = vrot.slane %v510, 5
        %v513 = vsel %vm379, %v508, %v512
        %v514 = vshrl.u32 %v345, 16
        %v516 = vrot.slane %v514, 4
        %v517 = vor.u32 %v516, %v512
        %v518 = vrot.slane %v517, 4
        %v520 = vshll.u32 %v346, 16
        %v522 = vrot.slane %v520, 5
        %v523 = vsel %vm379, %v518, %v522
        %v525 = vshrl.u32 %v347, 16
        %v527 = vrot.slane %v525, 4
        %v528 = vshll.u32 %v347, 16
        %v530 = vrot.slane %v528, 5
        %v531 = vor.u32 %v527, %v530
        %v532 = vrot.slane %v531, 4
        %v534 = vshll.u32 %v348, 16
        %v536 = vrot.slane %v534, 5
        %v537 = vsel %vm379, %v532, %v536
        %v538 = vshrl.u32 %v348, 16
        %v540 = vrot.slane %v538, 4
        %v541 = vor.u32 %v540, %v536
        %v542 = vrot.slane %v541, 4
        %v544 = vshll.u32 %v349, 16
        %v546 = vrot.slane %v544, 5
        %v547 = vsel %vm379, %v542, %v546
        %v549 = vshrl.u32 %v350, 16
        %v551 = vrot.slane %v549, 4
        %v552 = vshll.u32 %v350, 16
        %v554 = vrot.slane %v552, 5
        %v555 = vor.u32 %v551, %v554
        %v556 = vrot.slane %v555, 4
        %v558 = vshll.u32 %v351, 16
        %v560 = vrot.slane %v558, 5
        %v561 = vsel %vm379, %v556, %v560
        %v562 = vshrl.u32 %v351, 16
        %v564 = vrot.slane %v562, 4
        %v565 = vor.u32 %v564, %v560
        %v566 = vrot.slane %v565, 4
        %v568 = vshll.u32 %v352, 16
        %v570 = vrot.slane %v568, 5
        %v571 = vsel %vm379, %v566, %v570
        %v573 = vshrl.u32 %v353, 16
        %v575 = vrot.slane %v573, 4
        %v576 = vshll.u32 %v353, 16
        %v578 = vrot.slane %v576, 5
        %v579 = vor.u32 %v575, %v578
        %v580 = vrot.slane %v579, 4
        %v582 = vshll.u32 %v354, 16
        %v584 = vrot.slane %v582, 5
        %v585 = vsel %vm379, %v580, %v584
        %v586 = vshrl.u32 %v354, 16
        %v588 = vrot.slane %v586, 4
        %v589 = vor.u32 %v588, %v584
        %v590 = vrot.slane %v589, 4
        %v592 = vshll.u32 %v355, 16
        %v594 = vrot.slane %v592, 5
        %v595 = vsel %vm379, %v590, %v594
        %v597 = vshrl.u32 %v356, 16
        %v599 = vrot.slane %v597, 4
        %v600 = vshll.u32 %v356, 16
        %v602 = vrot.slane %v600, 5
        %v603 = vor.u32 %v599, %v602
        %v604 = vrot.slane %v603, 4
        %v606 = vshll.u32 %v357, 16
        %v608 = vrot.slane %v606, 5
        %v609 = vsel %vm379, %v604, %v608
        %v610 = vshrl.u32 %v357, 16
        %v612 = vrot.slane %v610, 4
        %v613 = vor.u32 %v612, %v608
        %v614 = vrot.slane %v613, 4
        %v616 = vshll.u32 %v358, 16
        %v618 = vrot.slane %v616, 5
        %v619 = vsel %vm379, %v614, %v618
        %v621 = vshrl.u32 %v359, 16
        %v623 = vrot.slane %v621, 4
        %v624 = vshll.u32 %v359, 16
        %v626 = vrot.slane %v624, 5
        %v627 = vor.u32 %v623, %v626
        %v628 = vrot.slane %v627, 4
        %v630 = vshll.u32 %v360, 16
        %v632 = vrot.slane %v630, 5
        %v633 = vsel %vm379, %v628, %v632
        %v634 = vshrl.u32 %v360, 16
        %v636 = vrot.slane %v634, 4
        %v637 = vor.u32 %v636, %v632
        %v638 = vrot.slane %v637, 4
        %v640 = vshll.u32 %v361, 16
        %v642 = vrot.slane %v640, 5
        %v643 = vsel %vm379, %v638, %v642
        %v645 = vshrl.u32 %v362, 16
        %v647 = vrot.slane %v645, 4
        %v648 = vshll.u32 %v362, 16
        %v650 = vrot.slane %v648, 5
        %v651 = vor.u32 %v647, %v650
        %v652 = vrot.slane %v651, 4
        %v654 = vshll.u32 %v363, 16
        %v656 = vrot.slane %v654, 5
        %v657 = vsel %vm379, %v652, %v656
        %v658 = vshrl.u32 %v363, 16
        %v660 = vrot.slane %v658, 4
        %v661 = vor.u32 %v660, %v656
        %v662 = vrot.slane %v661, 4
        %v664 = vshll.u32 %v364, 16
        %v666 = vrot.slane %v664, 5
        %v667 = vsel %vm379, %v662, %v666
        %v669 = vshrl.u32 %v365, 16
        %v671 = vrot.slane %v669, 4
        %v672 = vshll.u32 %v365, 16
        %v674 = vrot.slane %v672, 5
        %v675 = vor.u32 %v671, %v674
        %v676 = vrot.slane %v675, 4
        %v678 = vshll.u32 %v366, 16
        %v680 = vrot.slane %v678, 5
        %v681 = vsel %vm379, %v676, %v680
        %v682 = vshrl.u32 %v366, 16
        %v684 = vrot.slane %v682, 4
        %v685 = vor.u32 %v684, %v680
        %v686 = vrot.slane %v685, 4
        %v688 = vshll.u32 %v367, 16
        %v690 = vrot.slane %v688, 5
        %v691 = vsel %vm379, %v686, %v690
        %v693 = vshrl.u32 %v368, 16
        %v695 = vrot.slane %v693, 4
        %v696 = vshll.u32 %v368, 16
        %v698 = vrot.slane %v696, 5
        %v699 = vor.u32 %v695, %v698
        %v700 = vrot.slane %v699, 4
        %v702 = vshll.u32 %v369, 16
        %v704 = vrot.slane %v702, 5
        %v705 = vsel %vm379, %v700, %v704
        %v706 = vshrl.u32 %v369, 16
        %v708 = vrot.slane %v706, 4
        %v709 = vor.u32 %v708, %v704
        %v710 = vrot.slane %v709, 4
        %v712 = vshll.u32 %v370, 16
        %v714 = vrot.slane %v712, 5
        %v715 = vsel %vm379, %v710, %v714
        %v717 = vshrl.u32 %v371, 16
        %v719 = vrot.slane %v717, 4
        %v720 = vshll.u32 %v371, 16
        %v722 = vrot.slane %v720, 5
        %v723 = vor.u32 %v719, %v722
        %v724 = vrot.slane %v723, 4
        %v726 = vshll.u32 %v372, 16
        %v728 = vrot.slane %v726, 5
        %v729 = vsel %vm379, %v724, %v728
        %v730 = vshrl.u32 %v372, 16
        %v732 = vrot.slane %v730, 4
        %v733 = vor.u32 %v732, %v728
        %v734 = vrot.slane %v733, 4
        %v736 = vshll.u32 %v373, 16
        %v738 = vrot.slane %v736, 5
        %v739 = vsel %vm379, %v734, %v738
        %v741 = vshrl.u32 %v374, 16
        %v743 = vrot.slane %v741, 4
        %v744 = vshll.u32 %v374, 16
        %v746 = vrot.slane %v744, 5
        %v747 = vor.u32 %v743, %v746
        %v748 = vrot.slane %v747, 4
        %v750 = vshll.u32 %v375, 16
        %v752 = vrot.slane %v750, 5
        %v753 = vsel %vm379, %v748, %v752
        %v754 = vshrl.u32 %v375, 16
        %v756 = vrot.slane %v754, 4
        %v757 = vor.u32 %v756, %v752
        %v758 = vrot.slane %v757, 4
        %v760 = vshll.u32 %v376, 16
        %v762 = vrot.slane %v760, 5
        %v763 = vsel %vm379, %v758, %v762
        %764 = vrot.lane.b32.xlu0 %v393, 4
        %v765 = vpop.permute.xlu0 %764
        %766 = vrot.lane.b32.xlu0 %v403, 4
        %v767 = vpop.permute.xlu0 %766
        %768 = vrot.lane.b32.xlu0 %v417, 4
        %v769 = vpop.permute.xlu0 %768
        %770 = vrot.lane.b32.xlu0 %v427, 4
        %v771 = vpop.permute.xlu0 %770
        %772 = vrot.lane.b32.xlu0 %v441, 4
        %v773 = vpop.permute.xlu0 %772
        %774 = vrot.lane.b32.xlu0 %v451, 4
        %v775 = vpop.permute.xlu0 %774
        %776 = vrot.lane.b32.xlu0 %v465, 4
        %v777 = vpop.permute.xlu0 %776
        %778 = vrot.lane.b32.xlu0 %v475, 4
        %v779 = vpop.permute.xlu0 %778
        %780 = vrot.lane.b32.xlu0 %v489, 4
        %v781 = vpop.permute.xlu0 %780
        %782 = vrot.lane.b32.xlu0 %v499, 4
        %v783 = vpop.permute.xlu0 %782
        %784 = vrot.lane.b32.xlu0 %v513, 4
        %v785 = vpop.permute.xlu0 %784
        %786 = vrot.lane.b32.xlu0 %v523, 4
        %v787 = vpop.permute.xlu0 %786
        %788 = vrot.lane.b32.xlu0 %v537, 4
        %v789 = vpop.permute.xlu0 %788
        %790 = vrot.lane.b32.xlu0 %v547, 4
        %v791 = vpop.permute.xlu0 %790
        %792 = vrot.lane.b32.xlu0 %v561, 4
        %v793 = vpop.permute.xlu0 %792
        %794 = vrot.lane.b32.xlu0 %v571, 4
        %v795 = vpop.permute.xlu0 %794
        %796 = vrot.lane.b32.xlu0 %v585, 4
        %v797 = vpop.permute.xlu0 %796
        %798 = vrot.lane.b32.xlu0 %v595, 4
        %v799 = vpop.permute.xlu0 %798
        %800 = vrot.lane.b32.xlu0 %v609, 4
        %v801 = vpop.permute.xlu0 %800
        %802 = vrot.lane.b32.xlu0 %v619, 4
        %v803 = vpop.permute.xlu0 %802
        %804 = vrot.lane.b32.xlu0 %v633, 4
        %v805 = vpop.permute.xlu0 %804
        %806 = vrot.lane.b32.xlu0 %v643, 4
        %v807 = vpop.permute.xlu0 %806
        %808 = vrot.lane.b32.xlu0 %v657, 4
        %v809 = vpop.permute.xlu0 %808
        %810 = vrot.lane.b32.xlu0 %v667, 4
        %v811 = vpop.permute.xlu0 %810
        %812 = vrot.lane.b32.xlu0 %v681, 4
        %v813 = vpop.permute.xlu0 %812
        %814 = vrot.lane.b32.xlu0 %v691, 4
        %v815 = vpop.permute.xlu0 %814
        %816 = vrot.lane.b32.xlu0 %v705, 4
        %v817 = vpop.permute.xlu0 %816
        %818 = vrot.lane.b32.xlu0 %v715, 4
        %v819 = vpop.permute.xlu0 %818
        %820 = vrot.lane.b32.xlu0 %v729, 4
        %v821 = vpop.permute.xlu0 %820
        %822 = vrot.lane.b32.xlu0 %v739, 4
        %v823 = vpop.permute.xlu0 %822
        %824 = vrot.lane.b32.xlu0 %v753, 4
        %v825 = vpop.permute.xlu0 %824
        %826 = vrot.lane.b32.xlu0 %v763, 4
        %v827 = vpop.permute.xlu0 %826
        %vm860 = vcmask 60448
        %861 = vst.msk [vmem:[#allocation2] sm:$0xf] %vm860, %v765
        %862 = vst.msk [vmem:[#allocation2 + $0x4] sm:$0xf] %vm860, %v767
        %863 = vst.msk [vmem:[#allocation2 + $0x8] sm:$0xf] %vm860, %v769
        %864 = vst.msk [vmem:[#allocation2 + $0xc] sm:$0xf] %vm860, %v771
        %865 = vst.msk [vmem:[#allocation2 + $0x10] sm:$0xf] %vm860, %v773
        %866 = vst.msk [vmem:[#allocation2 + $0x14] sm:$0xf] %vm860, %v775
        %867 = vst.msk [vmem:[#allocation2 + $0x18] sm:$0xf] %vm860, %v777
        %868 = vst.msk [vmem:[#allocation2 + $0x1c] sm:$0xf] %vm860, %v779
        %869 = vst.msk [vmem:[#allocation2 + $0x20] sm:$0xf] %vm860, %v781
        %870 = vst.msk [vmem:[#allocation2 + $0x24] sm:$0xf] %vm860, %v783
        %871 = vst.msk [vmem:[#allocation2 + $0x28] sm:$0xf] %vm860, %v785
        %872 = vst.msk [vmem:[#allocation2 + $0x2c] sm:$0xf] %vm860, %v787
        %873 = vst.msk [vmem:[#allocation2 + $0x30] sm:$0xf] %vm860, %v789
        %874 = vst.msk [vmem:[#allocation2 + $0x34] sm:$0xf] %vm860, %v791
        %875 = vst.msk [vmem:[#allocation2 + $0x38] sm:$0xf] %vm860, %v793
        %876 = vst.msk [vmem:[#allocation2 + $0x3c] sm:$0xf] %vm860, %v795
        %877 = vst.msk [vmem:[#allocation2 + $0x40] sm:$0xf] %vm860, %v797
        %878 = vst.msk [vmem:[#allocation2 + $0x44] sm:$0xf] %vm860, %v799
        %879 = vst.msk [vmem:[#allocation2 + $0x48] sm:$0xf] %vm860, %v801
        %880 = vst.msk [vmem:[#allocation2 + $0x4c] sm:$0xf] %vm860, %v803
        %881 = vst.msk [vmem:[#allocation2 + $0x50] sm:$0xf] %vm860, %v805
        %882 = vst.msk [vmem:[#allocation2 + $0x54] sm:$0xf] %vm860, %v807
        %883 = vst.msk [vmem:[#allocation2 + $0x58] sm:$0xf] %vm860, %v809
        %884 = vst.msk [vmem:[#allocation2 + $0x5c] sm:$0xf] %vm860, %v811
        %885 = vst.msk [vmem:[#allocation2 + $0x60] sm:$0xf] %vm860, %v813
        %886 = vst.msk [vmem:[#allocation2 + $0x64] sm:$0xf] %vm860, %v815
        %887 = vst.msk [vmem:[#allocation2 + $0x68] sm:$0xf] %vm860, %v817
        %888 = vst.msk [vmem:[#allocation2 + $0x6c] sm:$0xf] %vm860, %v819
        %889 = vst.msk [vmem:[#allocation2 + $0x70] sm:$0xf] %vm860, %v821
        %890 = vst.msk [vmem:[#allocation2 + $0x74] sm:$0xf] %vm860, %v823
        %891 = vst.msk [vmem:[#allocation2 + $0x78] sm:$0xf] %vm860, %v825
        %892 = vst.msk [vmem:[#allocation2 + $0x7c] sm:$0xf] %vm860, %v827
        %v893 = vld [vmem:[%s236] sm:$0xe]
        %v894 = vld [vmem:[%s236 + $0x4] sm:$0xf]
        %v895 = vld [vmem:[%s236 + $0x8] sm:$0x1]
        %v896 = vld [vmem:[%s236 + $0xc] sm:$0xe]
        %v897 = vld [vmem:[%s236 + $0x10] sm:$0xf]
        %v898 = vld [vmem:[%s236 + $0x14] sm:$0x1]
        %v899 = vld [vmem:[%s236 + $0x18] sm:$0xe]
        %v900 = vld [vmem:[%s236 + $0x1c] sm:$0xf]
        %v901 = vld [vmem:[%s236 + $0x20] sm:$0x1]
        %v902 = vld [vmem:[%s236 + $0x24] sm:$0xe]
        %v903 = vld [vmem:[%s236 + $0x28] sm:$0xf]
        %v904 = vld [vmem:[%s236 + $0x2c] sm:$0x1]
        %v905 = vld [vmem:[%s236 + $0x30] sm:$0xe]
        %v906 = vld [vmem:[%s236 + $0x34] sm:$0xf]
        %v907 = vld [vmem:[%s236 + $0x38] sm:$0x1]
        %v908 = vld [vmem:[%s236 + $0x3c] sm:$0xe]
        %v909 = vld [vmem:[%s236 + $0x40] sm:$0xf]
        %v910 = vld [vmem:[%s236 + $0x44] sm:$0x1]
        %v911 = vld [vmem:[%s236 + $0x48] sm:$0xe]
        %v912 = vld [vmem:[%s236 + $0x4c] sm:$0xf]
        %v913 = vld [vmem:[%s236 + $0x50] sm:$0x1]
        %v914 = vld [vmem:[%s236 + $0x54] sm:$0xe]
        %v915 = vld [vmem:[%s236 + $0x58] sm:$0xf]
        %v916 = vld [vmem:[%s236 + $0x5c] sm:$0x1]
        %v917 = vld [vmem:[%s236 + $0x60] sm:$0xe]
        %v918 = vld [vmem:[%s236 + $0x64] sm:$0xf]
        %v919 = vld [vmem:[%s236 + $0x68] sm:$0x1]
        %v920 = vld [vmem:[%s236 + $0x6c] sm:$0xe]
        %v921 = vld [vmem:[%s236 + $0x70] sm:$0xf]
        %v922 = vld [vmem:[%s236 + $0x74] sm:$0x1]
        %v923 = vld [vmem:[%s236 + $0x78] sm:$0xe]
        %v924 = vld [vmem:[%s236 + $0x7c] sm:$0xf]
        %v925 = vld [vmem:[%s236 + $0x80] sm:$0x1]
        %v926 = vld [vmem:[%s236 + $0x84] sm:$0xe]
        %v927 = vld [vmem:[%s236 + $0x88] sm:$0xf]
        %v928 = vld [vmem:[%s236 + $0x8c] sm:$0x1]
        %v929 = vld [vmem:[%s236 + $0x90] sm:$0xe]
        %v930 = vld [vmem:[%s236 + $0x94] sm:$0xf]
        %v931 = vld [vmem:[%s236 + $0x98] sm:$0x1]
        %v932 = vld [vmem:[%s236 + $0x9c] sm:$0xe]
        %v933 = vld [vmem:[%s236 + $0xa0] sm:$0xf]
        %v934 = vld [vmem:[%s236 + $0xa4] sm:$0x1]
        %v935 = vld [vmem:[%s236 + $0xa8] sm:$0xe]
        %v936 = vld [vmem:[%s236 + $0xac] sm:$0xf]
        %v937 = vld [vmem:[%s236 + $0xb0] sm:$0x1]
        %v938 = vld [vmem:[%s236 + $0xb4] sm:$0xe]
        %v939 = vld [vmem:[%s236 + $0xb8] sm:$0xf]
        %v940 = vld [vmem:[%s236 + $0xbc] sm:$0x1]
        %vm989 = vcmask 1042432
        %vm990 = vcmask 1046532
        %vm991 = vmor %vm989, %vm990
        %v992 = vrot.slane %v893, 5
        %v993 = vrot.slane %v992, 4
        %v994 = vrot.slane %v894, 5
        %v995 = vsel %vm991, %v993, %v994
        %v996 = vrot.slane %v994, 4
        %v997 = vrot.slane %v895, 5
        %v998 = vsel %vm991, %v996, %v997
        %v999 = vrot.slane %v896, 5
        %v1000 = vrot.slane %v999, 4
        %v1001 = vrot.slane %v897, 5
        %v1002 = vsel %vm991, %v1000, %v1001
        %v1003 = vrot.slane %v1001, 4
        %v1004 = vrot.slane %v898, 5
        %v1005 = vsel %vm991, %v1003, %v1004
        %v1006 = vrot.slane %v899, 5
        %v1007 = vrot.slane %v1006, 4
        %v1008 = vrot.slane %v900, 5
        %v1009 = vsel %vm991, %v1007, %v1008
        %v1010 = vrot.slane %v1008, 4
        %v1011 = vrot.slane %v901, 5
        %v1012 = vsel %vm991, %v1010, %v1011
        %v1013 = vrot.slane %v902, 5
        %v1014 = vrot.slane %v1013, 4
        %v1015 = vrot.slane %v903, 5
        %v1016 = vsel %vm991, %v1014, %v1015
        %v1017 = vrot.slane %v1015, 4
        %v1018 = vrot.slane %v904, 5
        %v1019 = vsel %vm991, %v1017, %v1018
        %v1020 = vrot.slane %v905, 5
        %v1021 = vrot.slane %v1020, 4
        %v1022 = vrot.slane %v906, 5
        %v1023 = vsel %vm991, %v1021, %v1022
        %v1024 = vrot.slane %v1022, 4
        %v1025 = vrot.slane %v907, 5
        %v1026 = vsel %vm991, %v1024, %v1025
        %v1027 = vrot.slane %v908, 5
        %v1028 = vrot.slane %v1027, 4
        %v1029 = vrot.slane %v909, 5
        %v1030 = vsel %vm991, %v1028, %v1029
        %v1031 = vrot.slane %v1029, 4
        %v1032 = vrot.slane %v910, 5
        %v1033 = vsel %vm991, %v1031, %v1032
        %v1034 = vrot.slane %v911, 5
        %v1035 = vrot.slane %v1034, 4
        %v1036 = vrot.slane %v912, 5
        %v1037 = vsel %vm991, %v1035, %v1036
        %v1038 = vrot.slane %v1036, 4
        %v1039 = vrot.slane %v913, 5
        %v1040 = vsel %vm991, %v1038, %v1039
        %v1041 = vrot.slane %v914, 5
        %v1042 = vrot.slane %v1041, 4
        %v1043 = vrot.slane %v915, 5
        %v1044 = vsel %vm991, %v1042, %v1043
        %v1045 = vrot.slane %v1043, 4
        %v1046 = vrot.slane %v916, 5
        %v1047 = vsel %vm991, %v1045, %v1046
        %v1048 = vrot.slane %v917, 5
        %v1049 = vrot.slane %v1048, 4
        %v1050 = vrot.slane %v918, 5
        %v1051 = vsel %vm991, %v1049, %v1050
        %v1052 = vrot.slane %v1050, 4
        %v1053 = vrot.slane %v919, 5
        %v1054 = vsel %vm991, %v1052, %v1053
        %v1055 = vrot.slane %v920, 5
        %v1056 = vrot.slane %v1055, 4
        %v1057 = vrot.slane %v921, 5
        %v1058 = vsel %vm991, %v1056, %v1057
        %v1059 = vrot.slane %v1057, 4
        %v1060 = vrot.slane %v922, 5
        %v1061 = vsel %vm991, %v1059, %v1060
        %v1062 = vrot.slane %v923, 5
        %v1063 = vrot.slane %v1062, 4
        %v1064 = vrot.slane %v924, 5
        %v1065 = vsel %vm991, %v1063, %v1064
        %v1066 = vrot.slane %v1064, 4
        %v1067 = vrot.slane %v925, 5
        %v1068 = vsel %vm991, %v1066, %v1067
        %v1069 = vrot.slane %v926, 5
        %v1070 = vrot.slane %v1069, 4
        %v1071 = vrot.slane %v927, 5
        %v1072 = vsel %vm991, %v1070, %v1071
        %v1073 = vrot.slane %v1071, 4
        %v1074 = vrot.slane %v928, 5
        %v1075 = vsel %vm991, %v1073, %v1074
        %v1076 = vrot.slane %v929, 5
        %v1077 = vrot.slane %v1076, 4
        %v1078 = vrot.slane %v930, 5
        %v1079 = vsel %vm991, %v1077, %v1078
        %v1080 = vrot.slane %v1078, 4
        %v1081 = vrot.slane %v931, 5
        %v1082 = vsel %vm991, %v1080, %v1081
        %v1083 = vrot.slane %v932, 5
        %v1084 = vrot.slane %v1083, 4
        %v1085 = vrot.slane %v933, 5
        %v1086 = vsel %vm991, %v1084, %v1085
        %v1087 = vrot.slane %v1085, 4
        %v1088 = vrot.slane %v934, 5
        %v1089 = vsel %vm991, %v1087, %v1088
        %v1090 = vrot.slane %v935, 5
        %v1091 = vrot.slane %v1090, 4
        %v1092 = vrot.slane %v936, 5
        %v1093 = vsel %vm991, %v1091, %v1092
        %v1094 = vrot.slane %v1092, 4
        %v1095 = vrot.slane %v937, 5
        %v1096 = vsel %vm991, %v1094, %v1095
        %v1097 = vrot.slane %v938, 5
        %v1098 = vrot.slane %v1097, 4
        %v1099 = vrot.slane %v939, 5
        %v1100 = vsel %vm991, %v1098, %v1099
        %v1101 = vrot.slane %v1099, 4
        %v1102 = vrot.slane %v940, 5
        %v1103 = vsel %vm991, %v1101, %v1102
        %1104 = vrot.lane.b32.xlu0 %v995, 8
        %v1105 = vpop.permute.xlu0 %1104
        %1106 = vrot.lane.b32.xlu0 %v998, 8
        %v1107 = vpop.permute.xlu0 %1106
        %1108 = vrot.lane.b32.xlu0 %v1002, 8
        %v1109 = vpop.permute.xlu0 %1108
        %1110 = vrot.lane.b32.xlu0 %v1005, 8
        %v1111 = vpop.permute.xlu0 %1110
        %1112 = vrot.lane.b32.xlu0 %v1009, 8
        %v1113 = vpop.permute.xlu0 %1112
        %1114 = vrot.lane.b32.xlu0 %v1012, 8
        %v1115 = vpop.permute.xlu0 %1114
        %1116 = vrot.lane.b32.xlu0 %v1016, 8
        %v1117 = vpop.permute.xlu0 %1116
        %1118 = vrot.lane.b32.xlu0 %v1019, 8
        %v1119 = vpop.permute.xlu0 %1118
        %1120 = vrot.lane.b32.xlu0 %v1023, 8
        %v1121 = vpop.permute.xlu0 %1120
        %1122 = vrot.lane.b32.xlu0 %v1026, 8
        %v1123 = vpop.permute.xlu0 %1122
        %1124 = vrot.lane.b32.xlu0 %v1030, 8
        %v1125 = vpop.permute.xlu0 %1124
        %1126 = vrot.lane.b32.xlu0 %v1033, 8
        %v1127 = vpop.permute.xlu0 %1126
        %1128 = vrot.lane.b32.xlu0 %v1037, 8
        %v1129 = vpop.permute.xlu0 %1128
        %1130 = vrot.lane.b32.xlu0 %v1040, 8
        %v1131 = vpop.permute.xlu0 %1130
        %1132 = vrot.lane.b32.xlu0 %v1044, 8
        %v1133 = vpop.permute.xlu0 %1132
        %1134 = vrot.lane.b32.xlu0 %v1047, 8
        %v1135 = vpop.permute.xlu0 %1134
        %1136 = vrot.lane.b32.xlu0 %v1051, 8
        %v1137 = vpop.permute.xlu0 %1136
        %1138 = vrot.lane.b32.xlu0 %v1054, 8
        %v1139 = vpop.permute.xlu0 %1138
        %1140 = vrot.lane.b32.xlu0 %v1058, 8
        %v1141 = vpop.permute.xlu0 %1140
        %1142 = vrot.lane.b32.xlu0 %v1061, 8
        %v1143 = vpop.permute.xlu0 %1142
        %1144 = vrot.lane.b32.xlu0 %v1065, 8
        %v1145 = vpop.permute.xlu0 %1144
        %1146 = vrot.lane.b32.xlu0 %v1068, 8
        %v1147 = vpop.permute.xlu0 %1146
        %1148 = vrot.lane.b32.xlu0 %v1072, 8
        %v1149 = vpop.permute.xlu0 %1148
        %1150 = vrot.lane.b32.xlu0 %v1075, 8
        %v1151 = vpop.permute.xlu0 %1150
        %1152 = vrot.lane.b32.xlu0 %v1079, 8
        %v1153 = vpop.permute.xlu0 %1152
        %1154 = vrot.lane.b32.xlu0 %v1082, 8
        %v1155 = vpop.permute.xlu0 %1154
        %1156 = vrot.lane.b32.xlu0 %v1086, 8
        %v1157 = vpop.permute.xlu0 %1156
        %1158 = vrot.lane.b32.xlu0 %v1089, 8
        %v1159 = vpop.permute.xlu0 %1158
        %1160 = vrot.lane.b32.xlu0 %v1093, 8
        %v1161 = vpop.permute.xlu0 %1160
        %1162 = vrot.lane.b32.xlu0 %v1096, 8
        %v1163 = vpop.permute.xlu0 %1162
        %1164 = vrot.lane.b32.xlu0 %v1100, 8
        %v1165 = vpop.permute.xlu0 %1164
        %1166 = vrot.lane.b32.xlu0 %v1103, 8
        %v1167 = vpop.permute.xlu0 %1166
        %vm1200 = vcmask 93248
        %1201 = vst.msk [vmem:[#allocation2] sm:$0xf] %vm1200, %v1105
        %1202 = vst.msk [vmem:[#allocation2 + $0x4] sm:$0xf] %vm1200, %v1107
        %1203 = vst.msk [vmem:[#allocation2 + $0x8] sm:$0xf] %vm1200, %v1109
        %1204 = vst.msk [vmem:[#allocation2 + $0xc] sm:$0xf] %vm1200, %v1111
        %1205 = vst.msk [vmem:[#allocation2 + $0x10] sm:$0xf] %vm1200, %v1113
        %1206 = vst.msk [vmem:[#allocation2 + $0x14] sm:$0xf] %vm1200, %v1115
        %1207 = vst.msk [vmem:[#allocation2 + $0x18] sm:$0xf] %vm1200, %v1117
        %1208 = vst.msk [vmem:[#allocation2 + $0x1c] sm:$0xf] %vm1200, %v1119
        %1209 = vst.msk [vmem:[#allocation2 + $0x20] sm:$0xf] %vm1200, %v1121
        %1210 = vst.msk [vmem:[#allocation2 + $0x24] sm:$0xf] %vm1200, %v1123
        %1211 = vst.msk [vmem:[#allocation2 + $0x28] sm:$0xf] %vm1200, %v1125
        %1212 = vst.msk [vmem:[#allocation2 + $0x2c] sm:$0xf] %vm1200, %v1127
        %1213 = vst.msk [vmem:[#allocation2 + $0x30] sm:$0xf] %vm1200, %v1129
        %1214 = vst.msk [vmem:[#allocation2 + $0x34] sm:$0xf] %vm1200, %v1131
        %1215 = vst.msk [vmem:[#allocation2 + $0x38] sm:$0xf] %vm1200, %v1133
        %1216 = vst.msk [vmem:[#allocation2 + $0x3c] sm:$0xf] %vm1200, %v1135
        %1217 = vst.msk [vmem:[#allocation2 + $0x40] sm:$0xf] %vm1200, %v1137
        %1218 = vst.msk [vmem:[#allocation2 + $0x44] sm:$0xf] %vm1200, %v1139
        %1219 = vst.msk [vmem:[#allocation2 + $0x48] sm:$0xf] %vm1200, %v1141
        %1220 = vst.msk [vmem:[#allocation2 + $0x4c] sm:$0xf] %vm1200, %v1143
        %1221 = vst.msk [vmem:[#allocation2 + $0x50] sm:$0xf] %vm1200, %v1145
        %1222 = vst.msk [vmem:[#allocation2 + $0x54] sm:$0xf] %vm1200, %v1147
        %1223 = vst.msk [vmem:[#allocation2 + $0x58] sm:$0xf] %vm1200, %v1149
        %1224 = vst.msk [vmem:[#allocation2 + $0x5c] sm:$0xf] %vm1200, %v1151
        %1225 = vst.msk [vmem:[#allocation2 + $0x60] sm:$0xf] %vm1200, %v1153
        %1226 = vst.msk [vmem:[#allocation2 + $0x64] sm:$0xf] %vm1200, %v1155
        %1227 = vst.msk [vmem:[#allocation2 + $0x68] sm:$0xf] %vm1200, %v1157
        %1228 = vst.msk [vmem:[#allocation2 + $0x6c] sm:$0xf] %vm1200, %v1159
        %1229 = vst.msk [vmem:[#allocation2 + $0x70] sm:$0xf] %vm1200, %v1161
        %1230 = vst.msk [vmem:[#allocation2 + $0x74] sm:$0xf] %vm1200, %v1163
        %1231 = vst.msk [vmem:[#allocation2 + $0x78] sm:$0xf] %vm1200, %v1165
        %1232 = vst.msk [vmem:[#allocation2 + $0x7c] sm:$0xf] %vm1200, %v1167
        %s1233 = scalar_lea.vmem %s236, 12
        %v1234 = vld [vmem:[%s1233] sm:$0xf]
        %v1235 = vld [vmem:[%s1233 + $0x4] sm:$0xf]
        %v1236 = vld [vmem:[%s1233 + $0xc] sm:$0xf]
        %v1237 = vld [vmem:[%s1233 + $0x10] sm:$0xf]
        %v1238 = vld [vmem:[%s1233 + $0x18] sm:$0xf]
        %v1239 = vld [vmem:[%s1233 + $0x1c] sm:$0xf]
        %v1240 = vld [vmem:[%s1233 + $0x24] sm:$0xf]
        %v1241 = vld [vmem:[%s1233 + $0x28] sm:$0xf]
        %v1242 = vld [vmem:[%s1233 + $0x30] sm:$0xf]
        %v1243 = vld [vmem:[%s1233 + $0x34] sm:$0xf]
        %v1244 = vld [vmem:[%s1233 + $0x3c] sm:$0xf]
        %v1245 = vld [vmem:[%s1233 + $0x40] sm:$0xf]
        %v1246 = vld [vmem:[%s1233 + $0x48] sm:$0xf]
        %v1247 = vld [vmem:[%s1233 + $0x4c] sm:$0xf]
        %v1248 = vld [vmem:[%s1233 + $0x54] sm:$0xf]
        %v1249 = vld [vmem:[%s1233 + $0x58] sm:$0xf]
        %v1250 = vld [vmem:[%s1233 + $0x60] sm:$0xf]
        %v1251 = vld [vmem:[%s1233 + $0x64] sm:$0xf]
        %v1252 = vld [vmem:[%s1233 + $0x6c] sm:$0xf]
        %v1253 = vld [vmem:[%s1233 + $0x70] sm:$0xf]
        %v1254 = vld [vmem:[%s1233 + $0x78] sm:$0xf]
        %v1255 = vld [vmem:[%s1233 + $0x7c] sm:$0xf]
        %v1256 = vld [vmem:[%s1233 + $0x84] sm:$0xf]
        %v1257 = vld [vmem:[%s1233 + $0x88] sm:$0xf]
        %v1258 = vld [vmem:[%s1233 + $0x90] sm:$0xf]
        %v1259 = vld [vmem:[%s1233 + $0x94] sm:$0xf]
        %v1260 = vld [vmem:[%s1233 + $0x9c] sm:$0xf]
        %v1261 = vld [vmem:[%s1233 + $0xa0] sm:$0xf]
        %v1262 = vld [vmem:[%s1233 + $0xa8] sm:$0xf]
        %v1263 = vld [vmem:[%s1233 + $0xac] sm:$0xf]
        %v1264 = vld [vmem:[%s1233 + $0xb4] sm:$0xf]
        %v1265 = vld [vmem:[%s1233 + $0xb8] sm:$0xf]
        %1298 = vrot.lane.b32.xlu0 %v1234, 12
        %v1299 = vpop.permute.xlu0 %1298
        %1300 = vrot.lane.b32.xlu0 %v1235, 12
        %v1301 = vpop.permute.xlu0 %1300
        %1302 = vrot.lane.b32.xlu0 %v1236, 12
        %v1303 = vpop.permute.xlu0 %1302
        %1304 = vrot.lane.b32.xlu0 %v1237, 12
        %v1305 = vpop.permute.xlu0 %1304
        %1306 = vrot.lane.b32.xlu0 %v1238, 12
        %v1307 = vpop.permute.xlu0 %1306
        %1308 = vrot.lane.b32.xlu0 %v1239, 12
        %v1309 = vpop.permute.xlu0 %1308
        %1310 = vrot.lane.b32.xlu0 %v1240, 12
        %v1311 = vpop.permute.xlu0 %1310
        %1312 = vrot.lane.b32.xlu0 %v1241, 12
        %v1313 = vpop.permute.xlu0 %1312
        %1314 = vrot.lane.b32.xlu0 %v1242, 12
        %v1315 = vpop.permute.xlu0 %1314
        %1316 = vrot.lane.b32.xlu0 %v1243, 12
        %v1317 = vpop.permute.xlu0 %1316
        %1318 = vrot.lane.b32.xlu0 %v1244, 12
        %v1319 = vpop.permute.xlu0 %1318
        %1320 = vrot.lane.b32.xlu0 %v1245, 12
        %v1321 = vpop.permute.xlu0 %1320
        %1322 = vrot.lane.b32.xlu0 %v1246, 12
        %v1323 = vpop.permute.xlu0 %1322
        %1324 = vrot.lane.b32.xlu0 %v1247, 12
        %v1325 = vpop.permute.xlu0 %1324
        %1326 = vrot.lane.b32.xlu0 %v1248, 12
        %v1327 = vpop.permute.xlu0 %1326
        %1328 = vrot.lane.b32.xlu0 %v1249, 12
        %v1329 = vpop.permute.xlu0 %1328
        %1330 = vrot.lane.b32.xlu0 %v1250, 12
        %v1331 = vpop.permute.xlu0 %1330
        %1332 = vrot.lane.b32.xlu0 %v1251, 12
        %v1333 = vpop.permute.xlu0 %1332
        %1334 = vrot.lane.b32.xlu0 %v1252, 12
        %v1335 = vpop.permute.xlu0 %1334
        %1336 = vrot.lane.b32.xlu0 %v1253, 12
        %v1337 = vpop.permute.xlu0 %1336
        %1338 = vrot.lane.b32.xlu0 %v1254, 12
        %v1339 = vpop.permute.xlu0 %1338
        %1340 = vrot.lane.b32.xlu0 %v1255, 12
        %v1341 = vpop.permute.xlu0 %1340
        %1342 = vrot.lane.b32.xlu0 %v1256, 12
        %v1343 = vpop.permute.xlu0 %1342
        %1344 = vrot.lane.b32.xlu0 %v1257, 12
        %v1345 = vpop.permute.xlu0 %1344
        %1346 = vrot.lane.b32.xlu0 %v1258, 12
        %v1347 = vpop.permute.xlu0 %1346
        %1348 = vrot.lane.b32.xlu0 %v1259, 12
        %v1349 = vpop.permute.xlu0 %1348
        %1350 = vrot.lane.b32.xlu0 %v1260, 12
        %v1351 = vpop.permute.xlu0 %1350
        %1352 = vrot.lane.b32.xlu0 %v1261, 12
        %v1353 = vpop.permute.xlu0 %1352
        %1354 = vrot.lane.b32.xlu0 %v1262, 12
        %v1355 = vpop.permute.xlu0 %1354
        %1356 = vrot.lane.b32.xlu0 %v1263, 12
        %v1357 = vpop.permute.xlu0 %1356
        %1358 = vrot.lane.b32.xlu0 %v1264, 12
        %v1359 = vpop.permute.xlu0 %1358
        %1360 = vrot.lane.b32.xlu0 %v1265, 12
        %v1361 = vpop.permute.xlu0 %1360
        %vm1394 = vcmask 126048
        %1395 = vst.msk [vmem:[#allocation2] sm:$0xf] %vm1394, %v1299
        %1396 = vst.msk [vmem:[#allocation2 + $0x4] sm:$0xf] %vm1394, %v1301
        %1397 = vst.msk [vmem:[#allocation2 + $0x8] sm:$0xf] %vm1394, %v1303
        %1398 = vst.msk [vmem:[#allocation2 + $0xc] sm:$0xf] %vm1394, %v1305
        %1399 = vst.msk [vmem:[#allocation2 + $0x10] sm:$0xf] %vm1394, %v1307
        %1400 = vst.msk [vmem:[#allocation2 + $0x14] sm:$0xf] %vm1394, %v1309
        %1401 = vst.msk [vmem:[#allocation2 + $0x18] sm:$0xf] %vm1394, %v1311
        %1402 = vst.msk [vmem:[#allocation2 + $0x1c] sm:$0xf] %vm1394, %v1313
        %1403 = vst.msk [vmem:[#allocation2 + $0x20] sm:$0xf] %vm1394, %v1315
        %1404 = vst.msk [vmem:[#allocation2 + $0x24] sm:$0xf] %vm1394, %v1317
        %1405 = vst.msk [vmem:[#allocation2 + $0x28] sm:$0xf] %vm1394, %v1319
        %1406 = vst.msk [vmem:[#allocation2 + $0x2c] sm:$0xf] %vm1394, %v1321
        %1407 = vst.msk [vmem:[#allocation2 + $0x30] sm:$0xf] %vm1394, %v1323
        %1408 = vst.msk [vmem:[#allocation2 + $0x34] sm:$0xf] %vm1394, %v1325
        %1409 = vst.msk [vmem:[#allocation2 + $0x38] sm:$0xf] %vm1394, %v1327
        %1410 = vst.msk [vmem:[#allocation2 + $0x3c] sm:$0xf] %vm1394, %v1329
        %1411 = vst.msk [vmem:[#allocation2 + $0x40] sm:$0xf] %vm1394, %v1331
        %1412 = vst.msk [vmem:[#allocation2 + $0x44] sm:$0xf] %vm1394, %v1333
        %1413 = vst.msk [vmem:[#allocation2 + $0x48] sm:$0xf] %vm1394, %v1335
        %1414 = vst.msk [vmem:[#allocation2 + $0x4c] sm:$0xf] %vm1394, %v1337
        %1415 = vst.msk [vmem:[#allocation2 + $0x50] sm:$0xf] %vm1394, %v1339
        %1416 = vst.msk [vmem:[#allocation2 + $0x54] sm:$0xf] %vm1394, %v1341
        %1417 = vst.msk [vmem:[#allocation2 + $0x58] sm:$0xf] %vm1394, %v1343
        %1418 = vst.msk [vmem:[#allocation2 + $0x5c] sm:$0xf] %vm1394, %v1345
        %1419 = vst.msk [vmem:[#allocation2 + $0x60] sm:$0xf] %vm1394, %v1347
        %1420 = vst.msk [vmem:[#allocation2 + $0x64] sm:$0xf] %vm1394, %v1349
        %1421 = vst.msk [vmem:[#allocation2 + $0x68] sm:$0xf] %vm1394, %v1351
        %1422 = vst.msk [vmem:[#allocation2 + $0x6c] sm:$0xf] %vm1394, %v1353
        %1423 = vst.msk [vmem:[#allocation2 + $0x70] sm:$0xf] %vm1394, %v1355
        %1424 = vst.msk [vmem:[#allocation2 + $0x74] sm:$0xf] %vm1394, %v1357
        %1425 = vst.msk [vmem:[#allocation2 + $0x78] sm:$0xf] %vm1394, %v1359
        %1426 = vst.msk [vmem:[#allocation2 + $0x7c] sm:$0xf] %vm1394, %v1361
        %v1427 = vld [vmem:[%s1233] sm:$0xf]
        %v1428 = vld [vmem:[%s1233 + $0x4] sm:$0xf]
        %v1429 = vld [vmem:[%s1233 + $0x8] sm:$0x1]
        %v1430 = vld [vmem:[%s1233 + $0xc] sm:$0xf]
        %v1431 = vld [vmem:[%s1233 + $0x10] sm:$0xf]
        %v1432 = vld [vmem:[%s1233 + $0x14] sm:$0x1]
        %v1433 = vld [vmem:[%s1233 + $0x18] sm:$0xf]
        %v1434 = vld [vmem:[%s1233 + $0x1c] sm:$0xf]
        %v1435 = vld [vmem:[%s1233 + $0x20] sm:$0x1]
        %v1436 = vld [vmem:[%s1233 + $0x24] sm:$0xf]
        %v1437 = vld [vmem:[%s1233 + $0x28] sm:$0xf]
        %v1438 = vld [vmem:[%s1233 + $0x2c] sm:$0x1]
        %v1439 = vld [vmem:[%s1233 + $0x30] sm:$0xf]
        %v1440 = vld [vmem:[%s1233 + $0x34] sm:$0xf]
        %v1441 = vld [vmem:[%s1233 + $0x38] sm:$0x1]
        %v1442 = vld [vmem:[%s1233 + $0x3c] sm:$0xf]
        %v1443 = vld [vmem:[%s1233 + $0x40] sm:$0xf]
        %v1444 = vld [vmem:[%s1233 + $0x44] sm:$0x1]
        %v1445 = vld [vmem:[%s1233 + $0x48] sm:$0xf]
        %v1446 = vld [vmem:[%s1233 + $0x4c] sm:$0xf]
        %v1447 = vld [vmem:[%s1233 + $0x50] sm:$0x1]
        %v1448 = vld [vmem:[%s1233 + $0x54] sm:$0xf]
        %v1449 = vld [vmem:[%s1233 + $0x58] sm:$0xf]
        %v1450 = vld [vmem:[%s1233 + $0x5c] sm:$0x1]
        %v1451 = vld [vmem:[%s1233 + $0x60] sm:$0xf]
        %v1452 = vld [vmem:[%s1233 + $0x64] sm:$0xf]
        %v1453 = vld [vmem:[%s1233 + $0x68] sm:$0x1]
        %v1454 = vld [vmem:[%s1233 + $0x6c] sm:$0xf]
        %v1455 = vld [vmem:[%s1233 + $0x70] sm:$0xf]
        %v1456 = vld [vmem:[%s1233 + $0x74] sm:$0x1]
        %v1457 = vld [vmem:[%s1233 + $0x78] sm:$0xf]
        %v1458 = vld [vmem:[%s1233 + $0x7c] sm:$0xf]
        %v1459 = vld [vmem:[%s1233 + $0x80] sm:$0x1]
        %v1460 = vld [vmem:[%s1233 + $0x84] sm:$0xf]
        %v1461 = vld [vmem:[%s1233 + $0x88] sm:$0xf]
        %v1462 = vld [vmem:[%s1233 + $0x8c] sm:$0x1]
        %v1463 = vld [vmem:[%s1233 + $0x90] sm:$0xf]
        %v1464 = vld [vmem:[%s1233 + $0x94] sm:$0xf]
        %v1465 = vld [vmem:[%s1233 + $0x98] sm:$0x1]
        %v1466 = vld [vmem:[%s1233 + $0x9c] sm:$0xf]
        %v1467 = vld [vmem:[%s1233 + $0xa0] sm:$0xf]
        %v1468 = vld [vmem:[%s1233 + $0xa4] sm:$0x1]
        %v1469 = vld [vmem:[%s1233 + $0xa8] sm:$0xf]
        %v1470 = vld [vmem:[%s1233 + $0xac] sm:$0xf]
        %v1471 = vld [vmem:[%s1233 + $0xb0] sm:$0x1]
        %v1472 = vld [vmem:[%s1233 + $0xb4] sm:$0xf]
        %v1473 = vld [vmem:[%s1233 + $0xb8] sm:$0xf]
        %v1474 = vld [vmem:[%s1233 + $0xbc] sm:$0x1]
        %v1476 = vshrl.u32 %v1427, 16
        %v1478 = vrot.slane %v1476, 4
        %v1479 = vshll.u32 %v1427, 16
        %v1481 = vrot.slane %v1479, 5
        %v1482 = vor.u32 %v1478, %v1481
        %v1483 = vrot.slane %v1482, 4
        %v1485 = vshll.u32 %v1428, 16
        %v1487 = vrot.slane %v1485, 5
        %v1488 = vsel %vm379, %v1483, %v1487
        %v1489 = vshrl.u32 %v1428, 16
        %v1491 = vrot.slane %v1489, 4
        %v1492 = vor.u32 %v1491, %v1487
        %v1493 = vrot.slane %v1492, 4
        %v1495 = vshll.u32 %v1429, 16
        %v1497 = vrot.slane %v1495, 5
        %v1498 = vsel %vm379, %v1493, %v1497
        %v1500 = vshrl.u32 %v1430, 16
        %v1502 = vrot.slane %v1500, 4
        %v1503 = vshll.u32 %v1430, 16
        %v1505 = vrot.slane %v1503, 5
        %v1506 = vor.u32 %v1502, %v1505
        %v1507 = vrot.slane %v1506, 4
        %v1509 = vshll.u32 %v1431, 16
        %v1511 = vrot.slane %v1509, 5
        %v1512 = vsel %vm379, %v1507, %v1511
        %v1513 = vshrl.u32 %v1431, 16
        %v1515 = vrot.slane %v1513, 4
        %v1516 = vor.u32 %v1515, %v1511
        %v1517 = vrot.slane %v1516, 4
        %v1519 = vshll.u32 %v1432, 16
        %v1521 = vrot.slane %v1519, 5
        %v1522 = vsel %vm379, %v1517, %v1521
        %v1524 = vshrl.u32 %v1433, 16
        %v1526 = vrot.slane %v1524, 4
        %v1527 = vshll.u32 %v1433, 16
        %v1529 = vrot.slane %v1527, 5
        %v1530 = vor.u32 %v1526, %v1529
        %v1531 = vrot.slane %v1530, 4
        %v1533 = vshll.u32 %v1434, 16
        %v1535 = vrot.slane %v1533, 5
        %v1536 = vsel %vm379, %v1531, %v1535
        %v1537 = vshrl.u32 %v1434, 16
        %v1539 = vrot.slane %v1537, 4
        %v1540 = vor.u32 %v1539, %v1535
        %v1541 = vrot.slane %v1540, 4
        %v1543 = vshll.u32 %v1435, 16
        %v1545 = vrot.slane %v1543, 5
        %v1546 = vsel %vm379, %v1541, %v1545
        %v1548 = vshrl.u32 %v1436, 16
        %v1550 = vrot.slane %v1548, 4
        %v1551 = vshll.u32 %v1436, 16
        %v1553 = vrot.slane %v1551, 5
        %v1554 = vor.u32 %v1550, %v1553
        %v1555 = vrot.slane %v1554, 4
        %v1557 = vshll.u32 %v1437, 16
        %v1559 = vrot.slane %v1557, 5
        %v1560 = vsel %vm379, %v1555, %v1559
        %v1561 = vshrl.u32 %v1437, 16
        %v1563 = vrot.slane %v1561, 4
        %v1564 = vor.u32 %v1563, %v1559
        %v1565 = vrot.slane %v1564, 4
        %v1567 = vshll.u32 %v1438, 16
        %v1569 = vrot.slane %v1567, 5
        %v1570 = vsel %vm379, %v1565, %v1569
        %v1572 = vshrl.u32 %v1439, 16
        %v1574 = vrot.slane %v1572, 4
        %v1575 = vshll.u32 %v1439, 16
        %v1577 = vrot.slane %v1575, 5
        %v1578 = vor.u32 %v1574, %v1577
        %v1579 = vrot.slane %v1578, 4
        %v1581 = vshll.u32 %v1440, 16
        %v1583 = vrot.slane %v1581, 5
        %v1584 = vsel %vm379, %v1579, %v1583
        %v1585 = vshrl.u32 %v1440, 16
        %v1587 = vrot.slane %v1585, 4
        %v1588 = vor.u32 %v1587, %v1583
        %v1589 = vrot.slane %v1588, 4
        %v1591 = vshll.u32 %v1441, 16
        %v1593 = vrot.slane %v1591, 5
        %v1594 = vsel %vm379, %v1589, %v1593
        %v1596 = vshrl.u32 %v1442, 16
        %v1598 = vrot.slane %v1596, 4
        %v1599 = vshll.u32 %v1442, 16
        %v1601 = vrot.slane %v1599, 5
        %v1602 = vor.u32 %v1598, %v1601
        %v1603 = vrot.slane %v1602, 4
        %v1605 = vshll.u32 %v1443, 16
        %v1607 = vrot.slane %v1605, 5
        %v1608 = vsel %vm379, %v1603, %v1607
        %v1609 = vshrl.u32 %v1443, 16
        %v1611 = vrot.slane %v1609, 4
        %v1612 = vor.u32 %v1611, %v1607
        %v1613 = vrot.slane %v1612, 4
        %v1615 = vshll.u32 %v1444, 16
        %v1617 = vrot.slane %v1615, 5
        %v1618 = vsel %vm379, %v1613, %v1617
        %v1620 = vshrl.u32 %v1445, 16
        %v1622 = vrot.slane %v1620, 4
        %v1623 = vshll.u32 %v1445, 16
        %v1625 = vrot.slane %v1623, 5
        %v1626 = vor.u32 %v1622, %v1625
        %v1627 = vrot.slane %v1626, 4
        %v1629 = vshll.u32 %v1446, 16
        %v1631 = vrot.slane %v1629, 5
        %v1632 = vsel %vm379, %v1627, %v1631
        %v1633 = vshrl.u32 %v1446, 16
        %v1635 = vrot.slane %v1633, 4
        %v1636 = vor.u32 %v1635, %v1631
        %v1637 = vrot.slane %v1636, 4
        %v1639 = vshll.u32 %v1447, 16
        %v1641 = vrot.slane %v1639, 5
        %v1642 = vsel %vm379, %v1637, %v1641
        %v1644 = vshrl.u32 %v1448, 16
        %v1646 = vrot.slane %v1644, 4
        %v1647 = vshll.u32 %v1448, 16
        %v1649 = vrot.slane %v1647, 5
        %v1650 = vor.u32 %v1646, %v1649
        %v1651 = vrot.slane %v1650, 4
        %v1653 = vshll.u32 %v1449, 16
        %v1655 = vrot.slane %v1653, 5
        %v1656 = vsel %vm379, %v1651, %v1655
        %v1657 = vshrl.u32 %v1449, 16
        %v1659 = vrot.slane %v1657, 4
        %v1660 = vor.u32 %v1659, %v1655
        %v1661 = vrot.slane %v1660, 4
        %v1663 = vshll.u32 %v1450, 16
        %v1665 = vrot.slane %v1663, 5
        %v1666 = vsel %vm379, %v1661, %v1665
        %v1668 = vshrl.u32 %v1451, 16
        %v1670 = vrot.slane %v1668, 4
        %v1671 = vshll.u32 %v1451, 16
        %v1673 = vrot.slane %v1671, 5
        %v1674 = vor.u32 %v1670, %v1673
        %v1675 = vrot.slane %v1674, 4
        %v1677 = vshll.u32 %v1452, 16
        %v1679 = vrot.slane %v1677, 5
        %v1680 = vsel %vm379, %v1675, %v1679
        %v1681 = vshrl.u32 %v1452, 16
        %v1683 = vrot.slane %v1681, 4
        %v1684 = vor.u32 %v1683, %v1679
        %v1685 = vrot.slane %v1684, 4
        %v1687 = vshll.u32 %v1453, 16
        %v1689 = vrot.slane %v1687, 5
        %v1690 = vsel %vm379, %v1685, %v1689
        %v1692 = vshrl.u32 %v1454, 16
        %v1694 = vrot.slane %v1692, 4
        %v1695 = vshll.u32 %v1454, 16
        %v1697 = vrot.slane %v1695, 5
        %v1698 = vor.u32 %v1694, %v1697
        %v1699 = vrot.slane %v1698, 4
        %v1701 = vshll.u32 %v1455, 16
        %v1703 = vrot.slane %v1701, 5
        %v1704 = vsel %vm379, %v1699, %v1703
        %v1705 = vshrl.u32 %v1455, 16
        %v1707 = vrot.slane %v1705, 4
        %v1708 = vor.u32 %v1707, %v1703
        %v1709 = vrot.slane %v1708, 4
        %v1711 = vshll.u32 %v1456, 16
        %v1713 = vrot.slane %v1711, 5
        %v1714 = vsel %vm379, %v1709, %v1713
        %v1716 = vshrl.u32 %v1457, 16
        %v1718 = vrot.slane %v1716, 4
        %v1719 = vshll.u32 %v1457, 16
        %v1721 = vrot.slane %v1719, 5
        %v1722 = vor.u32 %v1718, %v1721
        %v1723 = vrot.slane %v1722, 4
        %v1725 = vshll.u32 %v1458, 16
        %v1727 = vrot.slane %v1725, 5
        %v1728 = vsel %vm379, %v1723, %v1727
        %v1729 = vshrl.u32 %v1458, 16
        %v1731 = vrot.slane %v1729, 4
        %v1732 = vor.u32 %v1731, %v1727
        %v1733 = vrot.slane %v1732, 4
        %v1735 = vshll.u32 %v1459, 16
        %v1737 = vrot.slane %v1735, 5
        %v1738 = vsel %vm379, %v1733, %v1737
        %v1740 = vshrl.u32 %v1460, 16
        %v1742 = vrot.slane %v1740, 4
        %v1743 = vshll.u32 %v1460, 16
        %v1745 = vrot.slane %v1743, 5
        %v1746 = vor.u32 %v1742, %v1745
        %v1747 = vrot.slane %v1746, 4
        %v1749 = vshll.u32 %v1461, 16
        %v1751 = vrot.slane %v1749, 5
        %v1752 = vsel %vm379, %v1747, %v1751
        %v1753 = vshrl.u32 %v1461, 16
        %v1755 = vrot.slane %v1753, 4
        %v1756 = vor.u32 %v1755, %v1751
        %v1757 = vrot.slane %v1756, 4
        %v1759 = vshll.u32 %v1462, 16
        %v1761 = vrot.slane %v1759, 5
        %v1762 = vsel %vm379, %v1757, %v1761
        %v1764 = vshrl.u32 %v1463, 16
        %v1766 = vrot.slane %v1764, 4
        %v1767 = vshll.u32 %v1463, 16
        %v1769 = vrot.slane %v1767, 5
        %v1770 = vor.u32 %v1766, %v1769
        %v1771 = vrot.slane %v1770, 4
        %v1773 = vshll.u32 %v1464, 16
        %v1775 = vrot.slane %v1773, 5
        %v1776 = vsel %vm379, %v1771, %v1775
        %v1777 = vshrl.u32 %v1464, 16
        %v1779 = vrot.slane %v1777, 4
        %v1780 = vor.u32 %v1779, %v1775
        %v1781 = vrot.slane %v1780, 4
        %v1783 = vshll.u32 %v1465, 16
        %v1785 = vrot.slane %v1783, 5
        %v1786 = vsel %vm379, %v1781, %v1785
        %v1788 = vshrl.u32 %v1466, 16
        %v1790 = vrot.slane %v1788, 4
        %v1791 = vshll.u32 %v1466, 16
        %v1793 = vrot.slane %v1791, 5
        %v1794 = vor.u32 %v1790, %v1793
        %v1795 = vrot.slane %v1794, 4
        %v1797 = vshll.u32 %v1467, 16
        %v1799 = vrot.slane %v1797, 5
        %v1800 = vsel %vm379, %v1795, %v1799
        %v1801 = vshrl.u32 %v1467, 16
        %v1803 = vrot.slane %v1801, 4
        %v1804 = vor.u32 %v1803, %v1799
        %v1805 = vrot.slane %v1804, 4
        %v1807 = vshll.u32 %v1468, 16
        %v1809 = vrot.slane %v1807, 5
        %v1810 = vsel %vm379, %v1805, %v1809
        %v1812 = vshrl.u32 %v1469, 16
        %v1814 = vrot.slane %v1812, 4
        %v1815 = vshll.u32 %v1469, 16
        %v1817 = vrot.slane %v1815, 5
        %v1818 = vor.u32 %v1814, %v1817
        %v1819 = vrot.slane %v1818, 4
        %v1821 = vshll.u32 %v1470, 16
        %v1823 = vrot.slane %v1821, 5
        %v1824 = vsel %vm379, %v1819, %v1823
        %v1825 = vshrl.u32 %v1470, 16
        %v1827 = vrot.slane %v1825, 4
        %v1828 = vor.u32 %v1827, %v1823
        %v1829 = vrot.slane %v1828, 4
        %v1831 = vshll.u32 %v1471, 16
        %v1833 = vrot.slane %v1831, 5
        %v1834 = vsel %vm379, %v1829, %v1833
        %v1836 = vshrl.u32 %v1472, 16
        %v1838 = vrot.slane %v1836, 4
        %v1839 = vshll.u32 %v1472, 16
        %v1841 = vrot.slane %v1839, 5
        %v1842 = vor.u32 %v1838, %v1841
        %v1843 = vrot.slane %v1842, 4
        %v1845 = vshll.u32 %v1473, 16
        %v1847 = vrot.slane %v1845, 5
        %v1848 = vsel %vm379, %v1843, %v1847
        %v1849 = vshrl.u32 %v1473, 16
        %v1851 = vrot.slane %v1849, 4
        %v1852 = vor.u32 %v1851, %v1847
        %v1853 = vrot.slane %v1852, 4
        %v1855 = vshll.u32 %v1474, 16
        %v1857 = vrot.slane %v1855, 5
        %v1858 = vsel %vm379, %v1853, %v1857
        %1859 = vrot.lane.b32.xlu0 %v1488, 16
        %v1860 = vpop.permute.xlu0 %1859
        %1861 = vrot.lane.b32.xlu0 %v1498, 16
        %v1862 = vpop.permute.xlu0 %1861
        %1863 = vrot.lane.b32.xlu0 %v1512, 16
        %v1864 = vpop.permute.xlu0 %1863
        %1865 = vrot.lane.b32.xlu0 %v1522, 16
        %v1866 = vpop.permute.xlu0 %1865
        %1867 = vrot.lane.b32.xlu0 %v1536, 16
        %v1868 = vpop.permute.xlu0 %1867
        %1869 = vrot.lane.b32.xlu0 %v1546, 16
        %v1870 = vpop.permute.xlu0 %1869
        %1871 = vrot.lane.b32.xlu0 %v1560, 16
        %v1872 = vpop.permute.xlu0 %1871
        %1873 = vrot.lane.b32.xlu0 %v1570, 16
        %v1874 = vpop.permute.xlu0 %1873
        %1875 = vrot.lane.b32.xlu0 %v1584, 16
        %v1876 = vpop.permute.xlu0 %1875
        %1877 = vrot.lane.b32.xlu0 %v1594, 16
        %v1878 = vpop.permute.xlu0 %1877
        %1879 = vrot.lane.b32.xlu0 %v1608, 16
        %v1880 = vpop.permute.xlu0 %1879
        %1881 = vrot.lane.b32.xlu0 %v1618, 16
        %v1882 = vpop.permute.xlu0 %1881
        %1883 = vrot.lane.b32.xlu0 %v1632, 16
        %v1884 = vpop.permute.xlu0 %1883
        %1885 = vrot.lane.b32.xlu0 %v1642, 16
        %v1886 = vpop.permute.xlu0 %1885
        %1887 = vrot.lane.b32.xlu0 %v1656, 16
        %v1888 = vpop.permute.xlu0 %1887
        %1889 = vrot.lane.b32.xlu0 %v1666, 16
        %v1890 = vpop.permute.xlu0 %1889
        %1891 = vrot.lane.b32.xlu0 %v1680, 16
        %v1892 = vpop.permute.xlu0 %1891
        %1893 = vrot.lane.b32.xlu0 %v1690, 16
        %v1894 = vpop.permute.xlu0 %1893
        %1895 = vrot.lane.b32.xlu0 %v1704, 16
        %v1896 = vpop.permute.xlu0 %1895
        %1897 = vrot.lane.b32.xlu0 %v1714, 16
        %v1898 = vpop.permute.xlu0 %1897
        %1899 = vrot.lane.b32.xlu0 %v1728, 16
        %v1900 = vpop.permute.xlu0 %1899
        %1901 = vrot.lane.b32.xlu0 %v1738, 16
        %v1902 = vpop.permute.xlu0 %1901
        %1903 = vrot.lane.b32.xlu0 %v1752, 16
        %v1904 = vpop.permute.xlu0 %1903
        %1905 = vrot.lane.b32.xlu0 %v1762, 16
        %v1906 = vpop.permute.xlu0 %1905
        %1907 = vrot.lane.b32.xlu0 %v1776, 16
        %v1908 = vpop.permute.xlu0 %1907
        %1909 = vrot.lane.b32.xlu0 %v1786, 16
        %v1910 = vpop.permute.xlu0 %1909
        %1911 = vrot.lane.b32.xlu0 %v1800, 16
        %v1912 = vpop.permute.xlu0 %1911
        %1913 = vrot.lane.b32.xlu0 %v1810, 16
        %v1914 = vpop.permute.xlu0 %1913
        %1915 = vrot.lane.b32.xlu0 %v1824, 16
        %v1916 = vpop.permute.xlu0 %1915
        %1917 = vrot.lane.b32.xlu0 %v1834, 16
        %v1918 = vpop.permute.xlu0 %1917
        %1919 = vrot.lane.b32.xlu0 %v1848, 16
        %v1920 = vpop.permute.xlu0 %1919
        %1921 = vrot.lane.b32.xlu0 %v1858, 16
        %v1922 = vpop.permute.xlu0 %1921
        %vm1955 = vcmask 158848
        %1956 = vst.msk [vmem:[#allocation2] sm:$0xf] %vm1955, %v1860
        %1957 = vst.msk [vmem:[#allocation2 + $0x4] sm:$0xf] %vm1955, %v1862
        %1958 = vst.msk [vmem:[#allocation2 + $0x8] sm:$0xf] %vm1955, %v1864
        %1959 = vst.msk [vmem:[#allocation2 + $0xc] sm:$0xf] %vm1955, %v1866
        %1960 = vst.msk [vmem:[#allocation2 + $0x10] sm:$0xf] %vm1955, %v1868
        %1961 = vst.msk [vmem:[#allocation2 + $0x14] sm:$0xf] %vm1955, %v1870
        %1962 = vst.msk [vmem:[#allocation2 + $0x18] sm:$0xf] %vm1955, %v1872
        %1963 = vst.msk [vmem:[#allocation2 + $0x1c] sm:$0xf] %vm1955, %v1874
        %1964 = vst.msk [vmem:[#allocation2 + $0x20] sm:$0xf] %vm1955, %v1876
        %1965 = vst.msk [vmem:[#allocation2 + $0x24] sm:$0xf] %vm1955, %v1878
        %1966 = vst.msk [vmem:[#allocation2 + $0x28] sm:$0xf] %vm1955, %v1880
        %1967 = vst.msk [vmem:[#allocation2 + $0x2c] sm:$0xf] %vm1955, %v1882
        %1968 = vst.msk [vmem:[#allocation2 + $0x30] sm:$0xf] %vm1955, %v1884
        %1969 = vst.msk [vmem:[#allocation2 + $0x34] sm:$0xf] %vm1955, %v1886
        %1970 = vst.msk [vmem:[#allocation2 + $0x38] sm:$0xf] %vm1955, %v1888
        %1971 = vst.msk [vmem:[#allocation2 + $0x3c] sm:$0xf] %vm1955, %v1890
        %1972 = vst.msk [vmem:[#allocation2 + $0x40] sm:$0xf] %vm1955, %v1892
        %1973 = vst.msk [vmem:[#allocation2 + $0x44] sm:$0xf] %vm1955, %v1894
        %1974 = vst.msk [vmem:[#allocation2 + $0x48] sm:$0xf] %vm1955, %v1896
        %1975 = vst.msk [vmem:[#allocation2 + $0x4c] sm:$0xf] %vm1955, %v1898
        %1976 = vst.msk [vmem:[#allocation2 + $0x50] sm:$0xf] %vm1955, %v1900
        %1977 = vst.msk [vmem:[#allocation2 + $0x54] sm:$0xf] %vm1955, %v1902
        %1978 = vst.msk [vmem:[#allocation2 + $0x58] sm:$0xf] %vm1955, %v1904
        %1979 = vst.msk [vmem:[#allocation2 + $0x5c] sm:$0xf] %vm1955, %v1906
        %1980 = vst.msk [vmem:[#allocation2 + $0x60] sm:$0xf] %vm1955, %v1908
        %1981 = vst.msk [vmem:[#allocation2 + $0x64] sm:$0xf] %vm1955, %v1910
        %1982 = vst.msk [vmem:[#allocation2 + $0x68] sm:$0xf] %vm1955, %v1912
        %1983 = vst.msk [vmem:[#allocation2 + $0x6c] sm:$0xf] %vm1955, %v1914
        %1984 = vst.msk [vmem:[#allocation2 + $0x70] sm:$0xf] %vm1955, %v1916
        %1985 = vst.msk [vmem:[#allocation2 + $0x74] sm:$0xf] %vm1955, %v1918
        %1986 = vst.msk [vmem:[#allocation2 + $0x78] sm:$0xf] %vm1955, %v1920
        %1987 = vst.msk [vmem:[#allocation2 + $0x7c] sm:$0xf] %vm1955, %v1922
        %v1988 = vld [vmem:[%s1233] sm:$0xe]
        %v1989 = vld [vmem:[%s1233 + $0x4] sm:$0xf]
        %v1990 = vld [vmem:[%s1233 + $0x8] sm:$0x1]
        %v1991 = vld [vmem:[%s1233 + $0xc] sm:$0xe]
        %v1992 = vld [vmem:[%s1233 + $0x10] sm:$0xf]
        %v1993 = vld [vmem:[%s1233 + $0x14] sm:$0x1]
        %v1994 = vld [vmem:[%s1233 + $0x18] sm:$0xe]
        %v1995 = vld [vmem:[%s1233 + $0x1c] sm:$0xf]
        %v1996 = vld [vmem:[%s1233 + $0x20] sm:$0x1]
        %v1997 = vld [vmem:[%s1233 + $0x24] sm:$0xe]
        %v1998 = vld [vmem:[%s1233 + $0x28] sm:$0xf]
        %v1999 = vld [vmem:[%s1233 + $0x2c] sm:$0x1]
        %v2000 = vld [vmem:[%s1233 + $0x30] sm:$0xe]
        %v2001 = vld [vmem:[%s1233 + $0x34] sm:$0xf]
        %v2002 = vld [vmem:[%s1233 + $0x38] sm:$0x1]
        %v2003 = vld [vmem:[%s1233 + $0x3c] sm:$0xe]
        %v2004 = vld [vmem:[%s1233 + $0x40] sm:$0xf]
        %v2005 = vld [vmem:[%s1233 + $0x44] sm:$0x1]
        %v2006 = vld [vmem:[%s1233 + $0x48] sm:$0xe]
        %v2007 = vld [vmem:[%s1233 + $0x4c] sm:$0xf]
        %v2008 = vld [vmem:[%s1233 + $0x50] sm:$0x1]
        %v2009 = vld [vmem:[%s1233 + $0x54] sm:$0xe]
        %v2010 = vld [vmem:[%s1233 + $0x58] sm:$0xf]
        %v2011 = vld [vmem:[%s1233 + $0x5c] sm:$0x1]
        %v2012 = vld [vmem:[%s1233 + $0x60] sm:$0xe]
        %v2013 = vld [vmem:[%s1233 + $0x64] sm:$0xf]
        %v2014 = vld [vmem:[%s1233 + $0x68] sm:$0x1]
        %v2015 = vld [vmem:[%s1233 + $0x6c] sm:$0xe]
        %v2016 = vld [vmem:[%s1233 + $0x70] sm:$0xf]
        %v2017 = vld [vmem:[%s1233 + $0x74] sm:$0x1]
        %v2018 = vld [vmem:[%s1233 + $0x78] sm:$0xe]
        %v2019 = vld [vmem:[%s1233 + $0x7c] sm:$0xf]
        %v2020 = vld [vmem:[%s1233 + $0x80] sm:$0x1]
        %v2021 = vld [vmem:[%s1233 + $0x84] sm:$0xe]
        %v2022 = vld [vmem:[%s1233 + $0x88] sm:$0xf]
        %v2023 = vld [vmem:[%s1233 + $0x8c] sm:$0x1]
        %v2024 = vld [vmem:[%s1233 + $0x90] sm:$0xe]
        %v2025 = vld [vmem:[%s1233 + $0x94] sm:$0xf]
        %v2026 = vld [vmem:[%s1233 + $0x98] sm:$0x1]
        %v2027 = vld [vmem:[%s1233 + $0x9c] sm:$0xe]
        %v2028 = vld [vmem:[%s1233 + $0xa0] sm:$0xf]
        %v2029 = vld [vmem:[%s1233 + $0xa4] sm:$0x1]
        %v2030 = vld [vmem:[%s1233 + $0xa8] sm:$0xe]
        %v2031 = vld [vmem:[%s1233 + $0xac] sm:$0xf]
        %v2032 = vld [vmem:[%s1233 + $0xb0] sm:$0x1]
        %v2033 = vld [vmem:[%s1233 + $0xb4] sm:$0xe]
        %v2034 = vld [vmem:[%s1233 + $0xb8] sm:$0xf]
        %v2035 = vld [vmem:[%s1233 + $0xbc] sm:$0x1]
        %v2084 = vrot.slane %v1988, 5
        %v2085 = vrot.slane %v2084, 4
        %v2086 = vrot.slane %v1989, 5
        %v2087 = vsel %vm991, %v2085, %v2086
        %v2088 = vrot.slane %v2086, 4
        %v2089 = vrot.slane %v1990, 5
        %v2090 = vsel %vm991, %v2088, %v2089
        %v2091 = vrot.slane %v1991, 5
        %v2092 = vrot.slane %v2091, 4
        %v2093 = vrot.slane %v1992, 5
        %v2094 = vsel %vm991, %v2092, %v2093
        %v2095 = vrot.slane %v2093, 4
        %v2096 = vrot.slane %v1993, 5
        %v2097 = vsel %vm991, %v2095, %v2096
        %v2098 = vrot.slane %v1994, 5
        %v2099 = vrot.slane %v2098, 4
        %v2100 = vrot.slane %v1995, 5
        %v2101 = vsel %vm991, %v2099, %v2100
        %v2102 = vrot.slane %v2100, 4
        %v2103 = vrot.slane %v1996, 5
        %v2104 = vsel %vm991, %v2102, %v2103
        %v2105 = vrot.slane %v1997, 5
        %v2106 = vrot.slane %v2105, 4
        %v2107 = vrot.slane %v1998, 5
        %v2108 = vsel %vm991, %v2106, %v2107
        %v2109 = vrot.slane %v2107, 4
        %v2110 = vrot.slane %v1999, 5
        %v2111 = vsel %vm991, %v2109, %v2110
        %v2112 = vrot.slane %v2000, 5
        %v2113 = vrot.slane %v2112, 4
        %v2114 = vrot.slane %v2001, 5
        %v2115 = vsel %vm991, %v2113, %v2114
        %v2116 = vrot.slane %v2114, 4
        %v2117 = vrot.slane %v2002, 5
        %v2118 = vsel %vm991, %v2116, %v2117
        %v2119 = vrot.slane %v2003, 5
        %v2120 = vrot.slane %v2119, 4
        %v2121 = vrot.slane %v2004, 5
        %v2122 = vsel %vm991, %v2120, %v2121
        %v2123 = vrot.slane %v2121, 4
        %v2124 = vrot.slane %v2005, 5
        %v2125 = vsel %vm991, %v2123, %v2124
        %v2126 = vrot.slane %v2006, 5
        %v2127 = vrot.slane %v2126, 4
        %v2128 = vrot.slane %v2007, 5
        %v2129 = vsel %vm991, %v2127, %v2128
        %v2130 = vrot.slane %v2128, 4
        %v2131 = vrot.slane %v2008, 5
        %v2132 = vsel %vm991, %v2130, %v2131
        %v2133 = vrot.slane %v2009, 5
        %v2134 = vrot.slane %v2133, 4
        %v2135 = vrot.slane %v2010, 5
        %v2136 = vsel %vm991, %v2134, %v2135
        %v2137 = vrot.slane %v2135, 4
        %v2138 = vrot.slane %v2011, 5
        %v2139 = vsel %vm991, %v2137, %v2138
        %v2140 = vrot.slane %v2012, 5
        %v2141 = vrot.slane %v2140, 4
        %v2142 = vrot.slane %v2013, 5
        %v2143 = vsel %vm991, %v2141, %v2142
        %v2144 = vrot.slane %v2142, 4
        %v2145 = vrot.slane %v2014, 5
        %v2146 = vsel %vm991, %v2144, %v2145
        %v2147 = vrot.slane %v2015, 5
        %v2148 = vrot.slane %v2147, 4
        %v2149 = vrot.slane %v2016, 5
        %v2150 = vsel %vm991, %v2148, %v2149
        %v2151 = vrot.slane %v2149, 4
        %v2152 = vrot.slane %v2017, 5
        %v2153 = vsel %vm991, %v2151, %v2152
        %v2154 = vrot.slane %v2018, 5
        %v2155 = vrot.slane %v2154, 4
        %v2156 = vrot.slane %v2019, 5
        %v2157 = vsel %vm991, %v2155, %v2156
        %v2158 = vrot.slane %v2156, 4
        %v2159 = vrot.slane %v2020, 5
        %v2160 = vsel %vm991, %v2158, %v2159
        %v2161 = vrot.slane %v2021, 5
        %v2162 = vrot.slane %v2161, 4
        %v2163 = vrot.slane %v2022, 5
        %v2164 = vsel %vm991, %v2162, %v2163
        %v2165 = vrot.slane %v2163, 4
        %v2166 = vrot.slane %v2023, 5
        %v2167 = vsel %vm991, %v2165, %v2166
        %v2168 = vrot.slane %v2024, 5
        %v2169 = vrot.slane %v2168, 4
        %v2170 = vrot.slane %v2025, 5
        %v2171 = vsel %vm991, %v2169, %v2170
        %v2172 = vrot.slane %v2170, 4
        %v2173 = vrot.slane %v2026, 5
        %v2174 = vsel %vm991, %v2172, %v2173
        %v2175 = vrot.slane %v2027, 5
        %v2176 = vrot.slane %v2175, 4
        %v2177 = vrot.slane %v2028, 5
        %v2178 = vsel %vm991, %v2176, %v2177
        %v2179 = vrot.slane %v2177, 4
        %v2180 = vrot.slane %v2029, 5
        %v2181 = vsel %vm991, %v2179, %v2180
        %v2182 = vrot.slane %v2030, 5
        %v2183 = vrot.slane %v2182, 4
        %v2184 = vrot.slane %v2031, 5
        %v2185 = vsel %vm991, %v2183, %v2184
        %v2186 = vrot.slane %v2184, 4
        %v2187 = vrot.slane %v2032, 5
        %v2188 = vsel %vm991, %v2186, %v2187
        %v2189 = vrot.slane %v2033, 5
        %v2190 = vrot.slane %v2189, 4
        %v2191 = vrot.slane %v2034, 5
        %v2192 = vsel %vm991, %v2190, %v2191
        %v2193 = vrot.slane %v2191, 4
        %v2194 = vrot.slane %v2035, 5
        %v2195 = vsel %vm991, %v2193, %v2194
        %2196 = vrot.lane.b32.xlu0 %v2087, 20
        %v2197 = vpop.permute.xlu0 %2196
        %2198 = vrot.lane.b32.xlu0 %v2090, 20
        %v2199 = vpop.permute.xlu0 %2198
        %2200 = vrot.lane.b32.xlu0 %v2094, 20
        %v2201 = vpop.permute.xlu0 %2200
        %2202 = vrot.lane.b32.xlu0 %v2097, 20
        %v2203 = vpop.permute.xlu0 %2202
        %2204 = vrot.lane.b32.xlu0 %v2101, 20
        %v2205 = vpop.permute.xlu0 %2204
        %2206 = vrot.lane.b32.xlu0 %v2104, 20
        %v2207 = vpop.permute.xlu0 %2206
        %2208 = vrot.lane.b32.xlu0 %v2108, 20
        %v2209 = vpop.permute.xlu0 %2208
        %2210 = vrot.lane.b32.xlu0 %v2111, 20
        %v2211 = vpop.permute.xlu0 %2210
        %2212 = vrot.lane.b32.xlu0 %v2115, 20
        %v2213 = vpop.permute.xlu0 %2212
        %2214 = vrot.lane.b32.xlu0 %v2118, 20
        %v2215 = vpop.permute.xlu0 %2214
        %2216 = vrot.lane.b32.xlu0 %v2122, 20
        %v2217 = vpop.permute.xlu0 %2216
        %2218 = vrot.lane.b32.xlu0 %v2125, 20
        %v2219 = vpop.permute.xlu0 %2218
        %2220 = vrot.lane.b32.xlu0 %v2129, 20
        %v2221 = vpop.permute.xlu0 %2220
        %2222 = vrot.lane.b32.xlu0 %v2132, 20
        %v2223 = vpop.permute.xlu0 %2222
        %2224 = vrot.lane.b32.xlu0 %v2136, 20
        %v2225 = vpop.permute.xlu0 %2224
        %2226 = vrot.lane.b32.xlu0 %v2139, 20
        %v2227 = vpop.permute.xlu0 %2226
        %2228 = vrot.lane.b32.xlu0 %v2143, 20
        %v2229 = vpop.permute.xlu0 %2228
        %2230 = vrot.lane.b32.xlu0 %v2146, 20
        %v2231 = vpop.permute.xlu0 %2230
        %2232 = vrot.lane.b32.xlu0 %v2150, 20
        %v2233 = vpop.permute.xlu0 %2232
        %2234 = vrot.lane.b32.xlu0 %v2153, 20
        %v2235 = vpop.permute.xlu0 %2234
        %2236 = vrot.lane.b32.xlu0 %v2157, 20
        %v2237 = vpop.permute.xlu0 %2236
        %2238 = vrot.lane.b32.xlu0 %v2160, 20
        %v2239 = vpop.permute.xlu0 %2238
        %2240 = vrot.lane.b32.xlu0 %v2164, 20
        %v2241 = vpop.permute.xlu0 %2240
        %2242 = vrot.lane.b32.xlu0 %v2167, 20
        %v2243 = vpop.permute.xlu0 %2242
        %2244 = vrot.lane.b32.xlu0 %v2171, 20
        %v2245 = vpop.permute.xlu0 %2244
        %2246 = vrot.lane.b32.xlu0 %v2174, 20
        %v2247 = vpop.permute.xlu0 %2246
        %2248 = vrot.lane.b32.xlu0 %v2178, 20
        %v2249 = vpop.permute.xlu0 %2248
        %2250 = vrot.lane.b32.xlu0 %v2181, 20
        %v2251 = vpop.permute.xlu0 %2250
        %2252 = vrot.lane.b32.xlu0 %v2185, 20
        %v2253 = vpop.permute.xlu0 %2252
        %2254 = vrot.lane.b32.xlu0 %v2188, 20
        %v2255 = vpop.permute.xlu0 %2254
        %2256 = vrot.lane.b32.xlu0 %v2192, 20
        %v2257 = vpop.permute.xlu0 %2256
        %2258 = vrot.lane.b32.xlu0 %v2195, 20
        %v2259 = vpop.permute.xlu0 %2258
        %vm2292 = vcmask 191648
        %2293 = vst.msk [vmem:[#allocation2] sm:$0xf] %vm2292, %v2197
        %2294 = vst.msk [vmem:[#allocation2 + $0x4] sm:$0xf] %vm2292, %v2199
        %2295 = vst.msk [vmem:[#allocation2 + $0x8] sm:$0xf] %vm2292, %v2201
        %2296 = vst.msk [vmem:[#allocation2 + $0xc] sm:$0xf] %vm2292, %v2203
        %2297 = vst.msk [vmem:[#allocation2 + $0x10] sm:$0xf] %vm2292, %v2205
        %2298 = vst.msk [vmem:[#allocation2 + $0x14] sm:$0xf] %vm2292, %v2207
        %2299 = vst.msk [vmem:[#allocation2 + $0x18] sm:$0xf] %vm2292, %v2209
        %2300 = vst.msk [vmem:[#allocation2 + $0x1c] sm:$0xf] %vm2292, %v2211
        %2301 = vst.msk [vmem:[#allocation2 + $0x20] sm:$0xf] %vm2292, %v2213
        %2302 = vst.msk [vmem:[#allocation2 + $0x24] sm:$0xf] %vm2292, %v2215
        %2303 = vst.msk [vmem:[#allocation2 + $0x28] sm:$0xf] %vm2292, %v2217
        %2304 = vst.msk [vmem:[#allocation2 + $0x2c] sm:$0xf] %vm2292, %v2219
        %2305 = vst.msk [vmem:[#allocation2 + $0x30] sm:$0xf] %vm2292, %v2221
        %2306 = vst.msk [vmem:[#allocation2 + $0x34] sm:$0xf] %vm2292, %v2223
        %2307 = vst.msk [vmem:[#allocation2 + $0x38] sm:$0xf] %vm2292, %v2225
        %2308 = vst.msk [vmem:[#allocation2 + $0x3c] sm:$0xf] %vm2292, %v2227
        %2309 = vst.msk [vmem:[#allocation2 + $0x40] sm:$0xf] %vm2292, %v2229
        %2310 = vst.msk [vmem:[#allocation2 + $0x44] sm:$0xf] %vm2292, %v2231
        %2311 = vst.msk [vmem:[#allocation2 + $0x48] sm:$0xf] %vm2292, %v2233
        %2312 = vst.msk [vmem:[#allocation2 + $0x4c] sm:$0xf] %vm2292, %v2235
        %2313 = vst.msk [vmem:[#allocation2 + $0x50] sm:$0xf] %vm2292, %v2237
        %2314 = vst.msk [vmem:[#allocation2 + $0x54] sm:$0xf] %vm2292, %v2239
        %2315 = vst.msk [vmem:[#allocation2 + $0x58] sm:$0xf] %vm2292, %v2241
        %2316 = vst.msk [vmem:[#allocation2 + $0x5c] sm:$0xf] %vm2292, %v2243
        %2317 = vst.msk [vmem:[#allocation2 + $0x60] sm:$0xf] %vm2292, %v2245
        %2318 = vst.msk [vmem:[#allocation2 + $0x64] sm:$0xf] %vm2292, %v2247
        %2319 = vst.msk [vmem:[#allocation2 + $0x68] sm:$0xf] %vm2292, %v2249
        %2320 = vst.msk [vmem:[#allocation2 + $0x6c] sm:$0xf] %vm2292, %v2251
        %2321 = vst.msk [vmem:[#allocation2 + $0x70] sm:$0xf] %vm2292, %v2253
        %2322 = vst.msk [vmem:[#allocation2 + $0x74] sm:$0xf] %vm2292, %v2255
        %2323 = vst.msk [vmem:[#allocation2 + $0x78] sm:$0xf] %vm2292, %v2257
        %2324 = vst.msk [vmem:[#allocation2 + $0x7c] sm:$0xf] %vm2292, %v2259
        %s2325 = scalar_lea.vmem %s236, 24
        %v2326 = vld [vmem:[%s2325] sm:$0xf]
        %v2327 = vld [vmem:[%s2325 + $0x4] sm:$0xf]
        %v2328 = vld [vmem:[%s2325 + $0xc] sm:$0xf]
        %v2329 = vld [vmem:[%s2325 + $0x10] sm:$0xf]
        %v2330 = vld [vmem:[%s2325 + $0x18] sm:$0xf]
        %v2331 = vld [vmem:[%s2325 + $0x1c] sm:$0xf]
        %v2332 = vld [vmem:[%s2325 + $0x24] sm:$0xf]
        %v2333 = vld [vmem:[%s2325 + $0x28] sm:$0xf]
        %v2334 = vld [vmem:[%s2325 + $0x30] sm:$0xf]
        %v2335 = vld [vmem:[%s2325 + $0x34] sm:$0xf]
        %v2336 = vld [vmem:[%s2325 + $0x3c] sm:$0xf]
        %v2337 = vld [vmem:[%s2325 + $0x40] sm:$0xf]
        %v2338 = vld [vmem:[%s2325 + $0x48] sm:$0xf]
        %v2339 = vld [vmem:[%s2325 + $0x4c] sm:$0xf]
        %v2340 = vld [vmem:[%s2325 + $0x54] sm:$0xf]
        %v2341 = vld [vmem:[%s2325 + $0x58] sm:$0xf]
        %v2342 = vld [vmem:[%s2325 + $0x60] sm:$0xf]
        %v2343 = vld [vmem:[%s2325 + $0x64] sm:$0xf]
        %v2344 = vld [vmem:[%s2325 + $0x6c] sm:$0xf]
        %v2345 = vld [vmem:[%s2325 + $0x70] sm:$0xf]
        %v2346 = vld [vmem:[%s2325 + $0x78] sm:$0xf]
        %v2347 = vld [vmem:[%s2325 + $0x7c] sm:$0xf]
        %v2348 = vld [vmem:[%s2325 + $0x84] sm:$0xf]
        %v2349 = vld [vmem:[%s2325 + $0x88] sm:$0xf]
        %v2350 = vld [vmem:[%s2325 + $0x90] sm:$0xf]
        %v2351 = vld [vmem:[%s2325 + $0x94] sm:$0xf]
        %v2352 = vld [vmem:[%s2325 + $0x9c] sm:$0xf]
        %v2353 = vld [vmem:[%s2325 + $0xa0] sm:$0xf]
        %v2354 = vld [vmem:[%s2325 + $0xa8] sm:$0xf]
        %v2355 = vld [vmem:[%s2325 + $0xac] sm:$0xf]
        %v2356 = vld [vmem:[%s2325 + $0xb4] sm:$0xf]
        %v2357 = vld [vmem:[%s2325 + $0xb8] sm:$0xf]
        %2390 = vrot.lane.b32.xlu0 %v2326, 24
        %v2391 = vpop.permute.xlu0 %2390
        %2392 = vrot.lane.b32.xlu0 %v2327, 24
        %v2393 = vpop.permute.xlu0 %2392
        %2394 = vrot.lane.b32.xlu0 %v2328, 24
        %v2395 = vpop.permute.xlu0 %2394
        %2396 = vrot.lane.b32.xlu0 %v2329, 24
        %v2397 = vpop.permute.xlu0 %2396
        %2398 = vrot.lane.b32.xlu0 %v2330, 24
        %v2399 = vpop.permute.xlu0 %2398
        %2400 = vrot.lane.b32.xlu0 %v2331, 24
        %v2401 = vpop.permute.xlu0 %2400
        %2402 = vrot.lane.b32.xlu0 %v2332, 24
        %v2403 = vpop.permute.xlu0 %2402
        %2404 = vrot.lane.b32.xlu0 %v2333, 24
        %v2405 = vpop.permute.xlu0 %2404
        %2406 = vrot.lane.b32.xlu0 %v2334, 24
        %v2407 = vpop.permute.xlu0 %2406
        %2408 = vrot.lane.b32.xlu0 %v2335, 24
        %v2409 = vpop.permute.xlu0 %2408
        %2410 = vrot.lane.b32.xlu0 %v2336, 24
        %v2411 = vpop.permute.xlu0 %2410
        %2412 = vrot.lane.b32.xlu0 %v2337, 24
        %v2413 = vpop.permute.xlu0 %2412
        %2414 = vrot.lane.b32.xlu0 %v2338, 24
        %v2415 = vpop.permute.xlu0 %2414
        %2416 = vrot.lane.b32.xlu0 %v2339, 24
        %v2417 = vpop.permute.xlu0 %2416
        %2418 = vrot.lane.b32.xlu0 %v2340, 24
        %v2419 = vpop.permute.xlu0 %2418
        %2420 = vrot.lane.b32.xlu0 %v2341, 24
        %v2421 = vpop.permute.xlu0 %2420
        %2422 = vrot.lane.b32.xlu0 %v2342, 24
        %v2423 = vpop.permute.xlu0 %2422
        %2424 = vrot.lane.b32.xlu0 %v2343, 24
        %v2425 = vpop.permute.xlu0 %2424
        %2426 = vrot.lane.b32.xlu0 %v2344, 24
        %v2427 = vpop.permute.xlu0 %2426
        %2428 = vrot.lane.b32.xlu0 %v2345, 24
        %v2429 = vpop.permute.xlu0 %2428
        %2430 = vrot.lane.b32.xlu0 %v2346, 24
        %v2431 = vpop.permute.xlu0 %2430
        %2432 = vrot.lane.b32.xlu0 %v2347, 24
        %v2433 = vpop.permute.xlu0 %2432
        %2434 = vrot.lane.b32.xlu0 %v2348, 24
        %v2435 = vpop.permute.xlu0 %2434
        %2436 = vrot.lane.b32.xlu0 %v2349, 24
        %v2437 = vpop.permute.xlu0 %2436
        %2438 = vrot.lane.b32.xlu0 %v2350, 24
        %v2439 = vpop.permute.xlu0 %2438
        %2440 = vrot.lane.b32.xlu0 %v2351, 24
        %v2441 = vpop.permute.xlu0 %2440
        %2442 = vrot.lane.b32.xlu0 %v2352, 24
        %v2443 = vpop.permute.xlu0 %2442
        %2444 = vrot.lane.b32.xlu0 %v2353, 24
        %v2445 = vpop.permute.xlu0 %2444
        %2446 = vrot.lane.b32.xlu0 %v2354, 24
        %v2447 = vpop.permute.xlu0 %2446
        %2448 = vrot.lane.b32.xlu0 %v2355, 24
        %v2449 = vpop.permute.xlu0 %2448
        %2450 = vrot.lane.b32.xlu0 %v2356, 24
        %v2451 = vpop.permute.xlu0 %2450
        %2452 = vrot.lane.b32.xlu0 %v2357, 24
        %v2453 = vpop.permute.xlu0 %2452
        %vm2486 = vcmask 224448
        %2487 = vst.msk [vmem:[#allocation2] sm:$0xf] %vm2486, %v2391
        %2488 = vst.msk [vmem:[#allocation2 + $0x4] sm:$0xf] %vm2486, %v2393
        %2489 = vst.msk [vmem:[#allocation2 + $0x8] sm:$0xf] %vm2486, %v2395
        %2490 = vst.msk [vmem:[#allocation2 + $0xc] sm:$0xf] %vm2486, %v2397
        %2491 = vst.msk [vmem:[#allocation2 + $0x10] sm:$0xf] %vm2486, %v2399
        %2492 = vst.msk [vmem:[#allocation2 + $0x14] sm:$0xf] %vm2486, %v2401
        %2493 = vst.msk [vmem:[#allocation2 + $0x18] sm:$0xf] %vm2486, %v2403
        %2494 = vst.msk [vmem:[#allocation2 + $0x1c] sm:$0xf] %vm2486, %v2405
        %2495 = vst.msk [vmem:[#allocation2 + $0x20] sm:$0xf] %vm2486, %v2407
        %2496 = vst.msk [vmem:[#allocation2 + $0x24] sm:$0xf] %vm2486, %v2409
        %2497 = vst.msk [vmem:[#allocation2 + $0x28] sm:$0xf] %vm2486, %v2411
        %2498 = vst.msk [vmem:[#allocation2 + $0x2c] sm:$0xf] %vm2486, %v2413
        %2499 = vst.msk [vmem:[#allocation2 + $0x30] sm:$0xf] %vm2486, %v2415
        %2500 = vst.msk [vmem:[#allocation2 + $0x34] sm:$0xf] %vm2486, %v2417
        %2501 = vst.msk [vmem:[#allocation2 + $0x38] sm:$0xf] %vm2486, %v2419
        %2502 = vst.msk [vmem:[#allocation2 + $0x3c] sm:$0xf] %vm2486, %v2421
        %2503 = vst.msk [vmem:[#allocation2 + $0x40] sm:$0xf] %vm2486, %v2423
        %2504 = vst.msk [vmem:[#allocation2 + $0x44] sm:$0xf] %vm2486, %v2425
        %2505 = vst.msk [vmem:[#allocation2 + $0x48] sm:$0xf] %vm2486, %v2427
        %2506 = vst.msk [vmem:[#allocation2 + $0x4c] sm:$0xf] %vm2486, %v2429
        %2507 = vst.msk [vmem:[#allocation2 + $0x50] sm:$0xf] %vm2486, %v2431
        %2508 = vst.msk [vmem:[#allocation2 + $0x54] sm:$0xf] %vm2486, %v2433
        %2509 = vst.msk [vmem:[#allocation2 + $0x58] sm:$0xf] %vm2486, %v2435
        %2510 = vst.msk [vmem:[#allocation2 + $0x5c] sm:$0xf] %vm2486, %v2437
        %2511 = vst.msk [vmem:[#allocation2 + $0x60] sm:$0xf] %vm2486, %v2439
        %2512 = vst.msk [vmem:[#allocation2 + $0x64] sm:$0xf] %vm2486, %v2441
        %2513 = vst.msk [vmem:[#allocation2 + $0x68] sm:$0xf] %vm2486, %v2443
        %2514 = vst.msk [vmem:[#allocation2 + $0x6c] sm:$0xf] %vm2486, %v2445
        %2515 = vst.msk [vmem:[#allocation2 + $0x70] sm:$0xf] %vm2486, %v2447
        %2516 = vst.msk [vmem:[#allocation2 + $0x74] sm:$0xf] %vm2486, %v2449
        %2517 = vst.msk [vmem:[#allocation2 + $0x78] sm:$0xf] %vm2486, %v2451
        %2518 = vst.msk [vmem:[#allocation2 + $0x7c] sm:$0xf] %vm2486, %v2453
        %v2519 = vld [vmem:[%s2325] sm:$0xf]
        %v2520 = vld [vmem:[%s2325 + $0x4] sm:$0xf]
        %v2521 = vld [vmem:[%s2325 + $0x8] sm:$0x1]
        %v2522 = vld [vmem:[%s2325 + $0xc] sm:$0xf]
        %v2523 = vld [vmem:[%s2325 + $0x10] sm:$0xf]
        %v2524 = vld [vmem:[%s2325 + $0x14] sm:$0x1]
        %v2525 = vld [vmem:[%s2325 + $0x18] sm:$0xf]
        %v2526 = vld [vmem:[%s2325 + $0x1c] sm:$0xf]
        %v2527 = vld [vmem:[%s2325 + $0x20] sm:$0x1]
        %v2528 = vld [vmem:[%s2325 + $0x24] sm:$0xf]
        %v2529 = vld [vmem:[%s2325 + $0x28] sm:$0xf]
        %v2530 = vld [vmem:[%s2325 + $0x2c] sm:$0x1]
        %v2531 = vld [vmem:[%s2325 + $0x30] sm:$0xf]
        %v2532 = vld [vmem:[%s2325 + $0x34] sm:$0xf]
        %v2533 = vld [vmem:[%s2325 + $0x38] sm:$0x1]
        %v2534 = vld [vmem:[%s2325 + $0x3c] sm:$0xf]
        %v2535 = vld [vmem:[%s2325 + $0x40] sm:$0xf]
        %v2536 = vld [vmem:[%s2325 + $0x44] sm:$0x1]
        %v2537 = vld [vmem:[%s2325 + $0x48] sm:$0xf]
        %v2538 = vld [vmem:[%s2325 + $0x4c] sm:$0xf]
        %v2539 = vld [vmem:[%s2325 + $0x50] sm:$0x1]
        %v2540 = vld [vmem:[%s2325 + $0x54] sm:$0xf]
        %v2541 = vld [vmem:[%s2325 + $0x58] sm:$0xf]
        %v2542 = vld [vmem:[%s2325 + $0x5c] sm:$0x1]
        %v2543 = vld [vmem:[%s2325 + $0x60] sm:$0xf]
        %v2544 = vld [vmem:[%s2325 + $0x64] sm:$0xf]
        %v2545 = vld [vmem:[%s2325 + $0x68] sm:$0x1]
        %v2546 = vld [vmem:[%s2325 + $0x6c] sm:$0xf]
        %v2547 = vld [vmem:[%s2325 + $0x70] sm:$0xf]
        %v2548 = vld [vmem:[%s2325 + $0x74] sm:$0x1]
        %v2549 = vld [vmem:[%s2325 + $0x78] sm:$0xf]
        %v2550 = vld [vmem:[%s2325 + $0x7c] sm:$0xf]
        %v2551 = vld [vmem:[%s2325 + $0x80] sm:$0x1]
        %v2552 = vld [vmem:[%s2325 + $0x84] sm:$0xf]
        %v2553 = vld [vmem:[%s2325 + $0x88] sm:$0xf]
        %v2554 = vld [vmem:[%s2325 + $0x8c] sm:$0x1]
        %v2555 = vld [vmem:[%s2325 + $0x90] sm:$0xf]
        %v2556 = vld [vmem:[%s2325 + $0x94] sm:$0xf]
        %v2557 = vld [vmem:[%s2325 + $0x98] sm:$0x1]
        %v2558 = vld [vmem:[%s2325 + $0x9c] sm:$0xf]
        %v2559 = vld [vmem:[%s2325 + $0xa0] sm:$0xf]
        %v2560 = vld [vmem:[%s2325 + $0xa4] sm:$0x1]
        %v2561 = vld [vmem:[%s2325 + $0xa8] sm:$0xf]
        %v2562 = vld [vmem:[%s2325 + $0xac] sm:$0xf]
        %v2563 = vld [vmem:[%s2325 + $0xb0] sm:$0x1]
        %v2564 = vld [vmem:[%s2325 + $0xb4] sm:$0xf]
        %v2565 = vld [vmem:[%s2325 + $0xb8] sm:$0xf]
        %v2566 = vld [vmem:[%s2325 + $0xbc] sm:$0x1]
        %v2568 = vshrl.u32 %v2519, 16
        %v2570 = vrot.slane %v2568, 4
        %v2571 = vshll.u32 %v2519, 16
        %v2573 = vrot.slane %v2571, 5
        %v2574 = vor.u32 %v2570, %v2573
        %v2575 = vrot.slane %v2574, 4
        %v2577 = vshll.u32 %v2520, 16
        %v2579 = vrot.slane %v2577, 5
        %v2580 = vsel %vm379, %v2575, %v2579
        %v2581 = vshrl.u32 %v2520, 16
        %v2583 = vrot.slane %v2581, 4
        %v2584 = vor.u32 %v2583, %v2579
        %v2585 = vrot.slane %v2584, 4
        %v2587 = vshll.u32 %v2521, 16
        %v2589 = vrot.slane %v2587, 5
        %v2590 = vsel %vm379, %v2585, %v2589
        %v2592 = vshrl.u32 %v2522, 16
        %v2594 = vrot.slane %v2592, 4
        %v2595 = vshll.u32 %v2522, 16
        %v2597 = vrot.slane %v2595, 5
        %v2598 = vor.u32 %v2594, %v2597
        %v2599 = vrot.slane %v2598, 4
        %v2601 = vshll.u32 %v2523, 16
        %v2603 = vrot.slane %v2601, 5
        %v2604 = vsel %vm379, %v2599, %v2603
        %v2605 = vshrl.u32 %v2523, 16
        %v2607 = vrot.slane %v2605, 4
        %v2608 = vor.u32 %v2607, %v2603
        %v2609 = vrot.slane %v2608, 4
        %v2611 = vshll.u32 %v2524, 16
        %v2613 = vrot.slane %v2611, 5
        %v2614 = vsel %vm379, %v2609, %v2613
        %v2616 = vshrl.u32 %v2525, 16
        %v2618 = vrot.slane %v2616, 4
        %v2619 = vshll.u32 %v2525, 16
        %v2621 = vrot.slane %v2619, 5
        %v2622 = vor.u32 %v2618, %v2621
        %v2623 = vrot.slane %v2622, 4
        %v2625 = vshll.u32 %v2526, 16
        %v2627 = vrot.slane %v2625, 5
        %v2628 = vsel %vm379, %v2623, %v2627
        %v2629 = vshrl.u32 %v2526, 16
        %v2631 = vrot.slane %v2629, 4
        %v2632 = vor.u32 %v2631, %v2627
        %v2633 = vrot.slane %v2632, 4
        %v2635 = vshll.u32 %v2527, 16
        %v2637 = vrot.slane %v2635, 5
        %v2638 = vsel %vm379, %v2633, %v2637
        %v2640 = vshrl.u32 %v2528, 16
        %v2642 = vrot.slane %v2640, 4
        %v2643 = vshll.u32 %v2528, 16
        %v2645 = vrot.slane %v2643, 5
        %v2646 = vor.u32 %v2642, %v2645
        %v2647 = vrot.slane %v2646, 4
        %v2649 = vshll.u32 %v2529, 16
        %v2651 = vrot.slane %v2649, 5
        %v2652 = vsel %vm379, %v2647, %v2651
        %v2653 = vshrl.u32 %v2529, 16
        %v2655 = vrot.slane %v2653, 4
        %v2656 = vor.u32 %v2655, %v2651
        %v2657 = vrot.slane %v2656, 4
        %v2659 = vshll.u32 %v2530, 16
        %v2661 = vrot.slane %v2659, 5
        %v2662 = vsel %vm379, %v2657, %v2661
        %v2664 = vshrl.u32 %v2531, 16
        %v2666 = vrot.slane %v2664, 4
        %v2667 = vshll.u32 %v2531, 16
        %v2669 = vrot.slane %v2667, 5
        %v2670 = vor.u32 %v2666, %v2669
        %v2671 = vrot.slane %v2670, 4
        %v2673 = vshll.u32 %v2532, 16
        %v2675 = vrot.slane %v2673, 5
        %v2676 = vsel %vm379, %v2671, %v2675
        %v2677 = vshrl.u32 %v2532, 16
        %v2679 = vrot.slane %v2677, 4
        %v2680 = vor.u32 %v2679, %v2675
        %v2681 = vrot.slane %v2680, 4
        %v2683 = vshll.u32 %v2533, 16
        %v2685 = vrot.slane %v2683, 5
        %v2686 = vsel %vm379, %v2681, %v2685
        %v2688 = vshrl.u32 %v2534, 16
        %v2690 = vrot.slane %v2688, 4
        %v2691 = vshll.u32 %v2534, 16
        %v2693 = vrot.slane %v2691, 5
        %v2694 = vor.u32 %v2690, %v2693
        %v2695 = vrot.slane %v2694, 4
        %v2697 = vshll.u32 %v2535, 16
        %v2699 = vrot.slane %v2697, 5
        %v2700 = vsel %vm379, %v2695, %v2699
        %v2701 = vshrl.u32 %v2535, 16
        %v2703 = vrot.slane %v2701, 4
        %v2704 = vor.u32 %v2703, %v2699
        %v2705 = vrot.slane %v2704, 4
        %v2707 = vshll.u32 %v2536, 16
        %v2709 = vrot.slane %v2707, 5
        %v2710 = vsel %vm379, %v2705, %v2709
        %v2712 = vshrl.u32 %v2537, 16
        %v2714 = vrot.slane %v2712, 4
        %v2715 = vshll.u32 %v2537, 16
        %v2717 = vrot.slane %v2715, 5
        %v2718 = vor.u32 %v2714, %v2717
        %v2719 = vrot.slane %v2718, 4
        %v2721 = vshll.u32 %v2538, 16
        %v2723 = vrot.slane %v2721, 5
        %v2724 = vsel %vm379, %v2719, %v2723
        %v2725 = vshrl.u32 %v2538, 16
        %v2727 = vrot.slane %v2725, 4
        %v2728 = vor.u32 %v2727, %v2723
        %v2729 = vrot.slane %v2728, 4
        %v2731 = vshll.u32 %v2539, 16
        %v2733 = vrot.slane %v2731, 5
        %v2734 = vsel %vm379, %v2729, %v2733
        %v2736 = vshrl.u32 %v2540, 16
        %v2738 = vrot.slane %v2736, 4
        %v2739 = vshll.u32 %v2540, 16
        %v2741 = vrot.slane %v2739, 5
        %v2742 = vor.u32 %v2738, %v2741
        %v2743 = vrot.slane %v2742, 4
        %v2745 = vshll.u32 %v2541, 16
        %v2747 = vrot.slane %v2745, 5
        %v2748 = vsel %vm379, %v2743, %v2747
        %v2749 = vshrl.u32 %v2541, 16
        %v2751 = vrot.slane %v2749, 4
        %v2752 = vor.u32 %v2751, %v2747
        %v2753 = vrot.slane %v2752, 4
        %v2755 = vshll.u32 %v2542, 16
        %v2757 = vrot.slane %v2755, 5
        %v2758 = vsel %vm379, %v2753, %v2757
        %v2760 = vshrl.u32 %v2543, 16
        %v2762 = vrot.slane %v2760, 4
        %v2763 = vshll.u32 %v2543, 16
        %v2765 = vrot.slane %v2763, 5
        %v2766 = vor.u32 %v2762, %v2765
        %v2767 = vrot.slane %v2766, 4
        %v2769 = vshll.u32 %v2544, 16
        %v2771 = vrot.slane %v2769, 5
        %v2772 = vsel %vm379, %v2767, %v2771
        %v2773 = vshrl.u32 %v2544, 16
        %v2775 = vrot.slane %v2773, 4
        %v2776 = vor.u32 %v2775, %v2771
        %v2777 = vrot.slane %v2776, 4
        %v2779 = vshll.u32 %v2545, 16
        %v2781 = vrot.slane %v2779, 5
        %v2782 = vsel %vm379, %v2777, %v2781
        %v2784 = vshrl.u32 %v2546, 16
        %v2786 = vrot.slane %v2784, 4
        %v2787 = vshll.u32 %v2546, 16
        %v2789 = vrot.slane %v2787, 5
        %v2790 = vor.u32 %v2786, %v2789
        %v2791 = vrot.slane %v2790, 4
        %v2793 = vshll.u32 %v2547, 16
        %v2795 = vrot.slane %v2793, 5
        %v2796 = vsel %vm379, %v2791, %v2795
        %v2797 = vshrl.u32 %v2547, 16
        %v2799 = vrot.slane %v2797, 4
        %v2800 = vor.u32 %v2799, %v2795
        %v2801 = vrot.slane %v2800, 4
        %v2803 = vshll.u32 %v2548, 16
        %v2805 = vrot.slane %v2803, 5
        %v2806 = vsel %vm379, %v2801, %v2805
        %v2808 = vshrl.u32 %v2549, 16
        %v2810 = vrot.slane %v2808, 4
        %v2811 = vshll.u32 %v2549, 16
        %v2813 = vrot.slane %v2811, 5
        %v2814 = vor.u32 %v2810, %v2813
        %v2815 = vrot.slane %v2814, 4
        %v2817 = vshll.u32 %v2550, 16
        %v2819 = vrot.slane %v2817, 5
        %v2820 = vsel %vm379, %v2815, %v2819
        %v2821 = vshrl.u32 %v2550, 16
        %v2823 = vrot.slane %v2821, 4
        %v2824 = vor.u32 %v2823, %v2819
        %v2825 = vrot.slane %v2824, 4
        %v2827 = vshll.u32 %v2551, 16
        %v2829 = vrot.slane %v2827, 5
        %v2830 = vsel %vm379, %v2825, %v2829
        %v2832 = vshrl.u32 %v2552, 16
        %v2834 = vrot.slane %v2832, 4
        %v2835 = vshll.u32 %v2552, 16
        %v2837 = vrot.slane %v2835, 5
        %v2838 = vor.u32 %v2834, %v2837
        %v2839 = vrot.slane %v2838, 4
        %v2841 = vshll.u32 %v2553, 16
        %v2843 = vrot.slane %v2841, 5
        %v2844 = vsel %vm379, %v2839, %v2843
        %v2845 = vshrl.u32 %v2553, 16
        %v2847 = vrot.slane %v2845, 4
        %v2848 = vor.u32 %v2847, %v2843
        %v2849 = vrot.slane %v2848, 4
        %v2851 = vshll.u32 %v2554, 16
        %v2853 = vrot.slane %v2851, 5
        %v2854 = vsel %vm379, %v2849, %v2853
        %v2856 = vshrl.u32 %v2555, 16
        %v2858 = vrot.slane %v2856, 4
        %v2859 = vshll.u32 %v2555, 16
        %v2861 = vrot.slane %v2859, 5
        %v2862 = vor.u32 %v2858, %v2861
        %v2863 = vrot.slane %v2862, 4
        %v2865 = vshll.u32 %v2556, 16
        %v2867 = vrot.slane %v2865, 5
        %v2868 = vsel %vm379, %v2863, %v2867
        %v2869 = vshrl.u32 %v2556, 16
        %v2871 = vrot.slane %v2869, 4
        %v2872 = vor.u32 %v2871, %v2867
        %v2873 = vrot.slane %v2872, 4
        %v2875 = vshll.u32 %v2557, 16
        %v2877 = vrot.slane %v2875, 5
        %v2878 = vsel %vm379, %v2873, %v2877
        %v2880 = vshrl.u32 %v2558, 16
        %v2882 = vrot.slane %v2880, 4
        %v2883 = vshll.u32 %v2558, 16
        %v2885 = vrot.slane %v2883, 5
        %v2886 = vor.u32 %v2882, %v2885
        %v2887 = vrot.slane %v2886, 4
        %v2889 = vshll.u32 %v2559, 16
        %v2891 = vrot.slane %v2889, 5
        %v2892 = vsel %vm379, %v2887, %v2891
        %v2893 = vshrl.u32 %v2559, 16
        %v2895 = vrot.slane %v2893, 4
        %v2896 = vor.u32 %v2895, %v2891
        %v2897 = vrot.slane %v2896, 4
        %v2899 = vshll.u32 %v2560, 16
        %v2901 = vrot.slane %v2899, 5
        %v2902 = vsel %vm379, %v2897, %v2901
        %v2904 = vshrl.u32 %v2561, 16
        %v2906 = vrot.slane %v2904, 4
        %v2907 = vshll.u32 %v2561, 16
        %v2909 = vrot.slane %v2907, 5
        %v2910 = vor.u32 %v2906, %v2909
        %v2911 = vrot.slane %v2910, 4
        %v2913 = vshll.u32 %v2562, 16
        %v2915 = vrot.slane %v2913, 5
        %v2916 = vsel %vm379, %v2911, %v2915
        %v2917 = vshrl.u32 %v2562, 16
        %v2919 = vrot.slane %v2917, 4
        %v2920 = vor.u32 %v2919, %v2915
        %v2921 = vrot.slane %v2920, 4
        %v2923 = vshll.u32 %v2563, 16
        %v2925 = vrot.slane %v2923, 5
        %v2926 = vsel %vm379, %v2921, %v2925
        %v2928 = vshrl.u32 %v2564, 16
        %v2930 = vrot.slane %v2928, 4
        %v2931 = vshll.u32 %v2564, 16
        %v2933 = vrot.slane %v2931, 5
        %v2934 = vor.u32 %v2930, %v2933
        %v2935 = vrot.slane %v2934, 4
        %v2937 = vshll.u32 %v2565, 16
        %v2939 = vrot.slane %v2937, 5
        %v2940 = vsel %vm379, %v2935, %v2939
        %v2941 = vshrl.u32 %v2565, 16
        %v2943 = vrot.slane %v2941, 4
        %v2944 = vor.u32 %v2943, %v2939
        %v2945 = vrot.slane %v2944, 4
        %v2947 = vshll.u32 %v2566, 16
        %v2949 = vrot.slane %v2947, 5
        %v2950 = vsel %vm379, %v2945, %v2949
        %2951 = vrot.lane.b32.xlu0 %v2580, 28
        %v2952 = vpop.permute.xlu0 %2951
        %2953 = vrot.lane.b32.xlu0 %v2590, 28
        %v2954 = vpop.permute.xlu0 %2953
        %2955 = vrot.lane.b32.xlu0 %v2604, 28
        %v2956 = vpop.permute.xlu0 %2955
        %2957 = vrot.lane.b32.xlu0 %v2614, 28
        %v2958 = vpop.permute.xlu0 %2957
        %2959 = vrot.lane.b32.xlu0 %v2628, 28
        %v2960 = vpop.permute.xlu0 %2959
        %2961 = vrot.lane.b32.xlu0 %v2638, 28
        %v2962 = vpop.permute.xlu0 %2961
        %2963 = vrot.lane.b32.xlu0 %v2652, 28
        %v2964 = vpop.permute.xlu0 %2963
        %2965 = vrot.lane.b32.xlu0 %v2662, 28
        %v2966 = vpop.permute.xlu0 %2965
        %2967 = vrot.lane.b32.xlu0 %v2676, 28
        %v2968 = vpop.permute.xlu0 %2967
        %2969 = vrot.lane.b32.xlu0 %v2686, 28
        %v2970 = vpop.permute.xlu0 %2969
        %2971 = vrot.lane.b32.xlu0 %v2700, 28
        %v2972 = vpop.permute.xlu0 %2971
        %2973 = vrot.lane.b32.xlu0 %v2710, 28
        %v2974 = vpop.permute.xlu0 %2973
        %2975 = vrot.lane.b32.xlu0 %v2724, 28
        %v2976 = vpop.permute.xlu0 %2975
        %2977 = vrot.lane.b32.xlu0 %v2734, 28
        %v2978 = vpop.permute.xlu0 %2977
        %2979 = vrot.lane.b32.xlu0 %v2748, 28
        %v2980 = vpop.permute.xlu0 %2979
        %2981 = vrot.lane.b32.xlu0 %v2758, 28
        %v2982 = vpop.permute.xlu0 %2981
        %2983 = vrot.lane.b32.xlu0 %v2772, 28
        %v2984 = vpop.permute.xlu0 %2983
        %2985 = vrot.lane.b32.xlu0 %v2782, 28
        %v2986 = vpop.permute.xlu0 %2985
        %2987 = vrot.lane.b32.xlu0 %v2796, 28
        %v2988 = vpop.permute.xlu0 %2987
        %2989 = vrot.lane.b32.xlu0 %v2806, 28
        %v2990 = vpop.permute.xlu0 %2989
        %2991 = vrot.lane.b32.xlu0 %v2820, 28
        %v2992 = vpop.permute.xlu0 %2991
        %2993 = vrot.lane.b32.xlu0 %v2830, 28
        %v2994 = vpop.permute.xlu0 %2993
        %2995 = vrot.lane.b32.xlu0 %v2844, 28
        %v2996 = vpop.permute.xlu0 %2995
        %2997 = vrot.lane.b32.xlu0 %v2854, 28
        %v2998 = vpop.permute.xlu0 %2997
        %2999 = vrot.lane.b32.xlu0 %v2868, 28
        %v3000 = vpop.permute.xlu0 %2999
        %3001 = vrot.lane.b32.xlu0 %v2878, 28
        %v3002 = vpop.permute.xlu0 %3001
        %3003 = vrot.lane.b32.xlu0 %v2892, 28
        %v3004 = vpop.permute.xlu0 %3003
        %3005 = vrot.lane.b32.xlu0 %v2902, 28
        %v3006 = vpop.permute.xlu0 %3005
        %3007 = vrot.lane.b32.xlu0 %v2916, 28
        %v3008 = vpop.permute.xlu0 %3007
        %3009 = vrot.lane.b32.xlu0 %v2926, 28
        %v3010 = vpop.permute.xlu0 %3009
        %3011 = vrot.lane.b32.xlu0 %v2940, 28
        %v3012 = vpop.permute.xlu0 %3011
        %3013 = vrot.lane.b32.xlu0 %v2950, 28
        %v3014 = vpop.permute.xlu0 %3013
        %vm3047 = vcmask 257248
        %3048 = vst.msk [vmem:[#allocation2] sm:$0xf] %vm3047, %v2952
        %3049 = vst.msk [vmem:[#allocation2 + $0x4] sm:$0xf] %vm3047, %v2954
        %3050 = vst.msk [vmem:[#allocation2 + $0x8] sm:$0xf] %vm3047, %v2956
        %3051 = vst.msk [vmem:[#allocation2 + $0xc] sm:$0xf] %vm3047, %v2958
        %3052 = vst.msk [vmem:[#allocation2 + $0x10] sm:$0xf] %vm3047, %v2960
        %3053 = vst.msk [vmem:[#allocation2 + $0x14] sm:$0xf] %vm3047, %v2962
        %3054 = vst.msk [vmem:[#allocation2 + $0x18] sm:$0xf] %vm3047, %v2964
        %3055 = vst.msk [vmem:[#allocation2 + $0x1c] sm:$0xf] %vm3047, %v2966
        %3056 = vst.msk [vmem:[#allocation2 + $0x20] sm:$0xf] %vm3047, %v2968
        %3057 = vst.msk [vmem:[#allocation2 + $0x24] sm:$0xf] %vm3047, %v2970
        %3058 = vst.msk [vmem:[#allocation2 + $0x28] sm:$0xf] %vm3047, %v2972
        %3059 = vst.msk [vmem:[#allocation2 + $0x2c] sm:$0xf] %vm3047, %v2974
        %3060 = vst.msk [vmem:[#allocation2 + $0x30] sm:$0xf] %vm3047, %v2976
        %3061 = vst.msk [vmem:[#allocation2 + $0x34] sm:$0xf] %vm3047, %v2978
        %3062 = vst.msk [vmem:[#allocation2 + $0x38] sm:$0xf] %vm3047, %v2980
        %3063 = vst.msk [vmem:[#allocation2 + $0x3c] sm:$0xf] %vm3047, %v2982
        %3064 = vst.msk [vmem:[#allocation2 + $0x40] sm:$0xf] %vm3047, %v2984
        %3065 = vst.msk [vmem:[#allocation2 + $0x44] sm:$0xf] %vm3047, %v2986
        %3066 = vst.msk [vmem:[#allocation2 + $0x48] sm:$0xf] %vm3047, %v2988
        %3067 = vst.msk [vmem:[#allocation2 + $0x4c] sm:$0xf] %vm3047, %v2990
        %3068 = vst.msk [vmem:[#allocation2 + $0x50] sm:$0xf] %vm3047, %v2992
        %3069 = vst.msk [vmem:[#allocation2 + $0x54] sm:$0xf] %vm3047, %v2994
        %3070 = vst.msk [vmem:[#allocation2 + $0x58] sm:$0xf] %vm3047, %v2996
        %3071 = vst.msk [vmem:[#allocation2 + $0x5c] sm:$0xf] %vm3047, %v2998
        %3072 = vst.msk [vmem:[#allocation2 + $0x60] sm:$0xf] %vm3047, %v3000
        %3073 = vst.msk [vmem:[#allocation2 + $0x64] sm:$0xf] %vm3047, %v3002
        %3074 = vst.msk [vmem:[#allocation2 + $0x68] sm:$0xf] %vm3047, %v3004
        %3075 = vst.msk [vmem:[#allocation2 + $0x6c] sm:$0xf] %vm3047, %v3006
        %3076 = vst.msk [vmem:[#allocation2 + $0x70] sm:$0xf] %vm3047, %v3008
        %3077 = vst.msk [vmem:[#allocation2 + $0x74] sm:$0xf] %vm3047, %v3010
        %3078 = vst.msk [vmem:[#allocation2 + $0x78] sm:$0xf] %vm3047, %v3012
        %3079 = vst.msk [vmem:[#allocation2 + $0x7c] sm:$0xf] %vm3047, %v3014
        %v3080 = vld [vmem:[%s2325] sm:$0xe]
        %v3081 = vld [vmem:[%s2325 + $0x4] sm:$0xf]
        %v3082 = vld [vmem:[%s2325 + $0x8] sm:$0x1]
        %v3083 = vld [vmem:[%s2325 + $0xc] sm:$0xe]
        %v3084 = vld [vmem:[%s2325 + $0x10] sm:$0xf]
        %v3085 = vld [vmem:[%s2325 + $0x14] sm:$0x1]
        %v3086 = vld [vmem:[%s2325 + $0x18] sm:$0xe]
        %v3087 = vld [vmem:[%s2325 + $0x1c] sm:$0xf]
        %v3088 = vld [vmem:[%s2325 + $0x20] sm:$0x1]
        %v3089 = vld [vmem:[%s2325 + $0x24] sm:$0xe]
        %v3090 = vld [vmem:[%s2325 + $0x28] sm:$0xf]
        %v3091 = vld [vmem:[%s2325 + $0x2c] sm:$0x1]
        %v3092 = vld [vmem:[%s2325 + $0x30] sm:$0xe]
        %v3093 = vld [vmem:[%s2325 + $0x34] sm:$0xf]
        %v3094 = vld [vmem:[%s2325 + $0x38] sm:$0x1]
        %v3095 = vld [vmem:[%s2325 + $0x3c] sm:$0xe]
        %v3096 = vld [vmem:[%s2325 + $0x40] sm:$0xf]
        %v3097 = vld [vmem:[%s2325 + $0x44] sm:$0x1]
        %v3098 = vld [vmem:[%s2325 + $0x48] sm:$0xe]
        %v3099 = vld [vmem:[%s2325 + $0x4c] sm:$0xf]
        %v3100 = vld [vmem:[%s2325 + $0x50] sm:$0x1]
        %v3101 = vld [vmem:[%s2325 + $0x54] sm:$0xe]
        %v3102 = vld [vmem:[%s2325 + $0x58] sm:$0xf]
        %v3103 = vld [vmem:[%s2325 + $0x5c] sm:$0x1]
        %v3104 = vld [vmem:[%s2325 + $0x60] sm:$0xe]
        %v3105 = vld [vmem:[%s2325 + $0x64] sm:$0xf]
        %v3106 = vld [vmem:[%s2325 + $0x68] sm:$0x1]
        %v3107 = vld [vmem:[%s2325 + $0x6c] sm:$0xe]
        %v3108 = vld [vmem:[%s2325 + $0x70] sm:$0xf]
        %v3109 = vld [vmem:[%s2325 + $0x74] sm:$0x1]
        %v3110 = vld [vmem:[%s2325 + $0x78] sm:$0xe]
        %v3111 = vld [vmem:[%s2325 + $0x7c] sm:$0xf]
        %v3112 = vld [vmem:[%s2325 + $0x80] sm:$0x1]
        %v3113 = vld [vmem:[%s2325 + $0x84] sm:$0xe]
        %v3114 = vld [vmem:[%s2325 + $0x88] sm:$0xf]
        %v3115 = vld [vmem:[%s2325 + $0x8c] sm:$0x1]
        %v3116 = vld [vmem:[%s2325 + $0x90] sm:$0xe]
        %v3117 = vld [vmem:[%s2325 + $0x94] sm:$0xf]
        %v3118 = vld [vmem:[%s2325 + $0x98] sm:$0x1]
        %v3119 = vld [vmem:[%s2325 + $0x9c] sm:$0xe]
        %v3120 = vld [vmem:[%s2325 + $0xa0] sm:$0xf]
        %v3121 = vld [vmem:[%s2325 + $0xa4] sm:$0x1]
        %v3122 = vld [vmem:[%s2325 + $0xa8] sm:$0xe]
        %v3123 = vld [vmem:[%s2325 + $0xac] sm:$0xf]
        %v3124 = vld [vmem:[%s2325 + $0xb0] sm:$0x1]
        %v3125 = vld [vmem:[%s2325 + $0xb4] sm:$0xe]
        %v3126 = vld [vmem:[%s2325 + $0xb8] sm:$0xf]
        %v3127 = vld [vmem:[%s2325 + $0xbc] sm:$0x1]
        %v3176 = vrot.slane %v3080, 5
        %v3177 = vrot.slane %v3176, 4
        %v3178 = vrot.slane %v3081, 5
        %v3179 = vsel %vm991, %v3177, %v3178
        %v3180 = vrot.slane %v3178, 4
        %v3181 = vrot.slane %v3082, 5
        %v3182 = vsel %vm991, %v3180, %v3181
        %v3183 = vrot.slane %v3083, 5
        %v3184 = vrot.slane %v3183, 4
        %v3185 = vrot.slane %v3084, 5
        %v3186 = vsel %vm991, %v3184, %v3185
        %v3187 = vrot.slane %v3185, 4
        %v3188 = vrot.slane %v3085, 5
        %v3189 = vsel %vm991, %v3187, %v3188
        %v3190 = vrot.slane %v3086, 5
        %v3191 = vrot.slane %v3190, 4
        %v3192 = vrot.slane %v3087, 5
        %v3193 = vsel %vm991, %v3191, %v3192
        %v3194 = vrot.slane %v3192, 4
        %v3195 = vrot.slane %v3088, 5
        %v3196 = vsel %vm991, %v3194, %v3195
        %v3197 = vrot.slane %v3089, 5
        %v3198 = vrot.slane %v3197, 4
        %v3199 = vrot.slane %v3090, 5
        %v3200 = vsel %vm991, %v3198, %v3199
        %v3201 = vrot.slane %v3199, 4
        %v3202 = vrot.slane %v3091, 5
        %v3203 = vsel %vm991, %v3201, %v3202
        %v3204 = vrot.slane %v3092, 5
        %v3205 = vrot.slane %v3204, 4
        %v3206 = vrot.slane %v3093, 5
        %v3207 = vsel %vm991, %v3205, %v3206
        %v3208 = vrot.slane %v3206, 4
        %v3209 = vrot.slane %v3094, 5
        %v3210 = vsel %vm991, %v3208, %v3209
        %v3211 = vrot.slane %v3095, 5
        %v3212 = vrot.slane %v3211, 4
        %v3213 = vrot.slane %v3096, 5
        %v3214 = vsel %vm991, %v3212, %v3213
        %v3215 = vrot.slane %v3213, 4
        %v3216 = vrot.slane %v3097, 5
        %v3217 = vsel %vm991, %v3215, %v3216
        %v3218 = vrot.slane %v3098, 5
        %v3219 = vrot.slane %v3218, 4
        %v3220 = vrot.slane %v3099, 5
        %v3221 = vsel %vm991, %v3219, %v3220
        %v3222 = vrot.slane %v3220, 4
        %v3223 = vrot.slane %v3100, 5
        %v3224 = vsel %vm991, %v3222, %v3223
        %v3225 = vrot.slane %v3101, 5
        %v3226 = vrot.slane %v3225, 4
        %v3227 = vrot.slane %v3102, 5
        %v3228 = vsel %vm991, %v3226, %v3227
        %v3229 = vrot.slane %v3227, 4
        %v3230 = vrot.slane %v3103, 5
        %v3231 = vsel %vm991, %v3229, %v3230
        %v3232 = vrot.slane %v3104, 5
        %v3233 = vrot.slane %v3232, 4
        %v3234 = vrot.slane %v3105, 5
        %v3235 = vsel %vm991, %v3233, %v3234
        %v3236 = vrot.slane %v3234, 4
        %v3237 = vrot.slane %v3106, 5
        %v3238 = vsel %vm991, %v3236, %v3237
        %v3239 = vrot.slane %v3107, 5
        %v3240 = vrot.slane %v3239, 4
        %v3241 = vrot.slane %v3108, 5
        %v3242 = vsel %vm991, %v3240, %v3241
        %v3243 = vrot.slane %v3241, 4
        %v3244 = vrot.slane %v3109, 5
        %v3245 = vsel %vm991, %v3243, %v3244
        %v3246 = vrot.slane %v3110, 5
        %v3247 = vrot.slane %v3246, 4
        %v3248 = vrot.slane %v3111, 5
        %v3249 = vsel %vm991, %v3247, %v3248
        %v3250 = vrot.slane %v3248, 4
        %v3251 = vrot.slane %v3112, 5
        %v3252 = vsel %vm991, %v3250, %v3251
        %v3253 = vrot.slane %v3113, 5
        %v3254 = vrot.slane %v3253, 4
        %v3255 = vrot.slane %v3114, 5
        %v3256 = vsel %vm991, %v3254, %v3255
        %v3257 = vrot.slane %v3255, 4
        %v3258 = vrot.slane %v3115, 5
        %v3259 = vsel %vm991, %v3257, %v3258
        %v3260 = vrot.slane %v3116, 5
        %v3261 = vrot.slane %v3260, 4
        %v3262 = vrot.slane %v3117, 5
        %v3263 = vsel %vm991, %v3261, %v3262
        %v3264 = vrot.slane %v3262, 4
        %v3265 = vrot.slane %v3118, 5
        %v3266 = vsel %vm991, %v3264, %v3265
        %v3267 = vrot.slane %v3119, 5
        %v3268 = vrot.slane %v3267, 4
        %v3269 = vrot.slane %v3120, 5
        %v3270 = vsel %vm991, %v3268, %v3269
        %v3271 = vrot.slane %v3269, 4
        %v3272 = vrot.slane %v3121, 5
        %v3273 = vsel %vm991, %v3271, %v3272
        %v3274 = vrot.slane %v3122, 5
        %v3275 = vrot.slane %v3274, 4
        %v3276 = vrot.slane %v3123, 5
        %v3277 = vsel %vm991, %v3275, %v3276
        %v3278 = vrot.slane %v3276, 4
        %v3279 = vrot.slane %v3124, 5
        %v3280 = vsel %vm991, %v3278, %v3279
        %v3281 = vrot.slane %v3125, 5
        %v3282 = vrot.slane %v3281, 4
        %v3283 = vrot.slane %v3126, 5
        %v3284 = vsel %vm991, %v3282, %v3283
        %v3285 = vrot.slane %v3283, 4
        %v3286 = vrot.slane %v3127, 5
        %v3287 = vsel %vm991, %v3285, %v3286
        %3288 = vrot.lane.b32.xlu0 %v3179, 32
        %v3289 = vpop.permute.xlu0 %3288
        %3290 = vrot.lane.b32.xlu0 %v3182, 32
        %v3291 = vpop.permute.xlu0 %3290
        %3292 = vrot.lane.b32.xlu0 %v3186, 32
        %v3293 = vpop.permute.xlu0 %3292
        %3294 = vrot.lane.b32.xlu0 %v3189, 32
        %v3295 = vpop.permute.xlu0 %3294
        %3296 = vrot.lane.b32.xlu0 %v3193, 32
        %v3297 = vpop.permute.xlu0 %3296
        %3298 = vrot.lane.b32.xlu0 %v3196, 32
        %v3299 = vpop.permute.xlu0 %3298
        %3300 = vrot.lane.b32.xlu0 %v3200, 32
        %v3301 = vpop.permute.xlu0 %3300
        %3302 = vrot.lane.b32.xlu0 %v3203, 32
        %v3303 = vpop.permute.xlu0 %3302
        %3304 = vrot.lane.b32.xlu0 %v3207, 32
        %v3305 = vpop.permute.xlu0 %3304
        %3306 = vrot.lane.b32.xlu0 %v3210, 32
        %v3307 = vpop.permute.xlu0 %3306
        %3308 = vrot.lane.b32.xlu0 %v3214, 32
        %v3309 = vpop.permute.xlu0 %3308
        %3310 = vrot.lane.b32.xlu0 %v3217, 32
        %v3311 = vpop.permute.xlu0 %3310
        %3312 = vrot.lane.b32.xlu0 %v3221, 32
        %v3313 = vpop.permute.xlu0 %3312
        %3314 = vrot.lane.b32.xlu0 %v3224, 32
        %v3315 = vpop.permute.xlu0 %3314
        %3316 = vrot.lane.b32.xlu0 %v3228, 32
        %v3317 = vpop.permute.xlu0 %3316
        %3318 = vrot.lane.b32.xlu0 %v3231, 32
        %v3319 = vpop.permute.xlu0 %3318
        %3320 = vrot.lane.b32.xlu0 %v3235, 32
        %v3321 = vpop.permute.xlu0 %3320
        %3322 = vrot.lane.b32.xlu0 %v3238, 32
        %v3323 = vpop.permute.xlu0 %3322
        %3324 = vrot.lane.b32.xlu0 %v3242, 32
        %v3325 = vpop.permute.xlu0 %3324
        %3326 = vrot.lane.b32.xlu0 %v3245, 32
        %v3327 = vpop.permute.xlu0 %3326
        %3328 = vrot.lane.b32.xlu0 %v3249, 32
        %v3329 = vpop.permute.xlu0 %3328
        %3330 = vrot.lane.b32.xlu0 %v3252, 32
        %v3331 = vpop.permute.xlu0 %3330
        %3332 = vrot.lane.b32.xlu0 %v3256, 32
        %v3333 = vpop.permute.xlu0 %3332
        %3334 = vrot.lane.b32.xlu0 %v3259, 32
        %v3335 = vpop.permute.xlu0 %3334
        %3336 = vrot.lane.b32.xlu0 %v3263, 32
        %v3337 = vpop.permute.xlu0 %3336
        %3338 = vrot.lane.b32.xlu0 %v3266, 32
        %v3339 = vpop.permute.xlu0 %3338
        %3340 = vrot.lane.b32.xlu0 %v3270, 32
        %v3341 = vpop.permute.xlu0 %3340
        %3342 = vrot.lane.b32.xlu0 %v3273, 32
        %v3343 = vpop.permute.xlu0 %3342
        %3344 = vrot.lane.b32.xlu0 %v3277, 32
        %v3345 = vpop.permute.xlu0 %3344
        %3346 = vrot.lane.b32.xlu0 %v3280, 32
        %v3347 = vpop.permute.xlu0 %3346
        %3348 = vrot.lane.b32.xlu0 %v3284, 32
        %v3349 = vpop.permute.xlu0 %3348
        %3350 = vrot.lane.b32.xlu0 %v3287, 32
        %v3351 = vpop.permute.xlu0 %3350
        %vm3384 = vcmask 290048
        %3385 = vst.msk [vmem:[#allocation2] sm:$0xf] %vm3384, %v3289
        %3386 = vst.msk [vmem:[#allocation2 + $0x4] sm:$0xf] %vm3384, %v3291
        %3387 = vst.msk [vmem:[#allocation2 + $0x8] sm:$0xf] %vm3384, %v3293
        %3388 = vst.msk [vmem:[#allocation2 + $0xc] sm:$0xf] %vm3384, %v3295
        %3389 = vst.msk [vmem:[#allocation2 + $0x10] sm:$0xf] %vm3384, %v3297
        %3390 = vst.msk [vmem:[#allocation2 + $0x14] sm:$0xf] %vm3384, %v3299
        %3391 = vst.msk [vmem:[#allocation2 + $0x18] sm:$0xf] %vm3384, %v3301
        %3392 = vst.msk [vmem:[#allocation2 + $0x1c] sm:$0xf] %vm3384, %v3303
        %3393 = vst.msk [vmem:[#allocation2 + $0x20] sm:$0xf] %vm3384, %v3305
        %3394 = vst.msk [vmem:[#allocation2 + $0x24] sm:$0xf] %vm3384, %v3307
        %3395 = vst.msk [vmem:[#allocation2 + $0x28] sm:$0xf] %vm3384, %v3309
        %3396 = vst.msk [vmem:[#allocation2 + $0x2c] sm:$0xf] %vm3384, %v3311
        %3397 = vst.msk [vmem:[#allocation2 + $0x30] sm:$0xf] %vm3384, %v3313
        %3398 = vst.msk [vmem:[#allocation2 + $0x34] sm:$0xf] %vm3384, %v3315
        %3399 = vst.msk [vmem:[#allocation2 + $0x38] sm:$0xf] %vm3384, %v3317
        %3400 = vst.msk [vmem:[#allocation2 + $0x3c] sm:$0xf] %vm3384, %v3319
        %3401 = vst.msk [vmem:[#allocation2 + $0x40] sm:$0xf] %vm3384, %v3321
        %3402 = vst.msk [vmem:[#allocation2 + $0x44] sm:$0xf] %vm3384, %v3323
        %3403 = vst.msk [vmem:[#allocation2 + $0x48] sm:$0xf] %vm3384, %v3325
        %3404 = vst.msk [vmem:[#allocation2 + $0x4c] sm:$0xf] %vm3384, %v3327
        %3405 = vst.msk [vmem:[#allocation2 + $0x50] sm:$0xf] %vm3384, %v3329
        %3406 = vst.msk [vmem:[#allocation2 + $0x54] sm:$0xf] %vm3384, %v3331
        %3407 = vst.msk [vmem:[#allocation2 + $0x58] sm:$0xf] %vm3384, %v3333
        %3408 = vst.msk [vmem:[#allocation2 + $0x5c] sm:$0xf] %vm3384, %v3335
        %3409 = vst.msk [vmem:[#allocation2 + $0x60] sm:$0xf] %vm3384, %v3337
        %3410 = vst.msk [vmem:[#allocation2 + $0x64] sm:$0xf] %vm3384, %v3339
        %3411 = vst.msk [vmem:[#allocation2 + $0x68] sm:$0xf] %vm3384, %v3341
        %3412 = vst.msk [vmem:[#allocation2 + $0x6c] sm:$0xf] %vm3384, %v3343
        %3413 = vst.msk [vmem:[#allocation2 + $0x70] sm:$0xf] %vm3384, %v3345
        %3414 = vst.msk [vmem:[#allocation2 + $0x74] sm:$0xf] %vm3384, %v3347
        %3415 = vst.msk [vmem:[#allocation2 + $0x78] sm:$0xf] %vm3384, %v3349
        %3416 = vst.msk [vmem:[#allocation2 + $0x7c] sm:$0xf] %vm3384, %v3351
      $region36: #{_conv_impl.1} parent=31 // pred_fallthru
        _
      %v3417 = vld [vmem:[#allocation2] sm:$0xf]
      %v3418 = vld [vmem:[#allocation2 + $0x4] sm:$0xf]
      %v3419 = vld [vmem:[#allocation2 + $0x8] sm:$0xf]
      %v3420 = vld [vmem:[#allocation2 + $0xc] sm:$0xf]
      %v3421 = vld [vmem:[#allocation2 + $0x10] sm:$0xf]
      %v3422 = vld [vmem:[#allocation2 + $0x14] sm:$0xf]
      %v3423 = vld [vmem:[#allocation2 + $0x18] sm:$0xf]
      %v3424 = vld [vmem:[#allocation2 + $0x1c] sm:$0xf]
      %v3425 = vld [vmem:[#allocation2 + $0x20] sm:$0xf]
      %v3426 = vld [vmem:[#allocation2 + $0x24] sm:$0xf]
      %v3427 = vld [vmem:[#allocation2 + $0x28] sm:$0xf]
      %v3428 = vld [vmem:[#allocation2 + $0x2c] sm:$0xf]
      %v3429 = vld [vmem:[#allocation2 + $0x30] sm:$0xf]
      %v3430 = vld [vmem:[#allocation2 + $0x34] sm:$0xf]
      %v3431 = vld [vmem:[#allocation2 + $0x38] sm:$0xf]
      %v3432 = vld [vmem:[#allocation2 + $0x3c] sm:$0xf]
      %v3433 = vld [vmem:[#allocation2 + $0x40] sm:$0xf]
      %v3434 = vld [vmem:[#allocation2 + $0x44] sm:$0xf]
      %v3435 = vld [vmem:[#allocation2 + $0x48] sm:$0xf]
      %v3436 = vld [vmem:[#allocation2 + $0x4c] sm:$0xf]
      %v3437 = vld [vmem:[#allocation2 + $0x50] sm:$0xf]
      %v3438 = vld [vmem:[#allocation2 + $0x54] sm:$0xf]
      %v3439 = vld [vmem:[#allocation2 + $0x58] sm:$0xf]
      %v3440 = vld [vmem:[#allocation2 + $0x5c] sm:$0xf]
      %v3441 = vld [vmem:[#allocation2 + $0x60] sm:$0xf]
      %v3442 = vld [vmem:[#allocation2 + $0x64] sm:$0xf]
      %v3443 = vld [vmem:[#allocation2 + $0x68] sm:$0xf]
      %v3444 = vld [vmem:[#allocation2 + $0x6c] sm:$0xf]
      %v3445 = vld [vmem:[#allocation2 + $0x70] sm:$0xf]
      %v3446 = vld [vmem:[#allocation2 + $0x74] sm:$0xf]
      %v3447 = vld [vmem:[#allocation2 + $0x78] sm:$0xf]
      %v3448 = vld [vmem:[#allocation2 + $0x7c] sm:$0xf]
      %v3449 = vld [vmem:[%s240] sm:$0xf]
      %v3450 = vld [vmem:[%s240 + $0x4] sm:$0xf]
      %v3451 = vld [vmem:[%s240 + $0x8] sm:$0xf]
      %v3452 = vld [vmem:[%s240 + $0xc] sm:$0xf]
      %v3453 = vld [vmem:[%s240 + $0x10] sm:$0x3]
      %v3486 = vunpack.c.l.b16 %v3417
      %v3487 = vunpack.c.l.b16 %v3418
      %v3488 = vunpack.c.l.b16 %v3419
      %v3489 = vunpack.c.l.b16 %v3420
      %v3490 = vunpack.c.l.b16 %v3421
      %v3491 = vunpack.c.l.b16 %v3422
      %v3492 = vunpack.c.l.b16 %v3423
      %v3493 = vunpack.c.l.b16 %v3424
      %v3494 = vunpack.c.l.b16 %v3425
      %v3495 = vunpack.c.l.b16 %v3426
      %v3496 = vunpack.c.l.b16 %v3427
      %v3497 = vunpack.c.l.b16 %v3428
      %v3498 = vunpack.c.l.b16 %v3429
      %v3499 = vunpack.c.l.b16 %v3430
      %v3500 = vunpack.c.l.b16 %v3431
      %v3501 = vunpack.c.l.b16 %v3432
      %v3502 = vunpack.c.l.b16 %v3433
      %v3503 = vunpack.c.l.b16 %v3434
      %v3504 = vunpack.c.l.b16 %v3435
      %v3505 = vunpack.c.l.b16 %v3436
      %v3506 = vunpack.c.l.b16 %v3437
      %v3507 = vunpack.c.l.b16 %v3438
      %v3508 = vunpack.c.l.b16 %v3439
      %v3509 = vunpack.c.l.b16 %v3440
      %v3510 = vunpack.c.l.b16 %v3441
      %v3511 = vunpack.c.l.b16 %v3442
      %v3512 = vunpack.c.l.b16 %v3443
      %v3513 = vunpack.c.l.b16 %v3444
      %v3514 = vunpack.c.l.b16 %v3445
      %v3515 = vunpack.c.l.b16 %v3446
      %v3516 = vunpack.c.l.b16 %v3447
      %v3517 = vunpack.c.l.b16 %v3448
      %v3518 = vpack.c.b16 %v3487, %v3486
      %v3519 = vpack.c.b16 %v3489, %v3488
      %v3520 = vpack.c.b16 %v3491, %v3490
      %v3521 = vpack.c.b16 %v3493, %v3492
      %v3522 = vpack.c.b16 %v3495, %v3494
      %v3523 = vpack.c.b16 %v3497, %v3496
      %v3524 = vpack.c.b16 %v3499, %v3498
      %v3525 = vpack.c.b16 %v3501, %v3500
      %v3526 = vpack.c.b16 %v3503, %v3502
      %v3527 = vpack.c.b16 %v3505, %v3504
      %v3528 = vpack.c.b16 %v3507, %v3506
      %v3529 = vpack.c.b16 %v3509, %v3508
      %v3530 = vpack.c.b16 %v3511, %v3510
      %v3531 = vpack.c.b16 %v3513, %v3512
      %v3532 = vpack.c.b16 %v3515, %v3514
      %v3533 = vpack.c.b16 %v3517, %v3516
      %v3539 = vunpack.c.l.b16 %v3449
      %v3540 = vunpack.c.l.b16 %v3450
      %v3541 = vunpack.c.l.b16 %v3451
      %v3542 = vunpack.c.l.b16 %v3452
      %v3543 = vunpack.c.l.b16 %v3453
      %v3544 = vpack.c.b16 %v3540, %v3539
      %v3545 = vpack.c.b16 %v3542, %v3541
      %v3546 = vpack.c.b16 %v3543, %v3543
      %vm3549 = vcmask 293888
      %v3551 = vsel %vm3549, %v3518, 0
      %v3554 = vsel %vm3549, %v3519, 0
      %v3557 = vsel %vm3549, %v3520, 0
      %v3560 = vsel %vm3549, %v3521, 0
      %v3563 = vsel %vm3549, %v3522, 0
      %v3566 = vsel %vm3549, %v3523, 0
      %v3569 = vsel %vm3549, %v3524, 0
      %v3572 = vsel %vm3549, %v3525, 0
      %v3575 = vsel %vm3549, %v3526, 0
      %v3578 = vsel %vm3549, %v3527, 0
      %v3581 = vsel %vm3549, %v3528, 0
      %v3584 = vsel %vm3549, %v3529, 0
      %v3587 = vsel %vm3549, %v3530, 0
      %v3590 = vsel %vm3549, %v3531, 0
      %v3593 = vsel %vm3549, %v3532, 0
      %v3596 = vsel %vm3549, %v3533, 0
      %vm3598 = vcmask 1041408
      %v3600 = vsel %vm3598, %v3546, 0
      %3602 = vmatprep.subr.bf16.mxu0 0
      %3603 = vmatpush1.bf16.msra.mxu0 0
      %3604 = vmatprep.subr.bf16.mxu0 0
      %3605 = vmatpush1.bf16.msra.mxu0 0
      %3606 = vmatprep.subr.bf16.mxu0 0
      %3607 = vmatpush1.bf16.msra.mxu0 0
      %3608 = vmatprep.subr.bf16.mxu0 0
      %3609 = vmatpush1.bf16.msra.mxu0 0
      %3610 = vmatprep.subr.bf16.mxu0 0
      %3611 = vmatpush1.bf16.msra.mxu0 0
      %3612 = vmatprep.subr.bf16.mxu0 0
      %3613 = vmatpush1.bf16.msra.mxu0 %v3600
      %3614 = vmatprep.subr.bf16.mxu0 0
      %3615 = vmatpush1.bf16.msra.mxu0 %v3545
      %3616 = vmatprep.subr.bf16.mxu0 0
      %3617 = vmatpush1.bf16.msra.mxu0 %v3544
      %3618 = vmatprep.subr.bf16.mxu0 0
      %3619 = vmatpush2.bf16.msra.mxu0 0
      %3620 = vmatprep.subr.bf16.mxu0 0
      %3621 = vmatpush2.bf16.msra.mxu0 0
      %3622 = vmatprep.subr.bf16.mxu0 0
      %3623 = vmatpush2.bf16.msra.mxu0 0
      %3624 = vmatprep.subr.bf16.mxu0 0
      %3625 = vmatpush2.bf16.msra.mxu0 0
      %3626 = vmatprep.subr.bf16.mxu0 0
      %3627 = vmatpush2.bf16.msra.mxu0 0
      %3628 = vmatprep.subr.bf16.mxu0 0
      %3629 = vmatpush2.bf16.msra.mxu0 0
      %3630 = vmatprep.subr.bf16.mxu0 0
      %3631 = vmatpush2.bf16.msra.mxu0 0
      %3632 = vmatprep.subr.bf16.mxu0 0
      %3633 = vmatpush2.bf16.msra.mxu0 0
      %3634 = vmatprep.mubr.bf16.mxu0 0
      %3635 = vmatmul.mubr.bf16.gmra.mxu0 %v3551
      %v3636 = vpop.f32.mrf.mxu0
      %v3637 = vadd.f32 0.0, %v3636
      %v3638 = vpop.f32.mrf.mxu0
      %v3639 = vpop.f32.mrf.mxu0
      %v3640 = vadd.f32 0.0, %v3639
      %v3641 = vpop.f32.mrf.mxu0
      %3642 = vmatprep.mubr.bf16.mxu0 0
      %3643 = vmatmul.mubr.bf16.gmra.mxu0 %v3554
      %v3644 = vpop.f32.mrf.mxu0
      %v3645 = vadd.f32 0.0, %v3644
      %v3646 = vpop.f32.mrf.mxu0
      %v3647 = vpop.f32.mrf.mxu0
      %v3648 = vadd.f32 0.0, %v3647
      %v3649 = vpop.f32.mrf.mxu0
      %3650 = vmatprep.mubr.bf16.mxu0 0
      %3651 = vmatmul.mubr.bf16.gmra.mxu0 %v3557
      %v3652 = vpop.f32.mrf.mxu0
      %v3653 = vadd.f32 0.0, %v3652
      %v3654 = vpop.f32.mrf.mxu0
      %v3655 = vpop.f32.mrf.mxu0
      %v3656 = vadd.f32 0.0, %v3655
      %v3657 = vpop.f32.mrf.mxu0
      %3658 = vmatprep.mubr.bf16.mxu0 0
      %3659 = vmatmul.mubr.bf16.gmra.mxu0 %v3560
      %v3660 = vpop.f32.mrf.mxu0
      %v3661 = vadd.f32 0.0, %v3660
      %v3662 = vpop.f32.mrf.mxu0
      %v3663 = vpop.f32.mrf.mxu0
      %v3664 = vadd.f32 0.0, %v3663
      %v3665 = vpop.f32.mrf.mxu0
      %3666 = vmatprep.mubr.bf16.mxu0 0
      %3667 = vmatmul.mubr.bf16.gmra.mxu0 %v3563
      %v3668 = vpop.f32.mrf.mxu0
      %v3669 = vadd.f32 0.0, %v3668
      %v3670 = vpop.f32.mrf.mxu0
      %v3671 = vpop.f32.mrf.mxu0
      %v3672 = vadd.f32 0.0, %v3671
      %v3673 = vpop.f32.mrf.mxu0
      %3674 = vmatprep.mubr.bf16.mxu0 0
      %3675 = vmatmul.mubr.bf16.gmra.mxu0 %v3566
      %v3676 = vpop.f32.mrf.mxu0
      %v3677 = vadd.f32 0.0, %v3676
      %v3678 = vpop.f32.mrf.mxu0
      %v3679 = vpop.f32.mrf.mxu0
      %v3680 = vadd.f32 0.0, %v3679
      %v3681 = vpop.f32.mrf.mxu0
      %3682 = vmatprep.mubr.bf16.mxu0 0
      %3683 = vmatmul.mubr.bf16.gmra.mxu0 %v3569
      %v3684 = vpop.f32.mrf.mxu0
      %v3685 = vadd.f32 0.0, %v3684
      %v3686 = vpop.f32.mrf.mxu0
      %v3687 = vpop.f32.mrf.mxu0
      %v3688 = vadd.f32 0.0, %v3687
      %v3689 = vpop.f32.mrf.mxu0
      %3690 = vmatprep.mubr.bf16.mxu0 0
      %3691 = vmatmul.mubr.bf16.gmra.mxu0 %v3572
      %v3692 = vpop.f32.mrf.mxu0
      %v3693 = vadd.f32 0.0, %v3692
      %v3694 = vpop.f32.mrf.mxu0
      %v3695 = vpop.f32.mrf.mxu0
      %v3696 = vadd.f32 0.0, %v3695
      %v3697 = vpop.f32.mrf.mxu0
      %3698 = vmatprep.mubr.bf16.mxu0 0
      %3699 = vmatmul.mubr.bf16.gmra.mxu0 %v3575
      %v3700 = vpop.f32.mrf.mxu0
      %v3701 = vadd.f32 0.0, %v3700
      %v3702 = vpop.f32.mrf.mxu0
      %v3703 = vpop.f32.mrf.mxu0
      %v3704 = vadd.f32 0.0, %v3703
      %v3705 = vpop.f32.mrf.mxu0
      %3706 = vmatprep.mubr.bf16.mxu0 0
      %3707 = vmatmul.mubr.bf16.gmra.mxu0 %v3578
      %v3708 = vpop.f32.mrf.mxu0
      %v3709 = vadd.f32 0.0, %v3708
      %v3710 = vpop.f32.mrf.mxu0
      %v3711 = vpop.f32.mrf.mxu0
      %v3712 = vadd.f32 0.0, %v3711
      %v3713 = vpop.f32.mrf.mxu0
      %3714 = vmatprep.mubr.bf16.mxu0 0
      %3715 = vmatmul.mubr.bf16.gmra.mxu0 %v3581
      %v3716 = vpop.f32.mrf.mxu0
      %v3717 = vadd.f32 0.0, %v3716
      %v3718 = vpop.f32.mrf.mxu0
      %v3719 = vpop.f32.mrf.mxu0
      %v3720 = vadd.f32 0.0, %v3719
      %v3721 = vpop.f32.mrf.mxu0
      %3722 = vmatprep.mubr.bf16.mxu0 0
      %3723 = vmatmul.mubr.bf16.gmra.mxu0 %v3584
      %v3724 = vpop.f32.mrf.mxu0
      %v3725 = vadd.f32 0.0, %v3724
      %v3726 = vpop.f32.mrf.mxu0
      %v3727 = vpop.f32.mrf.mxu0
      %v3728 = vadd.f32 0.0, %v3727
      %v3729 = vpop.f32.mrf.mxu0
      %3730 = vmatprep.mubr.bf16.mxu0 0
      %3731 = vmatmul.mubr.bf16.gmra.mxu0 %v3587
      %v3732 = vpop.f32.mrf.mxu0
      %v3733 = vadd.f32 0.0, %v3732
      %v3734 = vpop.f32.mrf.mxu0
      %v3735 = vpop.f32.mrf.mxu0
      %v3736 = vadd.f32 0.0, %v3735
      %v3737 = vpop.f32.mrf.mxu0
      %3738 = vmatprep.mubr.bf16.mxu0 0
      %3739 = vmatmul.mubr.bf16.gmra.mxu0 %v3590
      %v3740 = vpop.f32.mrf.mxu0
      %v3741 = vadd.f32 0.0, %v3740
      %v3742 = vpop.f32.mrf.mxu0
      %v3743 = vpop.f32.mrf.mxu0
      %v3744 = vadd.f32 0.0, %v3743
      %v3745 = vpop.f32.mrf.mxu0
      %3746 = vmatprep.mubr.bf16.mxu0 0
      %3747 = vmatmul.mubr.bf16.gmra.mxu0 %v3593
      %v3748 = vpop.f32.mrf.mxu0
      %v3749 = vadd.f32 0.0, %v3748
      %v3750 = vpop.f32.mrf.mxu0
      %v3751 = vpop.f32.mrf.mxu0
      %v3752 = vadd.f32 0.0, %v3751
      %v3753 = vpop.f32.mrf.mxu0
      %3754 = vmatprep.mubr.bf16.mxu0 0
      %3755 = vmatmul.mubr.bf16.gmra.mxu0 %v3596
      %v3756 = vpop.f32.mrf.mxu0
      %v3757 = vadd.f32 0.0, %v3756
      %v3758 = vpop.f32.mrf.mxu0
      %v3759 = vpop.f32.mrf.mxu0
      %v3760 = vadd.f32 0.0, %v3759
      %v3761 = vpop.f32.mrf.mxu0
      %3762 = vdwg.mxu0
      %v3763 = vld [vmem:[%s244] sm:$0x1]
      %v3764 = vlaneseq
      %v3765 = vshrl.u32 %v3764, 7
      %v3766 = vsub.s32 0, %v3765
      %v3767 = vrot.slane %v3763, %v3766
      %v3768 = vmul.f32 %v3637, %v3767
      %v3769 = vmul.f32 %v3640, %v3767
      %v3770 = vmul.f32 %v3645, %v3767
      %v3771 = vmul.f32 %v3648, %v3767
      %v3772 = vmul.f32 %v3653, %v3767
      %v3773 = vmul.f32 %v3656, %v3767
      %v3774 = vmul.f32 %v3661, %v3767
      %v3775 = vmul.f32 %v3664, %v3767
      %v3776 = vmul.f32 %v3669, %v3767
      %v3777 = vmul.f32 %v3672, %v3767
      %v3778 = vmul.f32 %v3677, %v3767
      %v3779 = vmul.f32 %v3680, %v3767
      %v3780 = vmul.f32 %v3685, %v3767
      %v3781 = vmul.f32 %v3688, %v3767
      %v3782 = vmul.f32 %v3693, %v3767
      %v3783 = vmul.f32 %v3696, %v3767
      %v3784 = vmul.f32 %v3701, %v3767
      %v3785 = vmul.f32 %v3704, %v3767
      %v3786 = vmul.f32 %v3709, %v3767
      %v3787 = vmul.f32 %v3712, %v3767
      %v3788 = vmul.f32 %v3717, %v3767
      %v3789 = vmul.f32 %v3720, %v3767
      %v3790 = vmul.f32 %v3725, %v3767
      %v3791 = vmul.f32 %v3728, %v3767
      %v3792 = vmul.f32 %v3733, %v3767
      %v3793 = vmul.f32 %v3736, %v3767
      %v3794 = vmul.f32 %v3741, %v3767
      %v3795 = vmul.f32 %v3744, %v3767
      %v3796 = vmul.f32 %v3749, %v3767
      %v3797 = vmul.f32 %v3752, %v3767
      %v3798 = vmul.f32 %v3757, %v3767
      %v3799 = vmul.f32 %v3760, %v3767
      %v3800 = vld [vmem:[%s244 + $0x1] sm:$0x1]
      %v3801 = vlaneseq
      %v3802 = vshrl.u32 %v3801, 7
      %v3803 = vsub.s32 0, %v3802
      %v3804 = vrot.slane %v3800, %v3803
      %v3805 = vadd.f32 %v3768, %v3804
      %v3806 = vadd.f32 %v3769, %v3804
      %v3807 = vadd.f32 %v3770, %v3804
      %v3808 = vadd.f32 %v3771, %v3804
      %v3809 = vadd.f32 %v3772, %v3804
      %v3810 = vadd.f32 %v3773, %v3804
      %v3811 = vadd.f32 %v3774, %v3804
      %v3812 = vadd.f32 %v3775, %v3804
      %v3813 = vadd.f32 %v3776, %v3804
      %v3814 = vadd.f32 %v3777, %v3804
      %v3815 = vadd.f32 %v3778, %v3804
      %v3816 = vadd.f32 %v3779, %v3804
      %v3817 = vadd.f32 %v3780, %v3804
      %v3818 = vadd.f32 %v3781, %v3804
      %v3819 = vadd.f32 %v3782, %v3804
      %v3820 = vadd.f32 %v3783, %v3804
      %v3821 = vadd.f32 %v3784, %v3804
      %v3822 = vadd.f32 %v3785, %v3804
      %v3823 = vadd.f32 %v3786, %v3804
      %v3824 = vadd.f32 %v3787, %v3804
      %v3825 = vadd.f32 %v3788, %v3804
      %v3826 = vadd.f32 %v3789, %v3804
      %v3827 = vadd.f32 %v3790, %v3804
      %v3828 = vadd.f32 %v3791, %v3804
      %v3829 = vadd.f32 %v3792, %v3804
      %v3830 = vadd.f32 %v3793, %v3804
      %v3831 = vadd.f32 %v3794, %v3804
      %v3832 = vadd.f32 %v3795, %v3804
      %v3833 = vadd.f32 %v3796, %v3804
      %v3834 = vadd.f32 %v3797, %v3804
      %v3835 = vadd.f32 %v3798, %v3804
      %v3836 = vadd.f32 %v3799, %v3804
      %v3837 = vmul.f32 %v3805, 0.5
      %v3838 = vmul.f32 %v3806, 0.5
      %v3839 = vmul.f32 %v3807, 0.5
      %v3840 = vmul.f32 %v3808, 0.5
      %v3841 = vmul.f32 %v3809, 0.5
      %v3842 = vmul.f32 %v3810, 0.5
      %v3843 = vmul.f32 %v3811, 0.5
      %v3844 = vmul.f32 %v3812, 0.5
      %v3845 = vmul.f32 %v3813, 0.5
      %v3846 = vmul.f32 %v3814, 0.5
      %v3847 = vmul.f32 %v3815, 0.5
      %v3848 = vmul.f32 %v3816, 0.5
      %v3849 = vmul.f32 %v3817, 0.5
      %v3850 = vmul.f32 %v3818, 0.5
      %v3851 = vmul.f32 %v3819, 0.5
      %v3852 = vmul.f32 %v3820, 0.5
      %v3853 = vmul.f32 %v3821, 0.5
      %v3854 = vmul.f32 %v3822, 0.5
      %v3855 = vmul.f32 %v3823, 0.5
      %v3856 = vmul.f32 %v3824, 0.5
      %v3857 = vmul.f32 %v3825, 0.5
      %v3858 = vmul.f32 %v3826, 0.5
      %v3859 = vmul.f32 %v3827, 0.5
      %v3860 = vmul.f32 %v3828, 0.5
      %v3861 = vmul.f32 %v3829, 0.5
      %v3862 = vmul.f32 %v3830, 0.5
      %v3863 = vmul.f32 %v3831, 0.5
      %v3864 = vmul.f32 %v3832, 0.5
      %v3865 = vmul.f32 %v3833, 0.5
      %v3866 = vmul.f32 %v3834, 0.5
      %v3867 = vmul.f32 %v3835, 0.5
      %v3868 = vmul.f32 %v3836, 0.5
      %v3869 = vtanh.pop %v3837
      %v3870 = vtanh.pop %v3838
      %v3871 = vtanh.pop %v3839
      %v3872 = vtanh.pop %v3840
      %v3873 = vtanh.pop %v3841
      %v3874 = vtanh.pop %v3842
      %v3875 = vtanh.pop %v3843
      %v3876 = vtanh.pop %v3844
      %v3877 = vtanh.pop %v3845
      %v3878 = vtanh.pop %v3846
      %v3879 = vtanh.pop %v3847
      %v3880 = vtanh.pop %v3848
      %v3881 = vtanh.pop %v3849
      %v3882 = vtanh.pop %v3850
      %v3883 = vtanh.pop %v3851
      %v3884 = vtanh.pop %v3852
      %v3885 = vtanh.pop %v3853
      %v3886 = vtanh.pop %v3854
      %v3887 = vtanh.pop %v3855
      %v3888 = vtanh.pop %v3856
      %v3889 = vtanh.pop %v3857
      %v3890 = vtanh.pop %v3858
      %v3891 = vtanh.pop %v3859
      %v3892 = vtanh.pop %v3860
      %v3893 = vtanh.pop %v3861
      %v3894 = vtanh.pop %v3862
      %v3895 = vtanh.pop %v3863
      %v3896 = vtanh.pop %v3864
      %v3897 = vtanh.pop %v3865
      %v3898 = vtanh.pop %v3866
      %v3899 = vtanh.pop %v3867
      %v3900 = vtanh.pop %v3868
      %v3901 = vmul.f32 %v3869, 0.5
      %v3902 = vmul.f32 %v3870, 0.5
      %v3903 = vmul.f32 %v3871, 0.5
      %v3904 = vmul.f32 %v3872, 0.5
      %v3905 = vmul.f32 %v3873, 0.5
      %v3906 = vmul.f32 %v3874, 0.5
      %v3907 = vmul.f32 %v3875, 0.5
      %v3908 = vmul.f32 %v3876, 0.5
      %v3909 = vmul.f32 %v3877, 0.5
      %v3910 = vmul.f32 %v3878, 0.5
      %v3911 = vmul.f32 %v3879, 0.5
      %v3912 = vmul.f32 %v3880, 0.5
      %v3913 = vmul.f32 %v3881, 0.5
      %v3914 = vmul.f32 %v3882, 0.5
      %v3915 = vmul.f32 %v3883, 0.5
      %v3916 = vmul.f32 %v3884, 0.5
      %v3917 = vmul.f32 %v3885, 0.5
      %v3918 = vmul.f32 %v3886, 0.5
      %v3919 = vmul.f32 %v3887, 0.5
      %v3920 = vmul.f32 %v3888, 0.5
      %v3921 = vmul.f32 %v3889, 0.5
      %v3922 = vmul.f32 %v3890, 0.5
      %v3923 = vmul.f32 %v3891, 0.5
      %v3924 = vmul.f32 %v3892, 0.5
      %v3925 = vmul.f32 %v3893, 0.5
      %v3926 = vmul.f32 %v3894, 0.5
      %v3927 = vmul.f32 %v3895, 0.5
      %v3928 = vmul.f32 %v3896, 0.5
      %v3929 = vmul.f32 %v3897, 0.5
      %v3930 = vmul.f32 %v3898, 0.5
      %v3931 = vmul.f32 %v3899, 0.5
      %v3932 = vmul.f32 %v3900, 0.5
      %v3933 = vadd.f32 %v3901, 0.5
      %v3934 = vadd.f32 %v3902, 0.5
      %v3935 = vadd.f32 %v3903, 0.5
      %v3936 = vadd.f32 %v3904, 0.5
      %v3937 = vadd.f32 %v3905, 0.5
      %v3938 = vadd.f32 %v3906, 0.5
      %v3939 = vadd.f32 %v3907, 0.5
      %v3940 = vadd.f32 %v3908, 0.5
      %v3941 = vadd.f32 %v3909, 0.5
      %v3942 = vadd.f32 %v3910, 0.5
      %v3943 = vadd.f32 %v3911, 0.5
      %v3944 = vadd.f32 %v3912, 0.5
      %v3945 = vadd.f32 %v3913, 0.5
      %v3946 = vadd.f32 %v3914, 0.5
      %v3947 = vadd.f32 %v3915, 0.5
      %v3948 = vadd.f32 %v3916, 0.5
      %v3949 = vadd.f32 %v3917, 0.5
      %v3950 = vadd.f32 %v3918, 0.5
      %v3951 = vadd.f32 %v3919, 0.5
      %v3952 = vadd.f32 %v3920, 0.5
      %v3953 = vadd.f32 %v3921, 0.5
      %v3954 = vadd.f32 %v3922, 0.5
      %v3955 = vadd.f32 %v3923, 0.5
      %v3956 = vadd.f32 %v3924, 0.5
      %v3957 = vadd.f32 %v3925, 0.5
      %v3958 = vadd.f32 %v3926, 0.5
      %v3959 = vadd.f32 %v3927, 0.5
      %v3960 = vadd.f32 %v3928, 0.5
      %v3961 = vadd.f32 %v3929, 0.5
      %v3962 = vadd.f32 %v3930, 0.5
      %v3963 = vadd.f32 %v3931, 0.5
      %v3964 = vadd.f32 %v3932, 0.5
      %v3965 = vmul.f32 %v3805, %v3933
      %v3966 = vmul.f32 %v3806, %v3934
      %v3967 = vmul.f32 %v3807, %v3935
      %v3968 = vmul.f32 %v3808, %v3936
      %v3969 = vmul.f32 %v3809, %v3937
      %v3970 = vmul.f32 %v3810, %v3938
      %v3971 = vmul.f32 %v3811, %v3939
      %v3972 = vmul.f32 %v3812, %v3940
      %v3973 = vmul.f32 %v3813, %v3941
      %v3974 = vmul.f32 %v3814, %v3942
      %v3975 = vmul.f32 %v3815, %v3943
      %v3976 = vmul.f32 %v3816, %v3944
      %v3977 = vmul.f32 %v3817, %v3945
      %v3978 = vmul.f32 %v3818, %v3946
      %v3979 = vmul.f32 %v3819, %v3947
      %v3980 = vmul.f32 %v3820, %v3948
      %v3981 = vmul.f32 %v3821, %v3949
      %v3982 = vmul.f32 %v3822, %v3950
      %v3983 = vmul.f32 %v3823, %v3951
      %v3984 = vmul.f32 %v3824, %v3952
      %v3985 = vmul.f32 %v3825, %v3953
      %v3986 = vmul.f32 %v3826, %v3954
      %v3987 = vmul.f32 %v3827, %v3955
      %v3988 = vmul.f32 %v3828, %v3956
      %v3989 = vmul.f32 %v3829, %v3957
      %v3990 = vmul.f32 %v3830, %v3958
      %v3991 = vmul.f32 %v3831, %v3959
      %v3992 = vmul.f32 %v3832, %v3960
      %v3993 = vmul.f32 %v3833, %v3961
      %v3994 = vmul.f32 %v3834, %v3962
      %v3995 = vmul.f32 %v3835, %v3963
      %v3996 = vmul.f32 %v3836, %v3964
      %3997 = vst [vmem:[%s257] sm:$0xff] %v3965
      %3998 = vst [vmem:[%s257 + $0x8] sm:$0xff] %v3966
      %3999 = vst [vmem:[%s257 + $0x10] sm:$0xff] %v3967
      %4000 = vst [vmem:[%s257 + $0x18] sm:$0xff] %v3968
      %4001 = vst [vmem:[%s257 + $0x20] sm:$0xff] %v3969
      %4002 = vst [vmem:[%s257 + $0x28] sm:$0xff] %v3970
      %4003 = vst [vmem:[%s257 + $0x30] sm:$0xff] %v3971
      %4004 = vst [vmem:[%s257 + $0x38] sm:$0xff] %v3972
      %4005 = vst [vmem:[%s257 + $0x40] sm:$0xff] %v3973
      %4006 = vst [vmem:[%s257 + $0x48] sm:$0xff] %v3974
      %4007 = vst [vmem:[%s257 + $0x50] sm:$0xff] %v3975
      %4008 = vst [vmem:[%s257 + $0x58] sm:$0xff] %v3976
      %4009 = vst [vmem:[%s257 + $0x60] sm:$0xff] %v3977
      %4010 = vst [vmem:[%s257 + $0x68] sm:$0xff] %v3978
      %4011 = vst [vmem:[%s257 + $0x70] sm:$0xff] %v3979
      %4012 = vst [vmem:[%s257 + $0x78] sm:$0xff] %v3980
      %4013 = vst [vmem:[%s257 + $0x80] sm:$0xff] %v3981
      %4014 = vst [vmem:[%s257 + $0x88] sm:$0xff] %v3982
      %4015 = vst [vmem:[%s257 + $0x90] sm:$0xff] %v3983
      %4016 = vst [vmem:[%s257 + $0x98] sm:$0xff] %v3984
      %4017 = vst [vmem:[%s257 + $0xa0] sm:$0xff] %v3985
      %4018 = vst [vmem:[%s257 + $0xa8] sm:$0xff] %v3986
      %4019 = vst [vmem:[%s257 + $0xb0] sm:$0xff] %v3987
      %4020 = vst [vmem:[%s257 + $0xb8] sm:$0xff] %v3988
      %4021 = vst [vmem:[%s257 + $0xc0] sm:$0xff] %v3989
      %4022 = vst [vmem:[%s257 + $0xc8] sm:$0xff] %v3990
      %4023 = vst [vmem:[%s257 + $0xd0] sm:$0xff] %v3991
      %4024 = vst [vmem:[%s257 + $0xd8] sm:$0xff] %v3992
      %4025 = vst [vmem:[%s257 + $0xe0] sm:$0xff] %v3993
      %4026 = vst [vmem:[%s257 + $0xe8] sm:$0xff] %v3994
      %4027 = vst [vmem:[%s257 + $0xf0] sm:$0xff] %v3995
      %4028 = vst [vmem:[%s257 + $0xf8] sm:$0xff] %v3996
      %s4029 = smul.u32 16, %s20
      %p4030 = scmp.lt.s32.totalorder %s19, 1
      %s4031 = scalar_select %p4030, %s19, 1
      %p4032 = scmp.lt.s32.totalorder %s4029, 15
      %s4033 = scalar_select %p4032, %s4029, 15
      %p4034 = scmp.lt.s32.totalorder %s21, 0
      %s4035 = scalar_select %p4034, %s21, 0
      %s4036 = smul.addr %s4033, 2
      %s4037 = sadd.s32 %s4035, %s4036
      %s4038 = smul.addr %s4031, 32
      %s4039 = sadd.s32 %s4037, %s4038
      %s4040 = smul.addr %s4039, 8
      %s4041 = scalar_lea.vmem %s3, %s4040
      // Predicated region
      $region37: #{_conv_impl.1} parent=31 // pred_check
        %p4042 = pneg %p135
      $region38: #{_conv_impl.1} parent=31 // pred_check_branch
        %4044 = sbr.rel (%p4042) target = $region40
      $region39: #{_conv_impl.1} parent=31 // pred_region
        %s4045 = smul.u32 16, %s20
      $region40: #{_conv_impl.1} parent=31 // pred_fallthru
        _
    $region32: #{_conv_impl.1} parent=5 // pred_fallthru
      _
    %p4046 = scmp.le.s32.totalorder 2, %s9
    // Predicated region
    $region41: #{_conv_impl.1} parent=5 // pred_check
      %p4047 = pneg %p4046
    $region42: #{_conv_impl.1} parent=5 // pred_check_branch
      %4049 = sbr.rel (%p4047) target = $region44
    $region43: #{_conv_impl.1} parent=5 // pred_region
      %s4050 = ssub.s32 %s9, 2
      // Predicated region
      $region45: #{_conv_impl.1} parent=43 // pred_check
        %p4051 = pneg %p141
      $region46: #{_conv_impl.1} parent=43 // pred_check_branch
        %4053 = sbr.rel (%p4051) target = $region48
      $region47: #{_conv_impl.1} parent=43 // pred_region
        %s4054 = smul.u32 16, %s23
        %p4055 = scmp.lt.s32.totalorder %s22, 1
        %s4056 = scalar_select %p4055, %s22, 1
        %p4057 = scmp.lt.s32.totalorder %s4054, 15
        %s4058 = scalar_select %p4057, %s4054, 15
        %p4059 = scmp.lt.s32.totalorder %s24, 0
        %s4060 = scalar_select %p4059, %s24, 0
        %s4061 = smul.addr %s4058, 2
        %s4062 = sadd.s32 %s4060, %s4061
        %s4063 = smul.addr %s4056, 32
        %s4064 = sadd.s32 %s4062, %s4063
        %s4065 = smul.addr %s4064, 8
        %s4066 = scalar_lea.vmem %s3, %s4065
      $region48: #{_conv_impl.1} parent=43 // pred_fallthru
        _
    $region44: #{_conv_impl.1} parent=5 // pred_fallthru
      _
  $region6: #{_conv_impl.1} parent=0 // loop_footer
    %s13 = sadd.s32 1, %s9
  $region7: #{_conv_impl.1} parent=0 // loop_footer_branch
    %8 = sbr.rel target = $region3
  $region8: #{_conv_impl.1} parent=0 // loop_exit
    _

</llo_original>
